<compile_context>
chip_gen: v7x
topology: tpu7x:2x2x1
jax: 0.10.0
libtpu: 0.0.40
codegen_flags: <defaults>
</compile_context>

<pallas_src>
import functools

import jax
import jax.numpy as jnp
from jax.experimental import pallas as pl
from jax.experimental.pallas import tpu as pltpu


def _stn3d_point_kernel(x_ref, w1_ref, b1_ref, w2_ref, b2_ref, w3_ref, b3_ref,
                        pooled_ref, *, tile_n, num_points, mask_tail):
    """Per-point MLP (3->64->128->1024, ReLU) + running max over points."""
    t = pl.program_id(1)

    @pl.when(t == 0)
    def _init():
        pooled_ref[...] = jnp.full(pooled_ref.shape, -jnp.inf, pooled_ref.dtype)

    x = x_ref[...]                                    # (tile_n, 3) f32
    w1 = w1_ref[...]                                  # (3, 64) f32

    # ---- layer 1 (3 -> 64): K=3 contraction as VPU broadcast-FMAs --------
    h = (x[:, 0:1] * w1[0:1, :]
         + x[:, 1:2] * w1[1:2, :]
         + x[:, 2:3] * w1[2:3, :]
         + b1_ref[...])
    h = jnp.maximum(h, 0.0)                           # (tile_n, 64) f32

    # ---- layers 2/3 on the MXU (bf16 inputs pre-cast in wrapper, f32 acc) --
    mm_dtype = w2_ref.dtype
    h = jnp.maximum(
        jnp.dot(h.astype(mm_dtype), w2_ref[...],
                preferred_element_type=jnp.float32) + b2_ref[...], 0.0)   # (tile_n, 128)
    h = jnp.maximum(
        jnp.dot(h.astype(mm_dtype), w3_ref[...],
                preferred_element_type=jnp.float32) + b3_ref[...], 0.0)   # (tile_n, 1024)

    # ---- mask zero-padded tail points before the max ----------------------
    if mask_tail:
        rows = jax.lax.broadcasted_iota(jnp.int32, (tile_n, 1), 0) + t * tile_n
        h = jnp.where(rows < num_points, h, -jnp.inf)

    # ---- running max over the point axis (MaxPool2d((N, 1))) -------------
    tile_max = jnp.max(h, axis=0, keepdims=True)      # (1, 1024)
    pooled_ref[...] = jnp.maximum(pooled_ref[...], tile_max)


def _stn3d_head_kernel(f_ref, wf1_ref, bf1_ref, wf2_ref, bf2_ref,
                       wf3_ref, bf3_ref, out_ref, *, k):
    """Batched FC head: fc1 -> fc2 -> fc3 (+ flattened identity)."""
    f = f_ref[...]                                            # (B, 1024) f32
    g = jnp.maximum(
        jnp.dot(f, wf1_ref[...], preferred_element_type=jnp.float32)
        + bf1_ref[...], 0.0)                                  # (B, 512)
    g = jnp.maximum(
        jnp.dot(g, wf2_ref[...], preferred_element_type=jnp.float32)
        + bf2_ref[...], 0.0)                                  # (B, 256)
    y = jnp.dot(g, wf3_ref[...], preferred_element_type=jnp.float32) \
        + bf3_ref[...]                                        # (B, k*k)
    idx = jax.lax.broadcasted_iota(jnp.int32, (1, k * k), 1)
    iden = jnp.where(idx % (k + 1) == 0, 1.0, 0.0).astype(jnp.float32)
    out_ref[...] = y + iden


def stn3d_forward(x_nchw, params, *, tile_n=1024, use_bf16=True):
    """x_nchw: (B, 1, N, 3) float32, like the PyTorch module input.

    use_bf16 (default True): run layer-2/3 matmuls with bf16 inputs and f32
    accumulation on the MXU (2-4x faster than the f32 path on v5e/v6e/v7x).
    Returns (transform (B, 3, 3), pooled features (B, 1024)).
    """
    B, C, N, K = x_nchw.shape
    assert C == 1 and K == 3, "STN3d with k=3 expects input (B, 1, num_points, 3)"
    x = x_nchw.reshape(B, N, K)

    # Point-tile sizing: multiple of 8 sublanes, zero-pad any remainder and
    # mask the padded rows to -inf inside the kernel before the running max.
    tile_n = min(tile_n, N)
    tile_n = ((tile_n + 7) // 8) * 8
    n_tiles = pl.cdiv(N, tile_n)
    n_pad = n_tiles * tile_n
    if n_pad != N:
        x = jnp.pad(x, ((0, 0), (0, n_pad - N), (0, 0)))
    mask_tail = (n_pad != N)

    # Pre-cast the MXU weights once in the wrapper (no in-kernel weight casts).
    mm_dtype = jnp.bfloat16 if use_bf16 else jnp.float32
    w2 = params["w2"].astype(mm_dtype)
    w3 = params["w3"].astype(mm_dtype)

    def wspec(arr):
        # constant-index full block: DMA'd once, resident across the grid
        nd = arr.ndim
        return pl.BlockSpec(arr.shape, lambda b, t, _nd=nd: (0,) * _nd)

    point_kernel = functools.partial(
        _stn3d_point_kernel, tile_n=tile_n, num_points=N, mask_tail=mask_tail)

    pooled = pl.pallas_call(
        point_kernel,
        out_shape=jax.ShapeDtypeStruct((B, 1, 1024), jnp.float32),
        grid_spec=pltpu.PrefetchScalarGridSpec(
            num_scalar_prefetch=0,
            grid=(B, n_tiles),
            in_specs=[
                pl.BlockSpec((None, tile_n, K), lambda b, t: (b, t, 0)),
                wspec(params["w1"]), wspec(params["b1"]),
                wspec(w2), wspec(params["b2"]),
                wspec(w3), wspec(params["b3"]),
            ],
            out_specs=pl.BlockSpec((None, 1, 1024), lambda b, t: (b, 0, 0)),
        ),
        compiler_params=pltpu.CompilerParams(
            # TODO(synk): on v7x verify dual-TC split of the batch axis; use
            # pltpu.CORE_PARALLEL if plain "parallel" does not split it.
            dimension_semantics=("parallel", "arbitrary"),
            vmem_limit_bytes=32 * 1024 * 1024),
    )(x, params["w1"], params["b1"], w2, params["b2"], w3, params["b3"])

    pooled = pooled.reshape(B, 1024)

    # FC head batched over B (single-block pallas_call; (B,1024)@(1024,512)
    # uses MXU rows properly instead of an M=1 matmul per batch).
    out9 = pl.pallas_call(
        functools.partial(_stn3d_head_kernel, k=K),
        out_shape=jax.ShapeDtypeStruct((B, K * K), jnp.float32),
    )(pooled, params["wf1"], params["bf1"], params["wf2"], params["bf2"],
      params["wf3"], params["bf3"])

    return out9.reshape(B, K, K), pooled


def init_params(key, k=3):
    """Deterministic parameters with the shapes implied by STN3d.__init__.

    Conv weights (Cout, Cin, 1, ks) are stored transposed as (Cin*ks, Cout);
    Linear weights (Cout, Cin) as (Cin, Cout).  BatchNorm (inference mode,
    PyTorch default init: gamma=1, beta=0, mean=0, var=1, eps=1e-5) is folded
    into the preceding weight/bias.
    """
    assert k == 3
    eps = 1e-5
    keys = jax.random.split(key, 10)

    def uni(kk, shape, fan_in):
        bound = 1.0 / (fan_in ** 0.5)
        return jax.random.uniform(kk, shape, jnp.float32, -bound, bound)

    def fold_bn(w, b):
        c = w.shape[-1]
        gamma = jnp.ones((c,), jnp.float32)
        beta = jnp.zeros((c,), jnp.float32)
        mean = jnp.zeros((c,), jnp.float32)
        var = jnp.ones((c,), jnp.float32)
        s = gamma / jnp.sqrt(var + eps)
        return w * s[None, :], b * s + (beta - mean * s)

    # TODO(synk): training-mode BatchNorm (per-batch statistics) is not
    # implemented; BN is applied in inference mode and folded into the weights.
    w1, b1 = fold_bn(uni(keys[0], (3, 64), 3), uni(keys[1], (64,), 3))            # conv1 (64,1,1,3)
    w2, b2 = fold_bn(uni(keys[2], (64, 128), 64), uni(keys[3], (128,), 64))       # conv2 (128,64,1,1)
    w3, b3 = fold_bn(uni(keys[4], (128, 1024), 128), uni(keys[5], (1024,), 128))  # conv3 (1024,128,1,1)
    wf1, bf1 = fold_bn(uni(keys[6], (1024, 512), 1024), uni(keys[7], (512,), 1024))
    wf2, bf2 = fold_bn(uni(keys[8], (512, 256), 512), uni(keys[9], (256,), 512))
    wf3 = jnp.zeros((256, k * k), jnp.float32)   # fc3.weight.data.zero_()
    bf3 = jnp.zeros((k * k,), jnp.float32)       # fc3.bias.data.zero_()

    return dict(
        w1=w1, b1=b1.reshape(1, -1), w2=w2, b2=b2.reshape(1, -1),
        w3=w3, b3=b3.reshape(1, -1),
        wf1=wf1, bf1=bf1.reshape(1, -1), wf2=wf2, bf2=bf2.reshape(1, -1),
        wf3=wf3, bf3=bf3.reshape(1, -1),
    )


def reference_forward(x_nchw, params, *, use_bf16=True):
    """Pure-JAX reference with matching numerics (for verification)."""
    B, _, N, K = x_nchw.shape
    x = x_nchw.reshape(B, N, K)
    mm_dtype = jnp.bfloat16 if use_bf16 else jnp.float32
    h = jax.nn.relu(x @ params["w1"] + params["b1"])
    h = jax.nn.relu(
        jnp.dot(h.astype(mm_dtype), params["w2"].astype(mm_dtype),
                preferred_element_type=jnp.float32) + params["b2"])
    h = jax.nn.relu(
        jnp.dot(h.astype(mm_dtype), params["w3"].astype(mm_dtype),
                preferred_element_type=jnp.float32) + params["b3"])
    f = jnp.max(h, axis=1)                              # MaxPool2d((N,1))
    g = jax.nn.relu(f @ params["wf1"] + params["bf1"])
    g = jax.nn.relu(g @ params["wf2"] + params["bf2"])
    y = g @ params["wf3"] + params["bf3"] \
        + jnp.eye(K, dtype=jnp.float32).reshape(1, K * K)
    return y.reshape(B, K, K), f


if __name__ == "__main__":
    # num_points = 2500 (the module's default) exercises the remainder/masking
    # path: 2500 pads to 3 tiles of 1024 with a masked tail.
    B, N, K = 2, 2500, 3
    key = jax.random.PRNGKey(0)
    k_x, k_p = jax.random.split(key)
    x_nchw = jax.random.normal(k_x, (B, 1, N, K), dtype=jnp.float32)
    params = init_params(k_p, K)

    out, pooled = stn3d_forward(x_nchw, params, tile_n=1024, use_bf16=True)
    out = jax.block_until_ready(out)
    pooled = jax.block_until_ready(pooled)

    ref_out, ref_pooled = reference_forward(x_nchw, params, use_bf16=True)
    assert out.shape == (B, K, K)
    assert jnp.allclose(pooled, ref_pooled, atol=1e-2, rtol=1e-2), (
        "pooled-feature mismatch, max abs err = %f"
        % float(jnp.max(jnp.abs(pooled - ref_pooled))))
    assert jnp.allclose(out, ref_out, atol=1e-4, rtol=1e-4), (
        "transform mismatch, max abs err = %f"
        % float(jnp.max(jnp.abs(out - ref_out))))
    print("KERNEL_OK")
</pallas_src>

<mosaic_0001>
module attributes {stable_mosaic.version = 11 : i64} {
  func.func @_stn3d_point_kernel(%arg0: i32, %arg1: i32, %arg2: memref<1x1024x3xf32, #tpu.memory_space<vmem>>, %arg3: memref<3x64xf32, #tpu.memory_space<vmem>>, %arg4: memref<1x64xf32, #tpu.memory_space<vmem>>, %arg5: memref<64x128xbf16, #tpu.memory_space<vmem>>, %arg6: memref<1x128xf32, #tpu.memory_space<vmem>>, %arg7: memref<128x1024xbf16, #tpu.memory_space<vmem>>, %arg8: memref<1x1024xf32, #tpu.memory_space<vmem>>, %arg9: memref<1x1x1024xf32, #tpu.memory_space<vmem>>) attributes {dimension_semantics = [#tpu.dimension_semantics<parallel>, #tpu.dimension_semantics<arbitrary>], iteration_bounds = array<i64: 2, 3>, scalar_prefetch = 0 : i64, scratch_operands = 0 : i64, tpu.core_type = #tpu.core_type<tc>, window_params = [{transform_indices = @transform_0, window_bounds = array<i64: 1, 1024, 3>}, {pipeline_mode = #tpu.pipeline_mode<synchronous>, transform_indices = @transform_1, window_bounds = array<i64: 3, 64>}, {pipeline_mode = #tpu.pipeline_mode<synchronous>, transform_indices = @transform_2, window_bounds = array<i64: 1, 64>}, {pipeline_mode = #tpu.pipeline_mode<synchronous>, transform_indices = @transform_3, window_bounds = array<i64: 64, 128>}, {pipeline_mode = #tpu.pipeline_mode<synchronous>, transform_indices = @transform_4, window_bounds = array<i64: 1, 128>}, {pipeline_mode = #tpu.pipeline_mode<synchronous>, transform_indices = @transform_5, window_bounds = array<i64: 128, 1024>}, {pipeline_mode = #tpu.pipeline_mode<synchronous>, transform_indices = @transform_6, window_bounds = array<i64: 1, 1024>}, {transform_indices = @transform_7, window_bounds = array<i64: 1, 1, 1024>}]} {
    %c0_i32 = arith.constant 0 : i32
    %0 = arith.cmpi eq, %arg1, %c0_i32 : i32
    %1 = arith.extui %0 : i1 to i32
    %c0_i32_0 = arith.constant 0 : i32
    %2 = arith.cmpi ne, %1, %c0_i32_0 : i32
    scf.if %2 {
      %cst_27 = arith.constant 0xFF800000 : f32
      %62 = vector.broadcast %cst_27 : f32 to vector<1x1024xf32>
      %c0_28 = arith.constant 0 : index
      %c0_29 = arith.constant 0 : index
      %c0_30 = arith.constant 0 : index
      %63 = vector.load %arg9[%c0_28, %c0_29, %c0_30] : memref<1x1x1024xf32, #tpu.memory_space<vmem>>, vector<1x1x1024xf32>
      %64 = vector.shape_cast %63 : vector<1x1x1024xf32> to vector<1x1024xf32>
      %65 = vector.shape_cast %62 : vector<1x1024xf32> to vector<1x1x1024xf32>
      tpu.vector_store %arg9[%c0_28, %c0_29, %c0_30], %65 {strides = array<i32>} : memref<1x1x1024xf32, #tpu.memory_space<vmem>>, vector<1x1x1024xf32>,
    } else {
    }
    %c0 = arith.constant 0 : index
    %c0_1 = arith.constant 0 : index
    %c0_2 = arith.constant 0 : index
    %3 = vector.load %arg2[%c0, %c0_1, %c0_2] : memref<1x1024x3xf32, #tpu.memory_space<vmem>>, vector<1x1024x3xf32>
    %4 = vector.shape_cast %3 : vector<1x1024x3xf32> to vector<1024x3xf32>
    %c0_3 = arith.constant 0 : index
    %c0_4 = arith.constant 0 : index
    %5 = vector.load %arg3[%c0_3, %c0_4] : memref<3x64xf32, #tpu.memory_space<vmem>>, vector<3x64xf32>
    %6 = vector.extract_strided_slice %4 {offsets = [0, 0], sizes = [1024, 1], strides = [1, 1]} : vector<1024x3xf32> to vector<1024x1xf32>
    %7 = vector.extract_strided_slice %5 {offsets = [0, 0], sizes = [1, 64], strides = [1, 1]} : vector<3x64xf32> to vector<1x64xf32>
    %8 = vector.broadcast %6 : vector<1024x1xf32> to vector<1024x64xf32>
    %9 = vector.broadcast %7 : vector<1x64xf32> to vector<1024x64xf32>
    %10 = arith.mulf %8, %9 : vector<1024x64xf32>
    %11 = vector.extract_strided_slice %4 {offsets = [0, 1], sizes = [1024, 1], strides = [1, 1]} : vector<1024x3xf32> to vector<1024x1xf32>
    %12 = vector.extract_strided_slice %5 {offsets = [1, 0], sizes = [1, 64], strides = [1, 1]} : vector<3x64xf32> to vector<1x64xf32>
    %13 = vector.broadcast %11 : vector<1024x1xf32> to vector<1024x64xf32>
    %14 = vector.broadcast %12 : vector<1x64xf32> to vector<1024x64xf32>
    %15 = arith.mulf %13, %14 : vector<1024x64xf32>
    %16 = arith.addf %10, %15 : vector<1024x64xf32>
    %17 = vector.extract_strided_slice %4 {offsets = [0, 2], sizes = [1024, 1], strides = [1, 1]} : vector<1024x3xf32> to vector<1024x1xf32>
    %18 = vector.extract_strided_slice %5 {offsets = [2, 0], sizes = [1, 64], strides = [1, 1]} : vector<3x64xf32> to vector<1x64xf32>
    %19 = vector.broadcast %17 : vector<1024x1xf32> to vector<1024x64xf32>
    %20 = vector.broadcast %18 : vector<1x64xf32> to vector<1024x64xf32>
    %21 = arith.mulf %19, %20 : vector<1024x64xf32>
    %22 = arith.addf %16, %21 : vector<1024x64xf32>
    %c0_5 = arith.constant 0 : index
    %c0_6 = arith.constant 0 : index
    %23 = vector.load %arg4[%c0_5, %c0_6] : memref<1x64xf32, #tpu.memory_space<vmem>>, vector<1x64xf32>
    %24 = vector.broadcast %23 : vector<1x64xf32> to vector<1024x64xf32>
    %25 = arith.addf %22, %24 : vector<1024x64xf32>
    %cst = arith.constant 0.000000e+00 : f32
    %26 = vector.broadcast %cst : f32 to vector<1024x64xf32>
    %27 = arith.maximumf %25, %26 : vector<1024x64xf32>
    %28 = arith.truncf %27 : vector<1024x64xf32> to vector<1024x64xbf16>
    %c0_7 = arith.constant 0 : index
    %c0_8 = arith.constant 0 : index
    %29 = vector.load %arg5[%c0_7, %c0_8] : memref<64x128xbf16, #tpu.memory_space<vmem>>, vector<64x128xbf16>
    %cst_9 = arith.constant dense<0.000000e+00> : vector<1024x128xf32>
    %30 = tpu.matmul %28, %29, %cst_9 {dimension_numbers = #tpu.dot_dimension_numbers<[1], [0], [0], [1], [0, 0, 1, 1], [], []>} : vector<1024x64xbf16>, vector<64x128xbf16>, vector<1024x128xf32> -> vector<1024x128xf32>
    %c0_10 = arith.constant 0 : index
    %c0_11 = arith.constant 0 : index
    %31 = vector.load %arg6[%c0_10, %c0_11] : memref<1x128xf32, #tpu.memory_space<vmem>>, vector<1x128xf32>
    %32 = vector.broadcast %31 : vector<1x128xf32> to vector<1024x128xf32>
    %33 = arith.addf %30, %32 : vector<1024x128xf32>
    %cst_12 = arith.constant 0.000000e+00 : f32
    %34 = vector.broadcast %cst_12 : f32 to vector<1024x128xf32>
    %35 = arith.maximumf %33, %34 : vector<1024x128xf32>
    %36 = arith.truncf %35 : vector<1024x128xf32> to vector<1024x128xbf16>
    %c0_13 = arith.constant 0 : index
    %c0_14 = arith.constant 0 : index
    %37 = vector.load %arg7[%c0_13, %c0_14] : memref<128x1024xbf16, #tpu.memory_space<vmem>>, vector<128x1024xbf16>
    %cst_15 = arith.constant dense<0.000000e+00> : vector<1024x1024xf32>
    %38 = tpu.matmul %36, %37, %cst_15 {dimension_numbers = #tpu.dot_dimension_numbers<[1], [0], [0], [1], [0, 0, 1, 1], [], []>} : vector<1024x128xbf16>, vector<128x1024xbf16>, vector<1024x1024xf32> -> vector<1024x1024xf32>
    %c0_16 = arith.constant 0 : index
    %c0_17 = arith.constant 0 : index
    %39 = vector.load %arg8[%c0_16, %c0_17] : memref<1x1024xf32, #tpu.memory_space<vmem>>, vector<1x1024xf32>
    %40 = vector.broadcast %39 : vector<1x1024xf32> to vector<1024x1024xf32>
    %41 = arith.addf %38, %40 : vector<1024x1024xf32>
    %cst_18 = arith.constant 0.000000e+00 : f32
    %42 = vector.broadcast %cst_18 : f32 to vector<1024x1024xf32>
    %43 = arith.maximumf %41, %42 : vector<1024x1024xf32>
    %44 = tpu.iota {dimensions = array<i32: 0>} : vector<1024x1xi32>
    %c1024_i32 = arith.constant 1024 : i32
    %45 = arith.muli %arg1, %c1024_i32 : i32
    %46 = vector.broadcast %45 : i32 to vector<1024x1xi32>
    %47 = arith.addi %44, %46 : vector<1024x1xi32>
    %c2500_i32 = arith.constant 2500 : i32
    %48 = vector.broadcast %c2500_i32 : i32 to vector<1024x1xi32>
    %49 = arith.cmpi slt, %47, %48 : vector<1024x1xi32>
    %cst_19 = arith.constant 0xFF800000 : f32
    %50 = vector.shape_cast %49 : vector<1024x1xi1> to vector<1024x1xi1>
    %51 = vector.broadcast %50 : vector<1024x1xi1> to vector<1024x1024xi1>
    %52 = vector.broadcast %cst_19 : f32 to vector<1024x1024xf32>
    %53 = arith.select %51, %43, %52 : vector<1024x1024xi1>, vector<1024x1024xf32>
    %cst_20 = arith.constant dense<0xFF800000> : vector<1024xf32>
    %54 = vector.multi_reduction <maximumf>, %53, %cst_20 [0] : vector<1024x1024xf32> to vector<1024xf32>
    %55 = vector.shape_cast %54 : vector<1024xf32> to vector<1x1024xf32>
    %c0_21 = arith.constant 0 : index
    %c0_22 = arith.constant 0 : index
    %c0_23 = arith.constant 0 : index
    %56 = vector.load %arg9[%c0_21, %c0_22, %c0_23] : memref<1x1x1024xf32, #tpu.memory_space<vmem>>, vector<1x1x1024xf32>
    %57 = vector.shape_cast %56 : vector<1x1x1024xf32> to vector<1x1024xf32>
    %58 = arith.maximumf %57, %55 : vector<1x1024xf32>
    %c0_24 = arith.constant 0 : index
    %c0_25 = arith.constant 0 : index
    %c0_26 = arith.constant 0 : index
    %59 = vector.load %arg9[%c0_24, %c0_25, %c0_26] : memref<1x1x1024xf32, #tpu.memory_space<vmem>>, vector<1x1x1024xf32>
    %60 = vector.shape_cast %59 : vector<1x1x1024xf32> to vector<1x1024xf32>
    %61 = vector.shape_cast %58 : vector<1x1024xf32> to vector<1x1x1024xf32>
    tpu.vector_store %arg9[%c0_24, %c0_25, %c0_26], %61 {strides = array<i32>} : memref<1x1x1024xf32, #tpu.memory_space<vmem>>, vector<1x1x1024xf32>,
    return
  }
  func.func @transform_0(%arg0: i32, %arg1: i32) -> (i32, i32, i32) {
    %c0_i32 = arith.constant 0 : i32
    %c0_i32_0 = arith.constant 0 : i32
    return %arg0, %arg1, %c0_i32 : i32, i32, i32
  }
  func.func @transform_1(%arg0: i32, %arg1: i32) -> (i32, i32) {
    %c0_i32 = arith.constant 0 : i32
    %c0_i32_0 = arith.constant 0 : i32
    %c0_i32_1 = arith.constant 0 : i32
    return %c0_i32, %c0_i32_0 : i32, i32
  }
  func.func @transform_2(%arg0: i32, %arg1: i32) -> (i32, i32) {
    %c0_i32 = arith.constant 0 : i32
    %c0_i32_0 = arith.constant 0 : i32
    %c0_i32_1 = arith.constant 0 : i32
    return %c0_i32, %c0_i32_0 : i32, i32
  }
  func.func @transform_3(%arg0: i32, %arg1: i32) -> (i32, i32) {
    %c0_i32 = arith.constant 0 : i32
    %c0_i32_0 = arith.constant 0 : i32
    %c0_i32_1 = arith.constant 0 : i32
    return %c0_i32, %c0_i32_0 : i32, i32
  }
  func.func @transform_4(%arg0: i32, %arg1: i32) -> (i32, i32) {
    %c0_i32 = arith.constant 0 : i32
    %c0_i32_0 = arith.constant 0 : i32
    %c0_i32_1 = arith.constant 0 : i32
    return %c0_i32, %c0_i32_0 : i32, i32
  }
  func.func @transform_5(%arg0: i32, %arg1: i32) -> (i32, i32) {
    %c0_i32 = arith.constant 0 : i32
    %c0_i32_0 = arith.constant 0 : i32
    %c0_i32_1 = arith.constant 0 : i32
    return %c0_i32, %c0_i32_0 : i32, i32
  }
  func.func @transform_6(%arg0: i32, %arg1: i32) -> (i32, i32) {
    %c0_i32 = arith.constant 0 : i32
    %c0_i32_0 = arith.constant 0 : i32
    %c0_i32_1 = arith.constant 0 : i32
    return %c0_i32, %c0_i32_0 : i32, i32
  }
  func.func @transform_7(%arg0: i32, %arg1: i32) -> (i32, i32, i32) {
    %c0_i32 = arith.constant 0 : i32
    %c0_i32_0 = arith.constant 0 : i32
    %c0_i32_1 = arith.constant 0 : i32
    return %arg0, %c0_i32, %c0_i32_0 : i32, i32, i32
  }
}

</mosaic_0001>

<llo_original>
// kernel: tpu_custom_call.1
$region0: #{tpu_custom_call.1}
  #allocation0 [shape = 'u32[]', space=smem, size = 0x4, offset = 0x4, fixed_abs, tag = 'smem constant byte address 0x4 - core index']
  #allocation1 [shape = 'u32[144,128]{1,0:T(1,128)}', space=vmem, size = 0x12000, scoped, tag = 'internal scratch']
  %s0 = inlined_call_operand.vmem [shape: f32[2,3072,3], index: 0, kind: input, shape index: {}]
  %s1 = inlined_call_operand.vmem [shape: f32[3,64], index: 1, kind: input, shape index: {}]
  %s2 = inlined_call_operand.vmem [shape: f32[1,64], index: 2, kind: input, shape index: {}]
  %s3 = inlined_call_operand.vmem [shape: bf16[64,128], index: 3, kind: input, shape index: {}]
  %s4 = inlined_call_operand.vmem [shape: f32[1,128], index: 4, kind: input, shape index: {}]
  %s5 = inlined_call_operand.vmem [shape: bf16[128,1024], index: 5, kind: input, shape index: {}]
  %s6 = inlined_call_operand.vmem [shape: f32[1,1024], index: 6, kind: input, shape index: {}]
  %s7 = inlined_call_operand.hbm [shape: f32[2,1,1024], index: 7, kind: output, shape index: {}]
  %s8 = sld [smem:[#allocation0]]
  $region65: #{tpu_custom_call.1} parent=0
    _
  %s10 = ssub.s32 1, %s8
  %s11 = scalar_select 0, %s10, %s8
  $region1: #{tpu_custom_call.1} parent=0
    #allocation2 [shape = 'u8[8192]{0}', space=vmem, size = 0x2000, scoped, tag = 'output window, operand 0']
    #allocation3 [shape = 's32[2]{0}', space=sflag, size = 0x8, scoped, tag = 'scoped memory for tpu_custom_call.1']
    %12 = vsyncpa [#allocation3], 0
    %s13 = scalar_lea.sflag [#allocation3], 1
    %14 = vsyncpa %s13, 0
    loop: start=0, step=1, limit=8
    $region2: #{tpu_custom_call.1} parent=1 // loop_pre_header
      _
    $region3: #{tpu_custom_call.1} parent=1 // loop_header
      %s16 = sphi 0, %s20
      %p17 = scmp.ge.s32.totalorder %s16, 8
      %s23 = sphi 0, %s35
      %s24 = sphi 0, %s31
      %s25 = sphi 0, %s23
      %s26 = sphi 0, %s24
      %s27 = sphi 0, %s25
      %s28 = sphi 0, %s26
      %s40 = sphi 0, %s42
      %s43 = sphi 0, %s40
      %s44 = sphi 0, %s43
      %s60 = sphi 0, %s44
      %s64 = sphi 0, %s64
      %s66 = sphi 0, %s64
      %s67 = sphi 0, %s66
      %s81 = sphi 0, %s67
      %s85 = sphi 0, %s85
      %s87 = sphi 0, %s85
      %s88 = sphi 0, %s87
      %s102 = sphi 0, %s88
      %s106 = sphi 0, %s106
      %s108 = sphi 0, %s106
      %s109 = sphi 0, %s108
      %s123 = sphi 0, %s109
      %s127 = sphi 0, %s127
      %s129 = sphi 0, %s127
      %s130 = sphi 0, %s129
      %s144 = sphi 0, %s130
      %s148 = sphi 0, %s148
      %s150 = sphi 0, %s148
      %s151 = sphi 0, %s150
      %s165 = sphi 0, %s151
      %s169 = sphi 0, %s169
      %s171 = sphi 0, %s169
      %s172 = sphi 0, %s171
      %s186 = sphi 0, %s172
      %s192 = sphi 0, %s194
      %s195 = sphi 0, %s192
      %s196 = sphi 0, %s195
      %s212 = sphi 0, %s196
    $region4: #{tpu_custom_call.1} parent=1 // loop_header_branch
      %19 = sbr.rel (%p17) target = $region8
    $region5: #{tpu_custom_call.1} parent=1 // loop_body
      %s21 = ssub.s32 %s16, 1
      %s22 = ssub.s32 %s16, 2
      %s29 = sadd.s32 1, %s24
      %p30 = scmp.ge.s32.totalorder %s29, 3
      %s31 = scalar_select %p30, 0, %s29
      %s32 = sadd.s32 1, %s23
      %s33 = scalar_select %p30, %s32, %s23
      %p34 = scmp.ge.s32.totalorder %s33, 2
      %s35 = scalar_select %p34, 0, %s33
      %s36 = ssub.s32 %s23, %s35
      %s37 = ssub.s32 %s24, %s31
      %s38 = sor.u32 %s36, %s37
      %p39 = scmp.eq.s32.totalorder %s38, 0
      %s41 = sadd.s32 %s40, 1
      %s42 = scalar_select %p39, %s40, %s41
      %p45 = pneg %p39
      %p46 = scmp.eq.s32.totalorder %s16, 5
      %p47 = por %p45, %p46
      %p48 = scmp.ne.s32.totalorder %s40, %s43
      %p49 = scmp.eq.s32.totalorder %s16, 0
      %p50 = por %p48, %p49
      %p51 = scmp.ne.s32.totalorder %s40, %s43
      %p52 = scmp.eq.s32.totalorder %s21, 5
      %p53 = por %p51, %p52
      %p54 = scmp.ne.s32.totalorder %s43, %s44
      %p55 = scmp.eq.s32.totalorder %s21, 0
      %p56 = por %p54, %p55
      %p57 = scmp.ne.s32.totalorder %s43, %s44
      %p58 = scmp.eq.s32.totalorder %s22, 5
      %p59 = por %p57, %p58
      %p61 = scmp.ne.s32.totalorder %s44, %s60
      %p62 = scmp.eq.s32.totalorder %s22, 0
      %p63 = por %p61, %p62
      %s65 = sadd.s32 %s64, 1
      %p68 = scmp.eq.s32.totalorder %s16, 5
      %p69 = scmp.ne.s32.totalorder %s64, %s66
      %p70 = scmp.eq.s32.totalorder %s16, 0
      %p71 = por %p69, %p70
      %p72 = scmp.ne.s32.totalorder %s64, %s66
      %p73 = scmp.eq.s32.totalorder %s21, 5
      %p74 = por %p72, %p73
      %p75 = scmp.ne.s32.totalorder %s66, %s67
      %p76 = scmp.eq.s32.totalorder %s21, 0
      %p77 = por %p75, %p76
      %p78 = scmp.ne.s32.totalorder %s66, %s67
      %p79 = scmp.eq.s32.totalorder %s22, 5
      %p80 = por %p78, %p79
      %p82 = scmp.ne.s32.totalorder %s67, %s81
      %p83 = scmp.eq.s32.totalorder %s22, 0
      %p84 = por %p82, %p83
      %s86 = sadd.s32 %s85, 1
      %p89 = scmp.eq.s32.totalorder %s16, 5
      %p90 = scmp.ne.s32.totalorder %s85, %s87
      %p91 = scmp.eq.s32.totalorder %s16, 0
      %p92 = por %p90, %p91
      %p93 = scmp.ne.s32.totalorder %s85, %s87
      %p94 = scmp.eq.s32.totalorder %s21, 5
      %p95 = por %p93, %p94
      %p96 = scmp.ne.s32.totalorder %s87, %s88
      %p97 = scmp.eq.s32.totalorder %s21, 0
      %p98 = por %p96, %p97
      %p99 = scmp.ne.s32.totalorder %s87, %s88
      %p100 = scmp.eq.s32.totalorder %s22, 5
      %p101 = por %p99, %p100
      %p103 = scmp.ne.s32.totalorder %s88, %s102
      %p104 = scmp.eq.s32.totalorder %s22, 0
      %p105 = por %p103, %p104
      %s107 = sadd.s32 %s106, 1
      %p110 = scmp.eq.s32.totalorder %s16, 5
      %p111 = scmp.ne.s32.totalorder %s106, %s108
      %p112 = scmp.eq.s32.totalorder %s16, 0
      %p113 = por %p111, %p112
      %p114 = scmp.ne.s32.totalorder %s106, %s108
      %p115 = scmp.eq.s32.totalorder %s21, 5
      %p116 = por %p114, %p115
      %p117 = scmp.ne.s32.totalorder %s108, %s109
      %p118 = scmp.eq.s32.totalorder %s21, 0
      %p119 = por %p117, %p118
      %p120 = scmp.ne.s32.totalorder %s108, %s109
      %p121 = scmp.eq.s32.totalorder %s22, 5
      %p122 = por %p120, %p121
      %p124 = scmp.ne.s32.totalorder %s109, %s123
      %p125 = scmp.eq.s32.totalorder %s22, 0
      %p126 = por %p124, %p125
      %s128 = sadd.s32 %s127, 1
      %p131 = scmp.eq.s32.totalorder %s16, 5
      %p132 = scmp.ne.s32.totalorder %s127, %s129
      %p133 = scmp.eq.s32.totalorder %s16, 0
      %p134 = por %p132, %p133
      %p135 = scmp.ne.s32.totalorder %s127, %s129
      %p136 = scmp.eq.s32.totalorder %s21, 5
      %p137 = por %p135, %p136
      %p138 = scmp.ne.s32.totalorder %s129, %s130
      %p139 = scmp.eq.s32.totalorder %s21, 0
      %p140 = por %p138, %p139
      %p141 = scmp.ne.s32.totalorder %s129, %s130
      %p142 = scmp.eq.s32.totalorder %s22, 5
      %p143 = por %p141, %p142
      %p145 = scmp.ne.s32.totalorder %s130, %s144
      %p146 = scmp.eq.s32.totalorder %s22, 0
      %p147 = por %p145, %p146
      %s149 = sadd.s32 %s148, 1
      %p152 = scmp.eq.s32.totalorder %s16, 5
      %p153 = scmp.ne.s32.totalorder %s148, %s150
      %p154 = scmp.eq.s32.totalorder %s16, 0
      %p155 = por %p153, %p154
      %p156 = scmp.ne.s32.totalorder %s148, %s150
      %p157 = scmp.eq.s32.totalorder %s21, 5
      %p158 = por %p156, %p157
      %p159 = scmp.ne.s32.totalorder %s150, %s151
      %p160 = scmp.eq.s32.totalorder %s21, 0
      %p161 = por %p159, %p160
      %p162 = scmp.ne.s32.totalorder %s150, %s151
      %p163 = scmp.eq.s32.totalorder %s22, 5
      %p164 = por %p162, %p163
      %p166 = scmp.ne.s32.totalorder %s151, %s165
      %p167 = scmp.eq.s32.totalorder %s22, 0
      %p168 = por %p166, %p167
      %s170 = sadd.s32 %s169, 1
      %p173 = scmp.eq.s32.totalorder %s16, 5
      %p174 = scmp.ne.s32.totalorder %s169, %s171
      %p175 = scmp.eq.s32.totalorder %s16, 0
      %p176 = por %p174, %p175
      %p177 = scmp.ne.s32.totalorder %s169, %s171
      %p178 = scmp.eq.s32.totalorder %s21, 5
      %p179 = por %p177, %p178
      %p180 = scmp.ne.s32.totalorder %s171, %s172
      %p181 = scmp.eq.s32.totalorder %s21, 0
      %p182 = por %p180, %p181
      %p183 = scmp.ne.s32.totalorder %s171, %s172
      %p184 = scmp.eq.s32.totalorder %s22, 5
      %p185 = por %p183, %p184
      %p187 = scmp.ne.s32.totalorder %s172, %s186
      %p188 = scmp.eq.s32.totalorder %s22, 0
      %p189 = por %p187, %p188
      %s190 = ssub.s32 %s23, %s35
      %p191 = scmp.eq.s32.totalorder %s190, 0
      %s193 = sadd.s32 %s192, 1
      %s194 = scalar_select %p191, %s192, %s193
      %p197 = pneg %p191
      %p198 = scmp.eq.s32.totalorder %s16, 5
      %p199 = por %p197, %p198
      %p200 = scmp.ne.s32.totalorder %s192, %s195
      %p201 = scmp.eq.s32.totalorder %s16, 0
      %p202 = por %p200, %p201
      %p203 = scmp.ne.s32.totalorder %s192, %s195
      %p204 = scmp.eq.s32.totalorder %s21, 5
      %p205 = por %p203, %p204
      %p206 = scmp.ne.s32.totalorder %s195, %s196
      %p207 = scmp.eq.s32.totalorder %s21, 0
      %p208 = por %p206, %p207
      %p209 = scmp.ne.s32.totalorder %s195, %s196
      %p210 = scmp.eq.s32.totalorder %s22, 5
      %p211 = por %p209, %p210
      %p213 = scmp.ne.s32.totalorder %s196, %s212
      %p214 = scmp.eq.s32.totalorder %s22, 0
      %p215 = por %p213, %p214
      %p216 = scmp.le.s32.totalorder 1, %s16
      %p217 = scmp.lt.s32.totalorder %s16, 7
      %p218 = pnand %p216, %p217
      %p219 = pneg %p218
      // Predicated region
      $region9: #{tpu_custom_call.1} parent=5 // pred_check
        _
      $region10: #{tpu_custom_call.1} parent=5 // pred_check_branch
        %221 = sbr.rel (%p218) target = $region12
      $region11: #{tpu_custom_call.1} parent=5 // pred_region
        %s222 = ssub.s32 %s16, 1
        // Predicated region
        $region13: #{tpu_custom_call.1} parent=11 // pred_check
          %p223 = pneg %p77
        $region14: #{tpu_custom_call.1} parent=11 // pred_check_branch
          %225 = sbr.rel (%p223) target = $region16
        $region15: #{tpu_custom_call.1} parent=11 // pred_region
          _
        $region16: #{tpu_custom_call.1} parent=11 // pred_fallthru
          _
        // Predicated region
        $region17: #{tpu_custom_call.1} parent=11 // pred_check
          %p226 = pneg %p98
        $region18: #{tpu_custom_call.1} parent=11 // pred_check_branch
          %228 = sbr.rel (%p226) target = $region20
        $region19: #{tpu_custom_call.1} parent=11 // pred_region
          _
        $region20: #{tpu_custom_call.1} parent=11 // pred_fallthru
          _
        // Predicated region
        $region21: #{tpu_custom_call.1} parent=11 // pred_check
          %p229 = pneg %p119
        $region22: #{tpu_custom_call.1} parent=11 // pred_check_branch
          %231 = sbr.rel (%p229) target = $region24
        $region23: #{tpu_custom_call.1} parent=11 // pred_region
          _
        $region24: #{tpu_custom_call.1} parent=11 // pred_fallthru
          _
        // Predicated region
        $region25: #{tpu_custom_call.1} parent=11 // pred_check
          %p232 = pneg %p140
        $region26: #{tpu_custom_call.1} parent=11 // pred_check_branch
          %234 = sbr.rel (%p232) target = $region28
        $region27: #{tpu_custom_call.1} parent=11 // pred_region
          _
        $region28: #{tpu_custom_call.1} parent=11 // pred_fallthru
          _
        // Predicated region
        $region29: #{tpu_custom_call.1} parent=11 // pred_check
          %p235 = pneg %p161
        $region30: #{tpu_custom_call.1} parent=11 // pred_check_branch
          %237 = sbr.rel (%p235) target = $region32
        $region31: #{tpu_custom_call.1} parent=11 // pred_region
          _
        $region32: #{tpu_custom_call.1} parent=11 // pred_fallthru
          _
        // Predicated region
        $region33: #{tpu_custom_call.1} parent=11 // pred_check
          %p238 = pneg %p182
        $region34: #{tpu_custom_call.1} parent=11 // pred_check_branch
          %240 = sbr.rel (%p238) target = $region36
        $region35: #{tpu_custom_call.1} parent=11 // pred_region
          _
        $region36: #{tpu_custom_call.1} parent=11 // pred_fallthru
          _
      $region12: #{tpu_custom_call.1} parent=5 // pred_fallthru
        _
      %p241 = scmp.lt.s32.totalorder %s16, 6
      // Predicated region
      $region37: #{tpu_custom_call.1} parent=5 // pred_check
        %p242 = pneg %p241
      $region38: #{tpu_custom_call.1} parent=5 // pred_check_branch
        %244 = sbr.rel (%p242) target = $region40
      $region39: #{tpu_custom_call.1} parent=5 // pred_region
        // Predicated region
        $region41: #{tpu_custom_call.1} parent=39 // pred_check
          %p245 = pneg %p50
        $region42: #{tpu_custom_call.1} parent=39 // pred_check_branch
          %247 = sbr.rel (%p245) target = $region44
        $region43: #{tpu_custom_call.1} parent=39 // pred_region
          %s248 = smul.u32 128, %s24
          %p249 = scmp.lt.s32.totalorder %s23, 1
          %s250 = scalar_select %p249, %s23, 1
          %p251 = scmp.lt.s32.totalorder %s248, 383
          %s252 = scalar_select %p251, %s248, 383
          %s253 = smul.addr %s250, 384
          %s254 = sadd.s32 %s252, %s253
          %s255 = smul.addr %s254, 8
          %s256 = scalar_lea.vmem %s0, %s255
          %s257 = smul.u32 128, %s24
        $region44: #{tpu_custom_call.1} parent=39 // pred_fallthru
          _
      $region40: #{tpu_custom_call.1} parent=5 // pred_fallthru
        _
      %p258 = scmp.le.s32.totalorder 1, %s16
      %p259 = scmp.lt.s32.totalorder %s16, 7
      %p260 = pnand %p258, %p259
      %p261 = pneg %p260
      // Predicated region
      $region45: #{tpu_custom_call.1} parent=5 // pred_check
        _
      $region46: #{tpu_custom_call.1} parent=5 // pred_check_branch
        %263 = sbr.rel (%p260) target = $region48
      $region47: #{tpu_custom_call.1} parent=5 // pred_region
        %s264 = ssub.s32 %s16, 1
        %s265 = smul.u32 128, %s26
        %p266 = scmp.lt.s32.totalorder %s25, 1
        %s267 = scalar_select %p266, %s25, 1
        %p268 = scmp.lt.s32.totalorder %s265, 383
        %s269 = scalar_select %p268, %s265, 383
        %s270 = smul.addr %s267, 384
        %s271 = sadd.s32 %s269, %s270
        %s272 = smul.addr %s271, 8
        %s273 = scalar_lea.vmem %s0, %s272
        %p274 = pneg %p56
        %p275 = pneg %p53
        %p276 = pneg %p77
        %p277 = pneg %p74
        %p278 = pneg %p98
        %p279 = pneg %p95
        %p280 = pneg %p119
        %p281 = pneg %p116
        %p282 = pneg %p140
        %p283 = pneg %p137
        %p284 = pneg %p161
        %p285 = pneg %p158
        %p286 = pneg %p182
        %p287 = pneg %p179
        %p288 = pneg %p208
        %p289 = pneg %p205
        %s290 = sand.u32 %s195, 1
        %s291 = scalar_lea.sflag [#allocation3], %s290
        %s292 = sand.u32 %s195, 1
        %s293 = smul.addr %s292, 8
        %s294 = scalar_lea.vmem [#allocation2], %s293
        %s295 = smul.u32 128, %s26
        %p296 = scmp.lt.s32.totalorder %s25, 1
        %s297 = scalar_select %p296, %s25, 1
        %p298 = scmp.lt.s32.totalorder %s295, 383
        %s299 = scalar_select %p298, %s295, 383
        %s300 = smul.addr %s297, 384
        %s301 = sadd.s32 %s299, %s300
        %s302 = smul.addr %s301, 8
        %s303 = scalar_lea.vmem %s0, %s302
        %s304 = smul.u32 128, %s26
        %p306 = scmp.eq.s32.totalorder %s26, 0
        // Predicated region
        $region49: #{tpu_custom_call.1} parent=47 // pred_check
          %p307 = pneg %p306
        $region50: #{tpu_custom_call.1} parent=47 // pred_check_branch
          %309 = sbr.rel (%p307) target = $region52
        $region51: #{tpu_custom_call.1} parent=47 // pred_region
          %310 = vst [vmem:[%s294] sm:$0xff] -inf
        $region52: #{tpu_custom_call.1} parent=47 // pred_fallthru
          _
        %v311 = vld [vmem:[%s303] sm:$0xff]
        %v312 = vld [vmem:[%s303 + $0x8] sm:$0xff]
        %v313 = vld [vmem:[%s303 + $0x10] sm:$0xff]
        %v314 = vld [vmem:[%s303 + $0x18] sm:$0xff]
        %v315 = vld [vmem:[%s303 + $0x20] sm:$0xff]
        %v316 = vld [vmem:[%s303 + $0x28] sm:$0xff]
        %v317 = vld [vmem:[%s303 + $0x30] sm:$0xff]
        %v318 = vld [vmem:[%s303 + $0x38] sm:$0xff]
        %v319 = vld [vmem:[%s303 + $0x40] sm:$0xff]
        %v320 = vld [vmem:[%s303 + $0x48] sm:$0xff]
        %v321 = vld [vmem:[%s303 + $0x50] sm:$0xff]
        %v322 = vld [vmem:[%s303 + $0x58] sm:$0xff]
        %v323 = vld [vmem:[%s303 + $0x60] sm:$0xff]
        %v324 = vld [vmem:[%s303 + $0x68] sm:$0xff]
        %v325 = vld [vmem:[%s303 + $0x70] sm:$0xff]
        %v326 = vld [vmem:[%s303 + $0x78] sm:$0xff]
        %v327 = vld [vmem:[%s303 + $0x80] sm:$0xff]
        %v328 = vld [vmem:[%s303 + $0x88] sm:$0xff]
        %v329 = vld [vmem:[%s303 + $0x90] sm:$0xff]
        %v330 = vld [vmem:[%s303 + $0x98] sm:$0xff]
        %v331 = vld [vmem:[%s303 + $0xa0] sm:$0xff]
        %v332 = vld [vmem:[%s303 + $0xa8] sm:$0xff]
        %v333 = vld [vmem:[%s303 + $0xb0] sm:$0xff]
        %v334 = vld [vmem:[%s303 + $0xb8] sm:$0xff]
        %v335 = vld [vmem:[%s303 + $0xc0] sm:$0xff]
        %v336 = vld [vmem:[%s303 + $0xc8] sm:$0xff]
        %v337 = vld [vmem:[%s303 + $0xd0] sm:$0xff]
        %v338 = vld [vmem:[%s303 + $0xd8] sm:$0xff]
        %v339 = vld [vmem:[%s303 + $0xe0] sm:$0xff]
        %v340 = vld [vmem:[%s303 + $0xe8] sm:$0xff]
        %v341 = vld [vmem:[%s303 + $0xf0] sm:$0xff]
        %v342 = vld [vmem:[%s303 + $0xf8] sm:$0xff]
        %v343 = vld [vmem:[%s303 + $0x100] sm:$0xff]
        %v344 = vld [vmem:[%s303 + $0x108] sm:$0xff]
        %v345 = vld [vmem:[%s303 + $0x110] sm:$0xff]
        %v346 = vld [vmem:[%s303 + $0x118] sm:$0xff]
        %v347 = vld [vmem:[%s303 + $0x120] sm:$0xff]
        %v348 = vld [vmem:[%s303 + $0x128] sm:$0xff]
        %v349 = vld [vmem:[%s303 + $0x130] sm:$0xff]
        %v350 = vld [vmem:[%s303 + $0x138] sm:$0xff]
        %v351 = vld [vmem:[%s303 + $0x140] sm:$0xff]
        %v352 = vld [vmem:[%s303 + $0x148] sm:$0xff]
        %v353 = vld [vmem:[%s303 + $0x150] sm:$0xff]
        %v354 = vld [vmem:[%s303 + $0x158] sm:$0xff]
        %v355 = vld [vmem:[%s303 + $0x160] sm:$0xff]
        %v356 = vld [vmem:[%s303 + $0x168] sm:$0xff]
        %v357 = vld [vmem:[%s303 + $0x170] sm:$0xff]
        %v358 = vld [vmem:[%s303 + $0x178] sm:$0xff]
        %v359 = vld [vmem:[%s303 + $0x180] sm:$0xff]
        %v360 = vld [vmem:[%s303 + $0x188] sm:$0xff]
        %v361 = vld [vmem:[%s303 + $0x190] sm:$0xff]
        %v362 = vld [vmem:[%s303 + $0x198] sm:$0xff]
        %v363 = vld [vmem:[%s303 + $0x1a0] sm:$0xff]
        %v364 = vld [vmem:[%s303 + $0x1a8] sm:$0xff]
        %v365 = vld [vmem:[%s303 + $0x1b0] sm:$0xff]
        %v366 = vld [vmem:[%s303 + $0x1b8] sm:$0xff]
        %v367 = vld [vmem:[%s303 + $0x1c0] sm:$0xff]
        %v368 = vld [vmem:[%s303 + $0x1c8] sm:$0xff]
        %v369 = vld [vmem:[%s303 + $0x1d0] sm:$0xff]
        %v370 = vld [vmem:[%s303 + $0x1d8] sm:$0xff]
        %v371 = vld [vmem:[%s303 + $0x1e0] sm:$0xff]
        %v372 = vld [vmem:[%s303 + $0x1e8] sm:$0xff]
        %v373 = vld [vmem:[%s303 + $0x1f0] sm:$0xff]
        %v374 = vld [vmem:[%s303 + $0x1f8] sm:$0xff]
        %v375 = vld [vmem:[%s303 + $0x200] sm:$0xff]
        %v376 = vld [vmem:[%s303 + $0x208] sm:$0xff]
        %v377 = vld [vmem:[%s303 + $0x210] sm:$0xff]
        %v378 = vld [vmem:[%s303 + $0x218] sm:$0xff]
        %v379 = vld [vmem:[%s303 + $0x220] sm:$0xff]
        %v380 = vld [vmem:[%s303 + $0x228] sm:$0xff]
        %v381 = vld [vmem:[%s303 + $0x230] sm:$0xff]
        %v382 = vld [vmem:[%s303 + $0x238] sm:$0xff]
        %v383 = vld [vmem:[%s303 + $0x240] sm:$0xff]
        %v384 = vld [vmem:[%s303 + $0x248] sm:$0xff]
        %v385 = vld [vmem:[%s303 + $0x250] sm:$0xff]
        %v386 = vld [vmem:[%s303 + $0x258] sm:$0xff]
        %v387 = vld [vmem:[%s303 + $0x260] sm:$0xff]
        %v388 = vld [vmem:[%s303 + $0x268] sm:$0xff]
        %v389 = vld [vmem:[%s303 + $0x270] sm:$0xff]
        %v390 = vld [vmem:[%s303 + $0x278] sm:$0xff]
        %v391 = vld [vmem:[%s303 + $0x280] sm:$0xff]
        %v392 = vld [vmem:[%s303 + $0x288] sm:$0xff]
        %v393 = vld [vmem:[%s303 + $0x290] sm:$0xff]
        %v394 = vld [vmem:[%s303 + $0x298] sm:$0xff]
        %v395 = vld [vmem:[%s303 + $0x2a0] sm:$0xff]
        %v396 = vld [vmem:[%s303 + $0x2a8] sm:$0xff]
        %v397 = vld [vmem:[%s303 + $0x2b0] sm:$0xff]
        %v398 = vld [vmem:[%s303 + $0x2b8] sm:$0xff]
        %v399 = vld [vmem:[%s303 + $0x2c0] sm:$0xff]
        %v400 = vld [vmem:[%s303 + $0x2c8] sm:$0xff]
        %v401 = vld [vmem:[%s303 + $0x2d0] sm:$0xff]
        %v402 = vld [vmem:[%s303 + $0x2d8] sm:$0xff]
        %v403 = vld [vmem:[%s303 + $0x2e0] sm:$0xff]
        %v404 = vld [vmem:[%s303 + $0x2e8] sm:$0xff]
        %v405 = vld [vmem:[%s303 + $0x2f0] sm:$0xff]
        %v406 = vld [vmem:[%s303 + $0x2f8] sm:$0xff]
        %v407 = vld [vmem:[%s303 + $0x300] sm:$0xff]
        %v408 = vld [vmem:[%s303 + $0x308] sm:$0xff]
        %v409 = vld [vmem:[%s303 + $0x310] sm:$0xff]
        %v410 = vld [vmem:[%s303 + $0x318] sm:$0xff]
        %v411 = vld [vmem:[%s303 + $0x320] sm:$0xff]
        %v412 = vld [vmem:[%s303 + $0x328] sm:$0xff]
        %v413 = vld [vmem:[%s303 + $0x330] sm:$0xff]
        %v414 = vld [vmem:[%s303 + $0x338] sm:$0xff]
        %v415 = vld [vmem:[%s303 + $0x340] sm:$0xff]
        %v416 = vld [vmem:[%s303 + $0x348] sm:$0xff]
        %v417 = vld [vmem:[%s303 + $0x350] sm:$0xff]
        %v418 = vld [vmem:[%s303 + $0x358] sm:$0xff]
        %v419 = vld [vmem:[%s303 + $0x360] sm:$0xff]
        %v420 = vld [vmem:[%s303 + $0x368] sm:$0xff]
        %v421 = vld [vmem:[%s303 + $0x370] sm:$0xff]
        %v422 = vld [vmem:[%s303 + $0x378] sm:$0xff]
        %v423 = vld [vmem:[%s303 + $0x380] sm:$0xff]
        %v424 = vld [vmem:[%s303 + $0x388] sm:$0xff]
        %v425 = vld [vmem:[%s303 + $0x390] sm:$0xff]
        %v426 = vld [vmem:[%s303 + $0x398] sm:$0xff]
        %v427 = vld [vmem:[%s303 + $0x3a0] sm:$0xff]
        %v428 = vld [vmem:[%s303 + $0x3a8] sm:$0xff]
        %v429 = vld [vmem:[%s303 + $0x3b0] sm:$0xff]
        %v430 = vld [vmem:[%s303 + $0x3b8] sm:$0xff]
        %v431 = vld [vmem:[%s303 + $0x3c0] sm:$0xff]
        %v432 = vld [vmem:[%s303 + $0x3c8] sm:$0xff]
        %v433 = vld [vmem:[%s303 + $0x3d0] sm:$0xff]
        %v434 = vld [vmem:[%s303 + $0x3d8] sm:$0xff]
        %v435 = vld [vmem:[%s303 + $0x3e0] sm:$0xff]
        %v436 = vld [vmem:[%s303 + $0x3e8] sm:$0xff]
        %v437 = vld [vmem:[%s303 + $0x3f0] sm:$0xff]
        %v438 = vld [vmem:[%s303 + $0x3f8] sm:$0xff]
        %v439 = vld [vmem:[%s1] sm:$0x7]
        %441 = vset.pattern.permute.xlu0 0
        %442 = vperm.xlu0 %441, %v311
        %v443 = vpop.permute.xlu0 %442
        %446 = vset.pattern.permute.xlu0 0
        %447 = vperm.xlu0 %446, %v312
        %v448 = vpop.permute.xlu0 %447
        %451 = vset.pattern.permute.xlu0 0
        %452 = vperm.xlu0 %451, %v313
        %v453 = vpop.permute.xlu0 %452
        %456 = vset.pattern.permute.xlu0 0
        %457 = vperm.xlu0 %456, %v314
        %v458 = vpop.permute.xlu0 %457
        %461 = vset.pattern.permute.xlu0 0
        %462 = vperm.xlu0 %461, %v315
        %v463 = vpop.permute.xlu0 %462
        %466 = vset.pattern.permute.xlu0 0
        %467 = vperm.xlu0 %466, %v316
        %v468 = vpop.permute.xlu0 %467
        %471 = vset.pattern.permute.xlu0 0
        %472 = vperm.xlu0 %471, %v317
        %v473 = vpop.permute.xlu0 %472
        %476 = vset.pattern.permute.xlu0 0
        %477 = vperm.xlu0 %476, %v318
        %v478 = vpop.permute.xlu0 %477
        %481 = vset.pattern.permute.xlu0 0
        %482 = vperm.xlu0 %481, %v319
        %v483 = vpop.permute.xlu0 %482
        %486 = vset.pattern.permute.xlu0 0
        %487 = vperm.xlu0 %486, %v320
        %v488 = vpop.permute.xlu0 %487
        %491 = vset.pattern.permute.xlu0 0
        %492 = vperm.xlu0 %491, %v321
        %v493 = vpop.permute.xlu0 %492
        %496 = vset.pattern.permute.xlu0 0
        %497 = vperm.xlu0 %496, %v322
        %v498 = vpop.permute.xlu0 %497
        %501 = vset.pattern.permute.xlu0 0
        %502 = vperm.xlu0 %501, %v323
        %v503 = vpop.permute.xlu0 %502
        %506 = vset.pattern.permute.xlu0 0
        %507 = vperm.xlu0 %506, %v324
        %v508 = vpop.permute.xlu0 %507
        %511 = vset.pattern.permute.xlu0 0
        %512 = vperm.xlu0 %511, %v325
        %v513 = vpop.permute.xlu0 %512
        %516 = vset.pattern.permute.xlu0 0
        %517 = vperm.xlu0 %516, %v326
        %v518 = vpop.permute.xlu0 %517
        %521 = vset.pattern.permute.xlu0 0
        %522 = vperm.xlu0 %521, %v327
        %v523 = vpop.permute.xlu0 %522
        %526 = vset.pattern.permute.xlu0 0
        %527 = vperm.xlu0 %526, %v328
        %v528 = vpop.permute.xlu0 %527
        %531 = vset.pattern.permute.xlu0 0
        %532 = vperm.xlu0 %531, %v329
        %v533 = vpop.permute.xlu0 %532
        %536 = vset.pattern.permute.xlu0 0
        %537 = vperm.xlu0 %536, %v330
        %v538 = vpop.permute.xlu0 %537
        %541 = vset.pattern.permute.xlu0 0
        %542 = vperm.xlu0 %541, %v331
        %v543 = vpop.permute.xlu0 %542
        %546 = vset.pattern.permute.xlu0 0
        %547 = vperm.xlu0 %546, %v332
        %v548 = vpop.permute.xlu0 %547
        %551 = vset.pattern.permute.xlu0 0
        %552 = vperm.xlu0 %551, %v333
        %v553 = vpop.permute.xlu0 %552
        %556 = vset.pattern.permute.xlu0 0
        %557 = vperm.xlu0 %556, %v334
        %v558 = vpop.permute.xlu0 %557
        %561 = vset.pattern.permute.xlu0 0
        %562 = vperm.xlu0 %561, %v335
        %v563 = vpop.permute.xlu0 %562
        %566 = vset.pattern.permute.xlu0 0
        %567 = vperm.xlu0 %566, %v336
        %v568 = vpop.permute.xlu0 %567
        %571 = vset.pattern.permute.xlu0 0
        %572 = vperm.xlu0 %571, %v337
        %v573 = vpop.permute.xlu0 %572
        %576 = vset.pattern.permute.xlu0 0
        %577 = vperm.xlu0 %576, %v338
        %v578 = vpop.permute.xlu0 %577
        %581 = vset.pattern.permute.xlu0 0
        %582 = vperm.xlu0 %581, %v339
        %v583 = vpop.permute.xlu0 %582
        %586 = vset.pattern.permute.xlu0 0
        %587 = vperm.xlu0 %586, %v340
        %v588 = vpop.permute.xlu0 %587
        %591 = vset.pattern.permute.xlu0 0
        %592 = vperm.xlu0 %591, %v341
        %v593 = vpop.permute.xlu0 %592
        %596 = vset.pattern.permute.xlu0 0
        %597 = vperm.xlu0 %596, %v342
        %v598 = vpop.permute.xlu0 %597
        %601 = vset.pattern.permute.xlu0 0
        %602 = vperm.xlu0 %601, %v343
        %v603 = vpop.permute.xlu0 %602
        %606 = vset.pattern.permute.xlu0 0
        %607 = vperm.xlu0 %606, %v344
        %v608 = vpop.permute.xlu0 %607
        %611 = vset.pattern.permute.xlu0 0
        %612 = vperm.xlu0 %611, %v345
        %v613 = vpop.permute.xlu0 %612
        %616 = vset.pattern.permute.xlu0 0
        %617 = vperm.xlu0 %616, %v346
        %v618 = vpop.permute.xlu0 %617
        %621 = vset.pattern.permute.xlu0 0
        %622 = vperm.xlu0 %621, %v347
        %v623 = vpop.permute.xlu0 %622
        %626 = vset.pattern.permute.xlu0 0
        %627 = vperm.xlu0 %626, %v348
        %v628 = vpop.permute.xlu0 %627
        %631 = vset.pattern.permute.xlu0 0
        %632 = vperm.xlu0 %631, %v349
        %v633 = vpop.permute.xlu0 %632
        %636 = vset.pattern.permute.xlu0 0
        %637 = vperm.xlu0 %636, %v350
        %v638 = vpop.permute.xlu0 %637
        %641 = vset.pattern.permute.xlu0 0
        %642 = vperm.xlu0 %641, %v351
        %v643 = vpop.permute.xlu0 %642
        %646 = vset.pattern.permute.xlu0 0
        %647 = vperm.xlu0 %646, %v352
        %v648 = vpop.permute.xlu0 %647
        %651 = vset.pattern.permute.xlu0 0
        %652 = vperm.xlu0 %651, %v353
        %v653 = vpop.permute.xlu0 %652
        %656 = vset.pattern.permute.xlu0 0
        %657 = vperm.xlu0 %656, %v354
        %v658 = vpop.permute.xlu0 %657
        %661 = vset.pattern.permute.xlu0 0
        %662 = vperm.xlu0 %661, %v355
        %v663 = vpop.permute.xlu0 %662
        %666 = vset.pattern.permute.xlu0 0
        %667 = vperm.xlu0 %666, %v356
        %v668 = vpop.permute.xlu0 %667
        %671 = vset.pattern.permute.xlu0 0
        %672 = vperm.xlu0 %671, %v357
        %v673 = vpop.permute.xlu0 %672
        %676 = vset.pattern.permute.xlu0 0
        %677 = vperm.xlu0 %676, %v358
        %v678 = vpop.permute.xlu0 %677
        %681 = vset.pattern.permute.xlu0 0
        %682 = vperm.xlu0 %681, %v359
        %v683 = vpop.permute.xlu0 %682
        %686 = vset.pattern.permute.xlu0 0
        %687 = vperm.xlu0 %686, %v360
        %v688 = vpop.permute.xlu0 %687
        %691 = vset.pattern.permute.xlu0 0
        %692 = vperm.xlu0 %691, %v361
        %v693 = vpop.permute.xlu0 %692
        %696 = vset.pattern.permute.xlu0 0
        %697 = vperm.xlu0 %696, %v362
        %v698 = vpop.permute.xlu0 %697
        %701 = vset.pattern.permute.xlu0 0
        %702 = vperm.xlu0 %701, %v363
        %v703 = vpop.permute.xlu0 %702
        %706 = vset.pattern.permute.xlu0 0
        %707 = vperm.xlu0 %706, %v364
        %v708 = vpop.permute.xlu0 %707
        %711 = vset.pattern.permute.xlu0 0
        %712 = vperm.xlu0 %711, %v365
        %v713 = vpop.permute.xlu0 %712
        %716 = vset.pattern.permute.xlu0 0
        %717 = vperm.xlu0 %716, %v366
        %v718 = vpop.permute.xlu0 %717
        %721 = vset.pattern.permute.xlu0 0
        %722 = vperm.xlu0 %721, %v367
        %v723 = vpop.permute.xlu0 %722
        %726 = vset.pattern.permute.xlu0 0
        %727 = vperm.xlu0 %726, %v368
        %v728 = vpop.permute.xlu0 %727
        %731 = vset.pattern.permute.xlu0 0
        %732 = vperm.xlu0 %731, %v369
        %v733 = vpop.permute.xlu0 %732
        %736 = vset.pattern.permute.xlu0 0
        %737 = vperm.xlu0 %736, %v370
        %v738 = vpop.permute.xlu0 %737
        %741 = vset.pattern.permute.xlu0 0
        %742 = vperm.xlu0 %741, %v371
        %v743 = vpop.permute.xlu0 %742
        %746 = vset.pattern.permute.xlu0 0
        %747 = vperm.xlu0 %746, %v372
        %v748 = vpop.permute.xlu0 %747
        %751 = vset.pattern.permute.xlu0 0
        %752 = vperm.xlu0 %751, %v373
        %v753 = vpop.permute.xlu0 %752
        %756 = vset.pattern.permute.xlu0 0
        %757 = vperm.xlu0 %756, %v374
        %v758 = vpop.permute.xlu0 %757
        %761 = vset.pattern.permute.xlu0 0
        %762 = vperm.xlu0 %761, %v375
        %v763 = vpop.permute.xlu0 %762
        %766 = vset.pattern.permute.xlu0 0
        %767 = vperm.xlu0 %766, %v376
        %v768 = vpop.permute.xlu0 %767
        %771 = vset.pattern.permute.xlu0 0
        %772 = vperm.xlu0 %771, %v377
        %v773 = vpop.permute.xlu0 %772
        %776 = vset.pattern.permute.xlu0 0
        %777 = vperm.xlu0 %776, %v378
        %v778 = vpop.permute.xlu0 %777
        %781 = vset.pattern.permute.xlu0 0
        %782 = vperm.xlu0 %781, %v379
        %v783 = vpop.permute.xlu0 %782
        %786 = vset.pattern.permute.xlu0 0
        %787 = vperm.xlu0 %786, %v380
        %v788 = vpop.permute.xlu0 %787
        %791 = vset.pattern.permute.xlu0 0
        %792 = vperm.xlu0 %791, %v381
        %v793 = vpop.permute.xlu0 %792
        %796 = vset.pattern.permute.xlu0 0
        %797 = vperm.xlu0 %796, %v382
        %v798 = vpop.permute.xlu0 %797
        %801 = vset.pattern.permute.xlu0 0
        %802 = vperm.xlu0 %801, %v383
        %v803 = vpop.permute.xlu0 %802
        %806 = vset.pattern.permute.xlu0 0
        %807 = vperm.xlu0 %806, %v384
        %v808 = vpop.permute.xlu0 %807
        %811 = vset.pattern.permute.xlu0 0
        %812 = vperm.xlu0 %811, %v385
        %v813 = vpop.permute.xlu0 %812
        %816 = vset.pattern.permute.xlu0 0
        %817 = vperm.xlu0 %816, %v386
        %v818 = vpop.permute.xlu0 %817
        %821 = vset.pattern.permute.xlu0 0
        %822 = vperm.xlu0 %821, %v387
        %v823 = vpop.permute.xlu0 %822
        %826 = vset.pattern.permute.xlu0 0
        %827 = vperm.xlu0 %826, %v388
        %v828 = vpop.permute.xlu0 %827
        %831 = vset.pattern.permute.xlu0 0
        %832 = vperm.xlu0 %831, %v389
        %v833 = vpop.permute.xlu0 %832
        %836 = vset.pattern.permute.xlu0 0
        %837 = vperm.xlu0 %836, %v390
        %v838 = vpop.permute.xlu0 %837
        %841 = vset.pattern.permute.xlu0 0
        %842 = vperm.xlu0 %841, %v391
        %v843 = vpop.permute.xlu0 %842
        %846 = vset.pattern.permute.xlu0 0
        %847 = vperm.xlu0 %846, %v392
        %v848 = vpop.permute.xlu0 %847
        %851 = vset.pattern.permute.xlu0 0
        %852 = vperm.xlu0 %851, %v393
        %v853 = vpop.permute.xlu0 %852
        %856 = vset.pattern.permute.xlu0 0
        %857 = vperm.xlu0 %856, %v394
        %v858 = vpop.permute.xlu0 %857
        %861 = vset.pattern.permute.xlu0 0
        %862 = vperm.xlu0 %861, %v395
        %v863 = vpop.permute.xlu0 %862
        %866 = vset.pattern.permute.xlu0 0
        %867 = vperm.xlu0 %866, %v396
        %v868 = vpop.permute.xlu0 %867
        %871 = vset.pattern.permute.xlu0 0
        %872 = vperm.xlu0 %871, %v397
        %v873 = vpop.permute.xlu0 %872
        %876 = vset.pattern.permute.xlu0 0
        %877 = vperm.xlu0 %876, %v398
        %v878 = vpop.permute.xlu0 %877
        %881 = vset.pattern.permute.xlu0 0
        %882 = vperm.xlu0 %881, %v399
        %v883 = vpop.permute.xlu0 %882
        %886 = vset.pattern.permute.xlu0 0
        %887 = vperm.xlu0 %886, %v400
        %v888 = vpop.permute.xlu0 %887
        %891 = vset.pattern.permute.xlu0 0
        %892 = vperm.xlu0 %891, %v401
        %v893 = vpop.permute.xlu0 %892
        %896 = vset.pattern.permute.xlu0 0
        %897 = vperm.xlu0 %896, %v402
        %v898 = vpop.permute.xlu0 %897
        %901 = vset.pattern.permute.xlu0 0
        %902 = vperm.xlu0 %901, %v403
        %v903 = vpop.permute.xlu0 %902
        %906 = vset.pattern.permute.xlu0 0
        %907 = vperm.xlu0 %906, %v404
        %v908 = vpop.permute.xlu0 %907
        %911 = vset.pattern.permute.xlu0 0
        %912 = vperm.xlu0 %911, %v405
        %v913 = vpop.permute.xlu0 %912
        %916 = vset.pattern.permute.xlu0 0
        %917 = vperm.xlu0 %916, %v406
        %v918 = vpop.permute.xlu0 %917
        %921 = vset.pattern.permute.xlu0 0
        %922 = vperm.xlu0 %921, %v407
        %v923 = vpop.permute.xlu0 %922
        %926 = vset.pattern.permute.xlu0 0
        %927 = vperm.xlu0 %926, %v408
        %v928 = vpop.permute.xlu0 %927
        %931 = vset.pattern.permute.xlu0 0
        %932 = vperm.xlu0 %931, %v409
        %v933 = vpop.permute.xlu0 %932
        %936 = vset.pattern.permute.xlu0 0
        %937 = vperm.xlu0 %936, %v410
        %v938 = vpop.permute.xlu0 %937
        %941 = vset.pattern.permute.xlu0 0
        %942 = vperm.xlu0 %941, %v411
        %v943 = vpop.permute.xlu0 %942
        %946 = vset.pattern.permute.xlu0 0
        %947 = vperm.xlu0 %946, %v412
        %v948 = vpop.permute.xlu0 %947
        %951 = vset.pattern.permute.xlu0 0
        %952 = vperm.xlu0 %951, %v413
        %v953 = vpop.permute.xlu0 %952
        %956 = vset.pattern.permute.xlu0 0
        %957 = vperm.xlu0 %956, %v414
        %v958 = vpop.permute.xlu0 %957
        %961 = vset.pattern.permute.xlu0 0
        %962 = vperm.xlu0 %961, %v415
        %v963 = vpop.permute.xlu0 %962
        %966 = vset.pattern.permute.xlu0 0
        %967 = vperm.xlu0 %966, %v416
        %v968 = vpop.permute.xlu0 %967
        %971 = vset.pattern.permute.xlu0 0
        %972 = vperm.xlu0 %971, %v417
        %v973 = vpop.permute.xlu0 %972
        %976 = vset.pattern.permute.xlu0 0
        %977 = vperm.xlu0 %976, %v418
        %v978 = vpop.permute.xlu0 %977
        %981 = vset.pattern.permute.xlu0 0
        %982 = vperm.xlu0 %981, %v419
        %v983 = vpop.permute.xlu0 %982
        %986 = vset.pattern.permute.xlu0 0
        %987 = vperm.xlu0 %986, %v420
        %v988 = vpop.permute.xlu0 %987
        %991 = vset.pattern.permute.xlu0 0
        %992 = vperm.xlu0 %991, %v421
        %v993 = vpop.permute.xlu0 %992
        %996 = vset.pattern.permute.xlu0 0
        %997 = vperm.xlu0 %996, %v422
        %v998 = vpop.permute.xlu0 %997
        %1001 = vset.pattern.permute.xlu0 0
        %1002 = vperm.xlu0 %1001, %v423
        %v1003 = vpop.permute.xlu0 %1002
        %1006 = vset.pattern.permute.xlu0 0
        %1007 = vperm.xlu0 %1006, %v424
        %v1008 = vpop.permute.xlu0 %1007
        %1011 = vset.pattern.permute.xlu0 0
        %1012 = vperm.xlu0 %1011, %v425
        %v1013 = vpop.permute.xlu0 %1012
        %1016 = vset.pattern.permute.xlu0 0
        %1017 = vperm.xlu0 %1016, %v426
        %v1018 = vpop.permute.xlu0 %1017
        %1021 = vset.pattern.permute.xlu0 0
        %1022 = vperm.xlu0 %1021, %v427
        %v1023 = vpop.permute.xlu0 %1022
        %1026 = vset.pattern.permute.xlu0 0
        %1027 = vperm.xlu0 %1026, %v428
        %v1028 = vpop.permute.xlu0 %1027
        %1031 = vset.pattern.permute.xlu0 0
        %1032 = vperm.xlu0 %1031, %v429
        %v1033 = vpop.permute.xlu0 %1032
        %1036 = vset.pattern.permute.xlu0 0
        %1037 = vperm.xlu0 %1036, %v430
        %v1038 = vpop.permute.xlu0 %1037
        %1041 = vset.pattern.permute.xlu0 0
        %1042 = vperm.xlu0 %1041, %v431
        %v1043 = vpop.permute.xlu0 %1042
        %1046 = vset.pattern.permute.xlu0 0
        %1047 = vperm.xlu0 %1046, %v432
        %v1048 = vpop.permute.xlu0 %1047
        %1051 = vset.pattern.permute.xlu0 0
        %1052 = vperm.xlu0 %1051, %v433
        %v1053 = vpop.permute.xlu0 %1052
        %1056 = vset.pattern.permute.xlu0 0
        %1057 = vperm.xlu0 %1056, %v434
        %v1058 = vpop.permute.xlu0 %1057
        %1061 = vset.pattern.permute.xlu0 0
        %1062 = vperm.xlu0 %1061, %v435
        %v1063 = vpop.permute.xlu0 %1062
        %1066 = vset.pattern.permute.xlu0 0
        %1067 = vperm.xlu0 %1066, %v436
        %v1068 = vpop.permute.xlu0 %1067
        %1071 = vset.pattern.permute.xlu0 0
        %1072 = vperm.xlu0 %1071, %v437
        %v1073 = vpop.permute.xlu0 %1072
        %1076 = vset.pattern.permute.xlu0 0
        %1077 = vperm.xlu0 %1076, %v438
        %v1078 = vpop.permute.xlu0 %1077
        %v1080 = vlaneseq
        %v1081 = vshrl.u32 %v1080, 7
        %v1082 = vsub.s32 0, %v1081
        %v1083 = vrot.slane %v439, %v1082
        %v1084 = vmul.f32 %v443, %v1083
        %v1085 = vmul.f32 %v448, %v1083
        %v1086 = vmul.f32 %v453, %v1083
        %v1087 = vmul.f32 %v458, %v1083
        %v1088 = vmul.f32 %v463, %v1083
        %v1089 = vmul.f32 %v468, %v1083
        %v1090 = vmul.f32 %v473, %v1083
        %v1091 = vmul.f32 %v478, %v1083
        %v1092 = vmul.f32 %v483, %v1083
        %v1093 = vmul.f32 %v488, %v1083
        %v1094 = vmul.f32 %v493, %v1083
        %v1095 = vmul.f32 %v498, %v1083
        %v1096 = vmul.f32 %v503, %v1083
        %v1097 = vmul.f32 %v508, %v1083
        %v1098 = vmul.f32 %v513, %v1083
        %v1099 = vmul.f32 %v518, %v1083
        %v1100 = vmul.f32 %v523, %v1083
        %v1101 = vmul.f32 %v528, %v1083
        %v1102 = vmul.f32 %v533, %v1083
        %v1103 = vmul.f32 %v538, %v1083
        %v1104 = vmul.f32 %v543, %v1083
        %v1105 = vmul.f32 %v548, %v1083
        %v1106 = vmul.f32 %v553, %v1083
        %v1107 = vmul.f32 %v558, %v1083
        %v1108 = vmul.f32 %v563, %v1083
        %v1109 = vmul.f32 %v568, %v1083
        %v1110 = vmul.f32 %v573, %v1083
        %v1111 = vmul.f32 %v578, %v1083
        %v1112 = vmul.f32 %v583, %v1083
        %v1113 = vmul.f32 %v588, %v1083
        %v1114 = vmul.f32 %v593, %v1083
        %v1115 = vmul.f32 %v598, %v1083
        %v1116 = vmul.f32 %v603, %v1083
        %v1117 = vmul.f32 %v608, %v1083
        %v1118 = vmul.f32 %v613, %v1083
        %v1119 = vmul.f32 %v618, %v1083
        %v1120 = vmul.f32 %v623, %v1083
        %v1121 = vmul.f32 %v628, %v1083
        %v1122 = vmul.f32 %v633, %v1083
        %v1123 = vmul.f32 %v638, %v1083
        %v1124 = vmul.f32 %v643, %v1083
        %v1125 = vmul.f32 %v648, %v1083
        %v1126 = vmul.f32 %v653, %v1083
        %v1127 = vmul.f32 %v658, %v1083
        %v1128 = vmul.f32 %v663, %v1083
        %v1129 = vmul.f32 %v668, %v1083
        %v1130 = vmul.f32 %v673, %v1083
        %v1131 = vmul.f32 %v678, %v1083
        %v1132 = vmul.f32 %v683, %v1083
        %v1133 = vmul.f32 %v688, %v1083
        %v1134 = vmul.f32 %v693, %v1083
        %v1135 = vmul.f32 %v698, %v1083
        %v1136 = vmul.f32 %v703, %v1083
        %v1137 = vmul.f32 %v708, %v1083
        %v1138 = vmul.f32 %v713, %v1083
        %v1139 = vmul.f32 %v718, %v1083
        %v1140 = vmul.f32 %v723, %v1083
        %v1141 = vmul.f32 %v728, %v1083
        %v1142 = vmul.f32 %v733, %v1083
        %v1143 = vmul.f32 %v738, %v1083
        %v1144 = vmul.f32 %v743, %v1083
        %v1145 = vmul.f32 %v748, %v1083
        %v1146 = vmul.f32 %v753, %v1083
        %v1147 = vmul.f32 %v758, %v1083
        %v1148 = vmul.f32 %v763, %v1083
        %v1149 = vmul.f32 %v768, %v1083
        %v1150 = vmul.f32 %v773, %v1083
        %v1151 = vmul.f32 %v778, %v1083
        %v1152 = vmul.f32 %v783, %v1083
        %v1153 = vmul.f32 %v788, %v1083
        %v1154 = vmul.f32 %v793, %v1083
        %v1155 = vmul.f32 %v798, %v1083
        %v1156 = vmul.f32 %v803, %v1083
        %v1157 = vmul.f32 %v808, %v1083
        %v1158 = vmul.f32 %v813, %v1083
        %v1159 = vmul.f32 %v818, %v1083
        %v1160 = vmul.f32 %v823, %v1083
        %v1161 = vmul.f32 %v828, %v1083
        %v1162 = vmul.f32 %v833, %v1083
        %v1163 = vmul.f32 %v838, %v1083
        %v1164 = vmul.f32 %v843, %v1083
        %v1165 = vmul.f32 %v848, %v1083
        %v1166 = vmul.f32 %v853, %v1083
        %v1167 = vmul.f32 %v858, %v1083
        %v1168 = vmul.f32 %v863, %v1083
        %v1169 = vmul.f32 %v868, %v1083
        %v1170 = vmul.f32 %v873, %v1083
        %v1171 = vmul.f32 %v878, %v1083
        %v1172 = vmul.f32 %v883, %v1083
        %v1173 = vmul.f32 %v888, %v1083
        %v1174 = vmul.f32 %v893, %v1083
        %v1175 = vmul.f32 %v898, %v1083
        %v1176 = vmul.f32 %v903, %v1083
        %v1177 = vmul.f32 %v908, %v1083
        %v1178 = vmul.f32 %v913, %v1083
        %v1179 = vmul.f32 %v918, %v1083
        %v1180 = vmul.f32 %v923, %v1083
        %v1181 = vmul.f32 %v928, %v1083
        %v1182 = vmul.f32 %v933, %v1083
        %v1183 = vmul.f32 %v938, %v1083
        %v1184 = vmul.f32 %v943, %v1083
        %v1185 = vmul.f32 %v948, %v1083
        %v1186 = vmul.f32 %v953, %v1083
        %v1187 = vmul.f32 %v958, %v1083
        %v1188 = vmul.f32 %v963, %v1083
        %v1189 = vmul.f32 %v968, %v1083
        %v1190 = vmul.f32 %v973, %v1083
        %v1191 = vmul.f32 %v978, %v1083
        %v1192 = vmul.f32 %v983, %v1083
        %v1193 = vmul.f32 %v988, %v1083
        %v1194 = vmul.f32 %v993, %v1083
        %v1195 = vmul.f32 %v998, %v1083
        %v1196 = vmul.f32 %v1003, %v1083
        %v1197 = vmul.f32 %v1008, %v1083
        %v1198 = vmul.f32 %v1013, %v1083
        %v1199 = vmul.f32 %v1018, %v1083
        %v1200 = vmul.f32 %v1023, %v1083
        %v1201 = vmul.f32 %v1028, %v1083
        %v1202 = vmul.f32 %v1033, %v1083
        %v1203 = vmul.f32 %v1038, %v1083
        %v1204 = vmul.f32 %v1043, %v1083
        %v1205 = vmul.f32 %v1048, %v1083
        %v1206 = vmul.f32 %v1053, %v1083
        %v1207 = vmul.f32 %v1058, %v1083
        %v1208 = vmul.f32 %v1063, %v1083
        %v1209 = vmul.f32 %v1068, %v1083
        %v1210 = vmul.f32 %v1073, %v1083
        %v1211 = vmul.f32 %v1078, %v1083
        %1212 = vset.pattern.permute.xlu0 1
        %1213 = vperm.xlu0 %1212, %v311
        %v1214 = vpop.permute.xlu0 %1213
        %1216 = vset.pattern.permute.xlu0 1
        %1217 = vperm.xlu0 %1216, %v312
        %v1218 = vpop.permute.xlu0 %1217
        %1220 = vset.pattern.permute.xlu0 1
        %1221 = vperm.xlu0 %1220, %v313
        %v1222 = vpop.permute.xlu0 %1221
        %1224 = vset.pattern.permute.xlu0 1
        %1225 = vperm.xlu0 %1224, %v314
        %v1226 = vpop.permute.xlu0 %1225
        %1228 = vset.pattern.permute.xlu0 1
        %1229 = vperm.xlu0 %1228, %v315
        %v1230 = vpop.permute.xlu0 %1229
        %1232 = vset.pattern.permute.xlu0 1
        %1233 = vperm.xlu0 %1232, %v316
        %v1234 = vpop.permute.xlu0 %1233
        %1236 = vset.pattern.permute.xlu0 1
        %1237 = vperm.xlu0 %1236, %v317
        %v1238 = vpop.permute.xlu0 %1237
        %1240 = vset.pattern.permute.xlu0 1
        %1241 = vperm.xlu0 %1240, %v318
        %v1242 = vpop.permute.xlu0 %1241
        %1244 = vset.pattern.permute.xlu0 1
        %1245 = vperm.xlu0 %1244, %v319
        %v1246 = vpop.permute.xlu0 %1245
        %1248 = vset.pattern.permute.xlu0 1
        %1249 = vperm.xlu0 %1248, %v320
        %v1250 = vpop.permute.xlu0 %1249
        %1252 = vset.pattern.permute.xlu0 1
        %1253 = vperm.xlu0 %1252, %v321
        %v1254 = vpop.permute.xlu0 %1253
        %1256 = vset.pattern.permute.xlu0 1
        %1257 = vperm.xlu0 %1256, %v322
        %v1258 = vpop.permute.xlu0 %1257
        %1260 = vset.pattern.permute.xlu0 1
        %1261 = vperm.xlu0 %1260, %v323
        %v1262 = vpop.permute.xlu0 %1261
        %1264 = vset.pattern.permute.xlu0 1
        %1265 = vperm.xlu0 %1264, %v324
        %v1266 = vpop.permute.xlu0 %1265
        %1268 = vset.pattern.permute.xlu0 1
        %1269 = vperm.xlu0 %1268, %v325
        %v1270 = vpop.permute.xlu0 %1269
        %1272 = vset.pattern.permute.xlu0 1
        %1273 = vperm.xlu0 %1272, %v326
        %v1274 = vpop.permute.xlu0 %1273
        %1276 = vset.pattern.permute.xlu0 1
        %1277 = vperm.xlu0 %1276, %v327
        %v1278 = vpop.permute.xlu0 %1277
        %1280 = vset.pattern.permute.xlu0 1
        %1281 = vperm.xlu0 %1280, %v328
        %v1282 = vpop.permute.xlu0 %1281
        %1284 = vset.pattern.permute.xlu0 1
        %1285 = vperm.xlu0 %1284, %v329
        %v1286 = vpop.permute.xlu0 %1285
        %1288 = vset.pattern.permute.xlu0 1
        %1289 = vperm.xlu0 %1288, %v330
        %v1290 = vpop.permute.xlu0 %1289
        %1292 = vset.pattern.permute.xlu0 1
        %1293 = vperm.xlu0 %1292, %v331
        %v1294 = vpop.permute.xlu0 %1293
        %1296 = vset.pattern.permute.xlu0 1
        %1297 = vperm.xlu0 %1296, %v332
        %v1298 = vpop.permute.xlu0 %1297
        %1300 = vset.pattern.permute.xlu0 1
        %1301 = vperm.xlu0 %1300, %v333
        %v1302 = vpop.permute.xlu0 %1301
        %1304 = vset.pattern.permute.xlu0 1
        %1305 = vperm.xlu0 %1304, %v334
        %v1306 = vpop.permute.xlu0 %1305
        %1308 = vset.pattern.permute.xlu0 1
        %1309 = vperm.xlu0 %1308, %v335
        %v1310 = vpop.permute.xlu0 %1309
        %1312 = vset.pattern.permute.xlu0 1
        %1313 = vperm.xlu0 %1312, %v336
        %v1314 = vpop.permute.xlu0 %1313
        %1316 = vset.pattern.permute.xlu0 1
        %1317 = vperm.xlu0 %1316, %v337
        %v1318 = vpop.permute.xlu0 %1317
        %1320 = vset.pattern.permute.xlu0 1
        %1321 = vperm.xlu0 %1320, %v338
        %v1322 = vpop.permute.xlu0 %1321
        %1324 = vset.pattern.permute.xlu0 1
        %1325 = vperm.xlu0 %1324, %v339
        %v1326 = vpop.permute.xlu0 %1325
        %1328 = vset.pattern.permute.xlu0 1
        %1329 = vperm.xlu0 %1328, %v340
        %v1330 = vpop.permute.xlu0 %1329
        %1332 = vset.pattern.permute.xlu0 1
        %1333 = vperm.xlu0 %1332, %v341
        %v1334 = vpop.permute.xlu0 %1333
        %1336 = vset.pattern.permute.xlu0 1
        %1337 = vperm.xlu0 %1336, %v342
        %v1338 = vpop.permute.xlu0 %1337
        %1340 = vset.pattern.permute.xlu0 1
        %1341 = vperm.xlu0 %1340, %v343
        %v1342 = vpop.permute.xlu0 %1341
        %1344 = vset.pattern.permute.xlu0 1
        %1345 = vperm.xlu0 %1344, %v344
        %v1346 = vpop.permute.xlu0 %1345
        %1348 = vset.pattern.permute.xlu0 1
        %1349 = vperm.xlu0 %1348, %v345
        %v1350 = vpop.permute.xlu0 %1349
        %1352 = vset.pattern.permute.xlu0 1
        %1353 = vperm.xlu0 %1352, %v346
        %v1354 = vpop.permute.xlu0 %1353
        %1356 = vset.pattern.permute.xlu0 1
        %1357 = vperm.xlu0 %1356, %v347
        %v1358 = vpop.permute.xlu0 %1357
        %1360 = vset.pattern.permute.xlu0 1
        %1361 = vperm.xlu0 %1360, %v348
        %v1362 = vpop.permute.xlu0 %1361
        %1364 = vset.pattern.permute.xlu0 1
        %1365 = vperm.xlu0 %1364, %v349
        %v1366 = vpop.permute.xlu0 %1365
        %1368 = vset.pattern.permute.xlu0 1
        %1369 = vperm.xlu0 %1368, %v350
        %v1370 = vpop.permute.xlu0 %1369
        %1372 = vset.pattern.permute.xlu0 1
        %1373 = vperm.xlu0 %1372, %v351
        %v1374 = vpop.permute.xlu0 %1373
        %1376 = vset.pattern.permute.xlu0 1
        %1377 = vperm.xlu0 %1376, %v352
        %v1378 = vpop.permute.xlu0 %1377
        %1380 = vset.pattern.permute.xlu0 1
        %1381 = vperm.xlu0 %1380, %v353
        %v1382 = vpop.permute.xlu0 %1381
        %1384 = vset.pattern.permute.xlu0 1
        %1385 = vperm.xlu0 %1384, %v354
        %v1386 = vpop.permute.xlu0 %1385
        %1388 = vset.pattern.permute.xlu0 1
        %1389 = vperm.xlu0 %1388, %v355
        %v1390 = vpop.permute.xlu0 %1389
        %1392 = vset.pattern.permute.xlu0 1
        %1393 = vperm.xlu0 %1392, %v356
        %v1394 = vpop.permute.xlu0 %1393
        %1396 = vset.pattern.permute.xlu0 1
        %1397 = vperm.xlu0 %1396, %v357
        %v1398 = vpop.permute.xlu0 %1397
        %1400 = vset.pattern.permute.xlu0 1
        %1401 = vperm.xlu0 %1400, %v358
        %v1402 = vpop.permute.xlu0 %1401
        %1404 = vset.pattern.permute.xlu0 1
        %1405 = vperm.xlu0 %1404, %v359
        %v1406 = vpop.permute.xlu0 %1405
        %1408 = vset.pattern.permute.xlu0 1
        %1409 = vperm.xlu0 %1408, %v360
        %v1410 = vpop.permute.xlu0 %1409
        %1412 = vset.pattern.permute.xlu0 1
        %1413 = vperm.xlu0 %1412, %v361
        %v1414 = vpop.permute.xlu0 %1413
        %1416 = vset.pattern.permute.xlu0 1
        %1417 = vperm.xlu0 %1416, %v362
        %v1418 = vpop.permute.xlu0 %1417
        %1420 = vset.pattern.permute.xlu0 1
        %1421 = vperm.xlu0 %1420, %v363
        %v1422 = vpop.permute.xlu0 %1421
        %1424 = vset.pattern.permute.xlu0 1
        %1425 = vperm.xlu0 %1424, %v364
        %v1426 = vpop.permute.xlu0 %1425
        %1428 = vset.pattern.permute.xlu0 1
        %1429 = vperm.xlu0 %1428, %v365
        %v1430 = vpop.permute.xlu0 %1429
        %1432 = vset.pattern.permute.xlu0 1
        %1433 = vperm.xlu0 %1432, %v366
        %v1434 = vpop.permute.xlu0 %1433
        %1436 = vset.pattern.permute.xlu0 1
        %1437 = vperm.xlu0 %1436, %v367
        %v1438 = vpop.permute.xlu0 %1437
        %1440 = vset.pattern.permute.xlu0 1
        %1441 = vperm.xlu0 %1440, %v368
        %v1442 = vpop.permute.xlu0 %1441
        %1444 = vset.pattern.permute.xlu0 1
        %1445 = vperm.xlu0 %1444, %v369
        %v1446 = vpop.permute.xlu0 %1445
        %1448 = vset.pattern.permute.xlu0 1
        %1449 = vperm.xlu0 %1448, %v370
        %v1450 = vpop.permute.xlu0 %1449
        %1452 = vset.pattern.permute.xlu0 1
        %1453 = vperm.xlu0 %1452, %v371
        %v1454 = vpop.permute.xlu0 %1453
        %1456 = vset.pattern.permute.xlu0 1
        %1457 = vperm.xlu0 %1456, %v372
        %v1458 = vpop.permute.xlu0 %1457
        %1460 = vset.pattern.permute.xlu0 1
        %1461 = vperm.xlu0 %1460, %v373
        %v1462 = vpop.permute.xlu0 %1461
        %1464 = vset.pattern.permute.xlu0 1
        %1465 = vperm.xlu0 %1464, %v374
        %v1466 = vpop.permute.xlu0 %1465
        %1468 = vset.pattern.permute.xlu0 1
        %1469 = vperm.xlu0 %1468, %v375
        %v1470 = vpop.permute.xlu0 %1469
        %1472 = vset.pattern.permute.xlu0 1
        %1473 = vperm.xlu0 %1472, %v376
        %v1474 = vpop.permute.xlu0 %1473
        %1476 = vset.pattern.permute.xlu0 1
        %1477 = vperm.xlu0 %1476, %v377
        %v1478 = vpop.permute.xlu0 %1477
        %1480 = vset.pattern.permute.xlu0 1
        %1481 = vperm.xlu0 %1480, %v378
        %v1482 = vpop.permute.xlu0 %1481
        %1484 = vset.pattern.permute.xlu0 1
        %1485 = vperm.xlu0 %1484, %v379
        %v1486 = vpop.permute.xlu0 %1485
        %1488 = vset.pattern.permute.xlu0 1
        %1489 = vperm.xlu0 %1488, %v380
        %v1490 = vpop.permute.xlu0 %1489
        %1492 = vset.pattern.permute.xlu0 1
        %1493 = vperm.xlu0 %1492, %v381
        %v1494 = vpop.permute.xlu0 %1493
        %1496 = vset.pattern.permute.xlu0 1
        %1497 = vperm.xlu0 %1496, %v382
        %v1498 = vpop.permute.xlu0 %1497
        %1500 = vset.pattern.permute.xlu0 1
        %1501 = vperm.xlu0 %1500, %v383
        %v1502 = vpop.permute.xlu0 %1501
        %1504 = vset.pattern.permute.xlu0 1
        %1505 = vperm.xlu0 %1504, %v384
        %v1506 = vpop.permute.xlu0 %1505
        %1508 = vset.pattern.permute.xlu0 1
        %1509 = vperm.xlu0 %1508, %v385
        %v1510 = vpop.permute.xlu0 %1509
        %1512 = vset.pattern.permute.xlu0 1
        %1513 = vperm.xlu0 %1512, %v386
        %v1514 = vpop.permute.xlu0 %1513
        %1516 = vset.pattern.permute.xlu0 1
        %1517 = vperm.xlu0 %1516, %v387
        %v1518 = vpop.permute.xlu0 %1517
        %1520 = vset.pattern.permute.xlu0 1
        %1521 = vperm.xlu0 %1520, %v388
        %v1522 = vpop.permute.xlu0 %1521
        %1524 = vset.pattern.permute.xlu0 1
        %1525 = vperm.xlu0 %1524, %v389
        %v1526 = vpop.permute.xlu0 %1525
        %1528 = vset.pattern.permute.xlu0 1
        %1529 = vperm.xlu0 %1528, %v390
        %v1530 = vpop.permute.xlu0 %1529
        %1532 = vset.pattern.permute.xlu0 1
        %1533 = vperm.xlu0 %1532, %v391
        %v1534 = vpop.permute.xlu0 %1533
        %1536 = vset.pattern.permute.xlu0 1
        %1537 = vperm.xlu0 %1536, %v392
        %v1538 = vpop.permute.xlu0 %1537
        %1540 = vset.pattern.permute.xlu0 1
        %1541 = vperm.xlu0 %1540, %v393
        %v1542 = vpop.permute.xlu0 %1541
        %1544 = vset.pattern.permute.xlu0 1
        %1545 = vperm.xlu0 %1544, %v394
        %v1546 = vpop.permute.xlu0 %1545
        %1548 = vset.pattern.permute.xlu0 1
        %1549 = vperm.xlu0 %1548, %v395
        %v1550 = vpop.permute.xlu0 %1549
        %1552 = vset.pattern.permute.xlu0 1
        %1553 = vperm.xlu0 %1552, %v396
        %v1554 = vpop.permute.xlu0 %1553
        %1556 = vset.pattern.permute.xlu0 1
        %1557 = vperm.xlu0 %1556, %v397
        %v1558 = vpop.permute.xlu0 %1557
        %1560 = vset.pattern.permute.xlu0 1
        %1561 = vperm.xlu0 %1560, %v398
        %v1562 = vpop.permute.xlu0 %1561
        %1564 = vset.pattern.permute.xlu0 1
        %1565 = vperm.xlu0 %1564, %v399
        %v1566 = vpop.permute.xlu0 %1565
        %1568 = vset.pattern.permute.xlu0 1
        %1569 = vperm.xlu0 %1568, %v400
        %v1570 = vpop.permute.xlu0 %1569
        %1572 = vset.pattern.permute.xlu0 1
        %1573 = vperm.xlu0 %1572, %v401
        %v1574 = vpop.permute.xlu0 %1573
        %1576 = vset.pattern.permute.xlu0 1
        %1577 = vperm.xlu0 %1576, %v402
        %v1578 = vpop.permute.xlu0 %1577
        %1580 = vset.pattern.permute.xlu0 1
        %1581 = vperm.xlu0 %1580, %v403
        %v1582 = vpop.permute.xlu0 %1581
        %1584 = vset.pattern.permute.xlu0 1
        %1585 = vperm.xlu0 %1584, %v404
        %v1586 = vpop.permute.xlu0 %1585
        %1588 = vset.pattern.permute.xlu0 1
        %1589 = vperm.xlu0 %1588, %v405
        %v1590 = vpop.permute.xlu0 %1589
        %1592 = vset.pattern.permute.xlu0 1
        %1593 = vperm.xlu0 %1592, %v406
        %v1594 = vpop.permute.xlu0 %1593
        %1596 = vset.pattern.permute.xlu0 1
        %1597 = vperm.xlu0 %1596, %v407
        %v1598 = vpop.permute.xlu0 %1597
        %1600 = vset.pattern.permute.xlu0 1
        %1601 = vperm.xlu0 %1600, %v408
        %v1602 = vpop.permute.xlu0 %1601
        %1604 = vset.pattern.permute.xlu0 1
        %1605 = vperm.xlu0 %1604, %v409
        %v1606 = vpop.permute.xlu0 %1605
        %1608 = vset.pattern.permute.xlu0 1
        %1609 = vperm.xlu0 %1608, %v410
        %v1610 = vpop.permute.xlu0 %1609
        %1612 = vset.pattern.permute.xlu0 1
        %1613 = vperm.xlu0 %1612, %v411
        %v1614 = vpop.permute.xlu0 %1613
        %1616 = vset.pattern.permute.xlu0 1
        %1617 = vperm.xlu0 %1616, %v412
        %v1618 = vpop.permute.xlu0 %1617
        %1620 = vset.pattern.permute.xlu0 1
        %1621 = vperm.xlu0 %1620, %v413
        %v1622 = vpop.permute.xlu0 %1621
        %1624 = vset.pattern.permute.xlu0 1
        %1625 = vperm.xlu0 %1624, %v414
        %v1626 = vpop.permute.xlu0 %1625
        %1628 = vset.pattern.permute.xlu0 1
        %1629 = vperm.xlu0 %1628, %v415
        %v1630 = vpop.permute.xlu0 %1629
        %1632 = vset.pattern.permute.xlu0 1
        %1633 = vperm.xlu0 %1632, %v416
        %v1634 = vpop.permute.xlu0 %1633
        %1636 = vset.pattern.permute.xlu0 1
        %1637 = vperm.xlu0 %1636, %v417
        %v1638 = vpop.permute.xlu0 %1637
        %1640 = vset.pattern.permute.xlu0 1
        %1641 = vperm.xlu0 %1640, %v418
        %v1642 = vpop.permute.xlu0 %1641
        %1644 = vset.pattern.permute.xlu0 1
        %1645 = vperm.xlu0 %1644, %v419
        %v1646 = vpop.permute.xlu0 %1645
        %1648 = vset.pattern.permute.xlu0 1
        %1649 = vperm.xlu0 %1648, %v420
        %v1650 = vpop.permute.xlu0 %1649
        %1652 = vset.pattern.permute.xlu0 1
        %1653 = vperm.xlu0 %1652, %v421
        %v1654 = vpop.permute.xlu0 %1653
        %1656 = vset.pattern.permute.xlu0 1
        %1657 = vperm.xlu0 %1656, %v422
        %v1658 = vpop.permute.xlu0 %1657
        %1660 = vset.pattern.permute.xlu0 1
        %1661 = vperm.xlu0 %1660, %v423
        %v1662 = vpop.permute.xlu0 %1661
        %1664 = vset.pattern.permute.xlu0 1
        %1665 = vperm.xlu0 %1664, %v424
        %v1666 = vpop.permute.xlu0 %1665
        %1668 = vset.pattern.permute.xlu0 1
        %1669 = vperm.xlu0 %1668, %v425
        %v1670 = vpop.permute.xlu0 %1669
        %1672 = vset.pattern.permute.xlu0 1
        %1673 = vperm.xlu0 %1672, %v426
        %v1674 = vpop.permute.xlu0 %1673
        %1676 = vset.pattern.permute.xlu0 1
        %1677 = vperm.xlu0 %1676, %v427
        %v1678 = vpop.permute.xlu0 %1677
        %1680 = vset.pattern.permute.xlu0 1
        %1681 = vperm.xlu0 %1680, %v428
        %v1682 = vpop.permute.xlu0 %1681
        %1684 = vset.pattern.permute.xlu0 1
        %1685 = vperm.xlu0 %1684, %v429
        %v1686 = vpop.permute.xlu0 %1685
        %1688 = vset.pattern.permute.xlu0 1
        %1689 = vperm.xlu0 %1688, %v430
        %v1690 = vpop.permute.xlu0 %1689
        %1692 = vset.pattern.permute.xlu0 1
        %1693 = vperm.xlu0 %1692, %v431
        %v1694 = vpop.permute.xlu0 %1693
        %1696 = vset.pattern.permute.xlu0 1
        %1697 = vperm.xlu0 %1696, %v432
        %v1698 = vpop.permute.xlu0 %1697
        %1700 = vset.pattern.permute.xlu0 1
        %1701 = vperm.xlu0 %1700, %v433
        %v1702 = vpop.permute.xlu0 %1701
        %1704 = vset.pattern.permute.xlu0 1
        %1705 = vperm.xlu0 %1704, %v434
        %v1706 = vpop.permute.xlu0 %1705
        %1708 = vset.pattern.permute.xlu0 1
        %1709 = vperm.xlu0 %1708, %v435
        %v1710 = vpop.permute.xlu0 %1709
        %1712 = vset.pattern.permute.xlu0 1
        %1713 = vperm.xlu0 %1712, %v436
        %v1714 = vpop.permute.xlu0 %1713
        %1716 = vset.pattern.permute.xlu0 1
        %1717 = vperm.xlu0 %1716, %v437
        %v1718 = vpop.permute.xlu0 %1717
        %1720 = vset.pattern.permute.xlu0 1
        %1721 = vperm.xlu0 %1720, %v438
        %v1722 = vpop.permute.xlu0 %1721
        %v1724 = vlaneseq
        %v1725 = vshrl.u32 %v1724, 7
        %v1726 = vsub.s32 1, %v1725
        %v1727 = vrot.slane %v439, %v1726
        %v1728 = vmul.f32 %v1214, %v1727
        %v1729 = vmul.f32 %v1218, %v1727
        %v1730 = vmul.f32 %v1222, %v1727
        %v1731 = vmul.f32 %v1226, %v1727
        %v1732 = vmul.f32 %v1230, %v1727
        %v1733 = vmul.f32 %v1234, %v1727
        %v1734 = vmul.f32 %v1238, %v1727
        %v1735 = vmul.f32 %v1242, %v1727
        %v1736 = vmul.f32 %v1246, %v1727
        %v1737 = vmul.f32 %v1250, %v1727
        %v1738 = vmul.f32 %v1254, %v1727
        %v1739 = vmul.f32 %v1258, %v1727
        %v1740 = vmul.f32 %v1262, %v1727
        %v1741 = vmul.f32 %v1266, %v1727
        %v1742 = vmul.f32 %v1270, %v1727
        %v1743 = vmul.f32 %v1274, %v1727
        %v1744 = vmul.f32 %v1278, %v1727
        %v1745 = vmul.f32 %v1282, %v1727
        %v1746 = vmul.f32 %v1286, %v1727
        %v1747 = vmul.f32 %v1290, %v1727
        %v1748 = vmul.f32 %v1294, %v1727
        %v1749 = vmul.f32 %v1298, %v1727
        %v1750 = vmul.f32 %v1302, %v1727
        %v1751 = vmul.f32 %v1306, %v1727
        %v1752 = vmul.f32 %v1310, %v1727
        %v1753 = vmul.f32 %v1314, %v1727
        %v1754 = vmul.f32 %v1318, %v1727
        %v1755 = vmul.f32 %v1322, %v1727
        %v1756 = vmul.f32 %v1326, %v1727
        %v1757 = vmul.f32 %v1330, %v1727
        %v1758 = vmul.f32 %v1334, %v1727
        %v1759 = vmul.f32 %v1338, %v1727
        %v1760 = vmul.f32 %v1342, %v1727
        %v1761 = vmul.f32 %v1346, %v1727
        %v1762 = vmul.f32 %v1350, %v1727
        %v1763 = vmul.f32 %v1354, %v1727
        %v1764 = vmul.f32 %v1358, %v1727
        %v1765 = vmul.f32 %v1362, %v1727
        %v1766 = vmul.f32 %v1366, %v1727
        %v1767 = vmul.f32 %v1370, %v1727
        %v1768 = vmul.f32 %v1374, %v1727
        %v1769 = vmul.f32 %v1378, %v1727
        %v1770 = vmul.f32 %v1382, %v1727
        %v1771 = vmul.f32 %v1386, %v1727
        %v1772 = vmul.f32 %v1390, %v1727
        %v1773 = vmul.f32 %v1394, %v1727
        %v1774 = vmul.f32 %v1398, %v1727
        %v1775 = vmul.f32 %v1402, %v1727
        %v1776 = vmul.f32 %v1406, %v1727
        %v1777 = vmul.f32 %v1410, %v1727
        %v1778 = vmul.f32 %v1414, %v1727
        %v1779 = vmul.f32 %v1418, %v1727
        %v1780 = vmul.f32 %v1422, %v1727
        %v1781 = vmul.f32 %v1426, %v1727
        %v1782 = vmul.f32 %v1430, %v1727
        %v1783 = vmul.f32 %v1434, %v1727
        %v1784 = vmul.f32 %v1438, %v1727
        %v1785 = vmul.f32 %v1442, %v1727
        %v1786 = vmul.f32 %v1446, %v1727
        %v1787 = vmul.f32 %v1450, %v1727
        %v1788 = vmul.f32 %v1454, %v1727
        %v1789 = vmul.f32 %v1458, %v1727
        %v1790 = vmul.f32 %v1462, %v1727
        %v1791 = vmul.f32 %v1466, %v1727
        %v1792 = vmul.f32 %v1470, %v1727
        %v1793 = vmul.f32 %v1474, %v1727
        %v1794 = vmul.f32 %v1478, %v1727
        %v1795 = vmul.f32 %v1482, %v1727
        %v1796 = vmul.f32 %v1486, %v1727
        %v1797 = vmul.f32 %v1490, %v1727
        %v1798 = vmul.f32 %v1494, %v1727
        %v1799 = vmul.f32 %v1498, %v1727
        %v1800 = vmul.f32 %v1502, %v1727
        %v1801 = vmul.f32 %v1506, %v1727
        %v1802 = vmul.f32 %v1510, %v1727
        %v1803 = vmul.f32 %v1514, %v1727
        %v1804 = vmul.f32 %v1518, %v1727
        %v1805 = vmul.f32 %v1522, %v1727
        %v1806 = vmul.f32 %v1526, %v1727
        %v1807 = vmul.f32 %v1530, %v1727
        %v1808 = vmul.f32 %v1534, %v1727
        %v1809 = vmul.f32 %v1538, %v1727
        %v1810 = vmul.f32 %v1542, %v1727
        %v1811 = vmul.f32 %v1546, %v1727
        %v1812 = vmul.f32 %v1550, %v1727
        %v1813 = vmul.f32 %v1554, %v1727
        %v1814 = vmul.f32 %v1558, %v1727
        %v1815 = vmul.f32 %v1562, %v1727
        %v1816 = vmul.f32 %v1566, %v1727
        %v1817 = vmul.f32 %v1570, %v1727
        %v1818 = vmul.f32 %v1574, %v1727
        %v1819 = vmul.f32 %v1578, %v1727
        %v1820 = vmul.f32 %v1582, %v1727
        %v1821 = vmul.f32 %v1586, %v1727
        %v1822 = vmul.f32 %v1590, %v1727
        %v1823 = vmul.f32 %v1594, %v1727
        %v1824 = vmul.f32 %v1598, %v1727
        %v1825 = vmul.f32 %v1602, %v1727
        %v1826 = vmul.f32 %v1606, %v1727
        %v1827 = vmul.f32 %v1610, %v1727
        %v1828 = vmul.f32 %v1614, %v1727
        %v1829 = vmul.f32 %v1618, %v1727
        %v1830 = vmul.f32 %v1622, %v1727
        %v1831 = vmul.f32 %v1626, %v1727
        %v1832 = vmul.f32 %v1630, %v1727
        %v1833 = vmul.f32 %v1634, %v1727
        %v1834 = vmul.f32 %v1638, %v1727
        %v1835 = vmul.f32 %v1642, %v1727
        %v1836 = vmul.f32 %v1646, %v1727
        %v1837 = vmul.f32 %v1650, %v1727
        %v1838 = vmul.f32 %v1654, %v1727
        %v1839 = vmul.f32 %v1658, %v1727
        %v1840 = vmul.f32 %v1662, %v1727
        %v1841 = vmul.f32 %v1666, %v1727
        %v1842 = vmul.f32 %v1670, %v1727
        %v1843 = vmul.f32 %v1674, %v1727
        %v1844 = vmul.f32 %v1678, %v1727
        %v1845 = vmul.f32 %v1682, %v1727
        %v1846 = vmul.f32 %v1686, %v1727
        %v1847 = vmul.f32 %v1690, %v1727
        %v1848 = vmul.f32 %v1694, %v1727
        %v1849 = vmul.f32 %v1698, %v1727
        %v1850 = vmul.f32 %v1702, %v1727
        %v1851 = vmul.f32 %v1706, %v1727
        %v1852 = vmul.f32 %v1710, %v1727
        %v1853 = vmul.f32 %v1714, %v1727
        %v1854 = vmul.f32 %v1718, %v1727
        %v1855 = vmul.f32 %v1722, %v1727
        %v1856 = vadd.f32 %v1084, %v1728
        %v1857 = vadd.f32 %v1085, %v1729
        %v1858 = vadd.f32 %v1086, %v1730
        %v1859 = vadd.f32 %v1087, %v1731
        %v1860 = vadd.f32 %v1088, %v1732
        %v1861 = vadd.f32 %v1089, %v1733
        %v1862 = vadd.f32 %v1090, %v1734
        %v1863 = vadd.f32 %v1091, %v1735
        %v1864 = vadd.f32 %v1092, %v1736
        %v1865 = vadd.f32 %v1093, %v1737
        %v1866 = vadd.f32 %v1094, %v1738
        %v1867 = vadd.f32 %v1095, %v1739
        %v1868 = vadd.f32 %v1096, %v1740
        %v1869 = vadd.f32 %v1097, %v1741
        %v1870 = vadd.f32 %v1098, %v1742
        %v1871 = vadd.f32 %v1099, %v1743
        %v1872 = vadd.f32 %v1100, %v1744
        %v1873 = vadd.f32 %v1101, %v1745
        %v1874 = vadd.f32 %v1102, %v1746
        %v1875 = vadd.f32 %v1103, %v1747
        %v1876 = vadd.f32 %v1104, %v1748
        %v1877 = vadd.f32 %v1105, %v1749
        %v1878 = vadd.f32 %v1106, %v1750
        %v1879 = vadd.f32 %v1107, %v1751
        %v1880 = vadd.f32 %v1108, %v1752
        %v1881 = vadd.f32 %v1109, %v1753
        %v1882 = vadd.f32 %v1110, %v1754
        %v1883 = vadd.f32 %v1111, %v1755
        %v1884 = vadd.f32 %v1112, %v1756
        %v1885 = vadd.f32 %v1113, %v1757
        %v1886 = vadd.f32 %v1114, %v1758
        %v1887 = vadd.f32 %v1115, %v1759
        %v1888 = vadd.f32 %v1116, %v1760
        %v1889 = vadd.f32 %v1117, %v1761
        %v1890 = vadd.f32 %v1118, %v1762
        %v1891 = vadd.f32 %v1119, %v1763
        %v1892 = vadd.f32 %v1120, %v1764
        %v1893 = vadd.f32 %v1121, %v1765
        %v1894 = vadd.f32 %v1122, %v1766
        %v1895 = vadd.f32 %v1123, %v1767
        %v1896 = vadd.f32 %v1124, %v1768
        %v1897 = vadd.f32 %v1125, %v1769
        %v1898 = vadd.f32 %v1126, %v1770
        %v1899 = vadd.f32 %v1127, %v1771
        %v1900 = vadd.f32 %v1128, %v1772
        %v1901 = vadd.f32 %v1129, %v1773
        %v1902 = vadd.f32 %v1130, %v1774
        %v1903 = vadd.f32 %v1131, %v1775
        %v1904 = vadd.f32 %v1132, %v1776
        %v1905 = vadd.f32 %v1133, %v1777
        %v1906 = vadd.f32 %v1134, %v1778
        %v1907 = vadd.f32 %v1135, %v1779
        %v1908 = vadd.f32 %v1136, %v1780
        %v1909 = vadd.f32 %v1137, %v1781
        %v1910 = vadd.f32 %v1138, %v1782
        %v1911 = vadd.f32 %v1139, %v1783
        %v1912 = vadd.f32 %v1140, %v1784
        %v1913 = vadd.f32 %v1141, %v1785
        %v1914 = vadd.f32 %v1142, %v1786
        %v1915 = vadd.f32 %v1143, %v1787
        %v1916 = vadd.f32 %v1144, %v1788
        %v1917 = vadd.f32 %v1145, %v1789
        %v1918 = vadd.f32 %v1146, %v1790
        %v1919 = vadd.f32 %v1147, %v1791
        %v1920 = vadd.f32 %v1148, %v1792
        %v1921 = vadd.f32 %v1149, %v1793
        %v1922 = vadd.f32 %v1150, %v1794
        %v1923 = vadd.f32 %v1151, %v1795
        %v1924 = vadd.f32 %v1152, %v1796
        %v1925 = vadd.f32 %v1153, %v1797
        %v1926 = vadd.f32 %v1154, %v1798
        %v1927 = vadd.f32 %v1155, %v1799
        %v1928 = vadd.f32 %v1156, %v1800
        %v1929 = vadd.f32 %v1157, %v1801
        %v1930 = vadd.f32 %v1158, %v1802
        %v1931 = vadd.f32 %v1159, %v1803
        %v1932 = vadd.f32 %v1160, %v1804
        %v1933 = vadd.f32 %v1161, %v1805
        %v1934 = vadd.f32 %v1162, %v1806
        %v1935 = vadd.f32 %v1163, %v1807
        %v1936 = vadd.f32 %v1164, %v1808
        %v1937 = vadd.f32 %v1165, %v1809
        %v1938 = vadd.f32 %v1166, %v1810
        %v1939 = vadd.f32 %v1167, %v1811
        %v1940 = vadd.f32 %v1168, %v1812
        %v1941 = vadd.f32 %v1169, %v1813
        %v1942 = vadd.f32 %v1170, %v1814
        %v1943 = vadd.f32 %v1171, %v1815
        %v1944 = vadd.f32 %v1172, %v1816
        %v1945 = vadd.f32 %v1173, %v1817
        %v1946 = vadd.f32 %v1174, %v1818
        %v1947 = vadd.f32 %v1175, %v1819
        %v1948 = vadd.f32 %v1176, %v1820
        %v1949 = vadd.f32 %v1177, %v1821
        %v1950 = vadd.f32 %v1178, %v1822
        %v1951 = vadd.f32 %v1179, %v1823
        %v1952 = vadd.f32 %v1180, %v1824
        %v1953 = vadd.f32 %v1181, %v1825
        %v1954 = vadd.f32 %v1182, %v1826
        %v1955 = vadd.f32 %v1183, %v1827
        %v1956 = vadd.f32 %v1184, %v1828
        %v1957 = vadd.f32 %v1185, %v1829
        %v1958 = vadd.f32 %v1186, %v1830
        %v1959 = vadd.f32 %v1187, %v1831
        %v1960 = vadd.f32 %v1188, %v1832
        %v1961 = vadd.f32 %v1189, %v1833
        %v1962 = vadd.f32 %v1190, %v1834
        %v1963 = vadd.f32 %v1191, %v1835
        %v1964 = vadd.f32 %v1192, %v1836
        %v1965 = vadd.f32 %v1193, %v1837
        %v1966 = vadd.f32 %v1194, %v1838
        %v1967 = vadd.f32 %v1195, %v1839
        %v1968 = vadd.f32 %v1196, %v1840
        %v1969 = vadd.f32 %v1197, %v1841
        %v1970 = vadd.f32 %v1198, %v1842
        %v1971 = vadd.f32 %v1199, %v1843
        %v1972 = vadd.f32 %v1200, %v1844
        %v1973 = vadd.f32 %v1201, %v1845
        %v1974 = vadd.f32 %v1202, %v1846
        %v1975 = vadd.f32 %v1203, %v1847
        %v1976 = vadd.f32 %v1204, %v1848
        %v1977 = vadd.f32 %v1205, %v1849
        %v1978 = vadd.f32 %v1206, %v1850
        %v1979 = vadd.f32 %v1207, %v1851
        %v1980 = vadd.f32 %v1208, %v1852
        %v1981 = vadd.f32 %v1209, %v1853
        %v1982 = vadd.f32 %v1210, %v1854
        %v1983 = vadd.f32 %v1211, %v1855
        %1984 = vset.pattern.permute.xlu0 2
        %1985 = vperm.xlu0 %1984, %v311
        %v1986 = vpop.permute.xlu0 %1985
        %1988 = vset.pattern.permute.xlu0 2
        %1989 = vperm.xlu0 %1988, %v312
        %v1990 = vpop.permute.xlu0 %1989
        %1992 = vset.pattern.permute.xlu0 2
        %1993 = vperm.xlu0 %1992, %v313
        %v1994 = vpop.permute.xlu0 %1993
        %1996 = vset.pattern.permute.xlu0 2
        %1997 = vperm.xlu0 %1996, %v314
        %v1998 = vpop.permute.xlu0 %1997
        %2000 = vset.pattern.permute.xlu0 2
        %2001 = vperm.xlu0 %2000, %v315
        %v2002 = vpop.permute.xlu0 %2001
        %2004 = vset.pattern.permute.xlu0 2
        %2005 = vperm.xlu0 %2004, %v316
        %v2006 = vpop.permute.xlu0 %2005
        %2008 = vset.pattern.permute.xlu0 2
        %2009 = vperm.xlu0 %2008, %v317
        %v2010 = vpop.permute.xlu0 %2009
        %2012 = vset.pattern.permute.xlu0 2
        %2013 = vperm.xlu0 %2012, %v318
        %v2014 = vpop.permute.xlu0 %2013
        %2016 = vset.pattern.permute.xlu0 2
        %2017 = vperm.xlu0 %2016, %v319
        %v2018 = vpop.permute.xlu0 %2017
        %2020 = vset.pattern.permute.xlu0 2
        %2021 = vperm.xlu0 %2020, %v320
        %v2022 = vpop.permute.xlu0 %2021
        %2024 = vset.pattern.permute.xlu0 2
        %2025 = vperm.xlu0 %2024, %v321
        %v2026 = vpop.permute.xlu0 %2025
        %2028 = vset.pattern.permute.xlu0 2
        %2029 = vperm.xlu0 %2028, %v322
        %v2030 = vpop.permute.xlu0 %2029
        %2032 = vset.pattern.permute.xlu0 2
        %2033 = vperm.xlu0 %2032, %v323
        %v2034 = vpop.permute.xlu0 %2033
        %2036 = vset.pattern.permute.xlu0 2
        %2037 = vperm.xlu0 %2036, %v324
        %v2038 = vpop.permute.xlu0 %2037
        %2040 = vset.pattern.permute.xlu0 2
        %2041 = vperm.xlu0 %2040, %v325
        %v2042 = vpop.permute.xlu0 %2041
        %2044 = vset.pattern.permute.xlu0 2
        %2045 = vperm.xlu0 %2044, %v326
        %v2046 = vpop.permute.xlu0 %2045
        %2048 = vset.pattern.permute.xlu0 2
        %2049 = vperm.xlu0 %2048, %v327
        %v2050 = vpop.permute.xlu0 %2049
        %2052 = vset.pattern.permute.xlu0 2
        %2053 = vperm.xlu0 %2052, %v328
        %v2054 = vpop.permute.xlu0 %2053
        %2056 = vset.pattern.permute.xlu0 2
        %2057 = vperm.xlu0 %2056, %v329
        %v2058 = vpop.permute.xlu0 %2057
        %2060 = vset.pattern.permute.xlu0 2
        %2061 = vperm.xlu0 %2060, %v330
        %v2062 = vpop.permute.xlu0 %2061
        %2064 = vset.pattern.permute.xlu0 2
        %2065 = vperm.xlu0 %2064, %v331
        %v2066 = vpop.permute.xlu0 %2065
        %2068 = vset.pattern.permute.xlu0 2
        %2069 = vperm.xlu0 %2068, %v332
        %v2070 = vpop.permute.xlu0 %2069
        %2072 = vset.pattern.permute.xlu0 2
        %2073 = vperm.xlu0 %2072, %v333
        %v2074 = vpop.permute.xlu0 %2073
        %2076 = vset.pattern.permute.xlu0 2
        %2077 = vperm.xlu0 %2076, %v334
        %v2078 = vpop.permute.xlu0 %2077
        %2080 = vset.pattern.permute.xlu0 2
        %2081 = vperm.xlu0 %2080, %v335
        %v2082 = vpop.permute.xlu0 %2081
        %2084 = vset.pattern.permute.xlu0 2
        %2085 = vperm.xlu0 %2084, %v336
        %v2086 = vpop.permute.xlu0 %2085
        %2088 = vset.pattern.permute.xlu0 2
        %2089 = vperm.xlu0 %2088, %v337
        %v2090 = vpop.permute.xlu0 %2089
        %2092 = vset.pattern.permute.xlu0 2
        %2093 = vperm.xlu0 %2092, %v338
        %v2094 = vpop.permute.xlu0 %2093
        %2096 = vset.pattern.permute.xlu0 2
        %2097 = vperm.xlu0 %2096, %v339
        %v2098 = vpop.permute.xlu0 %2097
        %2100 = vset.pattern.permute.xlu0 2
        %2101 = vperm.xlu0 %2100, %v340
        %v2102 = vpop.permute.xlu0 %2101
        %2104 = vset.pattern.permute.xlu0 2
        %2105 = vperm.xlu0 %2104, %v341
        %v2106 = vpop.permute.xlu0 %2105
        %2108 = vset.pattern.permute.xlu0 2
        %2109 = vperm.xlu0 %2108, %v342
        %v2110 = vpop.permute.xlu0 %2109
        %2112 = vset.pattern.permute.xlu0 2
        %2113 = vperm.xlu0 %2112, %v343
        %v2114 = vpop.permute.xlu0 %2113
        %2116 = vset.pattern.permute.xlu0 2
        %2117 = vperm.xlu0 %2116, %v344
        %v2118 = vpop.permute.xlu0 %2117
        %2120 = vset.pattern.permute.xlu0 2
        %2121 = vperm.xlu0 %2120, %v345
        %v2122 = vpop.permute.xlu0 %2121
        %2124 = vset.pattern.permute.xlu0 2
        %2125 = vperm.xlu0 %2124, %v346
        %v2126 = vpop.permute.xlu0 %2125
        %2128 = vset.pattern.permute.xlu0 2
        %2129 = vperm.xlu0 %2128, %v347
        %v2130 = vpop.permute.xlu0 %2129
        %2132 = vset.pattern.permute.xlu0 2
        %2133 = vperm.xlu0 %2132, %v348
        %v2134 = vpop.permute.xlu0 %2133
        %2136 = vset.pattern.permute.xlu0 2
        %2137 = vperm.xlu0 %2136, %v349
        %v2138 = vpop.permute.xlu0 %2137
        %2140 = vset.pattern.permute.xlu0 2
        %2141 = vperm.xlu0 %2140, %v350
        %v2142 = vpop.permute.xlu0 %2141
        %2144 = vset.pattern.permute.xlu0 2
        %2145 = vperm.xlu0 %2144, %v351
        %v2146 = vpop.permute.xlu0 %2145
        %2148 = vset.pattern.permute.xlu0 2
        %2149 = vperm.xlu0 %2148, %v352
        %v2150 = vpop.permute.xlu0 %2149
        %2152 = vset.pattern.permute.xlu0 2
        %2153 = vperm.xlu0 %2152, %v353
        %v2154 = vpop.permute.xlu0 %2153
        %2156 = vset.pattern.permute.xlu0 2
        %2157 = vperm.xlu0 %2156, %v354
        %v2158 = vpop.permute.xlu0 %2157
        %2160 = vset.pattern.permute.xlu0 2
        %2161 = vperm.xlu0 %2160, %v355
        %v2162 = vpop.permute.xlu0 %2161
        %2164 = vset.pattern.permute.xlu0 2
        %2165 = vperm.xlu0 %2164, %v356
        %v2166 = vpop.permute.xlu0 %2165
        %2168 = vset.pattern.permute.xlu0 2
        %2169 = vperm.xlu0 %2168, %v357
        %v2170 = vpop.permute.xlu0 %2169
        %2172 = vset.pattern.permute.xlu0 2
        %2173 = vperm.xlu0 %2172, %v358
        %v2174 = vpop.permute.xlu0 %2173
        %2176 = vset.pattern.permute.xlu0 2
        %2177 = vperm.xlu0 %2176, %v359
        %v2178 = vpop.permute.xlu0 %2177
        %2180 = vset.pattern.permute.xlu0 2
        %2181 = vperm.xlu0 %2180, %v360
        %v2182 = vpop.permute.xlu0 %2181
        %2184 = vset.pattern.permute.xlu0 2
        %2185 = vperm.xlu0 %2184, %v361
        %v2186 = vpop.permute.xlu0 %2185
        %2188 = vset.pattern.permute.xlu0 2
        %2189 = vperm.xlu0 %2188, %v362
        %v2190 = vpop.permute.xlu0 %2189
        %2192 = vset.pattern.permute.xlu0 2
        %2193 = vperm.xlu0 %2192, %v363
        %v2194 = vpop.permute.xlu0 %2193
        %2196 = vset.pattern.permute.xlu0 2
        %2197 = vperm.xlu0 %2196, %v364
        %v2198 = vpop.permute.xlu0 %2197
        %2200 = vset.pattern.permute.xlu0 2
        %2201 = vperm.xlu0 %2200, %v365
        %v2202 = vpop.permute.xlu0 %2201
        %2204 = vset.pattern.permute.xlu0 2
        %2205 = vperm.xlu0 %2204, %v366
        %v2206 = vpop.permute.xlu0 %2205
        %2208 = vset.pattern.permute.xlu0 2
        %2209 = vperm.xlu0 %2208, %v367
        %v2210 = vpop.permute.xlu0 %2209
        %2212 = vset.pattern.permute.xlu0 2
        %2213 = vperm.xlu0 %2212, %v368
        %v2214 = vpop.permute.xlu0 %2213
        %2216 = vset.pattern.permute.xlu0 2
        %2217 = vperm.xlu0 %2216, %v369
        %v2218 = vpop.permute.xlu0 %2217
        %2220 = vset.pattern.permute.xlu0 2
        %2221 = vperm.xlu0 %2220, %v370
        %v2222 = vpop.permute.xlu0 %2221
        %2224 = vset.pattern.permute.xlu0 2
        %2225 = vperm.xlu0 %2224, %v371
        %v2226 = vpop.permute.xlu0 %2225
        %2228 = vset.pattern.permute.xlu0 2
        %2229 = vperm.xlu0 %2228, %v372
        %v2230 = vpop.permute.xlu0 %2229
        %2232 = vset.pattern.permute.xlu0 2
        %2233 = vperm.xlu0 %2232, %v373
        %v2234 = vpop.permute.xlu0 %2233
        %2236 = vset.pattern.permute.xlu0 2
        %2237 = vperm.xlu0 %2236, %v374
        %v2238 = vpop.permute.xlu0 %2237
        %2240 = vset.pattern.permute.xlu0 2
        %2241 = vperm.xlu0 %2240, %v375
        %v2242 = vpop.permute.xlu0 %2241
        %2244 = vset.pattern.permute.xlu0 2
        %2245 = vperm.xlu0 %2244, %v376
        %v2246 = vpop.permute.xlu0 %2245
        %2248 = vset.pattern.permute.xlu0 2
        %2249 = vperm.xlu0 %2248, %v377
        %v2250 = vpop.permute.xlu0 %2249
        %2252 = vset.pattern.permute.xlu0 2
        %2253 = vperm.xlu0 %2252, %v378
        %v2254 = vpop.permute.xlu0 %2253
        %2256 = vset.pattern.permute.xlu0 2
        %2257 = vperm.xlu0 %2256, %v379
        %v2258 = vpop.permute.xlu0 %2257
        %2260 = vset.pattern.permute.xlu0 2
        %2261 = vperm.xlu0 %2260, %v380
        %v2262 = vpop.permute.xlu0 %2261
        %2264 = vset.pattern.permute.xlu0 2
        %2265 = vperm.xlu0 %2264, %v381
        %v2266 = vpop.permute.xlu0 %2265
        %2268 = vset.pattern.permute.xlu0 2
        %2269 = vperm.xlu0 %2268, %v382
        %v2270 = vpop.permute.xlu0 %2269
        %2272 = vset.pattern.permute.xlu0 2
        %2273 = vperm.xlu0 %2272, %v383
        %v2274 = vpop.permute.xlu0 %2273
        %2276 = vset.pattern.permute.xlu0 2
        %2277 = vperm.xlu0 %2276, %v384
        %v2278 = vpop.permute.xlu0 %2277
        %2280 = vset.pattern.permute.xlu0 2
        %2281 = vperm.xlu0 %2280, %v385
        %v2282 = vpop.permute.xlu0 %2281
        %2284 = vset.pattern.permute.xlu0 2
        %2285 = vperm.xlu0 %2284, %v386
        %v2286 = vpop.permute.xlu0 %2285
        %2288 = vset.pattern.permute.xlu0 2
        %2289 = vperm.xlu0 %2288, %v387
        %v2290 = vpop.permute.xlu0 %2289
        %2292 = vset.pattern.permute.xlu0 2
        %2293 = vperm.xlu0 %2292, %v388
        %v2294 = vpop.permute.xlu0 %2293
        %2296 = vset.pattern.permute.xlu0 2
        %2297 = vperm.xlu0 %2296, %v389
        %v2298 = vpop.permute.xlu0 %2297
        %2300 = vset.pattern.permute.xlu0 2
        %2301 = vperm.xlu0 %2300, %v390
        %v2302 = vpop.permute.xlu0 %2301
        %2304 = vset.pattern.permute.xlu0 2
        %2305 = vperm.xlu0 %2304, %v391
        %v2306 = vpop.permute.xlu0 %2305
        %2308 = vset.pattern.permute.xlu0 2
        %2309 = vperm.xlu0 %2308, %v392
        %v2310 = vpop.permute.xlu0 %2309
        %2312 = vset.pattern.permute.xlu0 2
        %2313 = vperm.xlu0 %2312, %v393
        %v2314 = vpop.permute.xlu0 %2313
        %2316 = vset.pattern.permute.xlu0 2
        %2317 = vperm.xlu0 %2316, %v394
        %v2318 = vpop.permute.xlu0 %2317
        %2320 = vset.pattern.permute.xlu0 2
        %2321 = vperm.xlu0 %2320, %v395
        %v2322 = vpop.permute.xlu0 %2321
        %2324 = vset.pattern.permute.xlu0 2
        %2325 = vperm.xlu0 %2324, %v396
        %v2326 = vpop.permute.xlu0 %2325
        %2328 = vset.pattern.permute.xlu0 2
        %2329 = vperm.xlu0 %2328, %v397
        %v2330 = vpop.permute.xlu0 %2329
        %2332 = vset.pattern.permute.xlu0 2
        %2333 = vperm.xlu0 %2332, %v398
        %v2334 = vpop.permute.xlu0 %2333
        %2336 = vset.pattern.permute.xlu0 2
        %2337 = vperm.xlu0 %2336, %v399
        %v2338 = vpop.permute.xlu0 %2337
        %2340 = vset.pattern.permute.xlu0 2
        %2341 = vperm.xlu0 %2340, %v400
        %v2342 = vpop.permute.xlu0 %2341
        %2344 = vset.pattern.permute.xlu0 2
        %2345 = vperm.xlu0 %2344, %v401
        %v2346 = vpop.permute.xlu0 %2345
        %2348 = vset.pattern.permute.xlu0 2
        %2349 = vperm.xlu0 %2348, %v402
        %v2350 = vpop.permute.xlu0 %2349
        %2352 = vset.pattern.permute.xlu0 2
        %2353 = vperm.xlu0 %2352, %v403
        %v2354 = vpop.permute.xlu0 %2353
        %2356 = vset.pattern.permute.xlu0 2
        %2357 = vperm.xlu0 %2356, %v404
        %v2358 = vpop.permute.xlu0 %2357
        %2360 = vset.pattern.permute.xlu0 2
        %2361 = vperm.xlu0 %2360, %v405
        %v2362 = vpop.permute.xlu0 %2361
        %2364 = vset.pattern.permute.xlu0 2
        %2365 = vperm.xlu0 %2364, %v406
        %v2366 = vpop.permute.xlu0 %2365
        %2368 = vset.pattern.permute.xlu0 2
        %2369 = vperm.xlu0 %2368, %v407
        %v2370 = vpop.permute.xlu0 %2369
        %2372 = vset.pattern.permute.xlu0 2
        %2373 = vperm.xlu0 %2372, %v408
        %v2374 = vpop.permute.xlu0 %2373
        %2376 = vset.pattern.permute.xlu0 2
        %2377 = vperm.xlu0 %2376, %v409
        %v2378 = vpop.permute.xlu0 %2377
        %2380 = vset.pattern.permute.xlu0 2
        %2381 = vperm.xlu0 %2380, %v410
        %v2382 = vpop.permute.xlu0 %2381
        %2384 = vset.pattern.permute.xlu0 2
        %2385 = vperm.xlu0 %2384, %v411
        %v2386 = vpop.permute.xlu0 %2385
        %2388 = vset.pattern.permute.xlu0 2
        %2389 = vperm.xlu0 %2388, %v412
        %v2390 = vpop.permute.xlu0 %2389
        %2392 = vset.pattern.permute.xlu0 2
        %2393 = vperm.xlu0 %2392, %v413
        %v2394 = vpop.permute.xlu0 %2393
        %2396 = vset.pattern.permute.xlu0 2
        %2397 = vperm.xlu0 %2396, %v414
        %v2398 = vpop.permute.xlu0 %2397
        %2400 = vset.pattern.permute.xlu0 2
        %2401 = vperm.xlu0 %2400, %v415
        %v2402 = vpop.permute.xlu0 %2401
        %2404 = vset.pattern.permute.xlu0 2
        %2405 = vperm.xlu0 %2404, %v416
        %v2406 = vpop.permute.xlu0 %2405
        %2408 = vset.pattern.permute.xlu0 2
        %2409 = vperm.xlu0 %2408, %v417
        %v2410 = vpop.permute.xlu0 %2409
        %2412 = vset.pattern.permute.xlu0 2
        %2413 = vperm.xlu0 %2412, %v418
        %v2414 = vpop.permute.xlu0 %2413
        %2416 = vset.pattern.permute.xlu0 2
        %2417 = vperm.xlu0 %2416, %v419
        %v2418 = vpop.permute.xlu0 %2417
        %2420 = vset.pattern.permute.xlu0 2
        %2421 = vperm.xlu0 %2420, %v420
        %v2422 = vpop.permute.xlu0 %2421
        %2424 = vset.pattern.permute.xlu0 2
        %2425 = vperm.xlu0 %2424, %v421
        %v2426 = vpop.permute.xlu0 %2425
        %2428 = vset.pattern.permute.xlu0 2
        %2429 = vperm.xlu0 %2428, %v422
        %v2430 = vpop.permute.xlu0 %2429
        %2432 = vset.pattern.permute.xlu0 2
        %2433 = vperm.xlu0 %2432, %v423
        %v2434 = vpop.permute.xlu0 %2433
        %2436 = vset.pattern.permute.xlu0 2
        %2437 = vperm.xlu0 %2436, %v424
        %v2438 = vpop.permute.xlu0 %2437
        %2440 = vset.pattern.permute.xlu0 2
        %2441 = vperm.xlu0 %2440, %v425
        %v2442 = vpop.permute.xlu0 %2441
        %2444 = vset.pattern.permute.xlu0 2
        %2445 = vperm.xlu0 %2444, %v426
        %v2446 = vpop.permute.xlu0 %2445
        %2448 = vset.pattern.permute.xlu0 2
        %2449 = vperm.xlu0 %2448, %v427
        %v2450 = vpop.permute.xlu0 %2449
        %2452 = vset.pattern.permute.xlu0 2
        %2453 = vperm.xlu0 %2452, %v428
        %v2454 = vpop.permute.xlu0 %2453
        %2456 = vset.pattern.permute.xlu0 2
        %2457 = vperm.xlu0 %2456, %v429
        %v2458 = vpop.permute.xlu0 %2457
        %2460 = vset.pattern.permute.xlu0 2
        %2461 = vperm.xlu0 %2460, %v430
        %v2462 = vpop.permute.xlu0 %2461
        %2464 = vset.pattern.permute.xlu0 2
        %2465 = vperm.xlu0 %2464, %v431
        %v2466 = vpop.permute.xlu0 %2465
        %2468 = vset.pattern.permute.xlu0 2
        %2469 = vperm.xlu0 %2468, %v432
        %v2470 = vpop.permute.xlu0 %2469
        %2472 = vset.pattern.permute.xlu0 2
        %2473 = vperm.xlu0 %2472, %v433
        %v2474 = vpop.permute.xlu0 %2473
        %2476 = vset.pattern.permute.xlu0 2
        %2477 = vperm.xlu0 %2476, %v434
        %v2478 = vpop.permute.xlu0 %2477
        %2480 = vset.pattern.permute.xlu0 2
        %2481 = vperm.xlu0 %2480, %v435
        %v2482 = vpop.permute.xlu0 %2481
        %2484 = vset.pattern.permute.xlu0 2
        %2485 = vperm.xlu0 %2484, %v436
        %v2486 = vpop.permute.xlu0 %2485
        %2488 = vset.pattern.permute.xlu0 2
        %2489 = vperm.xlu0 %2488, %v437
        %v2490 = vpop.permute.xlu0 %2489
        %2492 = vset.pattern.permute.xlu0 2
        %2493 = vperm.xlu0 %2492, %v438
        %v2494 = vpop.permute.xlu0 %2493
        %v2496 = vlaneseq
        %v2497 = vshrl.u32 %v2496, 7
        %v2498 = vsub.s32 2, %v2497
        %v2499 = vrot.slane %v439, %v2498
        %v2500 = vmul.f32 %v1986, %v2499
        %v2501 = vmul.f32 %v1990, %v2499
        %v2502 = vmul.f32 %v1994, %v2499
        %v2503 = vmul.f32 %v1998, %v2499
        %v2504 = vmul.f32 %v2002, %v2499
        %v2505 = vmul.f32 %v2006, %v2499
        %v2506 = vmul.f32 %v2010, %v2499
        %v2507 = vmul.f32 %v2014, %v2499
        %v2508 = vmul.f32 %v2018, %v2499
        %v2509 = vmul.f32 %v2022, %v2499
        %v2510 = vmul.f32 %v2026, %v2499
        %v2511 = vmul.f32 %v2030, %v2499
        %v2512 = vmul.f32 %v2034, %v2499
        %v2513 = vmul.f32 %v2038, %v2499
        %v2514 = vmul.f32 %v2042, %v2499
        %v2515 = vmul.f32 %v2046, %v2499
        %v2516 = vmul.f32 %v2050, %v2499
        %v2517 = vmul.f32 %v2054, %v2499
        %v2518 = vmul.f32 %v2058, %v2499
        %v2519 = vmul.f32 %v2062, %v2499
        %v2520 = vmul.f32 %v2066, %v2499
        %v2521 = vmul.f32 %v2070, %v2499
        %v2522 = vmul.f32 %v2074, %v2499
        %v2523 = vmul.f32 %v2078, %v2499
        %v2524 = vmul.f32 %v2082, %v2499
        %v2525 = vmul.f32 %v2086, %v2499
        %v2526 = vmul.f32 %v2090, %v2499
        %v2527 = vmul.f32 %v2094, %v2499
        %v2528 = vmul.f32 %v2098, %v2499
        %v2529 = vmul.f32 %v2102, %v2499
        %v2530 = vmul.f32 %v2106, %v2499
        %v2531 = vmul.f32 %v2110, %v2499
        %v2532 = vmul.f32 %v2114, %v2499
        %v2533 = vmul.f32 %v2118, %v2499
        %v2534 = vmul.f32 %v2122, %v2499
        %v2535 = vmul.f32 %v2126, %v2499
        %v2536 = vmul.f32 %v2130, %v2499
        %v2537 = vmul.f32 %v2134, %v2499
        %v2538 = vmul.f32 %v2138, %v2499
        %v2539 = vmul.f32 %v2142, %v2499
        %v2540 = vmul.f32 %v2146, %v2499
        %v2541 = vmul.f32 %v2150, %v2499
        %v2542 = vmul.f32 %v2154, %v2499
        %v2543 = vmul.f32 %v2158, %v2499
        %v2544 = vmul.f32 %v2162, %v2499
        %v2545 = vmul.f32 %v2166, %v2499
        %v2546 = vmul.f32 %v2170, %v2499
        %v2547 = vmul.f32 %v2174, %v2499
        %v2548 = vmul.f32 %v2178, %v2499
        %v2549 = vmul.f32 %v2182, %v2499
        %v2550 = vmul.f32 %v2186, %v2499
        %v2551 = vmul.f32 %v2190, %v2499
        %v2552 = vmul.f32 %v2194, %v2499
        %v2553 = vmul.f32 %v2198, %v2499
        %v2554 = vmul.f32 %v2202, %v2499
        %v2555 = vmul.f32 %v2206, %v2499
        %v2556 = vmul.f32 %v2210, %v2499
        %v2557 = vmul.f32 %v2214, %v2499
        %v2558 = vmul.f32 %v2218, %v2499
        %v2559 = vmul.f32 %v2222, %v2499
        %v2560 = vmul.f32 %v2226, %v2499
        %v2561 = vmul.f32 %v2230, %v2499
        %v2562 = vmul.f32 %v2234, %v2499
        %v2563 = vmul.f32 %v2238, %v2499
        %v2564 = vmul.f32 %v2242, %v2499
        %v2565 = vmul.f32 %v2246, %v2499
        %v2566 = vmul.f32 %v2250, %v2499
        %v2567 = vmul.f32 %v2254, %v2499
        %v2568 = vmul.f32 %v2258, %v2499
        %v2569 = vmul.f32 %v2262, %v2499
        %v2570 = vmul.f32 %v2266, %v2499
        %v2571 = vmul.f32 %v2270, %v2499
        %v2572 = vmul.f32 %v2274, %v2499
        %v2573 = vmul.f32 %v2278, %v2499
        %v2574 = vmul.f32 %v2282, %v2499
        %v2575 = vmul.f32 %v2286, %v2499
        %v2576 = vmul.f32 %v2290, %v2499
        %v2577 = vmul.f32 %v2294, %v2499
        %v2578 = vmul.f32 %v2298, %v2499
        %v2579 = vmul.f32 %v2302, %v2499
        %v2580 = vmul.f32 %v2306, %v2499
        %v2581 = vmul.f32 %v2310, %v2499
        %v2582 = vmul.f32 %v2314, %v2499
        %v2583 = vmul.f32 %v2318, %v2499
        %v2584 = vmul.f32 %v2322, %v2499
        %v2585 = vmul.f32 %v2326, %v2499
        %v2586 = vmul.f32 %v2330, %v2499
        %v2587 = vmul.f32 %v2334, %v2499
        %v2588 = vmul.f32 %v2338, %v2499
        %v2589 = vmul.f32 %v2342, %v2499
        %v2590 = vmul.f32 %v2346, %v2499
        %v2591 = vmul.f32 %v2350, %v2499
        %v2592 = vmul.f32 %v2354, %v2499
        %v2593 = vmul.f32 %v2358, %v2499
        %v2594 = vmul.f32 %v2362, %v2499
        %v2595 = vmul.f32 %v2366, %v2499
        %v2596 = vmul.f32 %v2370, %v2499
        %v2597 = vmul.f32 %v2374, %v2499
        %v2598 = vmul.f32 %v2378, %v2499
        %v2599 = vmul.f32 %v2382, %v2499
        %v2600 = vmul.f32 %v2386, %v2499
        %v2601 = vmul.f32 %v2390, %v2499
        %v2602 = vmul.f32 %v2394, %v2499
        %v2603 = vmul.f32 %v2398, %v2499
        %v2604 = vmul.f32 %v2402, %v2499
        %v2605 = vmul.f32 %v2406, %v2499
        %v2606 = vmul.f32 %v2410, %v2499
        %v2607 = vmul.f32 %v2414, %v2499
        %v2608 = vmul.f32 %v2418, %v2499
        %v2609 = vmul.f32 %v2422, %v2499
        %v2610 = vmul.f32 %v2426, %v2499
        %v2611 = vmul.f32 %v2430, %v2499
        %v2612 = vmul.f32 %v2434, %v2499
        %v2613 = vmul.f32 %v2438, %v2499
        %v2614 = vmul.f32 %v2442, %v2499
        %v2615 = vmul.f32 %v2446, %v2499
        %v2616 = vmul.f32 %v2450, %v2499
        %v2617 = vmul.f32 %v2454, %v2499
        %v2618 = vmul.f32 %v2458, %v2499
        %v2619 = vmul.f32 %v2462, %v2499
        %v2620 = vmul.f32 %v2466, %v2499
        %v2621 = vmul.f32 %v2470, %v2499
        %v2622 = vmul.f32 %v2474, %v2499
        %v2623 = vmul.f32 %v2478, %v2499
        %v2624 = vmul.f32 %v2482, %v2499
        %v2625 = vmul.f32 %v2486, %v2499
        %v2626 = vmul.f32 %v2490, %v2499
        %v2627 = vmul.f32 %v2494, %v2499
        %v2628 = vadd.f32 %v1856, %v2500
        %v2629 = vadd.f32 %v1857, %v2501
        %v2630 = vadd.f32 %v1858, %v2502
        %v2631 = vadd.f32 %v1859, %v2503
        %v2632 = vadd.f32 %v1860, %v2504
        %v2633 = vadd.f32 %v1861, %v2505
        %v2634 = vadd.f32 %v1862, %v2506
        %v2635 = vadd.f32 %v1863, %v2507
        %v2636 = vadd.f32 %v1864, %v2508
        %v2637 = vadd.f32 %v1865, %v2509
        %v2638 = vadd.f32 %v1866, %v2510
        %v2639 = vadd.f32 %v1867, %v2511
        %v2640 = vadd.f32 %v1868, %v2512
        %v2641 = vadd.f32 %v1869, %v2513
        %v2642 = vadd.f32 %v1870, %v2514
        %v2643 = vadd.f32 %v1871, %v2515
        %v2644 = vadd.f32 %v1872, %v2516
        %v2645 = vadd.f32 %v1873, %v2517
        %v2646 = vadd.f32 %v1874, %v2518
        %v2647 = vadd.f32 %v1875, %v2519
        %v2648 = vadd.f32 %v1876, %v2520
        %v2649 = vadd.f32 %v1877, %v2521
        %v2650 = vadd.f32 %v1878, %v2522
        %v2651 = vadd.f32 %v1879, %v2523
        %v2652 = vadd.f32 %v1880, %v2524
        %v2653 = vadd.f32 %v1881, %v2525
        %v2654 = vadd.f32 %v1882, %v2526
        %v2655 = vadd.f32 %v1883, %v2527
        %v2656 = vadd.f32 %v1884, %v2528
        %v2657 = vadd.f32 %v1885, %v2529
        %v2658 = vadd.f32 %v1886, %v2530
        %v2659 = vadd.f32 %v1887, %v2531
        %v2660 = vadd.f32 %v1888, %v2532
        %v2661 = vadd.f32 %v1889, %v2533
        %v2662 = vadd.f32 %v1890, %v2534
        %v2663 = vadd.f32 %v1891, %v2535
        %v2664 = vadd.f32 %v1892, %v2536
        %v2665 = vadd.f32 %v1893, %v2537
        %v2666 = vadd.f32 %v1894, %v2538
        %v2667 = vadd.f32 %v1895, %v2539
        %v2668 = vadd.f32 %v1896, %v2540
        %v2669 = vadd.f32 %v1897, %v2541
        %v2670 = vadd.f32 %v1898, %v2542
        %v2671 = vadd.f32 %v1899, %v2543
        %v2672 = vadd.f32 %v1900, %v2544
        %v2673 = vadd.f32 %v1901, %v2545
        %v2674 = vadd.f32 %v1902, %v2546
        %v2675 = vadd.f32 %v1903, %v2547
        %v2676 = vadd.f32 %v1904, %v2548
        %v2677 = vadd.f32 %v1905, %v2549
        %v2678 = vadd.f32 %v1906, %v2550
        %v2679 = vadd.f32 %v1907, %v2551
        %v2680 = vadd.f32 %v1908, %v2552
        %v2681 = vadd.f32 %v1909, %v2553
        %v2682 = vadd.f32 %v1910, %v2554
        %v2683 = vadd.f32 %v1911, %v2555
        %v2684 = vadd.f32 %v1912, %v2556
        %v2685 = vadd.f32 %v1913, %v2557
        %v2686 = vadd.f32 %v1914, %v2558
        %v2687 = vadd.f32 %v1915, %v2559
        %v2688 = vadd.f32 %v1916, %v2560
        %v2689 = vadd.f32 %v1917, %v2561
        %v2690 = vadd.f32 %v1918, %v2562
        %v2691 = vadd.f32 %v1919, %v2563
        %v2692 = vadd.f32 %v1920, %v2564
        %v2693 = vadd.f32 %v1921, %v2565
        %v2694 = vadd.f32 %v1922, %v2566
        %v2695 = vadd.f32 %v1923, %v2567
        %v2696 = vadd.f32 %v1924, %v2568
        %v2697 = vadd.f32 %v1925, %v2569
        %v2698 = vadd.f32 %v1926, %v2570
        %v2699 = vadd.f32 %v1927, %v2571
        %v2700 = vadd.f32 %v1928, %v2572
        %v2701 = vadd.f32 %v1929, %v2573
        %v2702 = vadd.f32 %v1930, %v2574
        %v2703 = vadd.f32 %v1931, %v2575
        %v2704 = vadd.f32 %v1932, %v2576
        %v2705 = vadd.f32 %v1933, %v2577
        %v2706 = vadd.f32 %v1934, %v2578
        %v2707 = vadd.f32 %v1935, %v2579
        %v2708 = vadd.f32 %v1936, %v2580
        %v2709 = vadd.f32 %v1937, %v2581
        %v2710 = vadd.f32 %v1938, %v2582
        %v2711 = vadd.f32 %v1939, %v2583
        %v2712 = vadd.f32 %v1940, %v2584
        %v2713 = vadd.f32 %v1941, %v2585
        %v2714 = vadd.f32 %v1942, %v2586
        %v2715 = vadd.f32 %v1943, %v2587
        %v2716 = vadd.f32 %v1944, %v2588
        %v2717 = vadd.f32 %v1945, %v2589
        %v2718 = vadd.f32 %v1946, %v2590
        %v2719 = vadd.f32 %v1947, %v2591
        %v2720 = vadd.f32 %v1948, %v2592
        %v2721 = vadd.f32 %v1949, %v2593
        %v2722 = vadd.f32 %v1950, %v2594
        %v2723 = vadd.f32 %v1951, %v2595
        %v2724 = vadd.f32 %v1952, %v2596
        %v2725 = vadd.f32 %v1953, %v2597
        %v2726 = vadd.f32 %v1954, %v2598
        %v2727 = vadd.f32 %v1955, %v2599
        %v2728 = vadd.f32 %v1956, %v2600
        %v2729 = vadd.f32 %v1957, %v2601
        %v2730 = vadd.f32 %v1958, %v2602
        %v2731 = vadd.f32 %v1959, %v2603
        %v2732 = vadd.f32 %v1960, %v2604
        %v2733 = vadd.f32 %v1961, %v2605
        %v2734 = vadd.f32 %v1962, %v2606
        %v2735 = vadd.f32 %v1963, %v2607
        %v2736 = vadd.f32 %v1964, %v2608
        %v2737 = vadd.f32 %v1965, %v2609
        %v2738 = vadd.f32 %v1966, %v2610
        %v2739 = vadd.f32 %v1967, %v2611
        %v2740 = vadd.f32 %v1968, %v2612
        %v2741 = vadd.f32 %v1969, %v2613
        %v2742 = vadd.f32 %v1970, %v2614
        %v2743 = vadd.f32 %v1971, %v2615
        %v2744 = vadd.f32 %v1972, %v2616
        %v2745 = vadd.f32 %v1973, %v2617
        %v2746 = vadd.f32 %v1974, %v2618
        %v2747 = vadd.f32 %v1975, %v2619
        %v2748 = vadd.f32 %v1976, %v2620
        %v2749 = vadd.f32 %v1977, %v2621
        %v2750 = vadd.f32 %v1978, %v2622
        %v2751 = vadd.f32 %v1979, %v2623
        %v2752 = vadd.f32 %v1980, %v2624
        %v2753 = vadd.f32 %v1981, %v2625
        %v2754 = vadd.f32 %v1982, %v2626
        %v2755 = vadd.f32 %v1983, %v2627
        %v2756 = vld [vmem:[%s2] sm:$0x1]
        %v2758 = vlaneseq
        %v2759 = vshrl.u32 %v2758, 7
        %v2760 = vsub.s32 0, %v2759
        %v2761 = vrot.slane %v2756, %v2760
        %v2763 = vadd.f32 %v2628, %v2761
        %v2764 = vadd.f32 %v2629, %v2761
        %v2765 = vadd.f32 %v2630, %v2761
        %v2766 = vadd.f32 %v2631, %v2761
        %v2767 = vadd.f32 %v2632, %v2761
        %v2768 = vadd.f32 %v2633, %v2761
        %v2769 = vadd.f32 %v2634, %v2761
        %v2770 = vadd.f32 %v2635, %v2761
        %v2771 = vadd.f32 %v2636, %v2761
        %v2772 = vadd.f32 %v2637, %v2761
        %v2773 = vadd.f32 %v2638, %v2761
        %v2774 = vadd.f32 %v2639, %v2761
        %v2775 = vadd.f32 %v2640, %v2761
        %v2776 = vadd.f32 %v2641, %v2761
        %v2777 = vadd.f32 %v2642, %v2761
        %v2778 = vadd.f32 %v2643, %v2761
        %v2779 = vadd.f32 %v2644, %v2761
        %v2780 = vadd.f32 %v2645, %v2761
        %v2781 = vadd.f32 %v2646, %v2761
        %v2782 = vadd.f32 %v2647, %v2761
        %v2783 = vadd.f32 %v2648, %v2761
        %v2784 = vadd.f32 %v2649, %v2761
        %v2785 = vadd.f32 %v2650, %v2761
        %v2786 = vadd.f32 %v2651, %v2761
        %v2787 = vadd.f32 %v2652, %v2761
        %v2788 = vadd.f32 %v2653, %v2761
        %v2789 = vadd.f32 %v2654, %v2761
        %v2790 = vadd.f32 %v2655, %v2761
        %v2791 = vadd.f32 %v2656, %v2761
        %v2792 = vadd.f32 %v2657, %v2761
        %v2793 = vadd.f32 %v2658, %v2761
        %v2794 = vadd.f32 %v2659, %v2761
        %v2795 = vadd.f32 %v2660, %v2761
        %v2796 = vadd.f32 %v2661, %v2761
        %v2797 = vadd.f32 %v2662, %v2761
        %v2798 = vadd.f32 %v2663, %v2761
        %v2799 = vadd.f32 %v2664, %v2761
        %v2800 = vadd.f32 %v2665, %v2761
        %v2801 = vadd.f32 %v2666, %v2761
        %v2802 = vadd.f32 %v2667, %v2761
        %v2803 = vadd.f32 %v2668, %v2761
        %v2804 = vadd.f32 %v2669, %v2761
        %v2805 = vadd.f32 %v2670, %v2761
        %v2806 = vadd.f32 %v2671, %v2761
        %v2807 = vadd.f32 %v2672, %v2761
        %v2808 = vadd.f32 %v2673, %v2761
        %v2809 = vadd.f32 %v2674, %v2761
        %v2810 = vadd.f32 %v2675, %v2761
        %v2811 = vadd.f32 %v2676, %v2761
        %v2812 = vadd.f32 %v2677, %v2761
        %v2813 = vadd.f32 %v2678, %v2761
        %v2814 = vadd.f32 %v2679, %v2761
        %v2815 = vadd.f32 %v2680, %v2761
        %v2816 = vadd.f32 %v2681, %v2761
        %v2817 = vadd.f32 %v2682, %v2761
        %v2818 = vadd.f32 %v2683, %v2761
        %v2819 = vadd.f32 %v2684, %v2761
        %v2820 = vadd.f32 %v2685, %v2761
        %v2821 = vadd.f32 %v2686, %v2761
        %v2822 = vadd.f32 %v2687, %v2761
        %v2823 = vadd.f32 %v2688, %v2761
        %v2824 = vadd.f32 %v2689, %v2761
        %v2825 = vadd.f32 %v2690, %v2761
        %v2826 = vadd.f32 %v2691, %v2761
        %v2827 = vadd.f32 %v2692, %v2761
        %v2828 = vadd.f32 %v2693, %v2761
        %v2829 = vadd.f32 %v2694, %v2761
        %v2830 = vadd.f32 %v2695, %v2761
        %v2831 = vadd.f32 %v2696, %v2761
        %v2832 = vadd.f32 %v2697, %v2761
        %v2833 = vadd.f32 %v2698, %v2761
        %v2834 = vadd.f32 %v2699, %v2761
        %v2835 = vadd.f32 %v2700, %v2761
        %v2836 = vadd.f32 %v2701, %v2761
        %v2837 = vadd.f32 %v2702, %v2761
        %v2838 = vadd.f32 %v2703, %v2761
        %v2839 = vadd.f32 %v2704, %v2761
        %v2840 = vadd.f32 %v2705, %v2761
        %v2841 = vadd.f32 %v2706, %v2761
        %v2842 = vadd.f32 %v2707, %v2761
        %v2843 = vadd.f32 %v2708, %v2761
        %v2844 = vadd.f32 %v2709, %v2761
        %v2845 = vadd.f32 %v2710, %v2761
        %v2846 = vadd.f32 %v2711, %v2761
        %v2847 = vadd.f32 %v2712, %v2761
        %v2848 = vadd.f32 %v2713, %v2761
        %v2849 = vadd.f32 %v2714, %v2761
        %v2850 = vadd.f32 %v2715, %v2761
        %v2851 = vadd.f32 %v2716, %v2761
        %v2852 = vadd.f32 %v2717, %v2761
        %v2853 = vadd.f32 %v2718, %v2761
        %v2854 = vadd.f32 %v2719, %v2761
        %v2855 = vadd.f32 %v2720, %v2761
        %v2856 = vadd.f32 %v2721, %v2761
        %v2857 = vadd.f32 %v2722, %v2761
        %v2858 = vadd.f32 %v2723, %v2761
        %v2859 = vadd.f32 %v2724, %v2761
        %v2860 = vadd.f32 %v2725, %v2761
        %v2861 = vadd.f32 %v2726, %v2761
        %v2862 = vadd.f32 %v2727, %v2761
        %v2863 = vadd.f32 %v2728, %v2761
        %v2864 = vadd.f32 %v2729, %v2761
        %v2865 = vadd.f32 %v2730, %v2761
        %v2866 = vadd.f32 %v2731, %v2761
        %v2867 = vadd.f32 %v2732, %v2761
        %v2868 = vadd.f32 %v2733, %v2761
        %v2869 = vadd.f32 %v2734, %v2761
        %v2870 = vadd.f32 %v2735, %v2761
        %v2871 = vadd.f32 %v2736, %v2761
        %v2872 = vadd.f32 %v2737, %v2761
        %v2873 = vadd.f32 %v2738, %v2761
        %v2874 = vadd.f32 %v2739, %v2761
        %v2875 = vadd.f32 %v2740, %v2761
        %v2876 = vadd.f32 %v2741, %v2761
        %v2877 = vadd.f32 %v2742, %v2761
        %v2878 = vadd.f32 %v2743, %v2761
        %v2879 = vadd.f32 %v2744, %v2761
        %v2880 = vadd.f32 %v2745, %v2761
        %v2881 = vadd.f32 %v2746, %v2761
        %v2882 = vadd.f32 %v2747, %v2761
        %v2883 = vadd.f32 %v2748, %v2761
        %v2884 = vadd.f32 %v2749, %v2761
        %v2885 = vadd.f32 %v2750, %v2761
        %v2886 = vadd.f32 %v2751, %v2761
        %v2887 = vadd.f32 %v2752, %v2761
        %v2888 = vadd.f32 %v2753, %v2761
        %v2889 = vadd.f32 %v2754, %v2761
        %v2890 = vadd.f32 %v2755, %v2761
        %v2891 = vmax.f32 %v2763, 0.0
        %v2892 = vmax.f32 %v2764, 0.0
        %v2893 = vmax.f32 %v2765, 0.0
        %v2894 = vmax.f32 %v2766, 0.0
        %v2895 = vmax.f32 %v2767, 0.0
        %v2896 = vmax.f32 %v2768, 0.0
        %v2897 = vmax.f32 %v2769, 0.0
        %v2898 = vmax.f32 %v2770, 0.0
        %v2899 = vmax.f32 %v2771, 0.0
        %v2900 = vmax.f32 %v2772, 0.0
        %v2901 = vmax.f32 %v2773, 0.0
        %v2902 = vmax.f32 %v2774, 0.0
        %v2903 = vmax.f32 %v2775, 0.0
        %v2904 = vmax.f32 %v2776, 0.0
        %v2905 = vmax.f32 %v2777, 0.0
        %v2906 = vmax.f32 %v2778, 0.0
        %v2907 = vmax.f32 %v2779, 0.0
        %v2908 = vmax.f32 %v2780, 0.0
        %v2909 = vmax.f32 %v2781, 0.0
        %v2910 = vmax.f32 %v2782, 0.0
        %v2911 = vmax.f32 %v2783, 0.0
        %v2912 = vmax.f32 %v2784, 0.0
        %v2913 = vmax.f32 %v2785, 0.0
        %v2914 = vmax.f32 %v2786, 0.0
        %v2915 = vmax.f32 %v2787, 0.0
        %v2916 = vmax.f32 %v2788, 0.0
        %v2917 = vmax.f32 %v2789, 0.0
        %v2918 = vmax.f32 %v2790, 0.0
        %v2919 = vmax.f32 %v2791, 0.0
        %v2920 = vmax.f32 %v2792, 0.0
        %v2921 = vmax.f32 %v2793, 0.0
        %v2922 = vmax.f32 %v2794, 0.0
        %v2923 = vmax.f32 %v2795, 0.0
        %v2924 = vmax.f32 %v2796, 0.0
        %v2925 = vmax.f32 %v2797, 0.0
        %v2926 = vmax.f32 %v2798, 0.0
        %v2927 = vmax.f32 %v2799, 0.0
        %v2928 = vmax.f32 %v2800, 0.0
        %v2929 = vmax.f32 %v2801, 0.0
        %v2930 = vmax.f32 %v2802, 0.0
        %v2931 = vmax.f32 %v2803, 0.0
        %v2932 = vmax.f32 %v2804, 0.0
        %v2933 = vmax.f32 %v2805, 0.0
        %v2934 = vmax.f32 %v2806, 0.0
        %v2935 = vmax.f32 %v2807, 0.0
        %v2936 = vmax.f32 %v2808, 0.0
        %v2937 = vmax.f32 %v2809, 0.0
        %v2938 = vmax.f32 %v2810, 0.0
        %v2939 = vmax.f32 %v2811, 0.0
        %v2940 = vmax.f32 %v2812, 0.0
        %v2941 = vmax.f32 %v2813, 0.0
        %v2942 = vmax.f32 %v2814, 0.0
        %v2943 = vmax.f32 %v2815, 0.0
        %v2944 = vmax.f32 %v2816, 0.0
        %v2945 = vmax.f32 %v2817, 0.0
        %v2946 = vmax.f32 %v2818, 0.0
        %v2947 = vmax.f32 %v2819, 0.0
        %v2948 = vmax.f32 %v2820, 0.0
        %v2949 = vmax.f32 %v2821, 0.0
        %v2950 = vmax.f32 %v2822, 0.0
        %v2951 = vmax.f32 %v2823, 0.0
        %v2952 = vmax.f32 %v2824, 0.0
        %v2953 = vmax.f32 %v2825, 0.0
        %v2954 = vmax.f32 %v2826, 0.0
        %v2955 = vmax.f32 %v2827, 0.0
        %v2956 = vmax.f32 %v2828, 0.0
        %v2957 = vmax.f32 %v2829, 0.0
        %v2958 = vmax.f32 %v2830, 0.0
        %v2959 = vmax.f32 %v2831, 0.0
        %v2960 = vmax.f32 %v2832, 0.0
        %v2961 = vmax.f32 %v2833, 0.0
        %v2962 = vmax.f32 %v2834, 0.0
        %v2963 = vmax.f32 %v2835, 0.0
        %v2964 = vmax.f32 %v2836, 0.0
        %v2965 = vmax.f32 %v2837, 0.0
        %v2966 = vmax.f32 %v2838, 0.0
        %v2967 = vmax.f32 %v2839, 0.0
        %v2968 = vmax.f32 %v2840, 0.0
        %v2969 = vmax.f32 %v2841, 0.0
        %v2970 = vmax.f32 %v2842, 0.0
        %v2971 = vmax.f32 %v2843, 0.0
        %v2972 = vmax.f32 %v2844, 0.0
        %v2973 = vmax.f32 %v2845, 0.0
        %v2974 = vmax.f32 %v2846, 0.0
        %v2975 = vmax.f32 %v2847, 0.0
        %v2976 = vmax.f32 %v2848, 0.0
        %v2977 = vmax.f32 %v2849, 0.0
        %v2978 = vmax.f32 %v2850, 0.0
        %v2979 = vmax.f32 %v2851, 0.0
        %v2980 = vmax.f32 %v2852, 0.0
        %v2981 = vmax.f32 %v2853, 0.0
        %v2982 = vmax.f32 %v2854, 0.0
        %v2983 = vmax.f32 %v2855, 0.0
        %v2984 = vmax.f32 %v2856, 0.0
        %v2985 = vmax.f32 %v2857, 0.0
        %v2986 = vmax.f32 %v2858, 0.0
        %v2987 = vmax.f32 %v2859, 0.0
        %v2988 = vmax.f32 %v2860, 0.0
        %v2989 = vmax.f32 %v2861, 0.0
        %v2990 = vmax.f32 %v2862, 0.0
        %v2991 = vmax.f32 %v2863, 0.0
        %v2992 = vmax.f32 %v2864, 0.0
        %v2993 = vmax.f32 %v2865, 0.0
        %v2994 = vmax.f32 %v2866, 0.0
        %v2995 = vmax.f32 %v2867, 0.0
        %v2996 = vmax.f32 %v2868, 0.0
        %v2997 = vmax.f32 %v2869, 0.0
        %v2998 = vmax.f32 %v2870, 0.0
        %v2999 = vmax.f32 %v2871, 0.0
        %v3000 = vmax.f32 %v2872, 0.0
        %v3001 = vmax.f32 %v2873, 0.0
        %v3002 = vmax.f32 %v2874, 0.0
        %v3003 = vmax.f32 %v2875, 0.0
        %v3004 = vmax.f32 %v2876, 0.0
        %v3005 = vmax.f32 %v2877, 0.0
        %v3006 = vmax.f32 %v2878, 0.0
        %v3007 = vmax.f32 %v2879, 0.0
        %v3008 = vmax.f32 %v2880, 0.0
        %v3009 = vmax.f32 %v2881, 0.0
        %v3010 = vmax.f32 %v2882, 0.0
        %v3011 = vmax.f32 %v2883, 0.0
        %v3012 = vmax.f32 %v2884, 0.0
        %v3013 = vmax.f32 %v2885, 0.0
        %v3014 = vmax.f32 %v2886, 0.0
        %v3015 = vmax.f32 %v2887, 0.0
        %v3016 = vmax.f32 %v2888, 0.0
        %v3017 = vmax.f32 %v2889, 0.0
        %v3018 = vmax.f32 %v2890, 0.0
        %v3019 = vpack.c.bf16 %v2892, %v2891
        %v3020 = vpack.c.bf16 %v2894, %v2893
        %v3021 = vpack.c.bf16 %v2896, %v2895
        %v3022 = vpack.c.bf16 %v2898, %v2897
        %v3023 = vpack.c.bf16 %v2900, %v2899
        %v3024 = vpack.c.bf16 %v2902, %v2901
        %v3025 = vpack.c.bf16 %v2904, %v2903
        %v3026 = vpack.c.bf16 %v2906, %v2905
        %v3027 = vpack.c.bf16 %v2908, %v2907
        %v3028 = vpack.c.bf16 %v2910, %v2909
        %v3029 = vpack.c.bf16 %v2912, %v2911
        %v3030 = vpack.c.bf16 %v2914, %v2913
        %v3031 = vpack.c.bf16 %v2916, %v2915
        %v3032 = vpack.c.bf16 %v2918, %v2917
        %v3033 = vpack.c.bf16 %v2920, %v2919
        %v3034 = vpack.c.bf16 %v2922, %v2921
        %v3035 = vpack.c.bf16 %v2924, %v2923
        %v3036 = vpack.c.bf16 %v2926, %v2925
        %v3037 = vpack.c.bf16 %v2928, %v2927
        %v3038 = vpack.c.bf16 %v2930, %v2929
        %v3039 = vpack.c.bf16 %v2932, %v2931
        %v3040 = vpack.c.bf16 %v2934, %v2933
        %v3041 = vpack.c.bf16 %v2936, %v2935
        %v3042 = vpack.c.bf16 %v2938, %v2937
        %v3043 = vpack.c.bf16 %v2940, %v2939
        %v3044 = vpack.c.bf16 %v2942, %v2941
        %v3045 = vpack.c.bf16 %v2944, %v2943
        %v3046 = vpack.c.bf16 %v2946, %v2945
        %v3047 = vpack.c.bf16 %v2948, %v2947
        %v3048 = vpack.c.bf16 %v2950, %v2949
        %v3049 = vpack.c.bf16 %v2952, %v2951
        %v3050 = vpack.c.bf16 %v2954, %v2953
        %v3051 = vpack.c.bf16 %v2956, %v2955
        %v3052 = vpack.c.bf16 %v2958, %v2957
        %v3053 = vpack.c.bf16 %v2960, %v2959
        %v3054 = vpack.c.bf16 %v2962, %v2961
        %v3055 = vpack.c.bf16 %v2964, %v2963
        %v3056 = vpack.c.bf16 %v2966, %v2965
        %v3057 = vpack.c.bf16 %v2968, %v2967
        %v3058 = vpack.c.bf16 %v2970, %v2969
        %v3059 = vpack.c.bf16 %v2972, %v2971
        %v3060 = vpack.c.bf16 %v2974, %v2973
        %v3061 = vpack.c.bf16 %v2976, %v2975
        %v3062 = vpack.c.bf16 %v2978, %v2977
        %v3063 = vpack.c.bf16 %v2980, %v2979
        %v3064 = vpack.c.bf16 %v2982, %v2981
        %v3065 = vpack.c.bf16 %v2984, %v2983
        %v3066 = vpack.c.bf16 %v2986, %v2985
        %v3067 = vpack.c.bf16 %v2988, %v2987
        %v3068 = vpack.c.bf16 %v2990, %v2989
        %v3069 = vpack.c.bf16 %v2992, %v2991
        %v3070 = vpack.c.bf16 %v2994, %v2993
        %v3071 = vpack.c.bf16 %v2996, %v2995
        %v3072 = vpack.c.bf16 %v2998, %v2997
        %v3073 = vpack.c.bf16 %v3000, %v2999
        %v3074 = vpack.c.bf16 %v3002, %v3001
        %v3075 = vpack.c.bf16 %v3004, %v3003
        %v3076 = vpack.c.bf16 %v3006, %v3005
        %v3077 = vpack.c.bf16 %v3008, %v3007
        %v3078 = vpack.c.bf16 %v3010, %v3009
        %v3079 = vpack.c.bf16 %v3012, %v3011
        %v3080 = vpack.c.bf16 %v3014, %v3013
        %v3081 = vpack.c.bf16 %v3016, %v3015
        %v3082 = vpack.c.bf16 %v3018, %v3017
        %v3083 = vld [vmem:[%s3] sm:$0xf]
        %v3084 = vld [vmem:[%s3 + $0x4] sm:$0xf]
        %v3085 = vld [vmem:[%s3 + $0x8] sm:$0xf]
        %v3086 = vld [vmem:[%s3 + $0xc] sm:$0xf]
        %v3087 = vld [vmem:[%s3 + $0x10] sm:$0xf]
        %v3088 = vld [vmem:[%s3 + $0x14] sm:$0xf]
        %v3089 = vld [vmem:[%s3 + $0x18] sm:$0xf]
        %v3090 = vld [vmem:[%s3 + $0x1c] sm:$0xf]
        %v3091 = vld [vmem:[%s4] sm:$0x1]
        %v3093 = vlaneseq
        %v3094 = vshrl.u32 %v3093, 7
        %v3095 = vsub.s32 0, %v3094
        %v3096 = vrot.slane %v3091, %v3095
        %v3106 = vunpack.c.l.b16 %v3083
        %v3107 = vunpack.c.l.b16 %v3084
        %v3108 = vunpack.c.l.b16 %v3085
        %v3109 = vunpack.c.l.b16 %v3086
        %v3110 = vunpack.c.l.b16 %v3087
        %v3111 = vunpack.c.l.b16 %v3088
        %v3112 = vunpack.c.l.b16 %v3089
        %v3113 = vunpack.c.l.b16 %v3090
        %v3114 = vpack.c.b16 %v3107, %v3106
        %v3115 = vpack.c.b16 %v3109, %v3108
        %v3116 = vpack.c.b16 %v3111, %v3110
        %v3117 = vpack.c.b16 %v3113, %v3112
        %vm3122 = vcmask 523264
        %v3124 = vsel %vm3122, %v3019, 0
        %v3127 = vsel %vm3122, %v3020, 0
        %v3130 = vsel %vm3122, %v3021, 0
        %v3133 = vsel %vm3122, %v3022, 0
        %v3136 = vsel %vm3122, %v3023, 0
        %v3139 = vsel %vm3122, %v3024, 0
        %v3142 = vsel %vm3122, %v3025, 0
        %v3145 = vsel %vm3122, %v3026, 0
        %v3148 = vsel %vm3122, %v3027, 0
        %v3151 = vsel %vm3122, %v3028, 0
        %v3154 = vsel %vm3122, %v3029, 0
        %v3157 = vsel %vm3122, %v3030, 0
        %v3160 = vsel %vm3122, %v3031, 0
        %v3163 = vsel %vm3122, %v3032, 0
        %v3166 = vsel %vm3122, %v3033, 0
        %v3169 = vsel %vm3122, %v3034, 0
        %v3172 = vsel %vm3122, %v3035, 0
        %v3175 = vsel %vm3122, %v3036, 0
        %v3178 = vsel %vm3122, %v3037, 0
        %v3181 = vsel %vm3122, %v3038, 0
        %v3184 = vsel %vm3122, %v3039, 0
        %v3187 = vsel %vm3122, %v3040, 0
        %v3190 = vsel %vm3122, %v3041, 0
        %v3193 = vsel %vm3122, %v3042, 0
        %v3196 = vsel %vm3122, %v3043, 0
        %v3199 = vsel %vm3122, %v3044, 0
        %v3202 = vsel %vm3122, %v3045, 0
        %v3205 = vsel %vm3122, %v3046, 0
        %v3208 = vsel %vm3122, %v3047, 0
        %v3211 = vsel %vm3122, %v3048, 0
        %v3214 = vsel %vm3122, %v3049, 0
        %v3217 = vsel %vm3122, %v3050, 0
        %v3220 = vsel %vm3122, %v3051, 0
        %v3223 = vsel %vm3122, %v3052, 0
        %v3226 = vsel %vm3122, %v3053, 0
        %v3229 = vsel %vm3122, %v3054, 0
        %v3232 = vsel %vm3122, %v3055, 0
        %v3235 = vsel %vm3122, %v3056, 0
        %v3238 = vsel %vm3122, %v3057, 0
        %v3241 = vsel %vm3122, %v3058, 0
        %v3244 = vsel %vm3122, %v3059, 0
        %v3247 = vsel %vm3122, %v3060, 0
        %v3250 = vsel %vm3122, %v3061, 0
        %v3253 = vsel %vm3122, %v3062, 0
        %v3256 = vsel %vm3122, %v3063, 0
        %v3259 = vsel %vm3122, %v3064, 0
        %v3262 = vsel %vm3122, %v3065, 0
        %v3265 = vsel %vm3122, %v3066, 0
        %v3268 = vsel %vm3122, %v3067, 0
        %v3271 = vsel %vm3122, %v3068, 0
        %v3274 = vsel %vm3122, %v3069, 0
        %v3277 = vsel %vm3122, %v3070, 0
        %v3280 = vsel %vm3122, %v3071, 0
        %v3283 = vsel %vm3122, %v3072, 0
        %v3286 = vsel %vm3122, %v3073, 0
        %v3289 = vsel %vm3122, %v3074, 0
        %v3292 = vsel %vm3122, %v3075, 0
        %v3295 = vsel %vm3122, %v3076, 0
        %v3298 = vsel %vm3122, %v3077, 0
        %v3301 = vsel %vm3122, %v3078, 0
        %v3304 = vsel %vm3122, %v3079, 0
        %v3307 = vsel %vm3122, %v3080, 0
        %v3310 = vsel %vm3122, %v3081, 0
        %v3313 = vsel %vm3122, %v3082, 0
        %3315 = vmatprep.subr.bf16.mxu0 0
        %3316 = vmatpush1.bf16.msra.mxu0 %v3114
        %3317 = vmatprep.subr.bf16.mxu0 0
        %3318 = vmatpush1.bf16.msra.mxu0 %v3115
        %3319 = vmatprep.subr.bf16.mxu0 0
        %3320 = vmatpush1.bf16.msra.mxu0 %v3116
        %3321 = vmatprep.subr.bf16.mxu0 0
        %3322 = vmatpush1.bf16.msra.mxu0 %v3117
        %3323 = vmatprep.subr.bf16.mxu0 0
        %3324 = vmatpush1.bf16.msra.mxu0 0
        %3325 = vmatprep.subr.bf16.mxu0 0
        %3326 = vmatpush1.bf16.msra.mxu0 0
        %3327 = vmatprep.subr.bf16.mxu0 0
        %3328 = vmatpush1.bf16.msra.mxu0 0
        %3329 = vmatprep.subr.bf16.mxu0 0
        %3330 = vmatpush1.bf16.msra.mxu0 0
        %3331 = vmatprep.subr.bf16.mxu0 0
        %3332 = vmatpush1.bf16.msra.mxu0 0
        %3333 = vmatprep.subr.bf16.mxu0 0
        %3334 = vmatpush1.bf16.msra.mxu0 0
        %3335 = vmatprep.subr.bf16.mxu0 0
        %3336 = vmatpush1.bf16.msra.mxu0 0
        %3337 = vmatprep.subr.bf16.mxu0 0
        %3338 = vmatpush1.bf16.msra.mxu0 0
        %3339 = vmatprep.subr.bf16.mxu0 0
        %3340 = vmatpush1.bf16.msra.mxu0 0
        %3341 = vmatprep.subr.bf16.mxu0 0
        %3342 = vmatpush1.bf16.msra.mxu0 0
        %3343 = vmatprep.subr.bf16.mxu0 0
        %3344 = vmatpush1.bf16.msra.mxu0 0
        %3345 = vmatprep.subr.bf16.mxu0 0
        %3346 = vmatpush1.bf16.msra.mxu0 0
        %3347 = vmatprep.mubr.bf16.mxu0 0
        %3348 = vmatmul.mubr.bf16.gmra.mrb[0].mxu0 %v3124
        %v3349 = vpop.f32.mrb[0].mxu0
        %v3350 = vadd.f32 %v3096, %v3349
        %v3351 = vpop.f32.mrb[0].mxu0
        %v3352 = vpop.f32.mrb[0].mxu0
        %v3353 = vadd.f32 %v3096, %v3352
        %v3354 = vpop.f32.mrb[0].mxu0
        %3355 = vmatprep.mubr.bf16.mxu0 0
        %3356 = vmatmul.mubr.bf16.gmra.mrb[0].mxu0 %v3127
        %v3357 = vpop.f32.mrb[0].mxu0
        %v3358 = vadd.f32 %v3096, %v3357
        %v3359 = vpop.f32.mrb[0].mxu0
        %v3360 = vpop.f32.mrb[0].mxu0
        %v3361 = vadd.f32 %v3096, %v3360
        %v3362 = vpop.f32.mrb[0].mxu0
        %3363 = vmatprep.mubr.bf16.mxu0 0
        %3364 = vmatmul.mubr.bf16.gmra.mrb[0].mxu0 %v3130
        %v3365 = vpop.f32.mrb[0].mxu0
        %v3366 = vadd.f32 %v3096, %v3365
        %v3367 = vpop.f32.mrb[0].mxu0
        %v3368 = vpop.f32.mrb[0].mxu0
        %v3369 = vadd.f32 %v3096, %v3368
        %v3370 = vpop.f32.mrb[0].mxu0
        %3371 = vmatprep.mubr.bf16.mxu0 0
        %3372 = vmatmul.mubr.bf16.gmra.mrb[0].mxu0 %v3133
        %v3373 = vpop.f32.mrb[0].mxu0
        %v3374 = vadd.f32 %v3096, %v3373
        %v3375 = vpop.f32.mrb[0].mxu0
        %v3376 = vpop.f32.mrb[0].mxu0
        %v3377 = vadd.f32 %v3096, %v3376
        %v3378 = vpop.f32.mrb[0].mxu0
        %3379 = vmatprep.mubr.bf16.mxu0 0
        %3380 = vmatmul.mubr.bf16.gmra.mrb[0].mxu0 %v3136
        %v3381 = vpop.f32.mrb[0].mxu0
        %v3382 = vadd.f32 %v3096, %v3381
        %v3383 = vpop.f32.mrb[0].mxu0
        %v3384 = vpop.f32.mrb[0].mxu0
        %v3385 = vadd.f32 %v3096, %v3384
        %v3386 = vpop.f32.mrb[0].mxu0
        %3387 = vmatprep.mubr.bf16.mxu0 0
        %3388 = vmatmul.mubr.bf16.gmra.mrb[0].mxu0 %v3139
        %v3389 = vpop.f32.mrb[0].mxu0
        %v3390 = vadd.f32 %v3096, %v3389
        %v3391 = vpop.f32.mrb[0].mxu0
        %v3392 = vpop.f32.mrb[0].mxu0
        %v3393 = vadd.f32 %v3096, %v3392
        %v3394 = vpop.f32.mrb[0].mxu0
        %3395 = vmatprep.mubr.bf16.mxu0 0
        %3396 = vmatmul.mubr.bf16.gmra.mrb[0].mxu0 %v3142
        %v3397 = vpop.f32.mrb[0].mxu0
        %v3398 = vadd.f32 %v3096, %v3397
        %v3399 = vpop.f32.mrb[0].mxu0
        %v3400 = vpop.f32.mrb[0].mxu0
        %v3401 = vadd.f32 %v3096, %v3400
        %v3402 = vpop.f32.mrb[0].mxu0
        %3403 = vmatprep.mubr.bf16.mxu0 0
        %3404 = vmatmul.mubr.bf16.gmra.mrb[0].mxu0 %v3145
        %v3405 = vpop.f32.mrb[0].mxu0
        %v3406 = vadd.f32 %v3096, %v3405
        %v3407 = vpop.f32.mrb[0].mxu0
        %v3408 = vpop.f32.mrb[0].mxu0
        %v3409 = vadd.f32 %v3096, %v3408
        %v3410 = vpop.f32.mrb[0].mxu0
        %3411 = vmatprep.mubr.bf16.mxu0 0
        %3412 = vmatmul.mubr.bf16.gmra.mrb[0].mxu0 %v3148
        %v3413 = vpop.f32.mrb[0].mxu0
        %v3414 = vadd.f32 %v3096, %v3413
        %v3415 = vpop.f32.mrb[0].mxu0
        %v3416 = vpop.f32.mrb[0].mxu0
        %v3417 = vadd.f32 %v3096, %v3416
        %v3418 = vpop.f32.mrb[0].mxu0
        %3419 = vmatprep.mubr.bf16.mxu0 0
        %3420 = vmatmul.mubr.bf16.gmra.mrb[0].mxu0 %v3151
        %v3421 = vpop.f32.mrb[0].mxu0
        %v3422 = vadd.f32 %v3096, %v3421
        %v3423 = vpop.f32.mrb[0].mxu0
        %v3424 = vpop.f32.mrb[0].mxu0
        %v3425 = vadd.f32 %v3096, %v3424
        %v3426 = vpop.f32.mrb[0].mxu0
        %3427 = vmatprep.mubr.bf16.mxu0 0
        %3428 = vmatmul.mubr.bf16.gmra.mrb[0].mxu0 %v3154
        %v3429 = vpop.f32.mrb[0].mxu0
        %v3430 = vadd.f32 %v3096, %v3429
        %v3431 = vpop.f32.mrb[0].mxu0
        %v3432 = vpop.f32.mrb[0].mxu0
        %v3433 = vadd.f32 %v3096, %v3432
        %v3434 = vpop.f32.mrb[0].mxu0
        %3435 = vmatprep.mubr.bf16.mxu0 0
        %3436 = vmatmul.mubr.bf16.gmra.mrb[0].mxu0 %v3157
        %v3437 = vpop.f32.mrb[0].mxu0
        %v3438 = vadd.f32 %v3096, %v3437
        %v3439 = vpop.f32.mrb[0].mxu0
        %v3440 = vpop.f32.mrb[0].mxu0
        %v3441 = vadd.f32 %v3096, %v3440
        %v3442 = vpop.f32.mrb[0].mxu0
        %3443 = vmatprep.mubr.bf16.mxu0 0
        %3444 = vmatmul.mubr.bf16.gmra.mrb[0].mxu0 %v3160
        %v3445 = vpop.f32.mrb[0].mxu0
        %v3446 = vadd.f32 %v3096, %v3445
        %v3447 = vpop.f32.mrb[0].mxu0
        %v3448 = vpop.f32.mrb[0].mxu0
        %v3449 = vadd.f32 %v3096, %v3448
        %v3450 = vpop.f32.mrb[0].mxu0
        %3451 = vmatprep.mubr.bf16.mxu0 0
        %3452 = vmatmul.mubr.bf16.gmra.mrb[0].mxu0 %v3163
        %v3453 = vpop.f32.mrb[0].mxu0
        %v3454 = vadd.f32 %v3096, %v3453
        %v3455 = vpop.f32.mrb[0].mxu0
        %v3456 = vpop.f32.mrb[0].mxu0
        %v3457 = vadd.f32 %v3096, %v3456
        %v3458 = vpop.f32.mrb[0].mxu0
        %3459 = vmatprep.mubr.bf16.mxu0 0
        %3460 = vmatmul.mubr.bf16.gmra.mrb[0].mxu0 %v3166
        %v3461 = vpop.f32.mrb[0].mxu0
        %v3462 = vadd.f32 %v3096, %v3461
        %v3463 = vpop.f32.mrb[0].mxu0
        %v3464 = vpop.f32.mrb[0].mxu0
        %v3465 = vadd.f32 %v3096, %v3464
        %v3466 = vpop.f32.mrb[0].mxu0
        %3467 = vmatprep.mubr.bf16.mxu0 0
        %3468 = vmatmul.mubr.bf16.gmra.mrb[0].mxu0 %v3169
        %v3469 = vpop.f32.mrb[0].mxu0
        %v3470 = vadd.f32 %v3096, %v3469
        %v3471 = vpop.f32.mrb[0].mxu0
        %v3472 = vpop.f32.mrb[0].mxu0
        %v3473 = vadd.f32 %v3096, %v3472
        %v3474 = vpop.f32.mrb[0].mxu0
        %3475 = vmatprep.mubr.bf16.mxu0 0
        %3476 = vmatmul.mubr.bf16.gmra.mrb[0].mxu0 %v3172
        %v3477 = vpop.f32.mrb[0].mxu0
        %v3478 = vadd.f32 %v3096, %v3477
        %v3479 = vpop.f32.mrb[0].mxu0
        %v3480 = vpop.f32.mrb[0].mxu0
        %v3481 = vadd.f32 %v3096, %v3480
        %v3482 = vpop.f32.mrb[0].mxu0
        %3483 = vmatprep.mubr.bf16.mxu0 0
        %3484 = vmatmul.mubr.bf16.gmra.mrb[0].mxu0 %v3175
        %v3485 = vpop.f32.mrb[0].mxu0
        %v3486 = vadd.f32 %v3096, %v3485
        %v3487 = vpop.f32.mrb[0].mxu0
        %v3488 = vpop.f32.mrb[0].mxu0
        %v3489 = vadd.f32 %v3096, %v3488
        %v3490 = vpop.f32.mrb[0].mxu0
        %3491 = vmatprep.mubr.bf16.mxu0 0
        %3492 = vmatmul.mubr.bf16.gmra.mrb[0].mxu0 %v3178
        %v3493 = vpop.f32.mrb[0].mxu0
        %v3494 = vadd.f32 %v3096, %v3493
        %v3495 = vpop.f32.mrb[0].mxu0
        %v3496 = vpop.f32.mrb[0].mxu0
        %v3497 = vadd.f32 %v3096, %v3496
        %v3498 = vpop.f32.mrb[0].mxu0
        %3499 = vmatprep.mubr.bf16.mxu0 0
        %3500 = vmatmul.mubr.bf16.gmra.mrb[0].mxu0 %v3181
        %v3501 = vpop.f32.mrb[0].mxu0
        %v3502 = vadd.f32 %v3096, %v3501
        %v3503 = vpop.f32.mrb[0].mxu0
        %v3504 = vpop.f32.mrb[0].mxu0
        %v3505 = vadd.f32 %v3096, %v3504
        %v3506 = vpop.f32.mrb[0].mxu0
        %3507 = vmatprep.mubr.bf16.mxu0 0
        %3508 = vmatmul.mubr.bf16.gmra.mrb[0].mxu0 %v3184
        %v3509 = vpop.f32.mrb[0].mxu0
        %v3510 = vadd.f32 %v3096, %v3509
        %v3511 = vpop.f32.mrb[0].mxu0
        %v3512 = vpop.f32.mrb[0].mxu0
        %v3513 = vadd.f32 %v3096, %v3512
        %v3514 = vpop.f32.mrb[0].mxu0
        %3515 = vmatprep.mubr.bf16.mxu0 0
        %3516 = vmatmul.mubr.bf16.gmra.mrb[0].mxu0 %v3187
        %v3517 = vpop.f32.mrb[0].mxu0
        %v3518 = vadd.f32 %v3096, %v3517
        %v3519 = vpop.f32.mrb[0].mxu0
        %v3520 = vpop.f32.mrb[0].mxu0
        %v3521 = vadd.f32 %v3096, %v3520
        %v3522 = vpop.f32.mrb[0].mxu0
        %3523 = vmatprep.mubr.bf16.mxu0 0
        %3524 = vmatmul.mubr.bf16.gmra.mrb[0].mxu0 %v3190
        %v3525 = vpop.f32.mrb[0].mxu0
        %v3526 = vadd.f32 %v3096, %v3525
        %v3527 = vpop.f32.mrb[0].mxu0
        %v3528 = vpop.f32.mrb[0].mxu0
        %v3529 = vadd.f32 %v3096, %v3528
        %v3530 = vpop.f32.mrb[0].mxu0
        %3531 = vmatprep.mubr.bf16.mxu0 0
        %3532 = vmatmul.mubr.bf16.gmra.mrb[0].mxu0 %v3193
        %v3533 = vpop.f32.mrb[0].mxu0
        %v3534 = vadd.f32 %v3096, %v3533
        %v3535 = vpop.f32.mrb[0].mxu0
        %v3536 = vpop.f32.mrb[0].mxu0
        %v3537 = vadd.f32 %v3096, %v3536
        %v3538 = vpop.f32.mrb[0].mxu0
        %3539 = vmatprep.mubr.bf16.mxu0 0
        %3540 = vmatmul.mubr.bf16.gmra.mrb[0].mxu0 %v3196
        %v3541 = vpop.f32.mrb[0].mxu0
        %v3542 = vadd.f32 %v3096, %v3541
        %v3543 = vpop.f32.mrb[0].mxu0
        %v3544 = vpop.f32.mrb[0].mxu0
        %v3545 = vadd.f32 %v3096, %v3544
        %v3546 = vpop.f32.mrb[0].mxu0
        %3547 = vmatprep.mubr.bf16.mxu0 0
        %3548 = vmatmul.mubr.bf16.gmra.mrb[0].mxu0 %v3199
        %v3549 = vpop.f32.mrb[0].mxu0
        %v3550 = vadd.f32 %v3096, %v3549
        %v3551 = vpop.f32.mrb[0].mxu0
        %v3552 = vpop.f32.mrb[0].mxu0
        %v3553 = vadd.f32 %v3096, %v3552
        %v3554 = vpop.f32.mrb[0].mxu0
        %3555 = vmatprep.mubr.bf16.mxu0 0
        %3556 = vmatmul.mubr.bf16.gmra.mrb[0].mxu0 %v3202
        %v3557 = vpop.f32.mrb[0].mxu0
        %v3558 = vadd.f32 %v3096, %v3557
        %v3559 = vpop.f32.mrb[0].mxu0
        %v3560 = vpop.f32.mrb[0].mxu0
        %v3561 = vadd.f32 %v3096, %v3560
        %v3562 = vpop.f32.mrb[0].mxu0
        %3563 = vmatprep.mubr.bf16.mxu0 0
        %3564 = vmatmul.mubr.bf16.gmra.mrb[0].mxu0 %v3205
        %v3565 = vpop.f32.mrb[0].mxu0
        %v3566 = vadd.f32 %v3096, %v3565
        %v3567 = vpop.f32.mrb[0].mxu0
        %v3568 = vpop.f32.mrb[0].mxu0
        %v3569 = vadd.f32 %v3096, %v3568
        %v3570 = vpop.f32.mrb[0].mxu0
        %3571 = vmatprep.mubr.bf16.mxu0 0
        %3572 = vmatmul.mubr.bf16.gmra.mrb[0].mxu0 %v3208
        %v3573 = vpop.f32.mrb[0].mxu0
        %v3574 = vadd.f32 %v3096, %v3573
        %v3575 = vpop.f32.mrb[0].mxu0
        %v3576 = vpop.f32.mrb[0].mxu0
        %v3577 = vadd.f32 %v3096, %v3576
        %v3578 = vpop.f32.mrb[0].mxu0
        %3579 = vmatprep.mubr.bf16.mxu0 0
        %3580 = vmatmul.mubr.bf16.gmra.mrb[0].mxu0 %v3211
        %v3581 = vpop.f32.mrb[0].mxu0
        %v3582 = vadd.f32 %v3096, %v3581
        %v3583 = vpop.f32.mrb[0].mxu0
        %v3584 = vpop.f32.mrb[0].mxu0
        %v3585 = vadd.f32 %v3096, %v3584
        %v3586 = vpop.f32.mrb[0].mxu0
        %3587 = vmatprep.mubr.bf16.mxu0 0
        %3588 = vmatmul.mubr.bf16.gmra.mrb[0].mxu0 %v3214
        %v3589 = vpop.f32.mrb[0].mxu0
        %v3590 = vadd.f32 %v3096, %v3589
        %v3591 = vpop.f32.mrb[0].mxu0
        %v3592 = vpop.f32.mrb[0].mxu0
        %v3593 = vadd.f32 %v3096, %v3592
        %v3594 = vpop.f32.mrb[0].mxu0
        %3595 = vmatprep.mubr.bf16.mxu0 0
        %3596 = vmatmul.mubr.bf16.gmra.mrb[0].mxu0 %v3217
        %v3597 = vpop.f32.mrb[0].mxu0
        %v3598 = vadd.f32 %v3096, %v3597
        %v3599 = vpop.f32.mrb[0].mxu0
        %v3600 = vpop.f32.mrb[0].mxu0
        %v3601 = vadd.f32 %v3096, %v3600
        %v3602 = vpop.f32.mrb[0].mxu0
        %3603 = vmatprep.mubr.bf16.mxu0 0
        %3604 = vmatmul.mubr.bf16.gmra.mrb[0].mxu0 %v3220
        %v3605 = vpop.f32.mrb[0].mxu0
        %v3606 = vadd.f32 %v3096, %v3605
        %v3607 = vpop.f32.mrb[0].mxu0
        %v3608 = vpop.f32.mrb[0].mxu0
        %v3609 = vadd.f32 %v3096, %v3608
        %v3610 = vpop.f32.mrb[0].mxu0
        %3611 = vmatprep.mubr.bf16.mxu0 0
        %3612 = vmatmul.mubr.bf16.gmra.mrb[0].mxu0 %v3223
        %v3613 = vpop.f32.mrb[0].mxu0
        %v3614 = vadd.f32 %v3096, %v3613
        %v3615 = vpop.f32.mrb[0].mxu0
        %v3616 = vpop.f32.mrb[0].mxu0
        %v3617 = vadd.f32 %v3096, %v3616
        %v3618 = vpop.f32.mrb[0].mxu0
        %3619 = vmatprep.mubr.bf16.mxu0 0
        %3620 = vmatmul.mubr.bf16.gmra.mrb[0].mxu0 %v3226
        %v3621 = vpop.f32.mrb[0].mxu0
        %v3622 = vadd.f32 %v3096, %v3621
        %v3623 = vpop.f32.mrb[0].mxu0
        %v3624 = vpop.f32.mrb[0].mxu0
        %v3625 = vadd.f32 %v3096, %v3624
        %v3626 = vpop.f32.mrb[0].mxu0
        %3627 = vmatprep.mubr.bf16.mxu0 0
        %3628 = vmatmul.mubr.bf16.gmra.mrb[0].mxu0 %v3229
        %v3629 = vpop.f32.mrb[0].mxu0
        %v3630 = vadd.f32 %v3096, %v3629
        %v3631 = vpop.f32.mrb[0].mxu0
        %v3632 = vpop.f32.mrb[0].mxu0
        %v3633 = vadd.f32 %v3096, %v3632
        %v3634 = vpop.f32.mrb[0].mxu0
        %3635 = vmatprep.mubr.bf16.mxu0 0
        %3636 = vmatmul.mubr.bf16.gmra.mrb[0].mxu0 %v3232
        %v3637 = vpop.f32.mrb[0].mxu0
        %v3638 = vadd.f32 %v3096, %v3637
        %v3639 = vpop.f32.mrb[0].mxu0
        %v3640 = vpop.f32.mrb[0].mxu0
        %v3641 = vadd.f32 %v3096, %v3640
        %v3642 = vpop.f32.mrb[0].mxu0
        %3643 = vmatprep.mubr.bf16.mxu0 0
        %3644 = vmatmul.mubr.bf16.gmra.mrb[0].mxu0 %v3235
        %v3645 = vpop.f32.mrb[0].mxu0
        %v3646 = vadd.f32 %v3096, %v3645
        %v3647 = vpop.f32.mrb[0].mxu0
        %v3648 = vpop.f32.mrb[0].mxu0
        %v3649 = vadd.f32 %v3096, %v3648
        %v3650 = vpop.f32.mrb[0].mxu0
        %3651 = vmatprep.mubr.bf16.mxu0 0
        %3652 = vmatmul.mubr.bf16.gmra.mrb[0].mxu0 %v3238
        %v3653 = vpop.f32.mrb[0].mxu0
        %v3654 = vadd.f32 %v3096, %v3653
        %v3655 = vpop.f32.mrb[0].mxu0
        %v3656 = vpop.f32.mrb[0].mxu0
        %v3657 = vadd.f32 %v3096, %v3656
        %v3658 = vpop.f32.mrb[0].mxu0
        %3659 = vmatprep.mubr.bf16.mxu0 0
        %3660 = vmatmul.mubr.bf16.gmra.mrb[0].mxu0 %v3241
        %v3661 = vpop.f32.mrb[0].mxu0
        %v3662 = vadd.f32 %v3096, %v3661
        %v3663 = vpop.f32.mrb[0].mxu0
        %v3664 = vpop.f32.mrb[0].mxu0
        %v3665 = vadd.f32 %v3096, %v3664
        %v3666 = vpop.f32.mrb[0].mxu0
        %3667 = vmatprep.mubr.bf16.mxu0 0
        %3668 = vmatmul.mubr.bf16.gmra.mrb[0].mxu0 %v3244
        %v3669 = vpop.f32.mrb[0].mxu0
        %v3670 = vadd.f32 %v3096, %v3669
        %v3671 = vpop.f32.mrb[0].mxu0
        %v3672 = vpop.f32.mrb[0].mxu0
        %v3673 = vadd.f32 %v3096, %v3672
        %v3674 = vpop.f32.mrb[0].mxu0
        %3675 = vmatprep.mubr.bf16.mxu0 0
        %3676 = vmatmul.mubr.bf16.gmra.mrb[0].mxu0 %v3247
        %v3677 = vpop.f32.mrb[0].mxu0
        %v3678 = vadd.f32 %v3096, %v3677
        %v3679 = vpop.f32.mrb[0].mxu0
        %v3680 = vpop.f32.mrb[0].mxu0
        %v3681 = vadd.f32 %v3096, %v3680
        %v3682 = vpop.f32.mrb[0].mxu0
        %3683 = vmatprep.mubr.bf16.mxu0 0
        %3684 = vmatmul.mubr.bf16.gmra.mrb[0].mxu0 %v3250
        %v3685 = vpop.f32.mrb[0].mxu0
        %v3686 = vadd.f32 %v3096, %v3685
        %v3687 = vpop.f32.mrb[0].mxu0
        %v3688 = vpop.f32.mrb[0].mxu0
        %v3689 = vadd.f32 %v3096, %v3688
        %v3690 = vpop.f32.mrb[0].mxu0
        %3691 = vmatprep.mubr.bf16.mxu0 0
        %3692 = vmatmul.mubr.bf16.gmra.mrb[0].mxu0 %v3253
        %v3693 = vpop.f32.mrb[0].mxu0
        %v3694 = vadd.f32 %v3096, %v3693
        %v3695 = vpop.f32.mrb[0].mxu0
        %v3696 = vpop.f32.mrb[0].mxu0
        %v3697 = vadd.f32 %v3096, %v3696
        %v3698 = vpop.f32.mrb[0].mxu0
        %3699 = vmatprep.mubr.bf16.mxu0 0
        %3700 = vmatmul.mubr.bf16.gmra.mrb[0].mxu0 %v3256
        %v3701 = vpop.f32.mrb[0].mxu0
        %v3702 = vadd.f32 %v3096, %v3701
        %v3703 = vpop.f32.mrb[0].mxu0
        %v3704 = vpop.f32.mrb[0].mxu0
        %v3705 = vadd.f32 %v3096, %v3704
        %v3706 = vpop.f32.mrb[0].mxu0
        %3707 = vmatprep.mubr.bf16.mxu0 0
        %3708 = vmatmul.mubr.bf16.gmra.mrb[0].mxu0 %v3259
        %v3709 = vpop.f32.mrb[0].mxu0
        %v3710 = vadd.f32 %v3096, %v3709
        %v3711 = vpop.f32.mrb[0].mxu0
        %v3712 = vpop.f32.mrb[0].mxu0
        %v3713 = vadd.f32 %v3096, %v3712
        %v3714 = vpop.f32.mrb[0].mxu0
        %3715 = vmatprep.mubr.bf16.mxu0 0
        %3716 = vmatmul.mubr.bf16.gmra.mrb[0].mxu0 %v3262
        %v3717 = vpop.f32.mrb[0].mxu0
        %v3718 = vadd.f32 %v3096, %v3717
        %v3719 = vpop.f32.mrb[0].mxu0
        %v3720 = vpop.f32.mrb[0].mxu0
        %v3721 = vadd.f32 %v3096, %v3720
        %v3722 = vpop.f32.mrb[0].mxu0
        %3723 = vmatprep.mubr.bf16.mxu0 0
        %3724 = vmatmul.mubr.bf16.gmra.mrb[0].mxu0 %v3265
        %v3725 = vpop.f32.mrb[0].mxu0
        %v3726 = vadd.f32 %v3096, %v3725
        %v3727 = vpop.f32.mrb[0].mxu0
        %v3728 = vpop.f32.mrb[0].mxu0
        %v3729 = vadd.f32 %v3096, %v3728
        %v3730 = vpop.f32.mrb[0].mxu0
        %3731 = vmatprep.mubr.bf16.mxu0 0
        %3732 = vmatmul.mubr.bf16.gmra.mrb[0].mxu0 %v3268
        %v3733 = vpop.f32.mrb[0].mxu0
        %v3734 = vadd.f32 %v3096, %v3733
        %v3735 = vpop.f32.mrb[0].mxu0
        %v3736 = vpop.f32.mrb[0].mxu0
        %v3737 = vadd.f32 %v3096, %v3736
        %v3738 = vpop.f32.mrb[0].mxu0
        %3739 = vmatprep.mubr.bf16.mxu0 0
        %3740 = vmatmul.mubr.bf16.gmra.mrb[0].mxu0 %v3271
        %v3741 = vpop.f32.mrb[0].mxu0
        %v3742 = vadd.f32 %v3096, %v3741
        %v3743 = vpop.f32.mrb[0].mxu0
        %v3744 = vpop.f32.mrb[0].mxu0
        %v3745 = vadd.f32 %v3096, %v3744
        %v3746 = vpop.f32.mrb[0].mxu0
        %3747 = vmatprep.mubr.bf16.mxu0 0
        %3748 = vmatmul.mubr.bf16.gmra.mrb[0].mxu0 %v3274
        %v3749 = vpop.f32.mrb[0].mxu0
        %v3750 = vadd.f32 %v3096, %v3749
        %v3751 = vpop.f32.mrb[0].mxu0
        %v3752 = vpop.f32.mrb[0].mxu0
        %v3753 = vadd.f32 %v3096, %v3752
        %v3754 = vpop.f32.mrb[0].mxu0
        %3755 = vmatprep.mubr.bf16.mxu0 0
        %3756 = vmatmul.mubr.bf16.gmra.mrb[0].mxu0 %v3277
        %v3757 = vpop.f32.mrb[0].mxu0
        %v3758 = vadd.f32 %v3096, %v3757
        %v3759 = vpop.f32.mrb[0].mxu0
        %v3760 = vpop.f32.mrb[0].mxu0
        %v3761 = vadd.f32 %v3096, %v3760
        %v3762 = vpop.f32.mrb[0].mxu0
        %3763 = vmatprep.mubr.bf16.mxu0 0
        %3764 = vmatmul.mubr.bf16.gmra.mrb[0].mxu0 %v3280
        %v3765 = vpop.f32.mrb[0].mxu0
        %v3766 = vadd.f32 %v3096, %v3765
        %v3767 = vpop.f32.mrb[0].mxu0
        %v3768 = vpop.f32.mrb[0].mxu0
        %v3769 = vadd.f32 %v3096, %v3768
        %v3770 = vpop.f32.mrb[0].mxu0
        %3771 = vmatprep.mubr.bf16.mxu0 0
        %3772 = vmatmul.mubr.bf16.gmra.mrb[0].mxu0 %v3283
        %v3773 = vpop.f32.mrb[0].mxu0
        %v3774 = vadd.f32 %v3096, %v3773
        %v3775 = vpop.f32.mrb[0].mxu0
        %v3776 = vpop.f32.mrb[0].mxu0
        %v3777 = vadd.f32 %v3096, %v3776
        %v3778 = vpop.f32.mrb[0].mxu0
        %3779 = vmatprep.mubr.bf16.mxu0 0
        %3780 = vmatmul.mubr.bf16.gmra.mrb[0].mxu0 %v3286
        %v3781 = vpop.f32.mrb[0].mxu0
        %v3782 = vadd.f32 %v3096, %v3781
        %v3783 = vpop.f32.mrb[0].mxu0
        %v3784 = vpop.f32.mrb[0].mxu0
        %v3785 = vadd.f32 %v3096, %v3784
        %v3786 = vpop.f32.mrb[0].mxu0
        %3787 = vmatprep.mubr.bf16.mxu0 0
        %3788 = vmatmul.mubr.bf16.gmra.mrb[0].mxu0 %v3289
        %v3789 = vpop.f32.mrb[0].mxu0
        %v3790 = vadd.f32 %v3096, %v3789
        %v3791 = vpop.f32.mrb[0].mxu0
        %v3792 = vpop.f32.mrb[0].mxu0
        %v3793 = vadd.f32 %v3096, %v3792
        %v3794 = vpop.f32.mrb[0].mxu0
        %3795 = vmatprep.mubr.bf16.mxu0 0
        %3796 = vmatmul.mubr.bf16.gmra.mrb[0].mxu0 %v3292
        %v3797 = vpop.f32.mrb[0].mxu0
        %v3798 = vadd.f32 %v3096, %v3797
        %v3799 = vpop.f32.mrb[0].mxu0
        %v3800 = vpop.f32.mrb[0].mxu0
        %v3801 = vadd.f32 %v3096, %v3800
        %v3802 = vpop.f32.mrb[0].mxu0
        %3803 = vmatprep.mubr.bf16.mxu0 0
        %3804 = vmatmul.mubr.bf16.gmra.mrb[0].mxu0 %v3295
        %v3805 = vpop.f32.mrb[0].mxu0
        %v3806 = vadd.f32 %v3096, %v3805
        %v3807 = vpop.f32.mrb[0].mxu0
        %v3808 = vpop.f32.mrb[0].mxu0
        %v3809 = vadd.f32 %v3096, %v3808
        %v3810 = vpop.f32.mrb[0].mxu0
        %3811 = vmatprep.mubr.bf16.mxu0 0
        %3812 = vmatmul.mubr.bf16.gmra.mrb[0].mxu0 %v3298
        %v3813 = vpop.f32.mrb[0].mxu0
        %v3814 = vadd.f32 %v3096, %v3813
        %v3815 = vpop.f32.mrb[0].mxu0
        %v3816 = vpop.f32.mrb[0].mxu0
        %v3817 = vadd.f32 %v3096, %v3816
        %v3818 = vpop.f32.mrb[0].mxu0
        %3819 = vmatprep.mubr.bf16.mxu0 0
        %3820 = vmatmul.mubr.bf16.gmra.mrb[0].mxu0 %v3301
        %v3821 = vpop.f32.mrb[0].mxu0
        %v3822 = vadd.f32 %v3096, %v3821
        %v3823 = vpop.f32.mrb[0].mxu0
        %v3824 = vpop.f32.mrb[0].mxu0
        %v3825 = vadd.f32 %v3096, %v3824
        %v3826 = vpop.f32.mrb[0].mxu0
        %3827 = vmatprep.mubr.bf16.mxu0 0
        %3828 = vmatmul.mubr.bf16.gmra.mrb[0].mxu0 %v3304
        %v3829 = vpop.f32.mrb[0].mxu0
        %v3830 = vadd.f32 %v3096, %v3829
        %v3831 = vpop.f32.mrb[0].mxu0
        %v3832 = vpop.f32.mrb[0].mxu0
        %v3833 = vadd.f32 %v3096, %v3832
        %v3834 = vpop.f32.mrb[0].mxu0
        %3835 = vmatprep.mubr.bf16.mxu0 0
        %3836 = vmatmul.mubr.bf16.gmra.mrb[0].mxu0 %v3307
        %v3837 = vpop.f32.mrb[0].mxu0
        %v3838 = vadd.f32 %v3096, %v3837
        %v3839 = vpop.f32.mrb[0].mxu0
        %v3840 = vpop.f32.mrb[0].mxu0
        %v3841 = vadd.f32 %v3096, %v3840
        %v3842 = vpop.f32.mrb[0].mxu0
        %3843 = vmatprep.mubr.bf16.mxu0 0
        %3844 = vmatmul.mubr.bf16.gmra.mrb[0].mxu0 %v3310
        %v3845 = vpop.f32.mrb[0].mxu0
        %v3846 = vadd.f32 %v3096, %v3845
        %v3847 = vpop.f32.mrb[0].mxu0
        %v3848 = vpop.f32.mrb[0].mxu0
        %v3849 = vadd.f32 %v3096, %v3848
        %v3850 = vpop.f32.mrb[0].mxu0
        %3851 = vmatprep.mubr.bf16.mxu0 0
        %3852 = vmatmul.mubr.bf16.gmra.mrb[0].mxu0 %v3313
        %v3853 = vpop.f32.mrb[0].mxu0
        %v3854 = vadd.f32 %v3096, %v3853
        %v3855 = vpop.f32.mrb[0].mxu0
        %v3856 = vpop.f32.mrb[0].mxu0
        %v3857 = vadd.f32 %v3096, %v3856
        %v3858 = vpop.f32.mrb[0].mxu0
        %3859 = vdwg.mxu0
        %v3860 = vmax.f32 %v3350, 0.0
        %v3861 = vmax.f32 %v3353, 0.0
        %v3862 = vmax.f32 %v3358, 0.0
        %v3863 = vmax.f32 %v3361, 0.0
        %v3864 = vmax.f32 %v3366, 0.0
        %v3865 = vmax.f32 %v3369, 0.0
        %v3866 = vmax.f32 %v3374, 0.0
        %v3867 = vmax.f32 %v3377, 0.0
        %v3868 = vmax.f32 %v3382, 0.0
        %v3869 = vmax.f32 %v3385, 0.0
        %v3870 = vmax.f32 %v3390, 0.0
        %v3871 = vmax.f32 %v3393, 0.0
        %v3872 = vmax.f32 %v3398, 0.0
        %v3873 = vmax.f32 %v3401, 0.0
        %v3874 = vmax.f32 %v3406, 0.0
        %v3875 = vmax.f32 %v3409, 0.0
        %v3876 = vmax.f32 %v3414, 0.0
        %v3877 = vmax.f32 %v3417, 0.0
        %v3878 = vmax.f32 %v3422, 0.0
        %v3879 = vmax.f32 %v3425, 0.0
        %v3880 = vmax.f32 %v3430, 0.0
        %v3881 = vmax.f32 %v3433, 0.0
        %v3882 = vmax.f32 %v3438, 0.0
        %v3883 = vmax.f32 %v3441, 0.0
        %v3884 = vmax.f32 %v3446, 0.0
        %v3885 = vmax.f32 %v3449, 0.0
        %v3886 = vmax.f32 %v3454, 0.0
        %v3887 = vmax.f32 %v3457, 0.0
        %v3888 = vmax.f32 %v3462, 0.0
        %v3889 = vmax.f32 %v3465, 0.0
        %v3890 = vmax.f32 %v3470, 0.0
        %v3891 = vmax.f32 %v3473, 0.0
        %v3892 = vmax.f32 %v3478, 0.0
        %v3893 = vmax.f32 %v3481, 0.0
        %v3894 = vmax.f32 %v3486, 0.0
        %v3895 = vmax.f32 %v3489, 0.0
        %v3896 = vmax.f32 %v3494, 0.0
        %v3897 = vmax.f32 %v3497, 0.0
        %v3898 = vmax.f32 %v3502, 0.0
        %v3899 = vmax.f32 %v3505, 0.0
        %v3900 = vmax.f32 %v3510, 0.0
        %v3901 = vmax.f32 %v3513, 0.0
        %v3902 = vmax.f32 %v3518, 0.0
        %v3903 = vmax.f32 %v3521, 0.0
        %v3904 = vmax.f32 %v3526, 0.0
        %v3905 = vmax.f32 %v3529, 0.0
        %v3906 = vmax.f32 %v3534, 0.0
        %v3907 = vmax.f32 %v3537, 0.0
        %v3908 = vmax.f32 %v3542, 0.0
        %v3909 = vmax.f32 %v3545, 0.0
        %v3910 = vmax.f32 %v3550, 0.0
        %v3911 = vmax.f32 %v3553, 0.0
        %v3912 = vmax.f32 %v3558, 0.0
        %v3913 = vmax.f32 %v3561, 0.0
        %v3914 = vmax.f32 %v3566, 0.0
        %v3915 = vmax.f32 %v3569, 0.0
        %v3916 = vmax.f32 %v3574, 0.0
        %v3917 = vmax.f32 %v3577, 0.0
        %v3918 = vmax.f32 %v3582, 0.0
        %v3919 = vmax.f32 %v3585, 0.0
        %v3920 = vmax.f32 %v3590, 0.0
        %v3921 = vmax.f32 %v3593, 0.0
        %v3922 = vmax.f32 %v3598, 0.0
        %v3923 = vmax.f32 %v3601, 0.0
        %v3924 = vmax.f32 %v3606, 0.0
        %v3925 = vmax.f32 %v3609, 0.0
        %v3926 = vmax.f32 %v3614, 0.0
        %v3927 = vmax.f32 %v3617, 0.0
        %v3928 = vmax.f32 %v3622, 0.0
        %v3929 = vmax.f32 %v3625, 0.0
        %v3930 = vmax.f32 %v3630, 0.0
        %v3931 = vmax.f32 %v3633, 0.0
        %v3932 = vmax.f32 %v3638, 0.0
        %v3933 = vmax.f32 %v3641, 0.0
        %v3934 = vmax.f32 %v3646, 0.0
        %v3935 = vmax.f32 %v3649, 0.0
        %v3936 = vmax.f32 %v3654, 0.0
        %v3937 = vmax.f32 %v3657, 0.0
        %v3938 = vmax.f32 %v3662, 0.0
        %v3939 = vmax.f32 %v3665, 0.0
        %v3940 = vmax.f32 %v3670, 0.0
        %v3941 = vmax.f32 %v3673, 0.0
        %v3942 = vmax.f32 %v3678, 0.0
        %v3943 = vmax.f32 %v3681, 0.0
        %v3944 = vmax.f32 %v3686, 0.0
        %v3945 = vmax.f32 %v3689, 0.0
        %v3946 = vmax.f32 %v3694, 0.0
        %v3947 = vmax.f32 %v3697, 0.0
        %v3948 = vmax.f32 %v3702, 0.0
        %v3949 = vmax.f32 %v3705, 0.0
        %v3950 = vmax.f32 %v3710, 0.0
        %v3951 = vmax.f32 %v3713, 0.0
        %v3952 = vmax.f32 %v3718, 0.0
        %v3953 = vmax.f32 %v3721, 0.0
        %v3954 = vmax.f32 %v3726, 0.0
        %v3955 = vmax.f32 %v3729, 0.0
        %v3956 = vmax.f32 %v3734, 0.0
        %v3957 = vmax.f32 %v3737, 0.0
        %v3958 = vmax.f32 %v3742, 0.0
        %v3959 = vmax.f32 %v3745, 0.0
        %v3960 = vmax.f32 %v3750, 0.0
        %v3961 = vmax.f32 %v3753, 0.0
        %v3962 = vmax.f32 %v3758, 0.0
        %v3963 = vmax.f32 %v3761, 0.0
        %v3964 = vmax.f32 %v3766, 0.0
        %v3965 = vmax.f32 %v3769, 0.0
        %v3966 = vmax.f32 %v3774, 0.0
        %v3967 = vmax.f32 %v3777, 0.0
        %v3968 = vmax.f32 %v3782, 0.0
        %v3969 = vmax.f32 %v3785, 0.0
        %v3970 = vmax.f32 %v3790, 0.0
        %v3971 = vmax.f32 %v3793, 0.0
        %v3972 = vmax.f32 %v3798, 0.0
        %v3973 = vmax.f32 %v3801, 0.0
        %v3974 = vmax.f32 %v3806, 0.0
        %v3975 = vmax.f32 %v3809, 0.0
        %v3976 = vmax.f32 %v3814, 0.0
        %v3977 = vmax.f32 %v3817, 0.0
        %v3978 = vmax.f32 %v3822, 0.0
        %v3979 = vmax.f32 %v3825, 0.0
        %v3980 = vmax.f32 %v3830, 0.0
        %v3981 = vmax.f32 %v3833, 0.0
        %v3982 = vmax.f32 %v3838, 0.0
        %v3983 = vmax.f32 %v3841, 0.0
        %v3984 = vmax.f32 %v3846, 0.0
        %v3985 = vmax.f32 %v3849, 0.0
        %v3986 = vmax.f32 %v3854, 0.0
        %v3987 = vmax.f32 %v3857, 0.0
        %v3988 = vpack.c.bf16 %v3861, %v3860
        %v3989 = vpack.c.bf16 %v3863, %v3862
        %v3990 = vpack.c.bf16 %v3865, %v3864
        %v3991 = vpack.c.bf16 %v3867, %v3866
        %v3992 = vpack.c.bf16 %v3869, %v3868
        %v3993 = vpack.c.bf16 %v3871, %v3870
        %v3994 = vpack.c.bf16 %v3873, %v3872
        %v3995 = vpack.c.bf16 %v3875, %v3874
        %v3996 = vpack.c.bf16 %v3877, %v3876
        %v3997 = vpack.c.bf16 %v3879, %v3878
        %v3998 = vpack.c.bf16 %v3881, %v3880
        %v3999 = vpack.c.bf16 %v3883, %v3882
        %v4000 = vpack.c.bf16 %v3885, %v3884
        %v4001 = vpack.c.bf16 %v3887, %v3886
        %v4002 = vpack.c.bf16 %v3889, %v3888
        %v4003 = vpack.c.bf16 %v3891, %v3890
        %v4004 = vpack.c.bf16 %v3893, %v3892
        %v4005 = vpack.c.bf16 %v3895, %v3894
        %v4006 = vpack.c.bf16 %v3897, %v3896
        %v4007 = vpack.c.bf16 %v3899, %v3898
        %v4008 = vpack.c.bf16 %v3901, %v3900
        %v4009 = vpack.c.bf16 %v3903, %v3902
        %v4010 = vpack.c.bf16 %v3905, %v3904
        %v4011 = vpack.c.bf16 %v3907, %v3906
        %v4012 = vpack.c.bf16 %v3909, %v3908
        %v4013 = vpack.c.bf16 %v3911, %v3910
        %v4014 = vpack.c.bf16 %v3913, %v3912
        %v4015 = vpack.c.bf16 %v3915, %v3914
        %v4016 = vpack.c.bf16 %v3917, %v3916
        %v4017 = vpack.c.bf16 %v3919, %v3918
        %v4018 = vpack.c.bf16 %v3921, %v3920
        %v4019 = vpack.c.bf16 %v3923, %v3922
        %v4020 = vpack.c.bf16 %v3925, %v3924
        %v4021 = vpack.c.bf16 %v3927, %v3926
        %v4022 = vpack.c.bf16 %v3929, %v3928
        %v4023 = vpack.c.bf16 %v3931, %v3930
        %v4024 = vpack.c.bf16 %v3933, %v3932
        %v4025 = vpack.c.bf16 %v3935, %v3934
        %v4026 = vpack.c.bf16 %v3937, %v3936
        %v4027 = vpack.c.bf16 %v3939, %v3938
        %v4028 = vpack.c.bf16 %v3941, %v3940
        %v4029 = vpack.c.bf16 %v3943, %v3942
        %v4030 = vpack.c.bf16 %v3945, %v3944
        %v4031 = vpack.c.bf16 %v3947, %v3946
        %v4032 = vpack.c.bf16 %v3949, %v3948
        %v4033 = vpack.c.bf16 %v3951, %v3950
        %v4034 = vpack.c.bf16 %v3953, %v3952
        %v4035 = vpack.c.bf16 %v3955, %v3954
        %v4036 = vpack.c.bf16 %v3957, %v3956
        %v4037 = vpack.c.bf16 %v3959, %v3958
        %v4038 = vpack.c.bf16 %v3961, %v3960
        %v4039 = vpack.c.bf16 %v3963, %v3962
        %v4040 = vpack.c.bf16 %v3965, %v3964
        %v4041 = vpack.c.bf16 %v3967, %v3966
        %v4042 = vpack.c.bf16 %v3969, %v3968
        %v4043 = vpack.c.bf16 %v3971, %v3970
        %v4044 = vpack.c.bf16 %v3973, %v3972
        %v4045 = vpack.c.bf16 %v3975, %v3974
        %v4046 = vpack.c.bf16 %v3977, %v3976
        %v4047 = vpack.c.bf16 %v3979, %v3978
        %v4048 = vpack.c.bf16 %v3981, %v3980
        %v4049 = vpack.c.bf16 %v3983, %v3982
        %v4050 = vpack.c.bf16 %v3985, %v3984
        %v4051 = vpack.c.bf16 %v3987, %v3986
        %v4052 = vld [vmem:[%s5] sm:$0xff]
        %v4053 = vld [vmem:[%s5 + $0x8] sm:$0xff]
        %v4054 = vld [vmem:[%s5 + $0x10] sm:$0xff]
        %v4055 = vld [vmem:[%s5 + $0x18] sm:$0xff]
        %v4056 = vld [vmem:[%s5 + $0x20] sm:$0xff]
        %v4057 = vld [vmem:[%s5 + $0x28] sm:$0xff]
        %v4058 = vld [vmem:[%s5 + $0x30] sm:$0xff]
        %v4059 = vld [vmem:[%s5 + $0x38] sm:$0xff]
        %v4060 = vld [vmem:[%s5 + $0x40] sm:$0xff]
        %v4061 = vld [vmem:[%s5 + $0x48] sm:$0xff]
        %v4062 = vld [vmem:[%s5 + $0x50] sm:$0xff]
        %v4063 = vld [vmem:[%s5 + $0x58] sm:$0xff]
        %v4064 = vld [vmem:[%s5 + $0x60] sm:$0xff]
        %v4065 = vld [vmem:[%s5 + $0x68] sm:$0xff]
        %v4066 = vld [vmem:[%s5 + $0x70] sm:$0xff]
        %v4067 = vld [vmem:[%s5 + $0x78] sm:$0xff]
        %v4068 = vld [vmem:[%s5 + $0x80] sm:$0xff]
        %v4069 = vld [vmem:[%s5 + $0x88] sm:$0xff]
        %v4070 = vld [vmem:[%s5 + $0x90] sm:$0xff]
        %v4071 = vld [vmem:[%s5 + $0x98] sm:$0xff]
        %v4072 = vld [vmem:[%s5 + $0xa0] sm:$0xff]
        %v4073 = vld [vmem:[%s5 + $0xa8] sm:$0xff]
        %v4074 = vld [vmem:[%s5 + $0xb0] sm:$0xff]
        %v4075 = vld [vmem:[%s5 + $0xb8] sm:$0xff]
        %v4076 = vld [vmem:[%s5 + $0xc0] sm:$0xff]
        %v4077 = vld [vmem:[%s5 + $0xc8] sm:$0xff]
        %v4078 = vld [vmem:[%s5 + $0xd0] sm:$0xff]
        %v4079 = vld [vmem:[%s5 + $0xd8] sm:$0xff]
        %v4080 = vld [vmem:[%s5 + $0xe0] sm:$0xff]
        %v4081 = vld [vmem:[%s5 + $0xe8] sm:$0xff]
        %v4082 = vld [vmem:[%s5 + $0xf0] sm:$0xff]
        %v4083 = vld [vmem:[%s5 + $0xf8] sm:$0xff]
        %v4084 = vld [vmem:[%s5 + $0x100] sm:$0xff]
        %v4085 = vld [vmem:[%s5 + $0x108] sm:$0xff]
        %v4086 = vld [vmem:[%s5 + $0x110] sm:$0xff]
        %v4087 = vld [vmem:[%s5 + $0x118] sm:$0xff]
        %v4088 = vld [vmem:[%s5 + $0x120] sm:$0xff]
        %v4089 = vld [vmem:[%s5 + $0x128] sm:$0xff]
        %v4090 = vld [vmem:[%s5 + $0x130] sm:$0xff]
        %v4091 = vld [vmem:[%s5 + $0x138] sm:$0xff]
        %v4092 = vld [vmem:[%s5 + $0x140] sm:$0xff]
        %v4093 = vld [vmem:[%s5 + $0x148] sm:$0xff]
        %v4094 = vld [vmem:[%s5 + $0x150] sm:$0xff]
        %v4095 = vld [vmem:[%s5 + $0x158] sm:$0xff]
        %v4096 = vld [vmem:[%s5 + $0x160] sm:$0xff]
        %v4097 = vld [vmem:[%s5 + $0x168] sm:$0xff]
        %v4098 = vld [vmem:[%s5 + $0x170] sm:$0xff]
        %v4099 = vld [vmem:[%s5 + $0x178] sm:$0xff]
        %v4100 = vld [vmem:[%s5 + $0x180] sm:$0xff]
        %v4101 = vld [vmem:[%s5 + $0x188] sm:$0xff]
        %v4102 = vld [vmem:[%s5 + $0x190] sm:$0xff]
        %v4103 = vld [vmem:[%s5 + $0x198] sm:$0xff]
        %v4104 = vld [vmem:[%s5 + $0x1a0] sm:$0xff]
        %v4105 = vld [vmem:[%s5 + $0x1a8] sm:$0xff]
        %v4106 = vld [vmem:[%s5 + $0x1b0] sm:$0xff]
        %v4107 = vld [vmem:[%s5 + $0x1b8] sm:$0xff]
        %v4108 = vld [vmem:[%s5 + $0x1c0] sm:$0xff]
        %v4109 = vld [vmem:[%s5 + $0x1c8] sm:$0xff]
        %v4110 = vld [vmem:[%s5 + $0x1d0] sm:$0xff]
        %v4111 = vld [vmem:[%s5 + $0x1d8] sm:$0xff]
        %v4112 = vld [vmem:[%s5 + $0x1e0] sm:$0xff]
        %v4113 = vld [vmem:[%s5 + $0x1e8] sm:$0xff]
        %v4114 = vld [vmem:[%s5 + $0x1f0] sm:$0xff]
        %v4115 = vld [vmem:[%s5 + $0x1f8] sm:$0xff]
        %v4116 = vld [vmem:[%s6] sm:$0xff]
        %v4118 = vlaneseq
        %v4119 = vshrl.u32 %v4118, 7
        %v4120 = vsub.s32 0, %v4119
        %v4121 = vrot.slane %v4116, %v4120
        %v4122 = vlaneseq
        %v4123 = vshrl.u32 %v4122, 7
        %v4124 = vsub.s32 1, %v4123
        %v4125 = vrot.slane %v4116, %v4124
        %v4126 = vlaneseq
        %v4127 = vshrl.u32 %v4126, 7
        %v4128 = vsub.s32 2, %v4127
        %v4129 = vrot.slane %v4116, %v4128
        %v4130 = vlaneseq
        %v4131 = vshrl.u32 %v4130, 7
        %v4132 = vsub.s32 3, %v4131
        %v4133 = vrot.slane %v4116, %v4132
        %v4134 = vlaneseq
        %v4135 = vshrl.u32 %v4134, 7
        %v4136 = vsub.s32 4, %v4135
        %v4137 = vrot.slane %v4116, %v4136
        %v4138 = vlaneseq
        %v4139 = vshrl.u32 %v4138, 7
        %v4140 = vsub.s32 5, %v4139
        %v4141 = vrot.slane %v4116, %v4140
        %v4142 = vlaneseq
        %v4143 = vshrl.u32 %v4142, 7
        %v4144 = vsub.s32 6, %v4143
        %v4145 = vrot.slane %v4116, %v4144
        %v4146 = vlaneseq
        %v4147 = vshrl.u32 %v4146, 7
        %v4148 = vsub.s32 7, %v4147
        %v4149 = vrot.slane %v4116, %v4148
        %v4222 = vunpack.c.l.b16 %v4052
        %v4223 = vunpack.c.h.b16 %v4052
        %v4224 = vunpack.c.l.b16 %v4053
        %v4225 = vunpack.c.h.b16 %v4053
        %v4226 = vunpack.c.l.b16 %v4054
        %v4227 = vunpack.c.h.b16 %v4054
        %v4228 = vunpack.c.l.b16 %v4055
        %v4229 = vunpack.c.h.b16 %v4055
        %v4230 = vunpack.c.l.b16 %v4056
        %v4231 = vunpack.c.h.b16 %v4056
        %v4232 = vunpack.c.l.b16 %v4057
        %v4233 = vunpack.c.h.b16 %v4057
        %v4234 = vunpack.c.l.b16 %v4058
        %v4235 = vunpack.c.h.b16 %v4058
        %v4236 = vunpack.c.l.b16 %v4059
        %v4237 = vunpack.c.h.b16 %v4059
        %v4238 = vunpack.c.l.b16 %v4060
        %v4239 = vunpack.c.h.b16 %v4060
        %v4240 = vunpack.c.l.b16 %v4061
        %v4241 = vunpack.c.h.b16 %v4061
        %v4242 = vunpack.c.l.b16 %v4062
        %v4243 = vunpack.c.h.b16 %v4062
        %v4244 = vunpack.c.l.b16 %v4063
        %v4245 = vunpack.c.h.b16 %v4063
        %v4246 = vunpack.c.l.b16 %v4064
        %v4247 = vunpack.c.h.b16 %v4064
        %v4248 = vunpack.c.l.b16 %v4065
        %v4249 = vunpack.c.h.b16 %v4065
        %v4250 = vunpack.c.l.b16 %v4066
        %v4251 = vunpack.c.h.b16 %v4066
        %v4252 = vunpack.c.l.b16 %v4067
        %v4253 = vunpack.c.h.b16 %v4067
        %v4254 = vunpack.c.l.b16 %v4068
        %v4255 = vunpack.c.h.b16 %v4068
        %v4256 = vunpack.c.l.b16 %v4069
        %v4257 = vunpack.c.h.b16 %v4069
        %v4258 = vunpack.c.l.b16 %v4070
        %v4259 = vunpack.c.h.b16 %v4070
        %v4260 = vunpack.c.l.b16 %v4071
        %v4261 = vunpack.c.h.b16 %v4071
        %v4262 = vunpack.c.l.b16 %v4072
        %v4263 = vunpack.c.h.b16 %v4072
        %v4264 = vunpack.c.l.b16 %v4073
        %v4265 = vunpack.c.h.b16 %v4073
        %v4266 = vunpack.c.l.b16 %v4074
        %v4267 = vunpack.c.h.b16 %v4074
        %v4268 = vunpack.c.l.b16 %v4075
        %v4269 = vunpack.c.h.b16 %v4075
        %v4270 = vunpack.c.l.b16 %v4076
        %v4271 = vunpack.c.h.b16 %v4076
        %v4272 = vunpack.c.l.b16 %v4077
        %v4273 = vunpack.c.h.b16 %v4077
        %v4274 = vunpack.c.l.b16 %v4078
        %v4275 = vunpack.c.h.b16 %v4078
        %v4276 = vunpack.c.l.b16 %v4079
        %v4277 = vunpack.c.h.b16 %v4079
        %v4278 = vunpack.c.l.b16 %v4080
        %v4279 = vunpack.c.h.b16 %v4080
        %v4280 = vunpack.c.l.b16 %v4081
        %v4281 = vunpack.c.h.b16 %v4081
        %v4282 = vunpack.c.l.b16 %v4082
        %v4283 = vunpack.c.h.b16 %v4082
        %v4284 = vunpack.c.l.b16 %v4083
        %v4285 = vunpack.c.h.b16 %v4083
        %v4286 = vunpack.c.l.b16 %v4084
        %v4287 = vunpack.c.h.b16 %v4084
        %v4288 = vunpack.c.l.b16 %v4085
        %v4289 = vunpack.c.h.b16 %v4085
        %v4290 = vunpack.c.l.b16 %v4086
        %v4291 = vunpack.c.h.b16 %v4086
        %v4292 = vunpack.c.l.b16 %v4087
        %v4293 = vunpack.c.h.b16 %v4087
        %v4294 = vunpack.c.l.b16 %v4088
        %v4295 = vunpack.c.h.b16 %v4088
        %v4296 = vunpack.c.l.b16 %v4089
        %v4297 = vunpack.c.h.b16 %v4089
        %v4298 = vunpack.c.l.b16 %v4090
        %v4299 = vunpack.c.h.b16 %v4090
        %v4300 = vunpack.c.l.b16 %v4091
        %v4301 = vunpack.c.h.b16 %v4091
        %v4302 = vunpack.c.l.b16 %v4092
        %v4303 = vunpack.c.h.b16 %v4092
        %v4304 = vunpack.c.l.b16 %v4093
        %v4305 = vunpack.c.h.b16 %v4093
        %v4306 = vunpack.c.l.b16 %v4094
        %v4307 = vunpack.c.h.b16 %v4094
        %v4308 = vunpack.c.l.b16 %v4095
        %v4309 = vunpack.c.h.b16 %v4095
        %v4310 = vunpack.c.l.b16 %v4096
        %v4311 = vunpack.c.h.b16 %v4096
        %v4312 = vunpack.c.l.b16 %v4097
        %v4313 = vunpack.c.h.b16 %v4097
        %v4314 = vunpack.c.l.b16 %v4098
        %v4315 = vunpack.c.h.b16 %v4098
        %v4316 = vunpack.c.l.b16 %v4099
        %v4317 = vunpack.c.h.b16 %v4099
        %v4318 = vunpack.c.l.b16 %v4100
        %v4319 = vunpack.c.h.b16 %v4100
        %v4320 = vunpack.c.l.b16 %v4101
        %v4321 = vunpack.c.h.b16 %v4101
        %v4322 = vunpack.c.l.b16 %v4102
        %v4323 = vunpack.c.h.b16 %v4102
        %v4324 = vunpack.c.l.b16 %v4103
        %v4325 = vunpack.c.h.b16 %v4103
        %v4326 = vunpack.c.l.b16 %v4104
        %v4327 = vunpack.c.h.b16 %v4104
        %v4328 = vunpack.c.l.b16 %v4105
        %v4329 = vunpack.c.h.b16 %v4105
        %v4330 = vunpack.c.l.b16 %v4106
        %v4331 = vunpack.c.h.b16 %v4106
        %v4332 = vunpack.c.l.b16 %v4107
        %v4333 = vunpack.c.h.b16 %v4107
        %v4334 = vunpack.c.l.b16 %v4108
        %v4335 = vunpack.c.h.b16 %v4108
        %v4336 = vunpack.c.l.b16 %v4109
        %v4337 = vunpack.c.h.b16 %v4109
        %v4338 = vunpack.c.l.b16 %v4110
        %v4339 = vunpack.c.h.b16 %v4110
        %v4340 = vunpack.c.l.b16 %v4111
        %v4341 = vunpack.c.h.b16 %v4111
        %v4342 = vunpack.c.l.b16 %v4112
        %v4343 = vunpack.c.h.b16 %v4112
        %v4344 = vunpack.c.l.b16 %v4113
        %v4345 = vunpack.c.h.b16 %v4113
        %v4346 = vunpack.c.l.b16 %v4114
        %v4347 = vunpack.c.h.b16 %v4114
        %v4348 = vunpack.c.l.b16 %v4115
        %v4349 = vunpack.c.h.b16 %v4115
        %v4350 = vpack.c.b16 %v4230, %v4222
        %v4351 = vpack.c.b16 %v4231, %v4223
        %v4352 = vpack.c.b16 %v4232, %v4224
        %v4353 = vpack.c.b16 %v4233, %v4225
        %v4354 = vpack.c.b16 %v4234, %v4226
        %v4355 = vpack.c.b16 %v4235, %v4227
        %v4356 = vpack.c.b16 %v4236, %v4228
        %v4357 = vpack.c.b16 %v4237, %v4229
        %v4358 = vpack.c.b16 %v4246, %v4238
        %v4359 = vpack.c.b16 %v4247, %v4239
        %v4360 = vpack.c.b16 %v4248, %v4240
        %v4361 = vpack.c.b16 %v4249, %v4241
        %v4362 = vpack.c.b16 %v4250, %v4242
        %v4363 = vpack.c.b16 %v4251, %v4243
        %v4364 = vpack.c.b16 %v4252, %v4244
        %v4365 = vpack.c.b16 %v4253, %v4245
        %v4366 = vpack.c.b16 %v4262, %v4254
        %v4367 = vpack.c.b16 %v4263, %v4255
        %v4368 = vpack.c.b16 %v4264, %v4256
        %v4369 = vpack.c.b16 %v4265, %v4257
        %v4370 = vpack.c.b16 %v4266, %v4258
        %v4371 = vpack.c.b16 %v4267, %v4259
        %v4372 = vpack.c.b16 %v4268, %v4260
        %v4373 = vpack.c.b16 %v4269, %v4261
        %v4374 = vpack.c.b16 %v4278, %v4270
        %v4375 = vpack.c.b16 %v4279, %v4271
        %v4376 = vpack.c.b16 %v4280, %v4272
        %v4377 = vpack.c.b16 %v4281, %v4273
        %v4378 = vpack.c.b16 %v4282, %v4274
        %v4379 = vpack.c.b16 %v4283, %v4275
        %v4380 = vpack.c.b16 %v4284, %v4276
        %v4381 = vpack.c.b16 %v4285, %v4277
        %v4382 = vpack.c.b16 %v4294, %v4286
        %v4383 = vpack.c.b16 %v4295, %v4287
        %v4384 = vpack.c.b16 %v4296, %v4288
        %v4385 = vpack.c.b16 %v4297, %v4289
        %v4386 = vpack.c.b16 %v4298, %v4290
        %v4387 = vpack.c.b16 %v4299, %v4291
        %v4388 = vpack.c.b16 %v4300, %v4292
        %v4389 = vpack.c.b16 %v4301, %v4293
        %v4390 = vpack.c.b16 %v4310, %v4302
        %v4391 = vpack.c.b16 %v4311, %v4303
        %v4392 = vpack.c.b16 %v4312, %v4304
        %v4393 = vpack.c.b16 %v4313, %v4305
        %v4394 = vpack.c.b16 %v4314, %v4306
        %v4395 = vpack.c.b16 %v4315, %v4307
        %v4396 = vpack.c.b16 %v4316, %v4308
        %v4397 = vpack.c.b16 %v4317, %v4309
        %v4398 = vpack.c.b16 %v4326, %v4318
        %v4399 = vpack.c.b16 %v4327, %v4319
        %v4400 = vpack.c.b16 %v4328, %v4320
        %v4401 = vpack.c.b16 %v4329, %v4321
        %v4402 = vpack.c.b16 %v4330, %v4322
        %v4403 = vpack.c.b16 %v4331, %v4323
        %v4404 = vpack.c.b16 %v4332, %v4324
        %v4405 = vpack.c.b16 %v4333, %v4325
        %v4406 = vpack.c.b16 %v4342, %v4334
        %v4407 = vpack.c.b16 %v4343, %v4335
        %v4408 = vpack.c.b16 %v4344, %v4336
        %v4409 = vpack.c.b16 %v4345, %v4337
        %v4410 = vpack.c.b16 %v4346, %v4338
        %v4411 = vpack.c.b16 %v4347, %v4339
        %v4412 = vpack.c.b16 %v4348, %v4340
        %v4413 = vpack.c.b16 %v4349, %v4341
        %4478 = vmatprep.subr.bf16.mxu0 %v4351
        %4479 = vmatpush1.bf16.msra.mxu0 %v4350
        %4480 = vmatprep.subr.bf16.mxu0 %v4359
        %4481 = vmatpush1.bf16.msra.mxu0 %v4358
        %4482 = vmatprep.subr.bf16.mxu0 %v4367
        %4483 = vmatpush1.bf16.msra.mxu0 %v4366
        %4484 = vmatprep.subr.bf16.mxu0 %v4375
        %4485 = vmatpush1.bf16.msra.mxu0 %v4374
        %4486 = vmatprep.subr.bf16.mxu0 %v4383
        %4487 = vmatpush1.bf16.msra.mxu0 %v4382
        %4488 = vmatprep.subr.bf16.mxu0 %v4391
        %4489 = vmatpush1.bf16.msra.mxu0 %v4390
        %4490 = vmatprep.subr.bf16.mxu0 %v4399
        %4491 = vmatpush1.bf16.msra.mxu0 %v4398
        %4492 = vmatprep.subr.bf16.mxu0 %v4407
        %4493 = vmatpush1.bf16.msra.mxu0 %v4406
        %4494 = vmatprep.subr.bf16.mxu0 0
        %4495 = vmatpush1.bf16.msra.mxu0 0
        %4496 = vmatprep.subr.bf16.mxu0 0
        %4497 = vmatpush1.bf16.msra.mxu0 0
        %4498 = vmatprep.subr.bf16.mxu0 0
        %4499 = vmatpush1.bf16.msra.mxu0 0
        %4500 = vmatprep.subr.bf16.mxu0 0
        %4501 = vmatpush1.bf16.msra.mxu0 0
        %4502 = vmatprep.subr.bf16.mxu0 0
        %4503 = vmatpush1.bf16.msra.mxu0 0
        %4504 = vmatprep.subr.bf16.mxu0 0
        %4505 = vmatpush1.bf16.msra.mxu0 0
        %4506 = vmatprep.subr.bf16.mxu0 0
        %4507 = vmatpush1.bf16.msra.mxu0 0
        %4508 = vmatprep.subr.bf16.mxu0 0
        %4509 = vmatpush1.bf16.msra.mxu0 0
        %4510 = vmatprep.mubr.bf16.mxu0 0
        %4511 = vmatmul.mubr.bf16.gmra.mrb[0].mxu0 %v3988
        %v4512 = vpop.f32.mrb[0].mxu0
        %v4513 = vadd.f32 %v4121, %v4512
        %v4514 = vpop.f32.mrb[0].mxu0
        %v4515 = vadd.f32 %v4125, %v4514
        %v4516 = vpop.f32.mrb[0].mxu0
        %v4517 = vadd.f32 %v4121, %v4516
        %v4518 = vpop.f32.mrb[0].mxu0
        %v4519 = vadd.f32 %v4125, %v4518
        %4520 = vmatprep.mubr.bf16.mxu0 0
        %4521 = vmatmul.mubr.bf16.gmra.mrb[0].mxu0 %v3989
        %v4522 = vpop.f32.mrb[0].mxu0
        %v4523 = vadd.f32 %v4121, %v4522
        %v4524 = vpop.f32.mrb[0].mxu0
        %v4525 = vadd.f32 %v4125, %v4524
        %v4526 = vpop.f32.mrb[0].mxu0
        %v4527 = vadd.f32 %v4121, %v4526
        %v4528 = vpop.f32.mrb[0].mxu0
        %v4529 = vadd.f32 %v4125, %v4528
        %4530 = vmatprep.mubr.bf16.mxu0 0
        %4531 = vmatmul.mubr.bf16.gmra.mrb[0].mxu0 %v3990
        %v4532 = vpop.f32.mrb[0].mxu0
        %v4533 = vadd.f32 %v4121, %v4532
        %v4534 = vpop.f32.mrb[0].mxu0
        %v4535 = vadd.f32 %v4125, %v4534
        %v4536 = vpop.f32.mrb[0].mxu0
        %v4537 = vadd.f32 %v4121, %v4536
        %v4538 = vpop.f32.mrb[0].mxu0
        %v4539 = vadd.f32 %v4125, %v4538
        %4540 = vmatprep.mubr.bf16.mxu0 0
        %4541 = vmatmul.mubr.bf16.gmra.mrb[0].mxu0 %v3991
        %v4542 = vpop.f32.mrb[0].mxu0
        %v4543 = vadd.f32 %v4121, %v4542
        %v4544 = vpop.f32.mrb[0].mxu0
        %v4545 = vadd.f32 %v4125, %v4544
        %v4546 = vpop.f32.mrb[0].mxu0
        %v4547 = vadd.f32 %v4121, %v4546
        %v4548 = vpop.f32.mrb[0].mxu0
        %v4549 = vadd.f32 %v4125, %v4548
        %4550 = vmatprep.mubr.bf16.mxu0 0
        %4551 = vmatmul.mubr.bf16.gmra.mrb[0].mxu0 %v3992
        %v4552 = vpop.f32.mrb[0].mxu0
        %v4553 = vadd.f32 %v4121, %v4552
        %v4554 = vpop.f32.mrb[0].mxu0
        %v4555 = vadd.f32 %v4125, %v4554
        %v4556 = vpop.f32.mrb[0].mxu0
        %v4557 = vadd.f32 %v4121, %v4556
        %v4558 = vpop.f32.mrb[0].mxu0
        %v4559 = vadd.f32 %v4125, %v4558
        %4560 = vmatprep.mubr.bf16.mxu0 0
        %4561 = vmatmul.mubr.bf16.gmra.mrb[0].mxu0 %v3993
        %v4562 = vpop.f32.mrb[0].mxu0
        %v4563 = vadd.f32 %v4121, %v4562
        %v4564 = vpop.f32.mrb[0].mxu0
        %v4565 = vadd.f32 %v4125, %v4564
        %v4566 = vpop.f32.mrb[0].mxu0
        %v4567 = vadd.f32 %v4121, %v4566
        %v4568 = vpop.f32.mrb[0].mxu0
        %v4569 = vadd.f32 %v4125, %v4568
        %4570 = vmatprep.mubr.bf16.mxu0 0
        %4571 = vmatmul.mubr.bf16.gmra.mrb[0].mxu0 %v3994
        %v4572 = vpop.f32.mrb[0].mxu0
        %v4573 = vadd.f32 %v4121, %v4572
        %v4574 = vpop.f32.mrb[0].mxu0
        %v4575 = vadd.f32 %v4125, %v4574
        %v4576 = vpop.f32.mrb[0].mxu0
        %v4577 = vadd.f32 %v4121, %v4576
        %v4578 = vpop.f32.mrb[0].mxu0
        %v4579 = vadd.f32 %v4125, %v4578
        %4580 = vmatprep.mubr.bf16.mxu0 0
        %4581 = vmatmul.mubr.bf16.gmra.mrb[0].mxu0 %v3995
        %v4582 = vpop.f32.mrb[0].mxu0
        %v4583 = vadd.f32 %v4121, %v4582
        %v4584 = vpop.f32.mrb[0].mxu0
        %v4585 = vadd.f32 %v4125, %v4584
        %v4586 = vpop.f32.mrb[0].mxu0
        %v4587 = vadd.f32 %v4121, %v4586
        %v4588 = vpop.f32.mrb[0].mxu0
        %v4589 = vadd.f32 %v4125, %v4588
        %4590 = vmatprep.mubr.bf16.mxu0 0
        %4591 = vmatmul.mubr.bf16.gmra.mrb[0].mxu0 %v3996
        %v4592 = vpop.f32.mrb[0].mxu0
        %v4593 = vadd.f32 %v4121, %v4592
        %v4594 = vpop.f32.mrb[0].mxu0
        %v4595 = vadd.f32 %v4125, %v4594
        %v4596 = vpop.f32.mrb[0].mxu0
        %v4597 = vadd.f32 %v4121, %v4596
        %v4598 = vpop.f32.mrb[0].mxu0
        %v4599 = vadd.f32 %v4125, %v4598
        %4600 = vmatprep.mubr.bf16.mxu0 0
        %4601 = vmatmul.mubr.bf16.gmra.mrb[0].mxu0 %v3997
        %v4602 = vpop.f32.mrb[0].mxu0
        %v4603 = vadd.f32 %v4121, %v4602
        %v4604 = vpop.f32.mrb[0].mxu0
        %v4605 = vadd.f32 %v4125, %v4604
        %v4606 = vpop.f32.mrb[0].mxu0
        %v4607 = vadd.f32 %v4121, %v4606
        %v4608 = vpop.f32.mrb[0].mxu0
        %v4609 = vadd.f32 %v4125, %v4608
        %4610 = vmatprep.mubr.bf16.mxu0 0
        %4611 = vmatmul.mubr.bf16.gmra.mrb[0].mxu0 %v3998
        %v4612 = vpop.f32.mrb[0].mxu0
        %v4613 = vadd.f32 %v4121, %v4612
        %v4614 = vpop.f32.mrb[0].mxu0
        %v4615 = vadd.f32 %v4125, %v4614
        %v4616 = vpop.f32.mrb[0].mxu0
        %v4617 = vadd.f32 %v4121, %v4616
        %v4618 = vpop.f32.mrb[0].mxu0
        %v4619 = vadd.f32 %v4125, %v4618
        %4620 = vmatprep.mubr.bf16.mxu0 0
        %4621 = vmatmul.mubr.bf16.gmra.mrb[0].mxu0 %v3999
        %v4622 = vpop.f32.mrb[0].mxu0
        %v4623 = vadd.f32 %v4121, %v4622
        %v4624 = vpop.f32.mrb[0].mxu0
        %v4625 = vadd.f32 %v4125, %v4624
        %v4626 = vpop.f32.mrb[0].mxu0
        %v4627 = vadd.f32 %v4121, %v4626
        %v4628 = vpop.f32.mrb[0].mxu0
        %v4629 = vadd.f32 %v4125, %v4628
        %4630 = vmatprep.mubr.bf16.mxu0 0
        %4631 = vmatmul.mubr.bf16.gmra.mrb[0].mxu0 %v4000
        %v4632 = vpop.f32.mrb[0].mxu0
        %v4633 = vadd.f32 %v4121, %v4632
        %v4634 = vpop.f32.mrb[0].mxu0
        %v4635 = vadd.f32 %v4125, %v4634
        %v4636 = vpop.f32.mrb[0].mxu0
        %v4637 = vadd.f32 %v4121, %v4636
        %v4638 = vpop.f32.mrb[0].mxu0
        %v4639 = vadd.f32 %v4125, %v4638
        %4640 = vmatprep.mubr.bf16.mxu0 0
        %4641 = vmatmul.mubr.bf16.gmra.mrb[0].mxu0 %v4001
        %v4642 = vpop.f32.mrb[0].mxu0
        %v4643 = vadd.f32 %v4121, %v4642
        %v4644 = vpop.f32.mrb[0].mxu0
        %v4645 = vadd.f32 %v4125, %v4644
        %v4646 = vpop.f32.mrb[0].mxu0
        %v4647 = vadd.f32 %v4121, %v4646
        %v4648 = vpop.f32.mrb[0].mxu0
        %v4649 = vadd.f32 %v4125, %v4648
        %4650 = vmatprep.mubr.bf16.mxu0 0
        %4651 = vmatmul.mubr.bf16.gmra.mrb[0].mxu0 %v4002
        %v4652 = vpop.f32.mrb[0].mxu0
        %v4653 = vadd.f32 %v4121, %v4652
        %v4654 = vpop.f32.mrb[0].mxu0
        %v4655 = vadd.f32 %v4125, %v4654
        %v4656 = vpop.f32.mrb[0].mxu0
        %v4657 = vadd.f32 %v4121, %v4656
        %v4658 = vpop.f32.mrb[0].mxu0
        %v4659 = vadd.f32 %v4125, %v4658
        %4660 = vmatprep.mubr.bf16.mxu0 0
        %4661 = vmatmul.mubr.bf16.gmra.mrb[0].mxu0 %v4003
        %v4662 = vpop.f32.mrb[0].mxu0
        %v4663 = vadd.f32 %v4121, %v4662
        %v4664 = vpop.f32.mrb[0].mxu0
        %v4665 = vadd.f32 %v4125, %v4664
        %v4666 = vpop.f32.mrb[0].mxu0
        %v4667 = vadd.f32 %v4121, %v4666
        %v4668 = vpop.f32.mrb[0].mxu0
        %v4669 = vadd.f32 %v4125, %v4668
        %4670 = vmatprep.mubr.bf16.mxu0 0
        %4671 = vmatmul.mubr.bf16.gmra.mrb[0].mxu0 %v4004
        %v4672 = vpop.f32.mrb[0].mxu0
        %v4673 = vadd.f32 %v4121, %v4672
        %v4674 = vpop.f32.mrb[0].mxu0
        %v4675 = vadd.f32 %v4125, %v4674
        %v4676 = vpop.f32.mrb[0].mxu0
        %v4677 = vadd.f32 %v4121, %v4676
        %v4678 = vpop.f32.mrb[0].mxu0
        %v4679 = vadd.f32 %v4125, %v4678
        %4680 = vmatprep.mubr.bf16.mxu0 0
        %4681 = vmatmul.mubr.bf16.gmra.mrb[0].mxu0 %v4005
        %v4682 = vpop.f32.mrb[0].mxu0
        %v4683 = vadd.f32 %v4121, %v4682
        %v4684 = vpop.f32.mrb[0].mxu0
        %v4685 = vadd.f32 %v4125, %v4684
        %v4686 = vpop.f32.mrb[0].mxu0
        %v4687 = vadd.f32 %v4121, %v4686
        %v4688 = vpop.f32.mrb[0].mxu0
        %v4689 = vadd.f32 %v4125, %v4688
        %4690 = vmatprep.mubr.bf16.mxu0 0
        %4691 = vmatmul.mubr.bf16.gmra.mrb[0].mxu0 %v4006
        %v4692 = vpop.f32.mrb[0].mxu0
        %v4693 = vadd.f32 %v4121, %v4692
        %v4694 = vpop.f32.mrb[0].mxu0
        %v4695 = vadd.f32 %v4125, %v4694
        %v4696 = vpop.f32.mrb[0].mxu0
        %v4697 = vadd.f32 %v4121, %v4696
        %v4698 = vpop.f32.mrb[0].mxu0
        %v4699 = vadd.f32 %v4125, %v4698
        %4700 = vmatprep.mubr.bf16.mxu0 0
        %4701 = vmatmul.mubr.bf16.gmra.mrb[0].mxu0 %v4007
        %v4702 = vpop.f32.mrb[0].mxu0
        %v4703 = vadd.f32 %v4121, %v4702
        %v4704 = vpop.f32.mrb[0].mxu0
        %v4705 = vadd.f32 %v4125, %v4704
        %v4706 = vpop.f32.mrb[0].mxu0
        %v4707 = vadd.f32 %v4121, %v4706
        %v4708 = vpop.f32.mrb[0].mxu0
        %v4709 = vadd.f32 %v4125, %v4708
        %4710 = vmatprep.mubr.bf16.mxu0 0
        %4711 = vmatmul.mubr.bf16.gmra.mrb[0].mxu0 %v4008
        %v4712 = vpop.f32.mrb[0].mxu0
        %v4713 = vadd.f32 %v4121, %v4712
        %v4714 = vpop.f32.mrb[0].mxu0
        %v4715 = vadd.f32 %v4125, %v4714
        %v4716 = vpop.f32.mrb[0].mxu0
        %v4717 = vadd.f32 %v4121, %v4716
        %v4718 = vpop.f32.mrb[0].mxu0
        %v4719 = vadd.f32 %v4125, %v4718
        %4720 = vmatprep.mubr.bf16.mxu0 0
        %4721 = vmatmul.mubr.bf16.gmra.mrb[0].mxu0 %v4009
        %v4722 = vpop.f32.mrb[0].mxu0
        %v4723 = vadd.f32 %v4121, %v4722
        %v4724 = vpop.f32.mrb[0].mxu0
        %v4725 = vadd.f32 %v4125, %v4724
        %v4726 = vpop.f32.mrb[0].mxu0
        %v4727 = vadd.f32 %v4121, %v4726
        %v4728 = vpop.f32.mrb[0].mxu0
        %v4729 = vadd.f32 %v4125, %v4728
        %4730 = vmatprep.mubr.bf16.mxu0 0
        %4731 = vmatmul.mubr.bf16.gmra.mrb[0].mxu0 %v4010
        %v4732 = vpop.f32.mrb[0].mxu0
        %v4733 = vadd.f32 %v4121, %v4732
        %v4734 = vpop.f32.mrb[0].mxu0
        %v4735 = vadd.f32 %v4125, %v4734
        %v4736 = vpop.f32.mrb[0].mxu0
        %v4737 = vadd.f32 %v4121, %v4736
        %v4738 = vpop.f32.mrb[0].mxu0
        %v4739 = vadd.f32 %v4125, %v4738
        %4740 = vmatprep.mubr.bf16.mxu0 0
        %4741 = vmatmul.mubr.bf16.gmra.mrb[0].mxu0 %v4011
        %v4742 = vpop.f32.mrb[0].mxu0
        %v4743 = vadd.f32 %v4121, %v4742
        %v4744 = vpop.f32.mrb[0].mxu0
        %v4745 = vadd.f32 %v4125, %v4744
        %v4746 = vpop.f32.mrb[0].mxu0
        %v4747 = vadd.f32 %v4121, %v4746
        %v4748 = vpop.f32.mrb[0].mxu0
        %v4749 = vadd.f32 %v4125, %v4748
        %4750 = vmatprep.mubr.bf16.mxu0 0
        %4751 = vmatmul.mubr.bf16.gmra.mrb[0].mxu0 %v4012
        %v4752 = vpop.f32.mrb[0].mxu0
        %v4753 = vadd.f32 %v4121, %v4752
        %v4754 = vpop.f32.mrb[0].mxu0
        %v4755 = vadd.f32 %v4125, %v4754
        %v4756 = vpop.f32.mrb[0].mxu0
        %v4757 = vadd.f32 %v4121, %v4756
        %v4758 = vpop.f32.mrb[0].mxu0
        %v4759 = vadd.f32 %v4125, %v4758
        %4760 = vmatprep.mubr.bf16.mxu0 0
        %4761 = vmatmul.mubr.bf16.gmra.mrb[0].mxu0 %v4013
        %v4762 = vpop.f32.mrb[0].mxu0
        %v4763 = vadd.f32 %v4121, %v4762
        %v4764 = vpop.f32.mrb[0].mxu0
        %v4765 = vadd.f32 %v4125, %v4764
        %v4766 = vpop.f32.mrb[0].mxu0
        %v4767 = vadd.f32 %v4121, %v4766
        %v4768 = vpop.f32.mrb[0].mxu0
        %v4769 = vadd.f32 %v4125, %v4768
        %4770 = vmatprep.mubr.bf16.mxu0 0
        %4771 = vmatmul.mubr.bf16.gmra.mrb[0].mxu0 %v4014
        %v4772 = vpop.f32.mrb[0].mxu0
        %v4773 = vadd.f32 %v4121, %v4772
        %v4774 = vpop.f32.mrb[0].mxu0
        %v4775 = vadd.f32 %v4125, %v4774
        %v4776 = vpop.f32.mrb[0].mxu0
        %v4777 = vadd.f32 %v4121, %v4776
        %v4778 = vpop.f32.mrb[0].mxu0
        %v4779 = vadd.f32 %v4125, %v4778
        %4780 = vmatprep.mubr.bf16.mxu0 0
        %4781 = vmatmul.mubr.bf16.gmra.mrb[0].mxu0 %v4015
        %v4782 = vpop.f32.mrb[0].mxu0
        %v4783 = vadd.f32 %v4121, %v4782
        %v4784 = vpop.f32.mrb[0].mxu0
        %v4785 = vadd.f32 %v4125, %v4784
        %v4786 = vpop.f32.mrb[0].mxu0
        %v4787 = vadd.f32 %v4121, %v4786
        %v4788 = vpop.f32.mrb[0].mxu0
        %v4789 = vadd.f32 %v4125, %v4788
        %4790 = vmatprep.mubr.bf16.mxu0 0
        %4791 = vmatmul.mubr.bf16.gmra.mrb[0].mxu0 %v4016
        %v4792 = vpop.f32.mrb[0].mxu0
        %v4793 = vadd.f32 %v4121, %v4792
        %v4794 = vpop.f32.mrb[0].mxu0
        %v4795 = vadd.f32 %v4125, %v4794
        %v4796 = vpop.f32.mrb[0].mxu0
        %v4797 = vadd.f32 %v4121, %v4796
        %v4798 = vpop.f32.mrb[0].mxu0
        %v4799 = vadd.f32 %v4125, %v4798
        %4800 = vmatprep.mubr.bf16.mxu0 0
        %4801 = vmatmul.mubr.bf16.gmra.mrb[0].mxu0 %v4017
        %v4802 = vpop.f32.mrb[0].mxu0
        %v4803 = vadd.f32 %v4121, %v4802
        %v4804 = vpop.f32.mrb[0].mxu0
        %v4805 = vadd.f32 %v4125, %v4804
        %v4806 = vpop.f32.mrb[0].mxu0
        %v4807 = vadd.f32 %v4121, %v4806
        %v4808 = vpop.f32.mrb[0].mxu0
        %v4809 = vadd.f32 %v4125, %v4808
        %4810 = vmatprep.mubr.bf16.mxu0 0
        %4811 = vmatmul.mubr.bf16.gmra.mrb[0].mxu0 %v4018
        %v4812 = vpop.f32.mrb[0].mxu0
        %v4813 = vadd.f32 %v4121, %v4812
        %v4814 = vpop.f32.mrb[0].mxu0
        %v4815 = vadd.f32 %v4125, %v4814
        %v4816 = vpop.f32.mrb[0].mxu0
        %v4817 = vadd.f32 %v4121, %v4816
        %v4818 = vpop.f32.mrb[0].mxu0
        %v4819 = vadd.f32 %v4125, %v4818
        %4820 = vmatprep.mubr.bf16.mxu0 0
        %4821 = vmatmul.mubr.bf16.gmra.mrb[0].mxu0 %v4019
        %v4822 = vpop.f32.mrb[0].mxu0
        %v4823 = vadd.f32 %v4121, %v4822
        %v4824 = vpop.f32.mrb[0].mxu0
        %v4825 = vadd.f32 %v4125, %v4824
        %v4826 = vpop.f32.mrb[0].mxu0
        %v4827 = vadd.f32 %v4121, %v4826
        %v4828 = vpop.f32.mrb[0].mxu0
        %v4829 = vadd.f32 %v4125, %v4828
        %4830 = vmatprep.mubr.bf16.mxu0 0
        %4831 = vmatmul.mubr.bf16.gmra.mrb[0].mxu0 %v4020
        %v4832 = vpop.f32.mrb[0].mxu0
        %v4833 = vadd.f32 %v4121, %v4832
        %v4834 = vpop.f32.mrb[0].mxu0
        %v4835 = vadd.f32 %v4125, %v4834
        %v4836 = vpop.f32.mrb[0].mxu0
        %v4837 = vadd.f32 %v4121, %v4836
        %v4838 = vpop.f32.mrb[0].mxu0
        %v4839 = vadd.f32 %v4125, %v4838
        %4840 = vmatprep.mubr.bf16.mxu0 0
        %4841 = vmatmul.mubr.bf16.gmra.mrb[0].mxu0 %v4021
        %v4842 = vpop.f32.mrb[0].mxu0
        %v4843 = vadd.f32 %v4121, %v4842
        %v4844 = vpop.f32.mrb[0].mxu0
        %v4845 = vadd.f32 %v4125, %v4844
        %v4846 = vpop.f32.mrb[0].mxu0
        %v4847 = vadd.f32 %v4121, %v4846
        %v4848 = vpop.f32.mrb[0].mxu0
        %v4849 = vadd.f32 %v4125, %v4848
        %4850 = vmatprep.mubr.bf16.mxu0 0
        %4851 = vmatmul.mubr.bf16.gmra.mrb[0].mxu0 %v4022
        %v4852 = vpop.f32.mrb[0].mxu0
        %v4853 = vadd.f32 %v4121, %v4852
        %v4854 = vpop.f32.mrb[0].mxu0
        %v4855 = vadd.f32 %v4125, %v4854
        %v4856 = vpop.f32.mrb[0].mxu0
        %v4857 = vadd.f32 %v4121, %v4856
        %v4858 = vpop.f32.mrb[0].mxu0
        %v4859 = vadd.f32 %v4125, %v4858
        %4860 = vmatprep.mubr.bf16.mxu0 0
        %4861 = vmatmul.mubr.bf16.gmra.mrb[0].mxu0 %v4023
        %v4862 = vpop.f32.mrb[0].mxu0
        %v4863 = vadd.f32 %v4121, %v4862
        %v4864 = vpop.f32.mrb[0].mxu0
        %v4865 = vadd.f32 %v4125, %v4864
        %v4866 = vpop.f32.mrb[0].mxu0
        %v4867 = vadd.f32 %v4121, %v4866
        %v4868 = vpop.f32.mrb[0].mxu0
        %v4869 = vadd.f32 %v4125, %v4868
        %4870 = vmatprep.mubr.bf16.mxu0 0
        %4871 = vmatmul.mubr.bf16.gmra.mrb[0].mxu0 %v4024
        %v4872 = vpop.f32.mrb[0].mxu0
        %v4873 = vadd.f32 %v4121, %v4872
        %v4874 = vpop.f32.mrb[0].mxu0
        %v4875 = vadd.f32 %v4125, %v4874
        %v4876 = vpop.f32.mrb[0].mxu0
        %v4877 = vadd.f32 %v4121, %v4876
        %v4878 = vpop.f32.mrb[0].mxu0
        %v4879 = vadd.f32 %v4125, %v4878
        %4880 = vmatprep.mubr.bf16.mxu0 0
        %4881 = vmatmul.mubr.bf16.gmra.mrb[0].mxu0 %v4025
        %v4882 = vpop.f32.mrb[0].mxu0
        %v4883 = vadd.f32 %v4121, %v4882
        %v4884 = vpop.f32.mrb[0].mxu0
        %v4885 = vadd.f32 %v4125, %v4884
        %v4886 = vpop.f32.mrb[0].mxu0
        %v4887 = vadd.f32 %v4121, %v4886
        %v4888 = vpop.f32.mrb[0].mxu0
        %v4889 = vadd.f32 %v4125, %v4888
        %4890 = vmatprep.mubr.bf16.mxu0 0
        %4891 = vmatmul.mubr.bf16.gmra.mrb[0].mxu0 %v4026
        %v4892 = vpop.f32.mrb[0].mxu0
        %v4893 = vadd.f32 %v4121, %v4892
        %v4894 = vpop.f32.mrb[0].mxu0
        %v4895 = vadd.f32 %v4125, %v4894
        %v4896 = vpop.f32.mrb[0].mxu0
        %v4897 = vadd.f32 %v4121, %v4896
        %v4898 = vpop.f32.mrb[0].mxu0
        %v4899 = vadd.f32 %v4125, %v4898
        %4900 = vmatprep.mubr.bf16.mxu0 0
        %4901 = vmatmul.mubr.bf16.gmra.mrb[0].mxu0 %v4027
        %v4902 = vpop.f32.mrb[0].mxu0
        %v4903 = vadd.f32 %v4121, %v4902
        %v4904 = vpop.f32.mrb[0].mxu0
        %v4905 = vadd.f32 %v4125, %v4904
        %v4906 = vpop.f32.mrb[0].mxu0
        %v4907 = vadd.f32 %v4121, %v4906
        %v4908 = vpop.f32.mrb[0].mxu0
        %v4909 = vadd.f32 %v4125, %v4908
        %4910 = vmatprep.mubr.bf16.mxu0 0
        %4911 = vmatmul.mubr.bf16.gmra.mrb[0].mxu0 %v4028
        %v4912 = vpop.f32.mrb[0].mxu0
        %v4913 = vadd.f32 %v4121, %v4912
        %v4914 = vpop.f32.mrb[0].mxu0
        %v4915 = vadd.f32 %v4125, %v4914
        %v4916 = vpop.f32.mrb[0].mxu0
        %v4917 = vadd.f32 %v4121, %v4916
        %v4918 = vpop.f32.mrb[0].mxu0
        %v4919 = vadd.f32 %v4125, %v4918
        %4920 = vmatprep.mubr.bf16.mxu0 0
        %4921 = vmatmul.mubr.bf16.gmra.mrb[0].mxu0 %v4029
        %v4922 = vpop.f32.mrb[0].mxu0
        %v4923 = vadd.f32 %v4121, %v4922
        %v4924 = vpop.f32.mrb[0].mxu0
        %v4925 = vadd.f32 %v4125, %v4924
        %v4926 = vpop.f32.mrb[0].mxu0
        %v4927 = vadd.f32 %v4121, %v4926
        %v4928 = vpop.f32.mrb[0].mxu0
        %v4929 = vadd.f32 %v4125, %v4928
        %4930 = vmatprep.mubr.bf16.mxu0 0
        %4931 = vmatmul.mubr.bf16.gmra.mrb[0].mxu0 %v4030
        %v4932 = vpop.f32.mrb[0].mxu0
        %v4933 = vadd.f32 %v4121, %v4932
        %v4934 = vpop.f32.mrb[0].mxu0
        %v4935 = vadd.f32 %v4125, %v4934
        %v4936 = vpop.f32.mrb[0].mxu0
        %v4937 = vadd.f32 %v4121, %v4936
        %v4938 = vpop.f32.mrb[0].mxu0
        %v4939 = vadd.f32 %v4125, %v4938
        %4940 = vmatprep.mubr.bf16.mxu0 0
        %4941 = vmatmul.mubr.bf16.gmra.mrb[0].mxu0 %v4031
        %v4942 = vpop.f32.mrb[0].mxu0
        %v4943 = vadd.f32 %v4121, %v4942
        %v4944 = vpop.f32.mrb[0].mxu0
        %v4945 = vadd.f32 %v4125, %v4944
        %v4946 = vpop.f32.mrb[0].mxu0
        %v4947 = vadd.f32 %v4121, %v4946
        %v4948 = vpop.f32.mrb[0].mxu0
        %v4949 = vadd.f32 %v4125, %v4948
        %4950 = vmatprep.mubr.bf16.mxu0 0
        %4951 = vmatmul.mubr.bf16.gmra.mrb[0].mxu0 %v4032
        %v4952 = vpop.f32.mrb[0].mxu0
        %v4953 = vadd.f32 %v4121, %v4952
        %v4954 = vpop.f32.mrb[0].mxu0
        %v4955 = vadd.f32 %v4125, %v4954
        %v4956 = vpop.f32.mrb[0].mxu0
        %v4957 = vadd.f32 %v4121, %v4956
        %v4958 = vpop.f32.mrb[0].mxu0
        %v4959 = vadd.f32 %v4125, %v4958
        %4960 = vmatprep.mubr.bf16.mxu0 0
        %4961 = vmatmul.mubr.bf16.gmra.mrb[0].mxu0 %v4033
        %v4962 = vpop.f32.mrb[0].mxu0
        %v4963 = vadd.f32 %v4121, %v4962
        %v4964 = vpop.f32.mrb[0].mxu0
        %v4965 = vadd.f32 %v4125, %v4964
        %v4966 = vpop.f32.mrb[0].mxu0
        %v4967 = vadd.f32 %v4121, %v4966
        %v4968 = vpop.f32.mrb[0].mxu0
        %v4969 = vadd.f32 %v4125, %v4968
        %4970 = vmatprep.mubr.bf16.mxu0 0
        %4971 = vmatmul.mubr.bf16.gmra.mrb[0].mxu0 %v4034
        %v4972 = vpop.f32.mrb[0].mxu0
        %v4973 = vadd.f32 %v4121, %v4972
        %v4974 = vpop.f32.mrb[0].mxu0
        %v4975 = vadd.f32 %v4125, %v4974
        %v4976 = vpop.f32.mrb[0].mxu0
        %v4977 = vadd.f32 %v4121, %v4976
        %v4978 = vpop.f32.mrb[0].mxu0
        %v4979 = vadd.f32 %v4125, %v4978
        %4980 = vmatprep.mubr.bf16.mxu0 0
        %4981 = vmatmul.mubr.bf16.gmra.mrb[0].mxu0 %v4035
        %v4982 = vpop.f32.mrb[0].mxu0
        %v4983 = vadd.f32 %v4121, %v4982
        %v4984 = vpop.f32.mrb[0].mxu0
        %v4985 = vadd.f32 %v4125, %v4984
        %v4986 = vpop.f32.mrb[0].mxu0
        %v4987 = vadd.f32 %v4121, %v4986
        %v4988 = vpop.f32.mrb[0].mxu0
        %v4989 = vadd.f32 %v4125, %v4988
        %4990 = vmatprep.mubr.bf16.mxu0 0
        %4991 = vmatmul.mubr.bf16.gmra.mrb[0].mxu0 %v4036
        %v4992 = vpop.f32.mrb[0].mxu0
        %v4993 = vadd.f32 %v4121, %v4992
        %v4994 = vpop.f32.mrb[0].mxu0
        %v4995 = vadd.f32 %v4125, %v4994
        %v4996 = vpop.f32.mrb[0].mxu0
        %v4997 = vadd.f32 %v4121, %v4996
        %v4998 = vpop.f32.mrb[0].mxu0
        %v4999 = vadd.f32 %v4125, %v4998
        %5000 = vmatprep.mubr.bf16.mxu0 0
        %5001 = vmatmul.mubr.bf16.gmra.mrb[0].mxu0 %v4037
        %v5002 = vpop.f32.mrb[0].mxu0
        %v5003 = vadd.f32 %v4121, %v5002
        %v5004 = vpop.f32.mrb[0].mxu0
        %v5005 = vadd.f32 %v4125, %v5004
        %v5006 = vpop.f32.mrb[0].mxu0
        %v5007 = vadd.f32 %v4121, %v5006
        %v5008 = vpop.f32.mrb[0].mxu0
        %v5009 = vadd.f32 %v4125, %v5008
        %5010 = vmatprep.mubr.bf16.mxu0 0
        %5011 = vmatmul.mubr.bf16.gmra.mrb[0].mxu0 %v4038
        %v5012 = vpop.f32.mrb[0].mxu0
        %v5013 = vadd.f32 %v4121, %v5012
        %v5014 = vpop.f32.mrb[0].mxu0
        %v5015 = vadd.f32 %v4125, %v5014
        %v5016 = vpop.f32.mrb[0].mxu0
        %v5017 = vadd.f32 %v4121, %v5016
        %v5018 = vpop.f32.mrb[0].mxu0
        %v5019 = vadd.f32 %v4125, %v5018
        %5020 = vmatprep.mubr.bf16.mxu0 0
        %5021 = vmatmul.mubr.bf16.gmra.mrb[0].mxu0 %v4039
        %v5022 = vpop.f32.mrb[0].mxu0
        %v5023 = vadd.f32 %v4121, %v5022
        %v5024 = vpop.f32.mrb[0].mxu0
        %v5025 = vadd.f32 %v4125, %v5024
        %v5026 = vpop.f32.mrb[0].mxu0
        %v5027 = vadd.f32 %v4121, %v5026
        %v5028 = vpop.f32.mrb[0].mxu0
        %v5029 = vadd.f32 %v4125, %v5028
        %5030 = vmatprep.mubr.bf16.mxu0 0
        %5031 = vmatmul.mubr.bf16.gmra.mrb[0].mxu0 %v4040
        %v5032 = vpop.f32.mrb[0].mxu0
        %v5033 = vadd.f32 %v4121, %v5032
        %v5034 = vpop.f32.mrb[0].mxu0
        %v5035 = vadd.f32 %v4125, %v5034
        %v5036 = vpop.f32.mrb[0].mxu0
        %v5037 = vadd.f32 %v4121, %v5036
        %v5038 = vpop.f32.mrb[0].mxu0
        %v5039 = vadd.f32 %v4125, %v5038
        %5040 = vmatprep.mubr.bf16.mxu0 0
        %5041 = vmatmul.mubr.bf16.gmra.mrb[0].mxu0 %v4041
        %v5042 = vpop.f32.mrb[0].mxu0
        %v5043 = vadd.f32 %v4121, %v5042
        %v5044 = vpop.f32.mrb[0].mxu0
        %v5045 = vadd.f32 %v4125, %v5044
        %v5046 = vpop.f32.mrb[0].mxu0
        %v5047 = vadd.f32 %v4121, %v5046
        %v5048 = vpop.f32.mrb[0].mxu0
        %v5049 = vadd.f32 %v4125, %v5048
        %5050 = vmatprep.mubr.bf16.mxu0 0
        %5051 = vmatmul.mubr.bf16.gmra.mrb[0].mxu0 %v4042
        %v5052 = vpop.f32.mrb[0].mxu0
        %v5053 = vadd.f32 %v4121, %v5052
        %v5054 = vpop.f32.mrb[0].mxu0
        %v5055 = vadd.f32 %v4125, %v5054
        %v5056 = vpop.f32.mrb[0].mxu0
        %v5057 = vadd.f32 %v4121, %v5056
        %v5058 = vpop.f32.mrb[0].mxu0
        %v5059 = vadd.f32 %v4125, %v5058
        %5060 = vmatprep.mubr.bf16.mxu0 0
        %5061 = vmatmul.mubr.bf16.gmra.mrb[0].mxu0 %v4043
        %v5062 = vpop.f32.mrb[0].mxu0
        %v5063 = vadd.f32 %v4121, %v5062
        %v5064 = vpop.f32.mrb[0].mxu0
        %v5065 = vadd.f32 %v4125, %v5064
        %v5066 = vpop.f32.mrb[0].mxu0
        %v5067 = vadd.f32 %v4121, %v5066
        %v5068 = vpop.f32.mrb[0].mxu0
        %v5069 = vadd.f32 %v4125, %v5068
        %5070 = vmatprep.mubr.bf16.mxu0 0
        %5071 = vmatmul.mubr.bf16.gmra.mrb[0].mxu0 %v4044
        %v5072 = vpop.f32.mrb[0].mxu0
        %v5073 = vadd.f32 %v4121, %v5072
        %v5074 = vpop.f32.mrb[0].mxu0
        %v5075 = vadd.f32 %v4125, %v5074
        %v5076 = vpop.f32.mrb[0].mxu0
        %v5077 = vadd.f32 %v4121, %v5076
        %v5078 = vpop.f32.mrb[0].mxu0
        %v5079 = vadd.f32 %v4125, %v5078
        %5080 = vmatprep.mubr.bf16.mxu0 0
        %5081 = vmatmul.mubr.bf16.gmra.mrb[0].mxu0 %v4045
        %v5082 = vpop.f32.mrb[0].mxu0
        %v5083 = vadd.f32 %v4121, %v5082
        %v5084 = vpop.f32.mrb[0].mxu0
        %v5085 = vadd.f32 %v4125, %v5084
        %v5086 = vpop.f32.mrb[0].mxu0
        %v5087 = vadd.f32 %v4121, %v5086
        %v5088 = vpop.f32.mrb[0].mxu0
        %v5089 = vadd.f32 %v4125, %v5088
        %5090 = vmatprep.mubr.bf16.mxu0 0
        %5091 = vmatmul.mubr.bf16.gmra.mrb[0].mxu0 %v4046
        %v5092 = vpop.f32.mrb[0].mxu0
        %v5093 = vadd.f32 %v4121, %v5092
        %v5094 = vpop.f32.mrb[0].mxu0
        %v5095 = vadd.f32 %v4125, %v5094
        %v5096 = vpop.f32.mrb[0].mxu0
        %v5097 = vadd.f32 %v4121, %v5096
        %v5098 = vpop.f32.mrb[0].mxu0
        %v5099 = vadd.f32 %v4125, %v5098
        %5100 = vmatprep.mubr.bf16.mxu0 0
        %5101 = vmatmul.mubr.bf16.gmra.mrb[0].mxu0 %v4047
        %v5102 = vpop.f32.mrb[0].mxu0
        %v5103 = vadd.f32 %v4121, %v5102
        %v5104 = vpop.f32.mrb[0].mxu0
        %v5105 = vadd.f32 %v4125, %v5104
        %v5106 = vpop.f32.mrb[0].mxu0
        %v5107 = vadd.f32 %v4121, %v5106
        %v5108 = vpop.f32.mrb[0].mxu0
        %v5109 = vadd.f32 %v4125, %v5108
        %5110 = vmatprep.mubr.bf16.mxu0 0
        %5111 = vmatmul.mubr.bf16.gmra.mrb[0].mxu0 %v4048
        %v5112 = vpop.f32.mrb[0].mxu0
        %v5113 = vadd.f32 %v4121, %v5112
        %v5114 = vpop.f32.mrb[0].mxu0
        %v5115 = vadd.f32 %v4125, %v5114
        %v5116 = vpop.f32.mrb[0].mxu0
        %v5117 = vadd.f32 %v4121, %v5116
        %v5118 = vpop.f32.mrb[0].mxu0
        %v5119 = vadd.f32 %v4125, %v5118
        %5120 = vmatprep.mubr.bf16.mxu0 0
        %5121 = vmatmul.mubr.bf16.gmra.mrb[0].mxu0 %v4049
        %v5122 = vpop.f32.mrb[0].mxu0
        %v5123 = vadd.f32 %v4121, %v5122
        %v5124 = vpop.f32.mrb[0].mxu0
        %v5125 = vadd.f32 %v4125, %v5124
        %v5126 = vpop.f32.mrb[0].mxu0
        %v5127 = vadd.f32 %v4121, %v5126
        %v5128 = vpop.f32.mrb[0].mxu0
        %v5129 = vadd.f32 %v4125, %v5128
        %5130 = vmatprep.mubr.bf16.mxu0 0
        %5131 = vmatmul.mubr.bf16.gmra.mrb[0].mxu0 %v4050
        %v5132 = vpop.f32.mrb[0].mxu0
        %v5133 = vadd.f32 %v4121, %v5132
        %v5134 = vpop.f32.mrb[0].mxu0
        %v5135 = vadd.f32 %v4125, %v5134
        %v5136 = vpop.f32.mrb[0].mxu0
        %v5137 = vadd.f32 %v4121, %v5136
        %v5138 = vpop.f32.mrb[0].mxu0
        %v5139 = vadd.f32 %v4125, %v5138
        %5140 = vmatprep.mubr.bf16.mxu0 0
        %5141 = vmatmul.mubr.bf16.gmra.mrb[0].mxu0 %v4051
        %v5142 = vpop.f32.mrb[0].mxu0
        %v5143 = vadd.f32 %v4121, %v5142
        %v5144 = vpop.f32.mrb[0].mxu0
        %v5145 = vadd.f32 %v4125, %v5144
        %v5146 = vpop.f32.mrb[0].mxu0
        %v5147 = vadd.f32 %v4121, %v5146
        %v5148 = vpop.f32.mrb[0].mxu0
        %v5149 = vadd.f32 %v4125, %v5148
        %5150 = vdwg.mxu0
        %5151 = vmatprep.subr.bf16.mxu0 %v4353
        %5152 = vmatpush1.bf16.msra.mxu0 %v4352
        %5153 = vmatprep.subr.bf16.mxu0 %v4361
        %5154 = vmatpush1.bf16.msra.mxu0 %v4360
        %5155 = vmatprep.subr.bf16.mxu0 %v4369
        %5156 = vmatpush1.bf16.msra.mxu0 %v4368
        %5157 = vmatprep.subr.bf16.mxu0 %v4377
        %5158 = vmatpush1.bf16.msra.mxu0 %v4376
        %5159 = vmatprep.subr.bf16.mxu0 %v4385
        %5160 = vmatpush1.bf16.msra.mxu0 %v4384
        %5161 = vmatprep.subr.bf16.mxu0 %v4393
        %5162 = vmatpush1.bf16.msra.mxu0 %v4392
        %5163 = vmatprep.subr.bf16.mxu0 %v4401
        %5164 = vmatpush1.bf16.msra.mxu0 %v4400
        %5165 = vmatprep.subr.bf16.mxu0 %v4409
        %5166 = vmatpush1.bf16.msra.mxu0 %v4408
        %5167 = vmatprep.subr.bf16.mxu0 0
        %5168 = vmatpush1.bf16.msra.mxu0 0
        %5169 = vmatprep.subr.bf16.mxu0 0
        %5170 = vmatpush1.bf16.msra.mxu0 0
        %5171 = vmatprep.subr.bf16.mxu0 0
        %5172 = vmatpush1.bf16.msra.mxu0 0
        %5173 = vmatprep.subr.bf16.mxu0 0
        %5174 = vmatpush1.bf16.msra.mxu0 0
        %5175 = vmatprep.subr.bf16.mxu0 0
        %5176 = vmatpush1.bf16.msra.mxu0 0
        %5177 = vmatprep.subr.bf16.mxu0 0
        %5178 = vmatpush1.bf16.msra.mxu0 0
        %5179 = vmatprep.subr.bf16.mxu0 0
        %5180 = vmatpush1.bf16.msra.mxu0 0
        %5181 = vmatprep.subr.bf16.mxu0 0
        %5182 = vmatpush1.bf16.msra.mxu0 0
        %5183 = vmatprep.mubr.bf16.mxu0 0
        %5184 = vmatmul.mubr.bf16.gmra.mrb[0].mxu0 %v3988
        %v5185 = vpop.f32.mrb[0].mxu0
        %v5186 = vadd.f32 %v4129, %v5185
        %v5187 = vpop.f32.mrb[0].mxu0
        %v5188 = vadd.f32 %v4133, %v5187
        %v5189 = vpop.f32.mrb[0].mxu0
        %v5190 = vadd.f32 %v4129, %v5189
        %v5191 = vpop.f32.mrb[0].mxu0
        %v5192 = vadd.f32 %v4133, %v5191
        %5193 = vmatprep.mubr.bf16.mxu0 0
        %5194 = vmatmul.mubr.bf16.gmra.mrb[0].mxu0 %v3989
        %v5195 = vpop.f32.mrb[0].mxu0
        %v5196 = vadd.f32 %v4129, %v5195
        %v5197 = vpop.f32.mrb[0].mxu0
        %v5198 = vadd.f32 %v4133, %v5197
        %v5199 = vpop.f32.mrb[0].mxu0
        %v5200 = vadd.f32 %v4129, %v5199
        %v5201 = vpop.f32.mrb[0].mxu0
        %v5202 = vadd.f32 %v4133, %v5201
        %5203 = vmatprep.mubr.bf16.mxu0 0
        %5204 = vmatmul.mubr.bf16.gmra.mrb[0].mxu0 %v3990
        %v5205 = vpop.f32.mrb[0].mxu0
        %v5206 = vadd.f32 %v4129, %v5205
        %v5207 = vpop.f32.mrb[0].mxu0
        %v5208 = vadd.f32 %v4133, %v5207
        %v5209 = vpop.f32.mrb[0].mxu0
        %v5210 = vadd.f32 %v4129, %v5209
        %v5211 = vpop.f32.mrb[0].mxu0
        %v5212 = vadd.f32 %v4133, %v5211
        %5213 = vmatprep.mubr.bf16.mxu0 0
        %5214 = vmatmul.mubr.bf16.gmra.mrb[0].mxu0 %v3991
        %v5215 = vpop.f32.mrb[0].mxu0
        %v5216 = vadd.f32 %v4129, %v5215
        %v5217 = vpop.f32.mrb[0].mxu0
        %v5218 = vadd.f32 %v4133, %v5217
        %v5219 = vpop.f32.mrb[0].mxu0
        %v5220 = vadd.f32 %v4129, %v5219
        %v5221 = vpop.f32.mrb[0].mxu0
        %v5222 = vadd.f32 %v4133, %v5221
        %5223 = vmatprep.mubr.bf16.mxu0 0
        %5224 = vmatmul.mubr.bf16.gmra.mrb[0].mxu0 %v3992
        %v5225 = vpop.f32.mrb[0].mxu0
        %v5226 = vadd.f32 %v4129, %v5225
        %v5227 = vpop.f32.mrb[0].mxu0
        %v5228 = vadd.f32 %v4133, %v5227
        %v5229 = vpop.f32.mrb[0].mxu0
        %v5230 = vadd.f32 %v4129, %v5229
        %v5231 = vpop.f32.mrb[0].mxu0
        %v5232 = vadd.f32 %v4133, %v5231
        %5233 = vmatprep.mubr.bf16.mxu0 0
        %5234 = vmatmul.mubr.bf16.gmra.mrb[0].mxu0 %v3993
        %v5235 = vpop.f32.mrb[0].mxu0
        %v5236 = vadd.f32 %v4129, %v5235
        %v5237 = vpop.f32.mrb[0].mxu0
        %v5238 = vadd.f32 %v4133, %v5237
        %v5239 = vpop.f32.mrb[0].mxu0
        %v5240 = vadd.f32 %v4129, %v5239
        %v5241 = vpop.f32.mrb[0].mxu0
        %v5242 = vadd.f32 %v4133, %v5241
        %5243 = vmatprep.mubr.bf16.mxu0 0
        %5244 = vmatmul.mubr.bf16.gmra.mrb[0].mxu0 %v3994
        %v5245 = vpop.f32.mrb[0].mxu0
        %v5246 = vadd.f32 %v4129, %v5245
        %v5247 = vpop.f32.mrb[0].mxu0
        %v5248 = vadd.f32 %v4133, %v5247
        %v5249 = vpop.f32.mrb[0].mxu0
        %v5250 = vadd.f32 %v4129, %v5249
        %v5251 = vpop.f32.mrb[0].mxu0
        %v5252 = vadd.f32 %v4133, %v5251
        %5253 = vmatprep.mubr.bf16.mxu0 0
        %5254 = vmatmul.mubr.bf16.gmra.mrb[0].mxu0 %v3995
        %v5255 = vpop.f32.mrb[0].mxu0
        %v5256 = vadd.f32 %v4129, %v5255
        %v5257 = vpop.f32.mrb[0].mxu0
        %v5258 = vadd.f32 %v4133, %v5257
        %v5259 = vpop.f32.mrb[0].mxu0
        %v5260 = vadd.f32 %v4129, %v5259
        %v5261 = vpop.f32.mrb[0].mxu0
        %v5262 = vadd.f32 %v4133, %v5261
        %5263 = vmatprep.mubr.bf16.mxu0 0
        %5264 = vmatmul.mubr.bf16.gmra.mrb[0].mxu0 %v3996
        %v5265 = vpop.f32.mrb[0].mxu0
        %v5266 = vadd.f32 %v4129, %v5265
        %v5267 = vpop.f32.mrb[0].mxu0
        %v5268 = vadd.f32 %v4133, %v5267
        %v5269 = vpop.f32.mrb[0].mxu0
        %v5270 = vadd.f32 %v4129, %v5269
        %v5271 = vpop.f32.mrb[0].mxu0
        %v5272 = vadd.f32 %v4133, %v5271
        %5273 = vmatprep.mubr.bf16.mxu0 0
        %5274 = vmatmul.mubr.bf16.gmra.mrb[0].mxu0 %v3997
        %v5275 = vpop.f32.mrb[0].mxu0
        %v5276 = vadd.f32 %v4129, %v5275
        %v5277 = vpop.f32.mrb[0].mxu0
        %v5278 = vadd.f32 %v4133, %v5277
        %v5279 = vpop.f32.mrb[0].mxu0
        %v5280 = vadd.f32 %v4129, %v5279
        %v5281 = vpop.f32.mrb[0].mxu0
        %v5282 = vadd.f32 %v4133, %v5281
        %5283 = vmatprep.mubr.bf16.mxu0 0
        %5284 = vmatmul.mubr.bf16.gmra.mrb[0].mxu0 %v3998
        %v5285 = vpop.f32.mrb[0].mxu0
        %v5286 = vadd.f32 %v4129, %v5285
        %v5287 = vpop.f32.mrb[0].mxu0
        %v5288 = vadd.f32 %v4133, %v5287
        %v5289 = vpop.f32.mrb[0].mxu0
        %v5290 = vadd.f32 %v4129, %v5289
        %v5291 = vpop.f32.mrb[0].mxu0
        %v5292 = vadd.f32 %v4133, %v5291
        %5293 = vmatprep.mubr.bf16.mxu0 0
        %5294 = vmatmul.mubr.bf16.gmra.mrb[0].mxu0 %v3999
        %v5295 = vpop.f32.mrb[0].mxu0
        %v5296 = vadd.f32 %v4129, %v5295
        %v5297 = vpop.f32.mrb[0].mxu0
        %v5298 = vadd.f32 %v4133, %v5297
        %v5299 = vpop.f32.mrb[0].mxu0
        %v5300 = vadd.f32 %v4129, %v5299
        %v5301 = vpop.f32.mrb[0].mxu0
        %v5302 = vadd.f32 %v4133, %v5301
        %5303 = vmatprep.mubr.bf16.mxu0 0
        %5304 = vmatmul.mubr.bf16.gmra.mrb[0].mxu0 %v4000
        %v5305 = vpop.f32.mrb[0].mxu0
        %v5306 = vadd.f32 %v4129, %v5305
        %v5307 = vpop.f32.mrb[0].mxu0
        %v5308 = vadd.f32 %v4133, %v5307
        %v5309 = vpop.f32.mrb[0].mxu0
        %v5310 = vadd.f32 %v4129, %v5309
        %v5311 = vpop.f32.mrb[0].mxu0
        %v5312 = vadd.f32 %v4133, %v5311
        %5313 = vmatprep.mubr.bf16.mxu0 0
        %5314 = vmatmul.mubr.bf16.gmra.mrb[0].mxu0 %v4001
        %v5315 = vpop.f32.mrb[0].mxu0
        %v5316 = vadd.f32 %v4129, %v5315
        %v5317 = vpop.f32.mrb[0].mxu0
        %v5318 = vadd.f32 %v4133, %v5317
        %v5319 = vpop.f32.mrb[0].mxu0
        %v5320 = vadd.f32 %v4129, %v5319
        %v5321 = vpop.f32.mrb[0].mxu0
        %v5322 = vadd.f32 %v4133, %v5321
        %5323 = vmatprep.mubr.bf16.mxu0 0
        %5324 = vmatmul.mubr.bf16.gmra.mrb[0].mxu0 %v4002
        %v5325 = vpop.f32.mrb[0].mxu0
        %v5326 = vadd.f32 %v4129, %v5325
        %v5327 = vpop.f32.mrb[0].mxu0
        %v5328 = vadd.f32 %v4133, %v5327
        %v5329 = vpop.f32.mrb[0].mxu0
        %v5330 = vadd.f32 %v4129, %v5329
        %v5331 = vpop.f32.mrb[0].mxu0
        %v5332 = vadd.f32 %v4133, %v5331
        %5333 = vmatprep.mubr.bf16.mxu0 0
        %5334 = vmatmul.mubr.bf16.gmra.mrb[0].mxu0 %v4003
        %v5335 = vpop.f32.mrb[0].mxu0
        %v5336 = vadd.f32 %v4129, %v5335
        %v5337 = vpop.f32.mrb[0].mxu0
        %v5338 = vadd.f32 %v4133, %v5337
        %v5339 = vpop.f32.mrb[0].mxu0
        %v5340 = vadd.f32 %v4129, %v5339
        %v5341 = vpop.f32.mrb[0].mxu0
        %v5342 = vadd.f32 %v4133, %v5341
        %5343 = vmatprep.mubr.bf16.mxu0 0
        %5344 = vmatmul.mubr.bf16.gmra.mrb[0].mxu0 %v4004
        %v5345 = vpop.f32.mrb[0].mxu0
        %v5346 = vadd.f32 %v4129, %v5345
        %v5347 = vpop.f32.mrb[0].mxu0
        %v5348 = vadd.f32 %v4133, %v5347
        %v5349 = vpop.f32.mrb[0].mxu0
        %v5350 = vadd.f32 %v4129, %v5349
        %v5351 = vpop.f32.mrb[0].mxu0
        %v5352 = vadd.f32 %v4133, %v5351
        %5353 = vmatprep.mubr.bf16.mxu0 0
        %5354 = vmatmul.mubr.bf16.gmra.mrb[0].mxu0 %v4005
        %v5355 = vpop.f32.mrb[0].mxu0
        %v5356 = vadd.f32 %v4129, %v5355
        %v5357 = vpop.f32.mrb[0].mxu0
        %v5358 = vadd.f32 %v4133, %v5357
        %v5359 = vpop.f32.mrb[0].mxu0
        %v5360 = vadd.f32 %v4129, %v5359
        %v5361 = vpop.f32.mrb[0].mxu0
        %v5362 = vadd.f32 %v4133, %v5361
        %5363 = vmatprep.mubr.bf16.mxu0 0
        %5364 = vmatmul.mubr.bf16.gmra.mrb[0].mxu0 %v4006
        %v5365 = vpop.f32.mrb[0].mxu0
        %v5366 = vadd.f32 %v4129, %v5365
        %v5367 = vpop.f32.mrb[0].mxu0
        %v5368 = vadd.f32 %v4133, %v5367
        %v5369 = vpop.f32.mrb[0].mxu0
        %v5370 = vadd.f32 %v4129, %v5369
        %v5371 = vpop.f32.mrb[0].mxu0
        %v5372 = vadd.f32 %v4133, %v5371
        %5373 = vmatprep.mubr.bf16.mxu0 0
        %5374 = vmatmul.mubr.bf16.gmra.mrb[0].mxu0 %v4007
        %v5375 = vpop.f32.mrb[0].mxu0
        %v5376 = vadd.f32 %v4129, %v5375
        %v5377 = vpop.f32.mrb[0].mxu0
        %v5378 = vadd.f32 %v4133, %v5377
        %v5379 = vpop.f32.mrb[0].mxu0
        %v5380 = vadd.f32 %v4129, %v5379
        %v5381 = vpop.f32.mrb[0].mxu0
        %v5382 = vadd.f32 %v4133, %v5381
        %5383 = vmatprep.mubr.bf16.mxu0 0
        %5384 = vmatmul.mubr.bf16.gmra.mrb[0].mxu0 %v4008
        %v5385 = vpop.f32.mrb[0].mxu0
        %v5386 = vadd.f32 %v4129, %v5385
        %v5387 = vpop.f32.mrb[0].mxu0
        %v5388 = vadd.f32 %v4133, %v5387
        %v5389 = vpop.f32.mrb[0].mxu0
        %v5390 = vadd.f32 %v4129, %v5389
        %v5391 = vpop.f32.mrb[0].mxu0
        %v5392 = vadd.f32 %v4133, %v5391
        %5393 = vmatprep.mubr.bf16.mxu0 0
        %5394 = vmatmul.mubr.bf16.gmra.mrb[0].mxu0 %v4009
        %v5395 = vpop.f32.mrb[0].mxu0
        %v5396 = vadd.f32 %v4129, %v5395
        %v5397 = vpop.f32.mrb[0].mxu0
        %v5398 = vadd.f32 %v4133, %v5397
        %v5399 = vpop.f32.mrb[0].mxu0
        %v5400 = vadd.f32 %v4129, %v5399
        %v5401 = vpop.f32.mrb[0].mxu0
        %v5402 = vadd.f32 %v4133, %v5401
        %5403 = vmatprep.mubr.bf16.mxu0 0
        %5404 = vmatmul.mubr.bf16.gmra.mrb[0].mxu0 %v4010
        %v5405 = vpop.f32.mrb[0].mxu0
        %v5406 = vadd.f32 %v4129, %v5405
        %v5407 = vpop.f32.mrb[0].mxu0
        %v5408 = vadd.f32 %v4133, %v5407
        %v5409 = vpop.f32.mrb[0].mxu0
        %v5410 = vadd.f32 %v4129, %v5409
        %v5411 = vpop.f32.mrb[0].mxu0
        %v5412 = vadd.f32 %v4133, %v5411
        %5413 = vmatprep.mubr.bf16.mxu0 0
        %5414 = vmatmul.mubr.bf16.gmra.mrb[0].mxu0 %v4011
        %v5415 = vpop.f32.mrb[0].mxu0
        %v5416 = vadd.f32 %v4129, %v5415
        %v5417 = vpop.f32.mrb[0].mxu0
        %v5418 = vadd.f32 %v4133, %v5417
        %v5419 = vpop.f32.mrb[0].mxu0
        %v5420 = vadd.f32 %v4129, %v5419
        %v5421 = vpop.f32.mrb[0].mxu0
        %v5422 = vadd.f32 %v4133, %v5421
        %5423 = vmatprep.mubr.bf16.mxu0 0
        %5424 = vmatmul.mubr.bf16.gmra.mrb[0].mxu0 %v4012
        %v5425 = vpop.f32.mrb[0].mxu0
        %v5426 = vadd.f32 %v4129, %v5425
        %v5427 = vpop.f32.mrb[0].mxu0
        %v5428 = vadd.f32 %v4133, %v5427
        %v5429 = vpop.f32.mrb[0].mxu0
        %v5430 = vadd.f32 %v4129, %v5429
        %v5431 = vpop.f32.mrb[0].mxu0
        %v5432 = vadd.f32 %v4133, %v5431
        %5433 = vmatprep.mubr.bf16.mxu0 0
        %5434 = vmatmul.mubr.bf16.gmra.mrb[0].mxu0 %v4013
        %v5435 = vpop.f32.mrb[0].mxu0
        %v5436 = vadd.f32 %v4129, %v5435
        %v5437 = vpop.f32.mrb[0].mxu0
        %v5438 = vadd.f32 %v4133, %v5437
        %v5439 = vpop.f32.mrb[0].mxu0
        %v5440 = vadd.f32 %v4129, %v5439
        %v5441 = vpop.f32.mrb[0].mxu0
        %v5442 = vadd.f32 %v4133, %v5441
        %5443 = vmatprep.mubr.bf16.mxu0 0
        %5444 = vmatmul.mubr.bf16.gmra.mrb[0].mxu0 %v4014
        %v5445 = vpop.f32.mrb[0].mxu0
        %v5446 = vadd.f32 %v4129, %v5445
        %v5447 = vpop.f32.mrb[0].mxu0
        %v5448 = vadd.f32 %v4133, %v5447
        %v5449 = vpop.f32.mrb[0].mxu0
        %v5450 = vadd.f32 %v4129, %v5449
        %v5451 = vpop.f32.mrb[0].mxu0
        %v5452 = vadd.f32 %v4133, %v5451
        %5453 = vmatprep.mubr.bf16.mxu0 0
        %5454 = vmatmul.mubr.bf16.gmra.mrb[0].mxu0 %v4015
        %v5455 = vpop.f32.mrb[0].mxu0
        %v5456 = vadd.f32 %v4129, %v5455
        %v5457 = vpop.f32.mrb[0].mxu0
        %v5458 = vadd.f32 %v4133, %v5457
        %v5459 = vpop.f32.mrb[0].mxu0
        %v5460 = vadd.f32 %v4129, %v5459
        %v5461 = vpop.f32.mrb[0].mxu0
        %v5462 = vadd.f32 %v4133, %v5461
        %5463 = vmatprep.mubr.bf16.mxu0 0
        %5464 = vmatmul.mubr.bf16.gmra.mrb[0].mxu0 %v4016
        %v5465 = vpop.f32.mrb[0].mxu0
        %v5466 = vadd.f32 %v4129, %v5465
        %v5467 = vpop.f32.mrb[0].mxu0
        %v5468 = vadd.f32 %v4133, %v5467
        %v5469 = vpop.f32.mrb[0].mxu0
        %v5470 = vadd.f32 %v4129, %v5469
        %v5471 = vpop.f32.mrb[0].mxu0
        %v5472 = vadd.f32 %v4133, %v5471
        %5473 = vmatprep.mubr.bf16.mxu0 0
        %5474 = vmatmul.mubr.bf16.gmra.mrb[0].mxu0 %v4017
        %v5475 = vpop.f32.mrb[0].mxu0
        %v5476 = vadd.f32 %v4129, %v5475
        %v5477 = vpop.f32.mrb[0].mxu0
        %v5478 = vadd.f32 %v4133, %v5477
        %v5479 = vpop.f32.mrb[0].mxu0
        %v5480 = vadd.f32 %v4129, %v5479
        %v5481 = vpop.f32.mrb[0].mxu0
        %v5482 = vadd.f32 %v4133, %v5481
        %5483 = vmatprep.mubr.bf16.mxu0 0
        %5484 = vmatmul.mubr.bf16.gmra.mrb[0].mxu0 %v4018
        %v5485 = vpop.f32.mrb[0].mxu0
        %v5486 = vadd.f32 %v4129, %v5485
        %v5487 = vpop.f32.mrb[0].mxu0
        %v5488 = vadd.f32 %v4133, %v5487
        %v5489 = vpop.f32.mrb[0].mxu0
        %v5490 = vadd.f32 %v4129, %v5489
        %v5491 = vpop.f32.mrb[0].mxu0
        %v5492 = vadd.f32 %v4133, %v5491
        %5493 = vmatprep.mubr.bf16.mxu0 0
        %5494 = vmatmul.mubr.bf16.gmra.mrb[0].mxu0 %v4019
        %v5495 = vpop.f32.mrb[0].mxu0
        %v5496 = vadd.f32 %v4129, %v5495
        %v5497 = vpop.f32.mrb[0].mxu0
        %v5498 = vadd.f32 %v4133, %v5497
        %v5499 = vpop.f32.mrb[0].mxu0
        %v5500 = vadd.f32 %v4129, %v5499
        %v5501 = vpop.f32.mrb[0].mxu0
        %v5502 = vadd.f32 %v4133, %v5501
        %5503 = vmatprep.mubr.bf16.mxu0 0
        %5504 = vmatmul.mubr.bf16.gmra.mrb[0].mxu0 %v4020
        %v5505 = vpop.f32.mrb[0].mxu0
        %v5506 = vadd.f32 %v4129, %v5505
        %v5507 = vpop.f32.mrb[0].mxu0
        %v5508 = vadd.f32 %v4133, %v5507
        %v5509 = vpop.f32.mrb[0].mxu0
        %v5510 = vadd.f32 %v4129, %v5509
        %v5511 = vpop.f32.mrb[0].mxu0
        %v5512 = vadd.f32 %v4133, %v5511
        %5513 = vmatprep.mubr.bf16.mxu0 0
        %5514 = vmatmul.mubr.bf16.gmra.mrb[0].mxu0 %v4021
        %v5515 = vpop.f32.mrb[0].mxu0
        %v5516 = vadd.f32 %v4129, %v5515
        %v5517 = vpop.f32.mrb[0].mxu0
        %v5518 = vadd.f32 %v4133, %v5517
        %v5519 = vpop.f32.mrb[0].mxu0
        %v5520 = vadd.f32 %v4129, %v5519
        %v5521 = vpop.f32.mrb[0].mxu0
        %v5522 = vadd.f32 %v4133, %v5521
        %5523 = vmatprep.mubr.bf16.mxu0 0
        %5524 = vmatmul.mubr.bf16.gmra.mrb[0].mxu0 %v4022
        %v5525 = vpop.f32.mrb[0].mxu0
        %v5526 = vadd.f32 %v4129, %v5525
        %v5527 = vpop.f32.mrb[0].mxu0
        %v5528 = vadd.f32 %v4133, %v5527
        %v5529 = vpop.f32.mrb[0].mxu0
        %v5530 = vadd.f32 %v4129, %v5529
        %v5531 = vpop.f32.mrb[0].mxu0
        %v5532 = vadd.f32 %v4133, %v5531
        %5533 = vmatprep.mubr.bf16.mxu0 0
        %5534 = vmatmul.mubr.bf16.gmra.mrb[0].mxu0 %v4023
        %v5535 = vpop.f32.mrb[0].mxu0
        %v5536 = vadd.f32 %v4129, %v5535
        %v5537 = vpop.f32.mrb[0].mxu0
        %v5538 = vadd.f32 %v4133, %v5537
        %v5539 = vpop.f32.mrb[0].mxu0
        %v5540 = vadd.f32 %v4129, %v5539
        %v5541 = vpop.f32.mrb[0].mxu0
        %v5542 = vadd.f32 %v4133, %v5541
        %5543 = vmatprep.mubr.bf16.mxu0 0
        %5544 = vmatmul.mubr.bf16.gmra.mrb[0].mxu0 %v4024
        %v5545 = vpop.f32.mrb[0].mxu0
        %v5546 = vadd.f32 %v4129, %v5545
        %v5547 = vpop.f32.mrb[0].mxu0
        %v5548 = vadd.f32 %v4133, %v5547
        %v5549 = vpop.f32.mrb[0].mxu0
        %v5550 = vadd.f32 %v4129, %v5549
        %v5551 = vpop.f32.mrb[0].mxu0
        %v5552 = vadd.f32 %v4133, %v5551
        %5553 = vmatprep.mubr.bf16.mxu0 0
        %5554 = vmatmul.mubr.bf16.gmra.mrb[0].mxu0 %v4025
        %v5555 = vpop.f32.mrb[0].mxu0
        %v5556 = vadd.f32 %v4129, %v5555
        %v5557 = vpop.f32.mrb[0].mxu0
        %v5558 = vadd.f32 %v4133, %v5557
        %v5559 = vpop.f32.mrb[0].mxu0
        %v5560 = vadd.f32 %v4129, %v5559
        %v5561 = vpop.f32.mrb[0].mxu0
        %v5562 = vadd.f32 %v4133, %v5561
        %5563 = vmatprep.mubr.bf16.mxu0 0
        %5564 = vmatmul.mubr.bf16.gmra.mrb[0].mxu0 %v4026
        %v5565 = vpop.f32.mrb[0].mxu0
        %v5566 = vadd.f32 %v4129, %v5565
        %v5567 = vpop.f32.mrb[0].mxu0
        %v5568 = vadd.f32 %v4133, %v5567
        %v5569 = vpop.f32.mrb[0].mxu0
        %v5570 = vadd.f32 %v4129, %v5569
        %v5571 = vpop.f32.mrb[0].mxu0
        %v5572 = vadd.f32 %v4133, %v5571
        %5573 = vmatprep.mubr.bf16.mxu0 0
        %5574 = vmatmul.mubr.bf16.gmra.mrb[0].mxu0 %v4027
        %v5575 = vpop.f32.mrb[0].mxu0
        %v5576 = vadd.f32 %v4129, %v5575
        %v5577 = vpop.f32.mrb[0].mxu0
        %v5578 = vadd.f32 %v4133, %v5577
        %v5579 = vpop.f32.mrb[0].mxu0
        %v5580 = vadd.f32 %v4129, %v5579
        %v5581 = vpop.f32.mrb[0].mxu0
        %v5582 = vadd.f32 %v4133, %v5581
        %5583 = vmatprep.mubr.bf16.mxu0 0
        %5584 = vmatmul.mubr.bf16.gmra.mrb[0].mxu0 %v4028
        %v5585 = vpop.f32.mrb[0].mxu0
        %v5586 = vadd.f32 %v4129, %v5585
        %v5587 = vpop.f32.mrb[0].mxu0
        %v5588 = vadd.f32 %v4133, %v5587
        %v5589 = vpop.f32.mrb[0].mxu0
        %v5590 = vadd.f32 %v4129, %v5589
        %v5591 = vpop.f32.mrb[0].mxu0
        %v5592 = vadd.f32 %v4133, %v5591
        %5593 = vmatprep.mubr.bf16.mxu0 0
        %5594 = vmatmul.mubr.bf16.gmra.mrb[0].mxu0 %v4029
        %v5595 = vpop.f32.mrb[0].mxu0
        %v5596 = vadd.f32 %v4129, %v5595
        %v5597 = vpop.f32.mrb[0].mxu0
        %v5598 = vadd.f32 %v4133, %v5597
        %v5599 = vpop.f32.mrb[0].mxu0
        %v5600 = vadd.f32 %v4129, %v5599
        %v5601 = vpop.f32.mrb[0].mxu0
        %v5602 = vadd.f32 %v4133, %v5601
        %5603 = vmatprep.mubr.bf16.mxu0 0
        %5604 = vmatmul.mubr.bf16.gmra.mrb[0].mxu0 %v4030
        %v5605 = vpop.f32.mrb[0].mxu0
        %v5606 = vadd.f32 %v4129, %v5605
        %v5607 = vpop.f32.mrb[0].mxu0
        %v5608 = vadd.f32 %v4133, %v5607
        %v5609 = vpop.f32.mrb[0].mxu0
        %v5610 = vadd.f32 %v4129, %v5609
        %v5611 = vpop.f32.mrb[0].mxu0
        %v5612 = vadd.f32 %v4133, %v5611
        %5613 = vmatprep.mubr.bf16.mxu0 0
        %5614 = vmatmul.mubr.bf16.gmra.mrb[0].mxu0 %v4031
        %v5615 = vpop.f32.mrb[0].mxu0
        %v5616 = vadd.f32 %v4129, %v5615
        %v5617 = vpop.f32.mrb[0].mxu0
        %v5618 = vadd.f32 %v4133, %v5617
        %v5619 = vpop.f32.mrb[0].mxu0
        %v5620 = vadd.f32 %v4129, %v5619
        %v5621 = vpop.f32.mrb[0].mxu0
        %v5622 = vadd.f32 %v4133, %v5621
        %5623 = vmatprep.mubr.bf16.mxu0 0
        %5624 = vmatmul.mubr.bf16.gmra.mrb[0].mxu0 %v4032
        %v5625 = vpop.f32.mrb[0].mxu0
        %v5626 = vadd.f32 %v4129, %v5625
        %v5627 = vpop.f32.mrb[0].mxu0
        %v5628 = vadd.f32 %v4133, %v5627
        %v5629 = vpop.f32.mrb[0].mxu0
        %v5630 = vadd.f32 %v4129, %v5629
        %v5631 = vpop.f32.mrb[0].mxu0
        %v5632 = vadd.f32 %v4133, %v5631
        %5633 = vmatprep.mubr.bf16.mxu0 0
        %5634 = vmatmul.mubr.bf16.gmra.mrb[0].mxu0 %v4033
        %v5635 = vpop.f32.mrb[0].mxu0
        %v5636 = vadd.f32 %v4129, %v5635
        %v5637 = vpop.f32.mrb[0].mxu0
        %v5638 = vadd.f32 %v4133, %v5637
        %v5639 = vpop.f32.mrb[0].mxu0
        %v5640 = vadd.f32 %v4129, %v5639
        %v5641 = vpop.f32.mrb[0].mxu0
        %v5642 = vadd.f32 %v4133, %v5641
        %5643 = vmatprep.mubr.bf16.mxu0 0
        %5644 = vmatmul.mubr.bf16.gmra.mrb[0].mxu0 %v4034
        %v5645 = vpop.f32.mrb[0].mxu0
        %v5646 = vadd.f32 %v4129, %v5645
        %v5647 = vpop.f32.mrb[0].mxu0
        %v5648 = vadd.f32 %v4133, %v5647
        %v5649 = vpop.f32.mrb[0].mxu0
        %v5650 = vadd.f32 %v4129, %v5649
        %v5651 = vpop.f32.mrb[0].mxu0
        %v5652 = vadd.f32 %v4133, %v5651
        %5653 = vmatprep.mubr.bf16.mxu0 0
        %5654 = vmatmul.mubr.bf16.gmra.mrb[0].mxu0 %v4035
        %v5655 = vpop.f32.mrb[0].mxu0
        %v5656 = vadd.f32 %v4129, %v5655
        %v5657 = vpop.f32.mrb[0].mxu0
        %v5658 = vadd.f32 %v4133, %v5657
        %v5659 = vpop.f32.mrb[0].mxu0
        %v5660 = vadd.f32 %v4129, %v5659
        %v5661 = vpop.f32.mrb[0].mxu0
        %v5662 = vadd.f32 %v4133, %v5661
        %5663 = vmatprep.mubr.bf16.mxu0 0
        %5664 = vmatmul.mubr.bf16.gmra.mrb[0].mxu0 %v4036
        %v5665 = vpop.f32.mrb[0].mxu0
        %v5666 = vadd.f32 %v4129, %v5665
        %v5667 = vpop.f32.mrb[0].mxu0
        %v5668 = vadd.f32 %v4133, %v5667
        %v5669 = vpop.f32.mrb[0].mxu0
        %v5670 = vadd.f32 %v4129, %v5669
        %v5671 = vpop.f32.mrb[0].mxu0
        %v5672 = vadd.f32 %v4133, %v5671
        %5673 = vmatprep.mubr.bf16.mxu0 0
        %5674 = vmatmul.mubr.bf16.gmra.mrb[0].mxu0 %v4037
        %v5675 = vpop.f32.mrb[0].mxu0
        %v5676 = vadd.f32 %v4129, %v5675
        %v5677 = vpop.f32.mrb[0].mxu0
        %v5678 = vadd.f32 %v4133, %v5677
        %v5679 = vpop.f32.mrb[0].mxu0
        %v5680 = vadd.f32 %v4129, %v5679
        %v5681 = vpop.f32.mrb[0].mxu0
        %v5682 = vadd.f32 %v4133, %v5681
        %5683 = vmatprep.mubr.bf16.mxu0 0
        %5684 = vmatmul.mubr.bf16.gmra.mrb[0].mxu0 %v4038
        %v5685 = vpop.f32.mrb[0].mxu0
        %v5686 = vadd.f32 %v4129, %v5685
        %v5687 = vpop.f32.mrb[0].mxu0
        %v5688 = vadd.f32 %v4133, %v5687
        %v5689 = vpop.f32.mrb[0].mxu0
        %v5690 = vadd.f32 %v4129, %v5689
        %v5691 = vpop.f32.mrb[0].mxu0
        %v5692 = vadd.f32 %v4133, %v5691
        %5693 = vmatprep.mubr.bf16.mxu0 0
        %5694 = vmatmul.mubr.bf16.gmra.mrb[0].mxu0 %v4039
        %v5695 = vpop.f32.mrb[0].mxu0
        %v5696 = vadd.f32 %v4129, %v5695
        %v5697 = vpop.f32.mrb[0].mxu0
        %v5698 = vadd.f32 %v4133, %v5697
        %v5699 = vpop.f32.mrb[0].mxu0
        %v5700 = vadd.f32 %v4129, %v5699
        %v5701 = vpop.f32.mrb[0].mxu0
        %v5702 = vadd.f32 %v4133, %v5701
        %5703 = vmatprep.mubr.bf16.mxu0 0
        %5704 = vmatmul.mubr.bf16.gmra.mrb[0].mxu0 %v4040
        %v5705 = vpop.f32.mrb[0].mxu0
        %v5706 = vadd.f32 %v4129, %v5705
        %v5707 = vpop.f32.mrb[0].mxu0
        %v5708 = vadd.f32 %v4133, %v5707
        %v5709 = vpop.f32.mrb[0].mxu0
        %v5710 = vadd.f32 %v4129, %v5709
        %v5711 = vpop.f32.mrb[0].mxu0
        %v5712 = vadd.f32 %v4133, %v5711
        %5713 = vmatprep.mubr.bf16.mxu0 0
        %5714 = vmatmul.mubr.bf16.gmra.mrb[0].mxu0 %v4041
        %v5715 = vpop.f32.mrb[0].mxu0
        %v5716 = vadd.f32 %v4129, %v5715
        %v5717 = vpop.f32.mrb[0].mxu0
        %v5718 = vadd.f32 %v4133, %v5717
        %v5719 = vpop.f32.mrb[0].mxu0
        %v5720 = vadd.f32 %v4129, %v5719
        %v5721 = vpop.f32.mrb[0].mxu0
        %v5722 = vadd.f32 %v4133, %v5721
        %5723 = vmatprep.mubr.bf16.mxu0 0
        %5724 = vmatmul.mubr.bf16.gmra.mrb[0].mxu0 %v4042
        %v5725 = vpop.f32.mrb[0].mxu0
        %v5726 = vadd.f32 %v4129, %v5725
        %v5727 = vpop.f32.mrb[0].mxu0
        %v5728 = vadd.f32 %v4133, %v5727
        %v5729 = vpop.f32.mrb[0].mxu0
        %v5730 = vadd.f32 %v4129, %v5729
        %v5731 = vpop.f32.mrb[0].mxu0
        %v5732 = vadd.f32 %v4133, %v5731
        %5733 = vmatprep.mubr.bf16.mxu0 0
        %5734 = vmatmul.mubr.bf16.gmra.mrb[0].mxu0 %v4043
        %v5735 = vpop.f32.mrb[0].mxu0
        %v5736 = vadd.f32 %v4129, %v5735
        %v5737 = vpop.f32.mrb[0].mxu0
        %v5738 = vadd.f32 %v4133, %v5737
        %v5739 = vpop.f32.mrb[0].mxu0
        %v5740 = vadd.f32 %v4129, %v5739
        %v5741 = vpop.f32.mrb[0].mxu0
        %v5742 = vadd.f32 %v4133, %v5741
        %5743 = vmatprep.mubr.bf16.mxu0 0
        %5744 = vmatmul.mubr.bf16.gmra.mrb[0].mxu0 %v4044
        %v5745 = vpop.f32.mrb[0].mxu0
        %v5746 = vadd.f32 %v4129, %v5745
        %v5747 = vpop.f32.mrb[0].mxu0
        %v5748 = vadd.f32 %v4133, %v5747
        %v5749 = vpop.f32.mrb[0].mxu0
        %v5750 = vadd.f32 %v4129, %v5749
        %v5751 = vpop.f32.mrb[0].mxu0
        %v5752 = vadd.f32 %v4133, %v5751
        %5753 = vmatprep.mubr.bf16.mxu0 0
        %5754 = vmatmul.mubr.bf16.gmra.mrb[0].mxu0 %v4045
        %v5755 = vpop.f32.mrb[0].mxu0
        %v5756 = vadd.f32 %v4129, %v5755
        %v5757 = vpop.f32.mrb[0].mxu0
        %v5758 = vadd.f32 %v4133, %v5757
        %v5759 = vpop.f32.mrb[0].mxu0
        %v5760 = vadd.f32 %v4129, %v5759
        %v5761 = vpop.f32.mrb[0].mxu0
        %v5762 = vadd.f32 %v4133, %v5761
        %5763 = vmatprep.mubr.bf16.mxu0 0
        %5764 = vmatmul.mubr.bf16.gmra.mrb[0].mxu0 %v4046
        %v5765 = vpop.f32.mrb[0].mxu0
        %v5766 = vadd.f32 %v4129, %v5765
        %v5767 = vpop.f32.mrb[0].mxu0
        %v5768 = vadd.f32 %v4133, %v5767
        %v5769 = vpop.f32.mrb[0].mxu0
        %v5770 = vadd.f32 %v4129, %v5769
        %v5771 = vpop.f32.mrb[0].mxu0
        %v5772 = vadd.f32 %v4133, %v5771
        %5773 = vmatprep.mubr.bf16.mxu0 0
        %5774 = vmatmul.mubr.bf16.gmra.mrb[0].mxu0 %v4047
        %v5775 = vpop.f32.mrb[0].mxu0
        %v5776 = vadd.f32 %v4129, %v5775
        %v5777 = vpop.f32.mrb[0].mxu0
        %v5778 = vadd.f32 %v4133, %v5777
        %v5779 = vpop.f32.mrb[0].mxu0
        %v5780 = vadd.f32 %v4129, %v5779
        %v5781 = vpop.f32.mrb[0].mxu0
        %v5782 = vadd.f32 %v4133, %v5781
        %5783 = vmatprep.mubr.bf16.mxu0 0
        %5784 = vmatmul.mubr.bf16.gmra.mrb[0].mxu0 %v4048
        %v5785 = vpop.f32.mrb[0].mxu0
        %v5786 = vadd.f32 %v4129, %v5785
        %v5787 = vpop.f32.mrb[0].mxu0
        %v5788 = vadd.f32 %v4133, %v5787
        %v5789 = vpop.f32.mrb[0].mxu0
        %v5790 = vadd.f32 %v4129, %v5789
        %v5791 = vpop.f32.mrb[0].mxu0
        %v5792 = vadd.f32 %v4133, %v5791
        %5793 = vmatprep.mubr.bf16.mxu0 0
        %5794 = vmatmul.mubr.bf16.gmra.mrb[0].mxu0 %v4049
        %v5795 = vpop.f32.mrb[0].mxu0
        %v5796 = vadd.f32 %v4129, %v5795
        %v5797 = vpop.f32.mrb[0].mxu0
        %v5798 = vadd.f32 %v4133, %v5797
        %v5799 = vpop.f32.mrb[0].mxu0
        %v5800 = vadd.f32 %v4129, %v5799
        %v5801 = vpop.f32.mrb[0].mxu0
        %v5802 = vadd.f32 %v4133, %v5801
        %5803 = vmatprep.mubr.bf16.mxu0 0
        %5804 = vmatmul.mubr.bf16.gmra.mrb[0].mxu0 %v4050
        %v5805 = vpop.f32.mrb[0].mxu0
        %v5806 = vadd.f32 %v4129, %v5805
        %v5807 = vpop.f32.mrb[0].mxu0
        %v5808 = vadd.f32 %v4133, %v5807
        %v5809 = vpop.f32.mrb[0].mxu0
        %v5810 = vadd.f32 %v4129, %v5809
        %v5811 = vpop.f32.mrb[0].mxu0
        %v5812 = vadd.f32 %v4133, %v5811
        %5813 = vmatprep.mubr.bf16.mxu0 0
        %5814 = vmatmul.mubr.bf16.gmra.mrb[0].mxu0 %v4051
        %v5815 = vpop.f32.mrb[0].mxu0
        %v5816 = vadd.f32 %v4129, %v5815
        %v5817 = vpop.f32.mrb[0].mxu0
        %v5818 = vadd.f32 %v4133, %v5817
        %v5819 = vpop.f32.mrb[0].mxu0
        %v5820 = vadd.f32 %v4129, %v5819
        %v5821 = vpop.f32.mrb[0].mxu0
        %v5822 = vadd.f32 %v4133, %v5821
        %5823 = vdwg.mxu0
        %5824 = vmatprep.subr.bf16.mxu0 %v4355
        %5825 = vmatpush1.bf16.msra.mxu0 %v4354
        %5826 = vmatprep.subr.bf16.mxu0 %v4363
        %5827 = vmatpush1.bf16.msra.mxu0 %v4362
        %5828 = vmatprep.subr.bf16.mxu0 %v4371
        %5829 = vmatpush1.bf16.msra.mxu0 %v4370
        %5830 = vmatprep.subr.bf16.mxu0 %v4379
        %5831 = vmatpush1.bf16.msra.mxu0 %v4378
        %5832 = vmatprep.subr.bf16.mxu0 %v4387
        %5833 = vmatpush1.bf16.msra.mxu0 %v4386
        %5834 = vmatprep.subr.bf16.mxu0 %v4395
        %5835 = vmatpush1.bf16.msra.mxu0 %v4394
        %5836 = vmatprep.subr.bf16.mxu0 %v4403
        %5837 = vmatpush1.bf16.msra.mxu0 %v4402
        %5838 = vmatprep.subr.bf16.mxu0 %v4411
        %5839 = vmatpush1.bf16.msra.mxu0 %v4410
        %5840 = vmatprep.subr.bf16.mxu0 0
        %5841 = vmatpush1.bf16.msra.mxu0 0
        %5842 = vmatprep.subr.bf16.mxu0 0
        %5843 = vmatpush1.bf16.msra.mxu0 0
        %5844 = vmatprep.subr.bf16.mxu0 0
        %5845 = vmatpush1.bf16.msra.mxu0 0
        %5846 = vmatprep.subr.bf16.mxu0 0
        %5847 = vmatpush1.bf16.msra.mxu0 0
        %5848 = vmatprep.subr.bf16.mxu0 0
        %5849 = vmatpush1.bf16.msra.mxu0 0
        %5850 = vmatprep.subr.bf16.mxu0 0
        %5851 = vmatpush1.bf16.msra.mxu0 0
        %5852 = vmatprep.subr.bf16.mxu0 0
        %5853 = vmatpush1.bf16.msra.mxu0 0
        %5854 = vmatprep.subr.bf16.mxu0 0
        %5855 = vmatpush1.bf16.msra.mxu0 0
        %5856 = vmatprep.mubr.bf16.mxu0 0
        %5857 = vmatmul.mubr.bf16.gmra.mrb[0].mxu0 %v3988
        %v5858 = vpop.f32.mrb[0].mxu0
        %v5859 = vadd.f32 %v4137, %v5858
        %v5860 = vpop.f32.mrb[0].mxu0
        %v5861 = vadd.f32 %v4141, %v5860
        %v5862 = vpop.f32.mrb[0].mxu0
        %v5863 = vadd.f32 %v4137, %v5862
        %v5864 = vpop.f32.mrb[0].mxu0
        %v5865 = vadd.f32 %v4141, %v5864
        %5866 = vmatprep.mubr.bf16.mxu0 0
        %5867 = vmatmul.mubr.bf16.gmra.mrb[0].mxu0 %v3989
        %v5868 = vpop.f32.mrb[0].mxu0
        %v5869 = vadd.f32 %v4137, %v5868
        %v5870 = vpop.f32.mrb[0].mxu0
        %v5871 = vadd.f32 %v4141, %v5870
        %v5872 = vpop.f32.mrb[0].mxu0
        %v5873 = vadd.f32 %v4137, %v5872
        %v5874 = vpop.f32.mrb[0].mxu0
        %v5875 = vadd.f32 %v4141, %v5874
        %5876 = vmatprep.mubr.bf16.mxu0 0
        %5877 = vmatmul.mubr.bf16.gmra.mrb[0].mxu0 %v3990
        %v5878 = vpop.f32.mrb[0].mxu0
        %v5879 = vadd.f32 %v4137, %v5878
        %v5880 = vpop.f32.mrb[0].mxu0
        %v5881 = vadd.f32 %v4141, %v5880
        %v5882 = vpop.f32.mrb[0].mxu0
        %v5883 = vadd.f32 %v4137, %v5882
        %v5884 = vpop.f32.mrb[0].mxu0
        %v5885 = vadd.f32 %v4141, %v5884
        %5886 = vmatprep.mubr.bf16.mxu0 0
        %5887 = vmatmul.mubr.bf16.gmra.mrb[0].mxu0 %v3991
        %v5888 = vpop.f32.mrb[0].mxu0
        %v5889 = vadd.f32 %v4137, %v5888
        %v5890 = vpop.f32.mrb[0].mxu0
        %v5891 = vadd.f32 %v4141, %v5890
        %v5892 = vpop.f32.mrb[0].mxu0
        %v5893 = vadd.f32 %v4137, %v5892
        %v5894 = vpop.f32.mrb[0].mxu0
        %v5895 = vadd.f32 %v4141, %v5894
        %5896 = vmatprep.mubr.bf16.mxu0 0
        %5897 = vmatmul.mubr.bf16.gmra.mrb[0].mxu0 %v3992
        %v5898 = vpop.f32.mrb[0].mxu0
        %v5899 = vadd.f32 %v4137, %v5898
        %v5900 = vpop.f32.mrb[0].mxu0
        %v5901 = vadd.f32 %v4141, %v5900
        %v5902 = vpop.f32.mrb[0].mxu0
        %v5903 = vadd.f32 %v4137, %v5902
        %v5904 = vpop.f32.mrb[0].mxu0
        %v5905 = vadd.f32 %v4141, %v5904
        %5906 = vmatprep.mubr.bf16.mxu0 0
        %5907 = vmatmul.mubr.bf16.gmra.mrb[0].mxu0 %v3993
        %v5908 = vpop.f32.mrb[0].mxu0
        %v5909 = vadd.f32 %v4137, %v5908
        %v5910 = vpop.f32.mrb[0].mxu0
        %v5911 = vadd.f32 %v4141, %v5910
        %v5912 = vpop.f32.mrb[0].mxu0
        %v5913 = vadd.f32 %v4137, %v5912
        %v5914 = vpop.f32.mrb[0].mxu0
        %v5915 = vadd.f32 %v4141, %v5914
        %5916 = vmatprep.mubr.bf16.mxu0 0
        %5917 = vmatmul.mubr.bf16.gmra.mrb[0].mxu0 %v3994
        %v5918 = vpop.f32.mrb[0].mxu0
        %v5919 = vadd.f32 %v4137, %v5918
        %v5920 = vpop.f32.mrb[0].mxu0
        %v5921 = vadd.f32 %v4141, %v5920
        %v5922 = vpop.f32.mrb[0].mxu0
        %v5923 = vadd.f32 %v4137, %v5922
        %v5924 = vpop.f32.mrb[0].mxu0
        %v5925 = vadd.f32 %v4141, %v5924
        %5926 = vmatprep.mubr.bf16.mxu0 0
        %5927 = vmatmul.mubr.bf16.gmra.mrb[0].mxu0 %v3995
        %v5928 = vpop.f32.mrb[0].mxu0
        %v5929 = vadd.f32 %v4137, %v5928
        %v5930 = vpop.f32.mrb[0].mxu0
        %v5931 = vadd.f32 %v4141, %v5930
        %v5932 = vpop.f32.mrb[0].mxu0
        %v5933 = vadd.f32 %v4137, %v5932
        %v5934 = vpop.f32.mrb[0].mxu0
        %v5935 = vadd.f32 %v4141, %v5934
        %5936 = vmatprep.mubr.bf16.mxu0 0
        %5937 = vmatmul.mubr.bf16.gmra.mrb[0].mxu0 %v3996
        %v5938 = vpop.f32.mrb[0].mxu0
        %v5939 = vadd.f32 %v4137, %v5938
        %v5940 = vpop.f32.mrb[0].mxu0
        %v5941 = vadd.f32 %v4141, %v5940
        %v5942 = vpop.f32.mrb[0].mxu0
        %v5943 = vadd.f32 %v4137, %v5942
        %v5944 = vpop.f32.mrb[0].mxu0
        %v5945 = vadd.f32 %v4141, %v5944
        %5946 = vmatprep.mubr.bf16.mxu0 0
        %5947 = vmatmul.mubr.bf16.gmra.mrb[0].mxu0 %v3997
        %v5948 = vpop.f32.mrb[0].mxu0
        %v5949 = vadd.f32 %v4137, %v5948
        %v5950 = vpop.f32.mrb[0].mxu0
        %v5951 = vadd.f32 %v4141, %v5950
        %v5952 = vpop.f32.mrb[0].mxu0
        %v5953 = vadd.f32 %v4137, %v5952
        %v5954 = vpop.f32.mrb[0].mxu0
        %v5955 = vadd.f32 %v4141, %v5954
        %5956 = vmatprep.mubr.bf16.mxu0 0
        %5957 = vmatmul.mubr.bf16.gmra.mrb[0].mxu0 %v3998
        %v5958 = vpop.f32.mrb[0].mxu0
        %v5959 = vadd.f32 %v4137, %v5958
        %v5960 = vpop.f32.mrb[0].mxu0
        %v5961 = vadd.f32 %v4141, %v5960
        %v5962 = vpop.f32.mrb[0].mxu0
        %v5963 = vadd.f32 %v4137, %v5962
        %v5964 = vpop.f32.mrb[0].mxu0
        %v5965 = vadd.f32 %v4141, %v5964
        %5966 = vmatprep.mubr.bf16.mxu0 0
        %5967 = vmatmul.mubr.bf16.gmra.mrb[0].mxu0 %v3999
        %v5968 = vpop.f32.mrb[0].mxu0
        %v5969 = vadd.f32 %v4137, %v5968
        %v5970 = vpop.f32.mrb[0].mxu0
        %v5971 = vadd.f32 %v4141, %v5970
        %v5972 = vpop.f32.mrb[0].mxu0
        %v5973 = vadd.f32 %v4137, %v5972
        %v5974 = vpop.f32.mrb[0].mxu0
        %v5975 = vadd.f32 %v4141, %v5974
        %5976 = vmatprep.mubr.bf16.mxu0 0
        %5977 = vmatmul.mubr.bf16.gmra.mrb[0].mxu0 %v4000
        %v5978 = vpop.f32.mrb[0].mxu0
        %v5979 = vadd.f32 %v4137, %v5978
        %v5980 = vpop.f32.mrb[0].mxu0
        %v5981 = vadd.f32 %v4141, %v5980
        %v5982 = vpop.f32.mrb[0].mxu0
        %v5983 = vadd.f32 %v4137, %v5982
        %v5984 = vpop.f32.mrb[0].mxu0
        %v5985 = vadd.f32 %v4141, %v5984
        %5986 = vmatprep.mubr.bf16.mxu0 0
        %5987 = vmatmul.mubr.bf16.gmra.mrb[0].mxu0 %v4001
        %v5988 = vpop.f32.mrb[0].mxu0
        %v5989 = vadd.f32 %v4137, %v5988
        %v5990 = vpop.f32.mrb[0].mxu0
        %v5991 = vadd.f32 %v4141, %v5990
        %v5992 = vpop.f32.mrb[0].mxu0
        %v5993 = vadd.f32 %v4137, %v5992
        %v5994 = vpop.f32.mrb[0].mxu0
        %v5995 = vadd.f32 %v4141, %v5994
        %5996 = vmatprep.mubr.bf16.mxu0 0
        %5997 = vmatmul.mubr.bf16.gmra.mrb[0].mxu0 %v4002
        %v5998 = vpop.f32.mrb[0].mxu0
        %v5999 = vadd.f32 %v4137, %v5998
        %v6000 = vpop.f32.mrb[0].mxu0
        %v6001 = vadd.f32 %v4141, %v6000
        %v6002 = vpop.f32.mrb[0].mxu0
        %v6003 = vadd.f32 %v4137, %v6002
        %v6004 = vpop.f32.mrb[0].mxu0
        %v6005 = vadd.f32 %v4141, %v6004
        %6006 = vmatprep.mubr.bf16.mxu0 0
        %6007 = vmatmul.mubr.bf16.gmra.mrb[0].mxu0 %v4003
        %v6008 = vpop.f32.mrb[0].mxu0
        %v6009 = vadd.f32 %v4137, %v6008
        %v6010 = vpop.f32.mrb[0].mxu0
        %v6011 = vadd.f32 %v4141, %v6010
        %v6012 = vpop.f32.mrb[0].mxu0
        %v6013 = vadd.f32 %v4137, %v6012
        %v6014 = vpop.f32.mrb[0].mxu0
        %v6015 = vadd.f32 %v4141, %v6014
        %6016 = vmatprep.mubr.bf16.mxu0 0
        %6017 = vmatmul.mubr.bf16.gmra.mrb[0].mxu0 %v4004
        %v6018 = vpop.f32.mrb[0].mxu0
        %v6019 = vadd.f32 %v4137, %v6018
        %v6020 = vpop.f32.mrb[0].mxu0
        %v6021 = vadd.f32 %v4141, %v6020
        %v6022 = vpop.f32.mrb[0].mxu0
        %v6023 = vadd.f32 %v4137, %v6022
        %v6024 = vpop.f32.mrb[0].mxu0
        %v6025 = vadd.f32 %v4141, %v6024
        %6026 = vmatprep.mubr.bf16.mxu0 0
        %6027 = vmatmul.mubr.bf16.gmra.mrb[0].mxu0 %v4005
        %v6028 = vpop.f32.mrb[0].mxu0
        %v6029 = vadd.f32 %v4137, %v6028
        %v6030 = vpop.f32.mrb[0].mxu0
        %v6031 = vadd.f32 %v4141, %v6030
        %v6032 = vpop.f32.mrb[0].mxu0
        %v6033 = vadd.f32 %v4137, %v6032
        %v6034 = vpop.f32.mrb[0].mxu0
        %v6035 = vadd.f32 %v4141, %v6034
        %6036 = vmatprep.mubr.bf16.mxu0 0
        %6037 = vmatmul.mubr.bf16.gmra.mrb[0].mxu0 %v4006
        %v6038 = vpop.f32.mrb[0].mxu0
        %v6039 = vadd.f32 %v4137, %v6038
        %v6040 = vpop.f32.mrb[0].mxu0
        %v6041 = vadd.f32 %v4141, %v6040
        %v6042 = vpop.f32.mrb[0].mxu0
        %v6043 = vadd.f32 %v4137, %v6042
        %v6044 = vpop.f32.mrb[0].mxu0
        %v6045 = vadd.f32 %v4141, %v6044
        %6046 = vmatprep.mubr.bf16.mxu0 0
        %6047 = vmatmul.mubr.bf16.gmra.mrb[0].mxu0 %v4007
        %v6048 = vpop.f32.mrb[0].mxu0
        %v6049 = vadd.f32 %v4137, %v6048
        %v6050 = vpop.f32.mrb[0].mxu0
        %v6051 = vadd.f32 %v4141, %v6050
        %v6052 = vpop.f32.mrb[0].mxu0
        %v6053 = vadd.f32 %v4137, %v6052
        %v6054 = vpop.f32.mrb[0].mxu0
        %v6055 = vadd.f32 %v4141, %v6054
        %6056 = vmatprep.mubr.bf16.mxu0 0
        %6057 = vmatmul.mubr.bf16.gmra.mrb[0].mxu0 %v4008
        %v6058 = vpop.f32.mrb[0].mxu0
        %v6059 = vadd.f32 %v4137, %v6058
        %v6060 = vpop.f32.mrb[0].mxu0
        %v6061 = vadd.f32 %v4141, %v6060
        %v6062 = vpop.f32.mrb[0].mxu0
        %v6063 = vadd.f32 %v4137, %v6062
        %v6064 = vpop.f32.mrb[0].mxu0
        %v6065 = vadd.f32 %v4141, %v6064
        %6066 = vmatprep.mubr.bf16.mxu0 0
        %6067 = vmatmul.mubr.bf16.gmra.mrb[0].mxu0 %v4009
        %v6068 = vpop.f32.mrb[0].mxu0
        %v6069 = vadd.f32 %v4137, %v6068
        %v6070 = vpop.f32.mrb[0].mxu0
        %v6071 = vadd.f32 %v4141, %v6070
        %v6072 = vpop.f32.mrb[0].mxu0
        %v6073 = vadd.f32 %v4137, %v6072
        %v6074 = vpop.f32.mrb[0].mxu0
        %v6075 = vadd.f32 %v4141, %v6074
        %6076 = vmatprep.mubr.bf16.mxu0 0
        %6077 = vmatmul.mubr.bf16.gmra.mrb[0].mxu0 %v4010
        %v6078 = vpop.f32.mrb[0].mxu0
        %v6079 = vadd.f32 %v4137, %v6078
        %v6080 = vpop.f32.mrb[0].mxu0
        %v6081 = vadd.f32 %v4141, %v6080
        %v6082 = vpop.f32.mrb[0].mxu0
        %v6083 = vadd.f32 %v4137, %v6082
        %v6084 = vpop.f32.mrb[0].mxu0
        %v6085 = vadd.f32 %v4141, %v6084
        %6086 = vmatprep.mubr.bf16.mxu0 0
        %6087 = vmatmul.mubr.bf16.gmra.mrb[0].mxu0 %v4011
        %v6088 = vpop.f32.mrb[0].mxu0
        %v6089 = vadd.f32 %v4137, %v6088
        %v6090 = vpop.f32.mrb[0].mxu0
        %v6091 = vadd.f32 %v4141, %v6090
        %v6092 = vpop.f32.mrb[0].mxu0
        %v6093 = vadd.f32 %v4137, %v6092
        %v6094 = vpop.f32.mrb[0].mxu0
        %v6095 = vadd.f32 %v4141, %v6094
        %6096 = vmatprep.mubr.bf16.mxu0 0
        %6097 = vmatmul.mubr.bf16.gmra.mrb[0].mxu0 %v4012
        %v6098 = vpop.f32.mrb[0].mxu0
        %v6099 = vadd.f32 %v4137, %v6098
        %v6100 = vpop.f32.mrb[0].mxu0
        %v6101 = vadd.f32 %v4141, %v6100
        %v6102 = vpop.f32.mrb[0].mxu0
        %v6103 = vadd.f32 %v4137, %v6102
        %v6104 = vpop.f32.mrb[0].mxu0
        %v6105 = vadd.f32 %v4141, %v6104
        %6106 = vmatprep.mubr.bf16.mxu0 0
        %6107 = vmatmul.mubr.bf16.gmra.mrb[0].mxu0 %v4013
        %v6108 = vpop.f32.mrb[0].mxu0
        %v6109 = vadd.f32 %v4137, %v6108
        %v6110 = vpop.f32.mrb[0].mxu0
        %v6111 = vadd.f32 %v4141, %v6110
        %v6112 = vpop.f32.mrb[0].mxu0
        %v6113 = vadd.f32 %v4137, %v6112
        %v6114 = vpop.f32.mrb[0].mxu0
        %v6115 = vadd.f32 %v4141, %v6114
        %6116 = vmatprep.mubr.bf16.mxu0 0
        %6117 = vmatmul.mubr.bf16.gmra.mrb[0].mxu0 %v4014
        %v6118 = vpop.f32.mrb[0].mxu0
        %v6119 = vadd.f32 %v4137, %v6118
        %v6120 = vpop.f32.mrb[0].mxu0
        %v6121 = vadd.f32 %v4141, %v6120
        %v6122 = vpop.f32.mrb[0].mxu0
        %v6123 = vadd.f32 %v4137, %v6122
        %v6124 = vpop.f32.mrb[0].mxu0
        %v6125 = vadd.f32 %v4141, %v6124
        %6126 = vmatprep.mubr.bf16.mxu0 0
        %6127 = vmatmul.mubr.bf16.gmra.mrb[0].mxu0 %v4015
        %v6128 = vpop.f32.mrb[0].mxu0
        %v6129 = vadd.f32 %v4137, %v6128
        %v6130 = vpop.f32.mrb[0].mxu0
        %v6131 = vadd.f32 %v4141, %v6130
        %v6132 = vpop.f32.mrb[0].mxu0
        %v6133 = vadd.f32 %v4137, %v6132
        %v6134 = vpop.f32.mrb[0].mxu0
        %v6135 = vadd.f32 %v4141, %v6134
        %6136 = vmatprep.mubr.bf16.mxu0 0
        %6137 = vmatmul.mubr.bf16.gmra.mrb[0].mxu0 %v4016
        %v6138 = vpop.f32.mrb[0].mxu0
        %v6139 = vadd.f32 %v4137, %v6138
        %v6140 = vpop.f32.mrb[0].mxu0
        %v6141 = vadd.f32 %v4141, %v6140
        %v6142 = vpop.f32.mrb[0].mxu0
        %v6143 = vadd.f32 %v4137, %v6142
        %v6144 = vpop.f32.mrb[0].mxu0
        %v6145 = vadd.f32 %v4141, %v6144
        %6146 = vmatprep.mubr.bf16.mxu0 0
        %6147 = vmatmul.mubr.bf16.gmra.mrb[0].mxu0 %v4017
        %v6148 = vpop.f32.mrb[0].mxu0
        %v6149 = vadd.f32 %v4137, %v6148
        %v6150 = vpop.f32.mrb[0].mxu0
        %v6151 = vadd.f32 %v4141, %v6150
        %v6152 = vpop.f32.mrb[0].mxu0
        %v6153 = vadd.f32 %v4137, %v6152
        %v6154 = vpop.f32.mrb[0].mxu0
        %v6155 = vadd.f32 %v4141, %v6154
        %6156 = vmatprep.mubr.bf16.mxu0 0
        %6157 = vmatmul.mubr.bf16.gmra.mrb[0].mxu0 %v4018
        %v6158 = vpop.f32.mrb[0].mxu0
        %v6159 = vadd.f32 %v4137, %v6158
        %v6160 = vpop.f32.mrb[0].mxu0
        %v6161 = vadd.f32 %v4141, %v6160
        %v6162 = vpop.f32.mrb[0].mxu0
        %v6163 = vadd.f32 %v4137, %v6162
        %v6164 = vpop.f32.mrb[0].mxu0
        %v6165 = vadd.f32 %v4141, %v6164
        %6166 = vmatprep.mubr.bf16.mxu0 0
        %6167 = vmatmul.mubr.bf16.gmra.mrb[0].mxu0 %v4019
        %v6168 = vpop.f32.mrb[0].mxu0
        %v6169 = vadd.f32 %v4137, %v6168
        %v6170 = vpop.f32.mrb[0].mxu0
        %v6171 = vadd.f32 %v4141, %v6170
        %v6172 = vpop.f32.mrb[0].mxu0
        %v6173 = vadd.f32 %v4137, %v6172
        %v6174 = vpop.f32.mrb[0].mxu0
        %v6175 = vadd.f32 %v4141, %v6174
        %6176 = vmatprep.mubr.bf16.mxu0 0
        %6177 = vmatmul.mubr.bf16.gmra.mrb[0].mxu0 %v4020
        %v6178 = vpop.f32.mrb[0].mxu0
        %v6179 = vadd.f32 %v4137, %v6178
        %v6180 = vpop.f32.mrb[0].mxu0
        %v6181 = vadd.f32 %v4141, %v6180
        %v6182 = vpop.f32.mrb[0].mxu0
        %v6183 = vadd.f32 %v4137, %v6182
        %v6184 = vpop.f32.mrb[0].mxu0
        %v6185 = vadd.f32 %v4141, %v6184
        %6186 = vmatprep.mubr.bf16.mxu0 0
        %6187 = vmatmul.mubr.bf16.gmra.mrb[0].mxu0 %v4021
        %v6188 = vpop.f32.mrb[0].mxu0
        %v6189 = vadd.f32 %v4137, %v6188
        %v6190 = vpop.f32.mrb[0].mxu0
        %v6191 = vadd.f32 %v4141, %v6190
        %v6192 = vpop.f32.mrb[0].mxu0
        %v6193 = vadd.f32 %v4137, %v6192
        %v6194 = vpop.f32.mrb[0].mxu0
        %v6195 = vadd.f32 %v4141, %v6194
        %6196 = vmatprep.mubr.bf16.mxu0 0
        %6197 = vmatmul.mubr.bf16.gmra.mrb[0].mxu0 %v4022
        %v6198 = vpop.f32.mrb[0].mxu0
        %v6199 = vadd.f32 %v4137, %v6198
        %v6200 = vpop.f32.mrb[0].mxu0
        %v6201 = vadd.f32 %v4141, %v6200
        %v6202 = vpop.f32.mrb[0].mxu0
        %v6203 = vadd.f32 %v4137, %v6202
        %v6204 = vpop.f32.mrb[0].mxu0
        %v6205 = vadd.f32 %v4141, %v6204
        %6206 = vmatprep.mubr.bf16.mxu0 0
        %6207 = vmatmul.mubr.bf16.gmra.mrb[0].mxu0 %v4023
        %v6208 = vpop.f32.mrb[0].mxu0
        %v6209 = vadd.f32 %v4137, %v6208
        %v6210 = vpop.f32.mrb[0].mxu0
        %v6211 = vadd.f32 %v4141, %v6210
        %v6212 = vpop.f32.mrb[0].mxu0
        %v6213 = vadd.f32 %v4137, %v6212
        %v6214 = vpop.f32.mrb[0].mxu0
        %v6215 = vadd.f32 %v4141, %v6214
        %6216 = vmatprep.mubr.bf16.mxu0 0
        %6217 = vmatmul.mubr.bf16.gmra.mrb[0].mxu0 %v4024
        %v6218 = vpop.f32.mrb[0].mxu0
        %v6219 = vadd.f32 %v4137, %v6218
        %v6220 = vpop.f32.mrb[0].mxu0
        %v6221 = vadd.f32 %v4141, %v6220
        %v6222 = vpop.f32.mrb[0].mxu0
        %v6223 = vadd.f32 %v4137, %v6222
        %v6224 = vpop.f32.mrb[0].mxu0
        %v6225 = vadd.f32 %v4141, %v6224
        %6226 = vmatprep.mubr.bf16.mxu0 0
        %6227 = vmatmul.mubr.bf16.gmra.mrb[0].mxu0 %v4025
        %v6228 = vpop.f32.mrb[0].mxu0
        %v6229 = vadd.f32 %v4137, %v6228
        %v6230 = vpop.f32.mrb[0].mxu0
        %v6231 = vadd.f32 %v4141, %v6230
        %v6232 = vpop.f32.mrb[0].mxu0
        %v6233 = vadd.f32 %v4137, %v6232
        %v6234 = vpop.f32.mrb[0].mxu0
        %v6235 = vadd.f32 %v4141, %v6234
        %6236 = vmatprep.mubr.bf16.mxu0 0
        %6237 = vmatmul.mubr.bf16.gmra.mrb[0].mxu0 %v4026
        %v6238 = vpop.f32.mrb[0].mxu0
        %v6239 = vadd.f32 %v4137, %v6238
        %v6240 = vpop.f32.mrb[0].mxu0
        %v6241 = vadd.f32 %v4141, %v6240
        %v6242 = vpop.f32.mrb[0].mxu0
        %v6243 = vadd.f32 %v4137, %v6242
        %v6244 = vpop.f32.mrb[0].mxu0
        %v6245 = vadd.f32 %v4141, %v6244
        %6246 = vmatprep.mubr.bf16.mxu0 0
        %6247 = vmatmul.mubr.bf16.gmra.mrb[0].mxu0 %v4027
        %v6248 = vpop.f32.mrb[0].mxu0
        %v6249 = vadd.f32 %v4137, %v6248
        %v6250 = vpop.f32.mrb[0].mxu0
        %v6251 = vadd.f32 %v4141, %v6250
        %v6252 = vpop.f32.mrb[0].mxu0
        %v6253 = vadd.f32 %v4137, %v6252
        %v6254 = vpop.f32.mrb[0].mxu0
        %v6255 = vadd.f32 %v4141, %v6254
        %6256 = vmatprep.mubr.bf16.mxu0 0
        %6257 = vmatmul.mubr.bf16.gmra.mrb[0].mxu0 %v4028
        %v6258 = vpop.f32.mrb[0].mxu0
        %v6259 = vadd.f32 %v4137, %v6258
        %v6260 = vpop.f32.mrb[0].mxu0
        %v6261 = vadd.f32 %v4141, %v6260
        %v6262 = vpop.f32.mrb[0].mxu0
        %v6263 = vadd.f32 %v4137, %v6262
        %v6264 = vpop.f32.mrb[0].mxu0
        %v6265 = vadd.f32 %v4141, %v6264
        %6266 = vmatprep.mubr.bf16.mxu0 0
        %6267 = vmatmul.mubr.bf16.gmra.mrb[0].mxu0 %v4029
        %v6268 = vpop.f32.mrb[0].mxu0
        %v6269 = vadd.f32 %v4137, %v6268
        %v6270 = vpop.f32.mrb[0].mxu0
        %v6271 = vadd.f32 %v4141, %v6270
        %v6272 = vpop.f32.mrb[0].mxu0
        %v6273 = vadd.f32 %v4137, %v6272
        %v6274 = vpop.f32.mrb[0].mxu0
        %v6275 = vadd.f32 %v4141, %v6274
        %6276 = vmatprep.mubr.bf16.mxu0 0
        %6277 = vmatmul.mubr.bf16.gmra.mrb[0].mxu0 %v4030
        %v6278 = vpop.f32.mrb[0].mxu0
        %v6279 = vadd.f32 %v4137, %v6278
        %v6280 = vpop.f32.mrb[0].mxu0
        %v6281 = vadd.f32 %v4141, %v6280
        %v6282 = vpop.f32.mrb[0].mxu0
        %v6283 = vadd.f32 %v4137, %v6282
        %v6284 = vpop.f32.mrb[0].mxu0
        %v6285 = vadd.f32 %v4141, %v6284
        %6286 = vmatprep.mubr.bf16.mxu0 0
        %6287 = vmatmul.mubr.bf16.gmra.mrb[0].mxu0 %v4031
        %v6288 = vpop.f32.mrb[0].mxu0
        %v6289 = vadd.f32 %v4137, %v6288
        %v6290 = vpop.f32.mrb[0].mxu0
        %v6291 = vadd.f32 %v4141, %v6290
        %v6292 = vpop.f32.mrb[0].mxu0
        %v6293 = vadd.f32 %v4137, %v6292
        %v6294 = vpop.f32.mrb[0].mxu0
        %v6295 = vadd.f32 %v4141, %v6294
        %6296 = vmatprep.mubr.bf16.mxu0 0
        %6297 = vmatmul.mubr.bf16.gmra.mrb[0].mxu0 %v4032
        %v6298 = vpop.f32.mrb[0].mxu0
        %v6299 = vadd.f32 %v4137, %v6298
        %v6300 = vpop.f32.mrb[0].mxu0
        %v6301 = vadd.f32 %v4141, %v6300
        %v6302 = vpop.f32.mrb[0].mxu0
        %v6303 = vadd.f32 %v4137, %v6302
        %v6304 = vpop.f32.mrb[0].mxu0
        %v6305 = vadd.f32 %v4141, %v6304
        %6306 = vmatprep.mubr.bf16.mxu0 0
        %6307 = vmatmul.mubr.bf16.gmra.mrb[0].mxu0 %v4033
        %v6308 = vpop.f32.mrb[0].mxu0
        %v6309 = vadd.f32 %v4137, %v6308
        %v6310 = vpop.f32.mrb[0].mxu0
        %v6311 = vadd.f32 %v4141, %v6310
        %v6312 = vpop.f32.mrb[0].mxu0
        %v6313 = vadd.f32 %v4137, %v6312
        %v6314 = vpop.f32.mrb[0].mxu0
        %v6315 = vadd.f32 %v4141, %v6314
        %6316 = vmatprep.mubr.bf16.mxu0 0
        %6317 = vmatmul.mubr.bf16.gmra.mrb[0].mxu0 %v4034
        %v6318 = vpop.f32.mrb[0].mxu0
        %v6319 = vadd.f32 %v4137, %v6318
        %v6320 = vpop.f32.mrb[0].mxu0
        %v6321 = vadd.f32 %v4141, %v6320
        %v6322 = vpop.f32.mrb[0].mxu0
        %v6323 = vadd.f32 %v4137, %v6322
        %v6324 = vpop.f32.mrb[0].mxu0
        %v6325 = vadd.f32 %v4141, %v6324
        %6326 = vmatprep.mubr.bf16.mxu0 0
        %6327 = vmatmul.mubr.bf16.gmra.mrb[0].mxu0 %v4035
        %v6328 = vpop.f32.mrb[0].mxu0
        %v6329 = vadd.f32 %v4137, %v6328
        %v6330 = vpop.f32.mrb[0].mxu0
        %v6331 = vadd.f32 %v4141, %v6330
        %v6332 = vpop.f32.mrb[0].mxu0
        %v6333 = vadd.f32 %v4137, %v6332
        %v6334 = vpop.f32.mrb[0].mxu0
        %v6335 = vadd.f32 %v4141, %v6334
        %6336 = vmatprep.mubr.bf16.mxu0 0
        %6337 = vmatmul.mubr.bf16.gmra.mrb[0].mxu0 %v4036
        %v6338 = vpop.f32.mrb[0].mxu0
        %v6339 = vadd.f32 %v4137, %v6338
        %v6340 = vpop.f32.mrb[0].mxu0
        %v6341 = vadd.f32 %v4141, %v6340
        %v6342 = vpop.f32.mrb[0].mxu0
        %v6343 = vadd.f32 %v4137, %v6342
        %v6344 = vpop.f32.mrb[0].mxu0
        %v6345 = vadd.f32 %v4141, %v6344
        %6346 = vmatprep.mubr.bf16.mxu0 0
        %6347 = vmatmul.mubr.bf16.gmra.mrb[0].mxu0 %v4037
        %v6348 = vpop.f32.mrb[0].mxu0
        %v6349 = vadd.f32 %v4137, %v6348
        %v6350 = vpop.f32.mrb[0].mxu0
        %v6351 = vadd.f32 %v4141, %v6350
        %v6352 = vpop.f32.mrb[0].mxu0
        %v6353 = vadd.f32 %v4137, %v6352
        %v6354 = vpop.f32.mrb[0].mxu0
        %v6355 = vadd.f32 %v4141, %v6354
        %6356 = vmatprep.mubr.bf16.mxu0 0
        %6357 = vmatmul.mubr.bf16.gmra.mrb[0].mxu0 %v4038
        %v6358 = vpop.f32.mrb[0].mxu0
        %v6359 = vadd.f32 %v4137, %v6358
        %v6360 = vpop.f32.mrb[0].mxu0
        %v6361 = vadd.f32 %v4141, %v6360
        %v6362 = vpop.f32.mrb[0].mxu0
        %v6363 = vadd.f32 %v4137, %v6362
        %v6364 = vpop.f32.mrb[0].mxu0
        %v6365 = vadd.f32 %v4141, %v6364
        %6366 = vmatprep.mubr.bf16.mxu0 0
        %6367 = vmatmul.mubr.bf16.gmra.mrb[0].mxu0 %v4039
        %v6368 = vpop.f32.mrb[0].mxu0
        %v6369 = vadd.f32 %v4137, %v6368
        %v6370 = vpop.f32.mrb[0].mxu0
        %v6371 = vadd.f32 %v4141, %v6370
        %v6372 = vpop.f32.mrb[0].mxu0
        %v6373 = vadd.f32 %v4137, %v6372
        %v6374 = vpop.f32.mrb[0].mxu0
        %v6375 = vadd.f32 %v4141, %v6374
        %6376 = vmatprep.mubr.bf16.mxu0 0
        %6377 = vmatmul.mubr.bf16.gmra.mrb[0].mxu0 %v4040
        %v6378 = vpop.f32.mrb[0].mxu0
        %v6379 = vadd.f32 %v4137, %v6378
        %v6380 = vpop.f32.mrb[0].mxu0
        %v6381 = vadd.f32 %v4141, %v6380
        %v6382 = vpop.f32.mrb[0].mxu0
        %v6383 = vadd.f32 %v4137, %v6382
        %v6384 = vpop.f32.mrb[0].mxu0
        %v6385 = vadd.f32 %v4141, %v6384
        %6386 = vmatprep.mubr.bf16.mxu0 0
        %6387 = vmatmul.mubr.bf16.gmra.mrb[0].mxu0 %v4041
        %v6388 = vpop.f32.mrb[0].mxu0
        %v6389 = vadd.f32 %v4137, %v6388
        %v6390 = vpop.f32.mrb[0].mxu0
        %v6391 = vadd.f32 %v4141, %v6390
        %v6392 = vpop.f32.mrb[0].mxu0
        %v6393 = vadd.f32 %v4137, %v6392
        %v6394 = vpop.f32.mrb[0].mxu0
        %v6395 = vadd.f32 %v4141, %v6394
        %6396 = vmatprep.mubr.bf16.mxu0 0
        %6397 = vmatmul.mubr.bf16.gmra.mrb[0].mxu0 %v4042
        %v6398 = vpop.f32.mrb[0].mxu0
        %v6399 = vadd.f32 %v4137, %v6398
        %v6400 = vpop.f32.mrb[0].mxu0
        %v6401 = vadd.f32 %v4141, %v6400
        %v6402 = vpop.f32.mrb[0].mxu0
        %v6403 = vadd.f32 %v4137, %v6402
        %v6404 = vpop.f32.mrb[0].mxu0
        %v6405 = vadd.f32 %v4141, %v6404
        %6406 = vmatprep.mubr.bf16.mxu0 0
        %6407 = vmatmul.mubr.bf16.gmra.mrb[0].mxu0 %v4043
        %v6408 = vpop.f32.mrb[0].mxu0
        %v6409 = vadd.f32 %v4137, %v6408
        %v6410 = vpop.f32.mrb[0].mxu0
        %v6411 = vadd.f32 %v4141, %v6410
        %v6412 = vpop.f32.mrb[0].mxu0
        %v6413 = vadd.f32 %v4137, %v6412
        %v6414 = vpop.f32.mrb[0].mxu0
        %v6415 = vadd.f32 %v4141, %v6414
        %6416 = vmatprep.mubr.bf16.mxu0 0
        %6417 = vmatmul.mubr.bf16.gmra.mrb[0].mxu0 %v4044
        %v6418 = vpop.f32.mrb[0].mxu0
        %v6419 = vadd.f32 %v4137, %v6418
        %v6420 = vpop.f32.mrb[0].mxu0
        %v6421 = vadd.f32 %v4141, %v6420
        %v6422 = vpop.f32.mrb[0].mxu0
        %v6423 = vadd.f32 %v4137, %v6422
        %v6424 = vpop.f32.mrb[0].mxu0
        %v6425 = vadd.f32 %v4141, %v6424
        %6426 = vmatprep.mubr.bf16.mxu0 0
        %6427 = vmatmul.mubr.bf16.gmra.mrb[0].mxu0 %v4045
        %v6428 = vpop.f32.mrb[0].mxu0
        %v6429 = vadd.f32 %v4137, %v6428
        %v6430 = vpop.f32.mrb[0].mxu0
        %v6431 = vadd.f32 %v4141, %v6430
        %v6432 = vpop.f32.mrb[0].mxu0
        %v6433 = vadd.f32 %v4137, %v6432
        %v6434 = vpop.f32.mrb[0].mxu0
        %v6435 = vadd.f32 %v4141, %v6434
        %6436 = vmatprep.mubr.bf16.mxu0 0
        %6437 = vmatmul.mubr.bf16.gmra.mrb[0].mxu0 %v4046
        %v6438 = vpop.f32.mrb[0].mxu0
        %v6439 = vadd.f32 %v4137, %v6438
        %v6440 = vpop.f32.mrb[0].mxu0
        %v6441 = vadd.f32 %v4141, %v6440
        %v6442 = vpop.f32.mrb[0].mxu0
        %v6443 = vadd.f32 %v4137, %v6442
        %v6444 = vpop.f32.mrb[0].mxu0
        %v6445 = vadd.f32 %v4141, %v6444
        %6446 = vmatprep.mubr.bf16.mxu0 0
        %6447 = vmatmul.mubr.bf16.gmra.mrb[0].mxu0 %v4047
        %v6448 = vpop.f32.mrb[0].mxu0
        %v6449 = vadd.f32 %v4137, %v6448
        %v6450 = vpop.f32.mrb[0].mxu0
        %v6451 = vadd.f32 %v4141, %v6450
        %v6452 = vpop.f32.mrb[0].mxu0
        %v6453 = vadd.f32 %v4137, %v6452
        %v6454 = vpop.f32.mrb[0].mxu0
        %v6455 = vadd.f32 %v4141, %v6454
        %6456 = vmatprep.mubr.bf16.mxu0 0
        %6457 = vmatmul.mubr.bf16.gmra.mrb[0].mxu0 %v4048
        %v6458 = vpop.f32.mrb[0].mxu0
        %v6459 = vadd.f32 %v4137, %v6458
        %v6460 = vpop.f32.mrb[0].mxu0
        %v6461 = vadd.f32 %v4141, %v6460
        %v6462 = vpop.f32.mrb[0].mxu0
        %v6463 = vadd.f32 %v4137, %v6462
        %v6464 = vpop.f32.mrb[0].mxu0
        %v6465 = vadd.f32 %v4141, %v6464
        %6466 = vmatprep.mubr.bf16.mxu0 0
        %6467 = vmatmul.mubr.bf16.gmra.mrb[0].mxu0 %v4049
        %v6468 = vpop.f32.mrb[0].mxu0
        %v6469 = vadd.f32 %v4137, %v6468
        %v6470 = vpop.f32.mrb[0].mxu0
        %v6471 = vadd.f32 %v4141, %v6470
        %v6472 = vpop.f32.mrb[0].mxu0
        %v6473 = vadd.f32 %v4137, %v6472
        %v6474 = vpop.f32.mrb[0].mxu0
        %v6475 = vadd.f32 %v4141, %v6474
        %6476 = vmatprep.mubr.bf16.mxu0 0
        %6477 = vmatmul.mubr.bf16.gmra.mrb[0].mxu0 %v4050
        %v6478 = vpop.f32.mrb[0].mxu0
        %v6479 = vadd.f32 %v4137, %v6478
        %v6480 = vpop.f32.mrb[0].mxu0
        %v6481 = vadd.f32 %v4141, %v6480
        %v6482 = vpop.f32.mrb[0].mxu0
        %v6483 = vadd.f32 %v4137, %v6482
        %v6484 = vpop.f32.mrb[0].mxu0
        %v6485 = vadd.f32 %v4141, %v6484
        %6486 = vmatprep.mubr.bf16.mxu0 0
        %6487 = vmatmul.mubr.bf16.gmra.mrb[0].mxu0 %v4051
        %v6488 = vpop.f32.mrb[0].mxu0
        %v6489 = vadd.f32 %v4137, %v6488
        %v6490 = vpop.f32.mrb[0].mxu0
        %v6491 = vadd.f32 %v4141, %v6490
        %v6492 = vpop.f32.mrb[0].mxu0
        %v6493 = vadd.f32 %v4137, %v6492
        %v6494 = vpop.f32.mrb[0].mxu0
        %v6495 = vadd.f32 %v4141, %v6494
        %6496 = vdwg.mxu0
        %6497 = vmatprep.subr.bf16.mxu0 %v4357
        %6498 = vmatpush1.bf16.msra.mxu0 %v4356
        %6499 = vmatprep.subr.bf16.mxu0 %v4365
        %6500 = vmatpush1.bf16.msra.mxu0 %v4364
        %6501 = vmatprep.subr.bf16.mxu0 %v4373
        %6502 = vmatpush1.bf16.msra.mxu0 %v4372
        %6503 = vmatprep.subr.bf16.mxu0 %v4381
        %6504 = vmatpush1.bf16.msra.mxu0 %v4380
        %6505 = vmatprep.subr.bf16.mxu0 %v4389
        %6506 = vmatpush1.bf16.msra.mxu0 %v4388
        %6507 = vmatprep.subr.bf16.mxu0 %v4397
        %6508 = vmatpush1.bf16.msra.mxu0 %v4396
        %6509 = vmatprep.subr.bf16.mxu0 %v4405
        %6510 = vmatpush1.bf16.msra.mxu0 %v4404
        %6511 = vmatprep.subr.bf16.mxu0 %v4413
        %6512 = vmatpush1.bf16.msra.mxu0 %v4412
        %6513 = vmatprep.subr.bf16.mxu0 0
        %6514 = vmatpush1.bf16.msra.mxu0 0
        %6515 = vmatprep.subr.bf16.mxu0 0
        %6516 = vmatpush1.bf16.msra.mxu0 0
        %6517 = vmatprep.subr.bf16.mxu0 0
        %6518 = vmatpush1.bf16.msra.mxu0 0
        %6519 = vmatprep.subr.bf16.mxu0 0
        %6520 = vmatpush1.bf16.msra.mxu0 0
        %6521 = vmatprep.subr.bf16.mxu0 0
        %6522 = vmatpush1.bf16.msra.mxu0 0
        %6523 = vmatprep.subr.bf16.mxu0 0
        %6524 = vmatpush1.bf16.msra.mxu0 0
        %6525 = vmatprep.subr.bf16.mxu0 0
        %6526 = vmatpush1.bf16.msra.mxu0 0
        %6527 = vmatprep.subr.bf16.mxu0 0
        %6528 = vmatpush1.bf16.msra.mxu0 0
        %6529 = vmatprep.mubr.bf16.mxu0 0
        %6530 = vmatmul.mubr.bf16.gmra.mrb[0].mxu0 %v3988
        %v6531 = vpop.f32.mrb[0].mxu0
        %v6532 = vadd.f32 %v4145, %v6531
        %v6533 = vpop.f32.mrb[0].mxu0
        %v6534 = vadd.f32 %v4149, %v6533
        %v6535 = vpop.f32.mrb[0].mxu0
        %v6536 = vadd.f32 %v4145, %v6535
        %v6537 = vpop.f32.mrb[0].mxu0
        %v6538 = vadd.f32 %v4149, %v6537
        %6539 = vmatprep.mubr.bf16.mxu0 0
        %6540 = vmatmul.mubr.bf16.gmra.mrb[0].mxu0 %v3989
        %v6541 = vpop.f32.mrb[0].mxu0
        %v6542 = vadd.f32 %v4145, %v6541
        %v6543 = vpop.f32.mrb[0].mxu0
        %v6544 = vadd.f32 %v4149, %v6543
        %v6545 = vpop.f32.mrb[0].mxu0
        %v6546 = vadd.f32 %v4145, %v6545
        %v6547 = vpop.f32.mrb[0].mxu0
        %v6548 = vadd.f32 %v4149, %v6547
        %6549 = vmatprep.mubr.bf16.mxu0 0
        %6550 = vmatmul.mubr.bf16.gmra.mrb[0].mxu0 %v3990
        %v6551 = vpop.f32.mrb[0].mxu0
        %v6552 = vadd.f32 %v4145, %v6551
        %v6553 = vpop.f32.mrb[0].mxu0
        %v6554 = vadd.f32 %v4149, %v6553
        %v6555 = vpop.f32.mrb[0].mxu0
        %v6556 = vadd.f32 %v4145, %v6555
        %v6557 = vpop.f32.mrb[0].mxu0
        %v6558 = vadd.f32 %v4149, %v6557
        %6559 = vmatprep.mubr.bf16.mxu0 0
        %6560 = vmatmul.mubr.bf16.gmra.mrb[0].mxu0 %v3991
        %v6561 = vpop.f32.mrb[0].mxu0
        %v6562 = vadd.f32 %v4145, %v6561
        %v6563 = vpop.f32.mrb[0].mxu0
        %v6564 = vadd.f32 %v4149, %v6563
        %v6565 = vpop.f32.mrb[0].mxu0
        %v6566 = vadd.f32 %v4145, %v6565
        %v6567 = vpop.f32.mrb[0].mxu0
        %v6568 = vadd.f32 %v4149, %v6567
        %6569 = vmatprep.mubr.bf16.mxu0 0
        %6570 = vmatmul.mubr.bf16.gmra.mrb[0].mxu0 %v3992
        %v6571 = vpop.f32.mrb[0].mxu0
        %v6572 = vadd.f32 %v4145, %v6571
        %v6573 = vpop.f32.mrb[0].mxu0
        %v6574 = vadd.f32 %v4149, %v6573
        %v6575 = vpop.f32.mrb[0].mxu0
        %v6576 = vadd.f32 %v4145, %v6575
        %v6577 = vpop.f32.mrb[0].mxu0
        %v6578 = vadd.f32 %v4149, %v6577
        %6579 = vmatprep.mubr.bf16.mxu0 0
        %6580 = vmatmul.mubr.bf16.gmra.mrb[0].mxu0 %v3993
        %v6581 = vpop.f32.mrb[0].mxu0
        %v6582 = vadd.f32 %v4145, %v6581
        %v6583 = vpop.f32.mrb[0].mxu0
        %v6584 = vadd.f32 %v4149, %v6583
        %v6585 = vpop.f32.mrb[0].mxu0
        %v6586 = vadd.f32 %v4145, %v6585
        %v6587 = vpop.f32.mrb[0].mxu0
        %v6588 = vadd.f32 %v4149, %v6587
        %6589 = vmatprep.mubr.bf16.mxu0 0
        %6590 = vmatmul.mubr.bf16.gmra.mrb[0].mxu0 %v3994
        %v6591 = vpop.f32.mrb[0].mxu0
        %v6592 = vadd.f32 %v4145, %v6591
        %v6593 = vpop.f32.mrb[0].mxu0
        %v6594 = vadd.f32 %v4149, %v6593
        %v6595 = vpop.f32.mrb[0].mxu0
        %v6596 = vadd.f32 %v4145, %v6595
        %v6597 = vpop.f32.mrb[0].mxu0
        %v6598 = vadd.f32 %v4149, %v6597
        %6599 = vmatprep.mubr.bf16.mxu0 0
        %6600 = vmatmul.mubr.bf16.gmra.mrb[0].mxu0 %v3995
        %v6601 = vpop.f32.mrb[0].mxu0
        %v6602 = vadd.f32 %v4145, %v6601
        %v6603 = vpop.f32.mrb[0].mxu0
        %v6604 = vadd.f32 %v4149, %v6603
        %v6605 = vpop.f32.mrb[0].mxu0
        %v6606 = vadd.f32 %v4145, %v6605
        %v6607 = vpop.f32.mrb[0].mxu0
        %v6608 = vadd.f32 %v4149, %v6607
        %6609 = vmatprep.mubr.bf16.mxu0 0
        %6610 = vmatmul.mubr.bf16.gmra.mrb[0].mxu0 %v3996
        %v6611 = vpop.f32.mrb[0].mxu0
        %v6612 = vadd.f32 %v4145, %v6611
        %v6613 = vpop.f32.mrb[0].mxu0
        %v6614 = vadd.f32 %v4149, %v6613
        %v6615 = vpop.f32.mrb[0].mxu0
        %v6616 = vadd.f32 %v4145, %v6615
        %v6617 = vpop.f32.mrb[0].mxu0
        %v6618 = vadd.f32 %v4149, %v6617
        %6619 = vmatprep.mubr.bf16.mxu0 0
        %6620 = vmatmul.mubr.bf16.gmra.mrb[0].mxu0 %v3997
        %v6621 = vpop.f32.mrb[0].mxu0
        %v6622 = vadd.f32 %v4145, %v6621
        %v6623 = vpop.f32.mrb[0].mxu0
        %v6624 = vadd.f32 %v4149, %v6623
        %v6625 = vpop.f32.mrb[0].mxu0
        %v6626 = vadd.f32 %v4145, %v6625
        %v6627 = vpop.f32.mrb[0].mxu0
        %v6628 = vadd.f32 %v4149, %v6627
        %6629 = vmatprep.mubr.bf16.mxu0 0
        %6630 = vmatmul.mubr.bf16.gmra.mrb[0].mxu0 %v3998
        %v6631 = vpop.f32.mrb[0].mxu0
        %v6632 = vadd.f32 %v4145, %v6631
        %v6633 = vpop.f32.mrb[0].mxu0
        %v6634 = vadd.f32 %v4149, %v6633
        %v6635 = vpop.f32.mrb[0].mxu0
        %v6636 = vadd.f32 %v4145, %v6635
        %v6637 = vpop.f32.mrb[0].mxu0
        %v6638 = vadd.f32 %v4149, %v6637
        %6639 = vmatprep.mubr.bf16.mxu0 0
        %6640 = vmatmul.mubr.bf16.gmra.mrb[0].mxu0 %v3999
        %v6641 = vpop.f32.mrb[0].mxu0
        %v6642 = vadd.f32 %v4145, %v6641
        %v6643 = vpop.f32.mrb[0].mxu0
        %v6644 = vadd.f32 %v4149, %v6643
        %v6645 = vpop.f32.mrb[0].mxu0
        %v6646 = vadd.f32 %v4145, %v6645
        %v6647 = vpop.f32.mrb[0].mxu0
        %v6648 = vadd.f32 %v4149, %v6647
        %6649 = vmatprep.mubr.bf16.mxu0 0
        %6650 = vmatmul.mubr.bf16.gmra.mrb[0].mxu0 %v4000
        %v6651 = vpop.f32.mrb[0].mxu0
        %v6652 = vadd.f32 %v4145, %v6651
        %v6653 = vpop.f32.mrb[0].mxu0
        %v6654 = vadd.f32 %v4149, %v6653
        %v6655 = vpop.f32.mrb[0].mxu0
        %v6656 = vadd.f32 %v4145, %v6655
        %v6657 = vpop.f32.mrb[0].mxu0
        %v6658 = vadd.f32 %v4149, %v6657
        %6659 = vmatprep.mubr.bf16.mxu0 0
        %6660 = vmatmul.mubr.bf16.gmra.mrb[0].mxu0 %v4001
        %v6661 = vpop.f32.mrb[0].mxu0
        %v6662 = vadd.f32 %v4145, %v6661
        %v6663 = vpop.f32.mrb[0].mxu0
        %v6664 = vadd.f32 %v4149, %v6663
        %v6665 = vpop.f32.mrb[0].mxu0
        %v6666 = vadd.f32 %v4145, %v6665
        %v6667 = vpop.f32.mrb[0].mxu0
        %v6668 = vadd.f32 %v4149, %v6667
        %6669 = vmatprep.mubr.bf16.mxu0 0
        %6670 = vmatmul.mubr.bf16.gmra.mrb[0].mxu0 %v4002
        %v6671 = vpop.f32.mrb[0].mxu0
        %v6672 = vadd.f32 %v4145, %v6671
        %v6673 = vpop.f32.mrb[0].mxu0
        %v6674 = vadd.f32 %v4149, %v6673
        %v6675 = vpop.f32.mrb[0].mxu0
        %v6676 = vadd.f32 %v4145, %v6675
        %v6677 = vpop.f32.mrb[0].mxu0
        %v6678 = vadd.f32 %v4149, %v6677
        %6679 = vmatprep.mubr.bf16.mxu0 0
        %6680 = vmatmul.mubr.bf16.gmra.mrb[0].mxu0 %v4003
        %v6681 = vpop.f32.mrb[0].mxu0
        %v6682 = vadd.f32 %v4145, %v6681
        %v6683 = vpop.f32.mrb[0].mxu0
        %v6684 = vadd.f32 %v4149, %v6683
        %v6685 = vpop.f32.mrb[0].mxu0
        %v6686 = vadd.f32 %v4145, %v6685
        %v6687 = vpop.f32.mrb[0].mxu0
        %v6688 = vadd.f32 %v4149, %v6687
        %6689 = vmatprep.mubr.bf16.mxu0 0
        %6690 = vmatmul.mubr.bf16.gmra.mrb[0].mxu0 %v4004
        %v6691 = vpop.f32.mrb[0].mxu0
        %v6692 = vadd.f32 %v4145, %v6691
        %v6693 = vpop.f32.mrb[0].mxu0
        %v6694 = vadd.f32 %v4149, %v6693
        %v6695 = vpop.f32.mrb[0].mxu0
        %v6696 = vadd.f32 %v4145, %v6695
        %v6697 = vpop.f32.mrb[0].mxu0
        %v6698 = vadd.f32 %v4149, %v6697
        %6699 = vmatprep.mubr.bf16.mxu0 0
        %6700 = vmatmul.mubr.bf16.gmra.mrb[0].mxu0 %v4005
        %v6701 = vpop.f32.mrb[0].mxu0
        %v6702 = vadd.f32 %v4145, %v6701
        %v6703 = vpop.f32.mrb[0].mxu0
        %v6704 = vadd.f32 %v4149, %v6703
        %v6705 = vpop.f32.mrb[0].mxu0
        %v6706 = vadd.f32 %v4145, %v6705
        %v6707 = vpop.f32.mrb[0].mxu0
        %v6708 = vadd.f32 %v4149, %v6707
        %6709 = vmatprep.mubr.bf16.mxu0 0
        %6710 = vmatmul.mubr.bf16.gmra.mrb[0].mxu0 %v4006
        %v6711 = vpop.f32.mrb[0].mxu0
        %v6712 = vadd.f32 %v4145, %v6711
        %v6713 = vpop.f32.mrb[0].mxu0
        %v6714 = vadd.f32 %v4149, %v6713
        %v6715 = vpop.f32.mrb[0].mxu0
        %v6716 = vadd.f32 %v4145, %v6715
        %v6717 = vpop.f32.mrb[0].mxu0
        %v6718 = vadd.f32 %v4149, %v6717
        %6719 = vmatprep.mubr.bf16.mxu0 0
        %6720 = vmatmul.mubr.bf16.gmra.mrb[0].mxu0 %v4007
        %v6721 = vpop.f32.mrb[0].mxu0
        %v6722 = vadd.f32 %v4145, %v6721
        %v6723 = vpop.f32.mrb[0].mxu0
        %v6724 = vadd.f32 %v4149, %v6723
        %v6725 = vpop.f32.mrb[0].mxu0
        %v6726 = vadd.f32 %v4145, %v6725
        %v6727 = vpop.f32.mrb[0].mxu0
        %v6728 = vadd.f32 %v4149, %v6727
        %6729 = vmatprep.mubr.bf16.mxu0 0
        %6730 = vmatmul.mubr.bf16.gmra.mrb[0].mxu0 %v4008
        %v6731 = vpop.f32.mrb[0].mxu0
        %v6732 = vadd.f32 %v4145, %v6731
        %v6733 = vpop.f32.mrb[0].mxu0
        %v6734 = vadd.f32 %v4149, %v6733
        %v6735 = vpop.f32.mrb[0].mxu0
        %v6736 = vadd.f32 %v4145, %v6735
        %v6737 = vpop.f32.mrb[0].mxu0
        %v6738 = vadd.f32 %v4149, %v6737
        %6739 = vmatprep.mubr.bf16.mxu0 0
        %6740 = vmatmul.mubr.bf16.gmra.mrb[0].mxu0 %v4009
        %v6741 = vpop.f32.mrb[0].mxu0
        %v6742 = vadd.f32 %v4145, %v6741
        %v6743 = vpop.f32.mrb[0].mxu0
        %v6744 = vadd.f32 %v4149, %v6743
        %v6745 = vpop.f32.mrb[0].mxu0
        %v6746 = vadd.f32 %v4145, %v6745
        %v6747 = vpop.f32.mrb[0].mxu0
        %v6748 = vadd.f32 %v4149, %v6747
        %6749 = vmatprep.mubr.bf16.mxu0 0
        %6750 = vmatmul.mubr.bf16.gmra.mrb[0].mxu0 %v4010
        %v6751 = vpop.f32.mrb[0].mxu0
        %v6752 = vadd.f32 %v4145, %v6751
        %v6753 = vpop.f32.mrb[0].mxu0
        %v6754 = vadd.f32 %v4149, %v6753
        %v6755 = vpop.f32.mrb[0].mxu0
        %v6756 = vadd.f32 %v4145, %v6755
        %v6757 = vpop.f32.mrb[0].mxu0
        %v6758 = vadd.f32 %v4149, %v6757
        %6759 = vmatprep.mubr.bf16.mxu0 0
        %6760 = vmatmul.mubr.bf16.gmra.mrb[0].mxu0 %v4011
        %v6761 = vpop.f32.mrb[0].mxu0
        %v6762 = vadd.f32 %v4145, %v6761
        %v6763 = vpop.f32.mrb[0].mxu0
        %v6764 = vadd.f32 %v4149, %v6763
        %v6765 = vpop.f32.mrb[0].mxu0
        %v6766 = vadd.f32 %v4145, %v6765
        %v6767 = vpop.f32.mrb[0].mxu0
        %v6768 = vadd.f32 %v4149, %v6767
        %6769 = vmatprep.mubr.bf16.mxu0 0
        %6770 = vmatmul.mubr.bf16.gmra.mrb[0].mxu0 %v4012
        %v6771 = vpop.f32.mrb[0].mxu0
        %v6772 = vadd.f32 %v4145, %v6771
        %v6773 = vpop.f32.mrb[0].mxu0
        %v6774 = vadd.f32 %v4149, %v6773
        %v6775 = vpop.f32.mrb[0].mxu0
        %v6776 = vadd.f32 %v4145, %v6775
        %v6777 = vpop.f32.mrb[0].mxu0
        %v6778 = vadd.f32 %v4149, %v6777
        %6779 = vmatprep.mubr.bf16.mxu0 0
        %6780 = vmatmul.mubr.bf16.gmra.mrb[0].mxu0 %v4013
        %v6781 = vpop.f32.mrb[0].mxu0
        %v6782 = vadd.f32 %v4145, %v6781
        %v6783 = vpop.f32.mrb[0].mxu0
        %v6784 = vadd.f32 %v4149, %v6783
        %v6785 = vpop.f32.mrb[0].mxu0
        %v6786 = vadd.f32 %v4145, %v6785
        %v6787 = vpop.f32.mrb[0].mxu0
        %v6788 = vadd.f32 %v4149, %v6787
        %6789 = vmatprep.mubr.bf16.mxu0 0
        %6790 = vmatmul.mubr.bf16.gmra.mrb[0].mxu0 %v4014
        %v6791 = vpop.f32.mrb[0].mxu0
        %v6792 = vadd.f32 %v4145, %v6791
        %v6793 = vpop.f32.mrb[0].mxu0
        %v6794 = vadd.f32 %v4149, %v6793
        %v6795 = vpop.f32.mrb[0].mxu0
        %v6796 = vadd.f32 %v4145, %v6795
        %v6797 = vpop.f32.mrb[0].mxu0
        %v6798 = vadd.f32 %v4149, %v6797
        %6799 = vmatprep.mubr.bf16.mxu0 0
        %6800 = vmatmul.mubr.bf16.gmra.mrb[0].mxu0 %v4015
        %v6801 = vpop.f32.mrb[0].mxu0
        %v6802 = vadd.f32 %v4145, %v6801
        %v6803 = vpop.f32.mrb[0].mxu0
        %v6804 = vadd.f32 %v4149, %v6803
        %v6805 = vpop.f32.mrb[0].mxu0
        %v6806 = vadd.f32 %v4145, %v6805
        %v6807 = vpop.f32.mrb[0].mxu0
        %v6808 = vadd.f32 %v4149, %v6807
        %6809 = vmatprep.mubr.bf16.mxu0 0
        %6810 = vmatmul.mubr.bf16.gmra.mrb[0].mxu0 %v4016
        %v6811 = vpop.f32.mrb[0].mxu0
        %v6812 = vadd.f32 %v4145, %v6811
        %v6813 = vpop.f32.mrb[0].mxu0
        %v6814 = vadd.f32 %v4149, %v6813
        %v6815 = vpop.f32.mrb[0].mxu0
        %v6816 = vadd.f32 %v4145, %v6815
        %v6817 = vpop.f32.mrb[0].mxu0
        %v6818 = vadd.f32 %v4149, %v6817
        %6819 = vmatprep.mubr.bf16.mxu0 0
        %6820 = vmatmul.mubr.bf16.gmra.mrb[0].mxu0 %v4017
        %v6821 = vpop.f32.mrb[0].mxu0
        %v6822 = vadd.f32 %v4145, %v6821
        %v6823 = vpop.f32.mrb[0].mxu0
        %v6824 = vadd.f32 %v4149, %v6823
        %v6825 = vpop.f32.mrb[0].mxu0
        %v6826 = vadd.f32 %v4145, %v6825
        %v6827 = vpop.f32.mrb[0].mxu0
        %v6828 = vadd.f32 %v4149, %v6827
        %6829 = vmatprep.mubr.bf16.mxu0 0
        %6830 = vmatmul.mubr.bf16.gmra.mrb[0].mxu0 %v4018
        %v6831 = vpop.f32.mrb[0].mxu0
        %v6832 = vadd.f32 %v4145, %v6831
        %v6833 = vpop.f32.mrb[0].mxu0
        %v6834 = vadd.f32 %v4149, %v6833
        %v6835 = vpop.f32.mrb[0].mxu0
        %v6836 = vadd.f32 %v4145, %v6835
        %v6837 = vpop.f32.mrb[0].mxu0
        %v6838 = vadd.f32 %v4149, %v6837
        %6839 = vmatprep.mubr.bf16.mxu0 0
        %6840 = vmatmul.mubr.bf16.gmra.mrb[0].mxu0 %v4019
        %v6841 = vpop.f32.mrb[0].mxu0
        %v6842 = vadd.f32 %v4145, %v6841
        %v6843 = vpop.f32.mrb[0].mxu0
        %v6844 = vadd.f32 %v4149, %v6843
        %v6845 = vpop.f32.mrb[0].mxu0
        %v6846 = vadd.f32 %v4145, %v6845
        %v6847 = vpop.f32.mrb[0].mxu0
        %v6848 = vadd.f32 %v4149, %v6847
        %6849 = vmatprep.mubr.bf16.mxu0 0
        %6850 = vmatmul.mubr.bf16.gmra.mrb[0].mxu0 %v4020
        %v6851 = vpop.f32.mrb[0].mxu0
        %v6852 = vadd.f32 %v4145, %v6851
        %v6853 = vpop.f32.mrb[0].mxu0
        %v6854 = vadd.f32 %v4149, %v6853
        %v6855 = vpop.f32.mrb[0].mxu0
        %v6856 = vadd.f32 %v4145, %v6855
        %v6857 = vpop.f32.mrb[0].mxu0
        %v6858 = vadd.f32 %v4149, %v6857
        %6859 = vmatprep.mubr.bf16.mxu0 0
        %6860 = vmatmul.mubr.bf16.gmra.mrb[0].mxu0 %v4021
        %v6861 = vpop.f32.mrb[0].mxu0
        %v6862 = vadd.f32 %v4145, %v6861
        %v6863 = vpop.f32.mrb[0].mxu0
        %v6864 = vadd.f32 %v4149, %v6863
        %v6865 = vpop.f32.mrb[0].mxu0
        %v6866 = vadd.f32 %v4145, %v6865
        %v6867 = vpop.f32.mrb[0].mxu0
        %v6868 = vadd.f32 %v4149, %v6867
        %6869 = vmatprep.mubr.bf16.mxu0 0
        %6870 = vmatmul.mubr.bf16.gmra.mrb[0].mxu0 %v4022
        %v6871 = vpop.f32.mrb[0].mxu0
        %v6872 = vadd.f32 %v4145, %v6871
        %v6873 = vpop.f32.mrb[0].mxu0
        %v6874 = vadd.f32 %v4149, %v6873
        %v6875 = vpop.f32.mrb[0].mxu0
        %v6876 = vadd.f32 %v4145, %v6875
        %v6877 = vpop.f32.mrb[0].mxu0
        %v6878 = vadd.f32 %v4149, %v6877
        %6879 = vmatprep.mubr.bf16.mxu0 0
        %6880 = vmatmul.mubr.bf16.gmra.mrb[0].mxu0 %v4023
        %v6881 = vpop.f32.mrb[0].mxu0
        %v6882 = vadd.f32 %v4145, %v6881
        %v6883 = vpop.f32.mrb[0].mxu0
        %v6884 = vadd.f32 %v4149, %v6883
        %v6885 = vpop.f32.mrb[0].mxu0
        %v6886 = vadd.f32 %v4145, %v6885
        %v6887 = vpop.f32.mrb[0].mxu0
        %v6888 = vadd.f32 %v4149, %v6887
        %6889 = vmatprep.mubr.bf16.mxu0 0
        %6890 = vmatmul.mubr.bf16.gmra.mrb[0].mxu0 %v4024
        %v6891 = vpop.f32.mrb[0].mxu0
        %v6892 = vadd.f32 %v4145, %v6891
        %v6893 = vpop.f32.mrb[0].mxu0
        %v6894 = vadd.f32 %v4149, %v6893
        %v6895 = vpop.f32.mrb[0].mxu0
        %v6896 = vadd.f32 %v4145, %v6895
        %v6897 = vpop.f32.mrb[0].mxu0
        %v6898 = vadd.f32 %v4149, %v6897
        %6899 = vmatprep.mubr.bf16.mxu0 0
        %6900 = vmatmul.mubr.bf16.gmra.mrb[0].mxu0 %v4025
        %v6901 = vpop.f32.mrb[0].mxu0
        %v6902 = vadd.f32 %v4145, %v6901
        %v6903 = vpop.f32.mrb[0].mxu0
        %v6904 = vadd.f32 %v4149, %v6903
        %v6905 = vpop.f32.mrb[0].mxu0
        %v6906 = vadd.f32 %v4145, %v6905
        %v6907 = vpop.f32.mrb[0].mxu0
        %v6908 = vadd.f32 %v4149, %v6907
        %6909 = vmatprep.mubr.bf16.mxu0 0
        %6910 = vmatmul.mubr.bf16.gmra.mrb[0].mxu0 %v4026
        %v6911 = vpop.f32.mrb[0].mxu0
        %v6912 = vadd.f32 %v4145, %v6911
        %v6913 = vpop.f32.mrb[0].mxu0
        %v6914 = vadd.f32 %v4149, %v6913
        %v6915 = vpop.f32.mrb[0].mxu0
        %v6916 = vadd.f32 %v4145, %v6915
        %v6917 = vpop.f32.mrb[0].mxu0
        %v6918 = vadd.f32 %v4149, %v6917
        %6919 = vmatprep.mubr.bf16.mxu0 0
        %6920 = vmatmul.mubr.bf16.gmra.mrb[0].mxu0 %v4027
        %v6921 = vpop.f32.mrb[0].mxu0
        %v6922 = vadd.f32 %v4145, %v6921
        %v6923 = vpop.f32.mrb[0].mxu0
        %v6924 = vadd.f32 %v4149, %v6923
        %v6925 = vpop.f32.mrb[0].mxu0
        %v6926 = vadd.f32 %v4145, %v6925
        %v6927 = vpop.f32.mrb[0].mxu0
        %v6928 = vadd.f32 %v4149, %v6927
        %6929 = vmatprep.mubr.bf16.mxu0 0
        %6930 = vmatmul.mubr.bf16.gmra.mrb[0].mxu0 %v4028
        %v6931 = vpop.f32.mrb[0].mxu0
        %v6932 = vadd.f32 %v4145, %v6931
        %v6933 = vpop.f32.mrb[0].mxu0
        %v6934 = vadd.f32 %v4149, %v6933
        %v6935 = vpop.f32.mrb[0].mxu0
        %v6936 = vadd.f32 %v4145, %v6935
        %v6937 = vpop.f32.mrb[0].mxu0
        %v6938 = vadd.f32 %v4149, %v6937
        %6939 = vmatprep.mubr.bf16.mxu0 0
        %6940 = vmatmul.mubr.bf16.gmra.mrb[0].mxu0 %v4029
        %v6941 = vpop.f32.mrb[0].mxu0
        %v6942 = vadd.f32 %v4145, %v6941
        %v6943 = vpop.f32.mrb[0].mxu0
        %v6944 = vadd.f32 %v4149, %v6943
        %v6945 = vpop.f32.mrb[0].mxu0
        %v6946 = vadd.f32 %v4145, %v6945
        %v6947 = vpop.f32.mrb[0].mxu0
        %v6948 = vadd.f32 %v4149, %v6947
        %6949 = vmatprep.mubr.bf16.mxu0 0
        %6950 = vmatmul.mubr.bf16.gmra.mrb[0].mxu0 %v4030
        %v6951 = vpop.f32.mrb[0].mxu0
        %v6952 = vadd.f32 %v4145, %v6951
        %v6953 = vpop.f32.mrb[0].mxu0
        %v6954 = vadd.f32 %v4149, %v6953
        %v6955 = vpop.f32.mrb[0].mxu0
        %v6956 = vadd.f32 %v4145, %v6955
        %v6957 = vpop.f32.mrb[0].mxu0
        %v6958 = vadd.f32 %v4149, %v6957
        %6959 = vmatprep.mubr.bf16.mxu0 0
        %6960 = vmatmul.mubr.bf16.gmra.mrb[0].mxu0 %v4031
        %v6961 = vpop.f32.mrb[0].mxu0
        %v6962 = vadd.f32 %v4145, %v6961
        %v6963 = vpop.f32.mrb[0].mxu0
        %v6964 = vadd.f32 %v4149, %v6963
        %v6965 = vpop.f32.mrb[0].mxu0
        %v6966 = vadd.f32 %v4145, %v6965
        %v6967 = vpop.f32.mrb[0].mxu0
        %v6968 = vadd.f32 %v4149, %v6967
        %6969 = vmatprep.mubr.bf16.mxu0 0
        %6970 = vmatmul.mubr.bf16.gmra.mrb[0].mxu0 %v4032
        %v6971 = vpop.f32.mrb[0].mxu0
        %v6972 = vadd.f32 %v4145, %v6971
        %v6973 = vpop.f32.mrb[0].mxu0
        %v6974 = vadd.f32 %v4149, %v6973
        %v6975 = vpop.f32.mrb[0].mxu0
        %v6976 = vadd.f32 %v4145, %v6975
        %v6977 = vpop.f32.mrb[0].mxu0
        %v6978 = vadd.f32 %v4149, %v6977
        %6979 = vmatprep.mubr.bf16.mxu0 0
        %6980 = vmatmul.mubr.bf16.gmra.mrb[0].mxu0 %v4033
        %v6981 = vpop.f32.mrb[0].mxu0
        %v6982 = vadd.f32 %v4145, %v6981
        %v6983 = vpop.f32.mrb[0].mxu0
        %v6984 = vadd.f32 %v4149, %v6983
        %v6985 = vpop.f32.mrb[0].mxu0
        %v6986 = vadd.f32 %v4145, %v6985
        %v6987 = vpop.f32.mrb[0].mxu0
        %v6988 = vadd.f32 %v4149, %v6987
        %6989 = vmatprep.mubr.bf16.mxu0 0
        %6990 = vmatmul.mubr.bf16.gmra.mrb[0].mxu0 %v4034
        %v6991 = vpop.f32.mrb[0].mxu0
        %v6992 = vadd.f32 %v4145, %v6991
        %v6993 = vpop.f32.mrb[0].mxu0
        %v6994 = vadd.f32 %v4149, %v6993
        %v6995 = vpop.f32.mrb[0].mxu0
        %v6996 = vadd.f32 %v4145, %v6995
        %v6997 = vpop.f32.mrb[0].mxu0
        %v6998 = vadd.f32 %v4149, %v6997
        %6999 = vmatprep.mubr.bf16.mxu0 0
        %7000 = vmatmul.mubr.bf16.gmra.mrb[0].mxu0 %v4035
        %v7001 = vpop.f32.mrb[0].mxu0
        %v7002 = vadd.f32 %v4145, %v7001
        %v7003 = vpop.f32.mrb[0].mxu0
        %v7004 = vadd.f32 %v4149, %v7003
        %v7005 = vpop.f32.mrb[0].mxu0
        %v7006 = vadd.f32 %v4145, %v7005
        %v7007 = vpop.f32.mrb[0].mxu0
        %v7008 = vadd.f32 %v4149, %v7007
        %7009 = vmatprep.mubr.bf16.mxu0 0
        %7010 = vmatmul.mubr.bf16.gmra.mrb[0].mxu0 %v4036
        %v7011 = vpop.f32.mrb[0].mxu0
        %v7012 = vadd.f32 %v4145, %v7011
        %v7013 = vpop.f32.mrb[0].mxu0
        %v7014 = vadd.f32 %v4149, %v7013
        %v7015 = vpop.f32.mrb[0].mxu0
        %v7016 = vadd.f32 %v4145, %v7015
        %v7017 = vpop.f32.mrb[0].mxu0
        %v7018 = vadd.f32 %v4149, %v7017
        %7019 = vmatprep.mubr.bf16.mxu0 0
        %7020 = vmatmul.mubr.bf16.gmra.mrb[0].mxu0 %v4037
        %v7021 = vpop.f32.mrb[0].mxu0
        %v7022 = vadd.f32 %v4145, %v7021
        %v7023 = vpop.f32.mrb[0].mxu0
        %v7024 = vadd.f32 %v4149, %v7023
        %v7025 = vpop.f32.mrb[0].mxu0
        %v7026 = vadd.f32 %v4145, %v7025
        %v7027 = vpop.f32.mrb[0].mxu0
        %v7028 = vadd.f32 %v4149, %v7027
        %7029 = vmatprep.mubr.bf16.mxu0 0
        %7030 = vmatmul.mubr.bf16.gmra.mrb[0].mxu0 %v4038
        %v7031 = vpop.f32.mrb[0].mxu0
        %v7032 = vadd.f32 %v4145, %v7031
        %v7033 = vpop.f32.mrb[0].mxu0
        %v7034 = vadd.f32 %v4149, %v7033
        %v7035 = vpop.f32.mrb[0].mxu0
        %v7036 = vadd.f32 %v4145, %v7035
        %v7037 = vpop.f32.mrb[0].mxu0
        %v7038 = vadd.f32 %v4149, %v7037
        %7039 = vmatprep.mubr.bf16.mxu0 0
        %7040 = vmatmul.mubr.bf16.gmra.mrb[0].mxu0 %v4039
        %v7041 = vpop.f32.mrb[0].mxu0
        %v7042 = vadd.f32 %v4145, %v7041
        %v7043 = vpop.f32.mrb[0].mxu0
        %v7044 = vadd.f32 %v4149, %v7043
        %v7045 = vpop.f32.mrb[0].mxu0
        %v7046 = vadd.f32 %v4145, %v7045
        %v7047 = vpop.f32.mrb[0].mxu0
        %v7048 = vadd.f32 %v4149, %v7047
        %7049 = vmatprep.mubr.bf16.mxu0 0
        %7050 = vmatmul.mubr.bf16.gmra.mrb[0].mxu0 %v4040
        %v7051 = vpop.f32.mrb[0].mxu0
        %v7052 = vadd.f32 %v4145, %v7051
        %v7053 = vpop.f32.mrb[0].mxu0
        %v7054 = vadd.f32 %v4149, %v7053
        %v7055 = vpop.f32.mrb[0].mxu0
        %v7056 = vadd.f32 %v4145, %v7055
        %v7057 = vpop.f32.mrb[0].mxu0
        %v7058 = vadd.f32 %v4149, %v7057
        %7059 = vmatprep.mubr.bf16.mxu0 0
        %7060 = vmatmul.mubr.bf16.gmra.mrb[0].mxu0 %v4041
        %v7061 = vpop.f32.mrb[0].mxu0
        %v7062 = vadd.f32 %v4145, %v7061
        %v7063 = vpop.f32.mrb[0].mxu0
        %v7064 = vadd.f32 %v4149, %v7063
        %v7065 = vpop.f32.mrb[0].mxu0
        %v7066 = vadd.f32 %v4145, %v7065
        %v7067 = vpop.f32.mrb[0].mxu0
        %v7068 = vadd.f32 %v4149, %v7067
        %7069 = vmatprep.mubr.bf16.mxu0 0
        %7070 = vmatmul.mubr.bf16.gmra.mrb[0].mxu0 %v4042
        %v7071 = vpop.f32.mrb[0].mxu0
        %v7072 = vadd.f32 %v4145, %v7071
        %v7073 = vpop.f32.mrb[0].mxu0
        %v7074 = vadd.f32 %v4149, %v7073
        %v7075 = vpop.f32.mrb[0].mxu0
        %v7076 = vadd.f32 %v4145, %v7075
        %v7077 = vpop.f32.mrb[0].mxu0
        %v7078 = vadd.f32 %v4149, %v7077
        %7079 = vmatprep.mubr.bf16.mxu0 0
        %7080 = vmatmul.mubr.bf16.gmra.mrb[0].mxu0 %v4043
        %v7081 = vpop.f32.mrb[0].mxu0
        %v7082 = vadd.f32 %v4145, %v7081
        %v7083 = vpop.f32.mrb[0].mxu0
        %v7084 = vadd.f32 %v4149, %v7083
        %v7085 = vpop.f32.mrb[0].mxu0
        %v7086 = vadd.f32 %v4145, %v7085
        %v7087 = vpop.f32.mrb[0].mxu0
        %v7088 = vadd.f32 %v4149, %v7087
        %7089 = vmatprep.mubr.bf16.mxu0 0
        %7090 = vmatmul.mubr.bf16.gmra.mrb[0].mxu0 %v4044
        %v7091 = vpop.f32.mrb[0].mxu0
        %v7092 = vadd.f32 %v4145, %v7091
        %v7093 = vpop.f32.mrb[0].mxu0
        %v7094 = vadd.f32 %v4149, %v7093
        %v7095 = vpop.f32.mrb[0].mxu0
        %v7096 = vadd.f32 %v4145, %v7095
        %v7097 = vpop.f32.mrb[0].mxu0
        %v7098 = vadd.f32 %v4149, %v7097
        %7099 = vmatprep.mubr.bf16.mxu0 0
        %7100 = vmatmul.mubr.bf16.gmra.mrb[0].mxu0 %v4045
        %v7101 = vpop.f32.mrb[0].mxu0
        %v7102 = vadd.f32 %v4145, %v7101
        %v7103 = vpop.f32.mrb[0].mxu0
        %v7104 = vadd.f32 %v4149, %v7103
        %v7105 = vpop.f32.mrb[0].mxu0
        %v7106 = vadd.f32 %v4145, %v7105
        %v7107 = vpop.f32.mrb[0].mxu0
        %v7108 = vadd.f32 %v4149, %v7107
        %7109 = vmatprep.mubr.bf16.mxu0 0
        %7110 = vmatmul.mubr.bf16.gmra.mrb[0].mxu0 %v4046
        %v7111 = vpop.f32.mrb[0].mxu0
        %v7112 = vadd.f32 %v4145, %v7111
        %v7113 = vpop.f32.mrb[0].mxu0
        %v7114 = vadd.f32 %v4149, %v7113
        %v7115 = vpop.f32.mrb[0].mxu0
        %v7116 = vadd.f32 %v4145, %v7115
        %v7117 = vpop.f32.mrb[0].mxu0
        %v7118 = vadd.f32 %v4149, %v7117
        %7119 = vmatprep.mubr.bf16.mxu0 0
        %7120 = vmatmul.mubr.bf16.gmra.mrb[0].mxu0 %v4047
        %v7121 = vpop.f32.mrb[0].mxu0
        %v7122 = vadd.f32 %v4145, %v7121
        %v7123 = vpop.f32.mrb[0].mxu0
        %v7124 = vadd.f32 %v4149, %v7123
        %v7125 = vpop.f32.mrb[0].mxu0
        %v7126 = vadd.f32 %v4145, %v7125
        %v7127 = vpop.f32.mrb[0].mxu0
        %v7128 = vadd.f32 %v4149, %v7127
        %7129 = vmatprep.mubr.bf16.mxu0 0
        %7130 = vmatmul.mubr.bf16.gmra.mrb[0].mxu0 %v4048
        %v7131 = vpop.f32.mrb[0].mxu0
        %v7132 = vadd.f32 %v4145, %v7131
        %v7133 = vpop.f32.mrb[0].mxu0
        %v7134 = vadd.f32 %v4149, %v7133
        %v7135 = vpop.f32.mrb[0].mxu0
        %v7136 = vadd.f32 %v4145, %v7135
        %v7137 = vpop.f32.mrb[0].mxu0
        %v7138 = vadd.f32 %v4149, %v7137
        %7139 = vmatprep.mubr.bf16.mxu0 0
        %7140 = vmatmul.mubr.bf16.gmra.mrb[0].mxu0 %v4049
        %v7141 = vpop.f32.mrb[0].mxu0
        %v7142 = vadd.f32 %v4145, %v7141
        %v7143 = vpop.f32.mrb[0].mxu0
        %v7144 = vadd.f32 %v4149, %v7143
        %v7145 = vpop.f32.mrb[0].mxu0
        %v7146 = vadd.f32 %v4145, %v7145
        %v7147 = vpop.f32.mrb[0].mxu0
        %v7148 = vadd.f32 %v4149, %v7147
        %7149 = vmatprep.mubr.bf16.mxu0 0
        %7150 = vmatmul.mubr.bf16.gmra.mrb[0].mxu0 %v4050
        %v7151 = vpop.f32.mrb[0].mxu0
        %v7152 = vadd.f32 %v4145, %v7151
        %v7153 = vpop.f32.mrb[0].mxu0
        %v7154 = vadd.f32 %v4149, %v7153
        %v7155 = vpop.f32.mrb[0].mxu0
        %v7156 = vadd.f32 %v4145, %v7155
        %v7157 = vpop.f32.mrb[0].mxu0
        %v7158 = vadd.f32 %v4149, %v7157
        %7159 = vmatprep.mubr.bf16.mxu0 0
        %7160 = vmatmul.mubr.bf16.gmra.mrb[0].mxu0 %v4051
        %v7161 = vpop.f32.mrb[0].mxu0
        %v7162 = vadd.f32 %v4145, %v7161
        %v7163 = vpop.f32.mrb[0].mxu0
        %v7164 = vadd.f32 %v4149, %v7163
        %v7165 = vpop.f32.mrb[0].mxu0
        %v7166 = vadd.f32 %v4145, %v7165
        %v7167 = vpop.f32.mrb[0].mxu0
        %v7168 = vadd.f32 %v4149, %v7167
        %7169 = vdwg.mxu0
        %v7170 = vmax.f32 %v4513, 0.0
        %v7171 = vmax.f32 %v4515, 0.0
        %v7172 = vmax.f32 %v5186, 0.0
        %v7173 = vmax.f32 %v5188, 0.0
        %v7174 = vmax.f32 %v5859, 0.0
        %v7175 = vmax.f32 %v5861, 0.0
        %v7176 = vmax.f32 %v6532, 0.0
        %v7177 = vmax.f32 %v6534, 0.0
        %v7178 = vmax.f32 %v4517, 0.0
        %v7179 = vmax.f32 %v4519, 0.0
        %v7180 = vmax.f32 %v5190, 0.0
        %v7181 = vmax.f32 %v5192, 0.0
        %v7182 = vmax.f32 %v5863, 0.0
        %v7183 = vmax.f32 %v5865, 0.0
        %v7184 = vmax.f32 %v6536, 0.0
        %v7185 = vmax.f32 %v6538, 0.0
        %v7186 = vmax.f32 %v4523, 0.0
        %v7187 = vmax.f32 %v4525, 0.0
        %v7188 = vmax.f32 %v5196, 0.0
        %v7189 = vmax.f32 %v5198, 0.0
        %v7190 = vmax.f32 %v5869, 0.0
        %v7191 = vmax.f32 %v5871, 0.0
        %v7192 = vmax.f32 %v6542, 0.0
        %v7193 = vmax.f32 %v6544, 0.0
        %v7194 = vmax.f32 %v4527, 0.0
        %v7195 = vmax.f32 %v4529, 0.0
        %v7196 = vmax.f32 %v5200, 0.0
        %v7197 = vmax.f32 %v5202, 0.0
        %v7198 = vmax.f32 %v5873, 0.0
        %v7199 = vmax.f32 %v5875, 0.0
        %v7200 = vmax.f32 %v6546, 0.0
        %v7201 = vmax.f32 %v6548, 0.0
        %v7202 = vmax.f32 %v4533, 0.0
        %v7203 = vmax.f32 %v4535, 0.0
        %v7204 = vmax.f32 %v5206, 0.0
        %v7205 = vmax.f32 %v5208, 0.0
        %v7206 = vmax.f32 %v5879, 0.0
        %v7207 = vmax.f32 %v5881, 0.0
        %v7208 = vmax.f32 %v6552, 0.0
        %v7209 = vmax.f32 %v6554, 0.0
        %v7210 = vmax.f32 %v4537, 0.0
        %v7211 = vmax.f32 %v4539, 0.0
        %v7212 = vmax.f32 %v5210, 0.0
        %v7213 = vmax.f32 %v5212, 0.0
        %v7214 = vmax.f32 %v5883, 0.0
        %v7215 = vmax.f32 %v5885, 0.0
        %v7216 = vmax.f32 %v6556, 0.0
        %v7217 = vmax.f32 %v6558, 0.0
        %v7218 = vmax.f32 %v4543, 0.0
        %v7219 = vmax.f32 %v4545, 0.0
        %v7220 = vmax.f32 %v5216, 0.0
        %v7221 = vmax.f32 %v5218, 0.0
        %v7222 = vmax.f32 %v5889, 0.0
        %v7223 = vmax.f32 %v5891, 0.0
        %v7224 = vmax.f32 %v6562, 0.0
        %v7225 = vmax.f32 %v6564, 0.0
        %v7226 = vmax.f32 %v4547, 0.0
        %v7227 = vmax.f32 %v4549, 0.0
        %v7228 = vmax.f32 %v5220, 0.0
        %v7229 = vmax.f32 %v5222, 0.0
        %v7230 = vmax.f32 %v5893, 0.0
        %v7231 = vmax.f32 %v5895, 0.0
        %v7232 = vmax.f32 %v6566, 0.0
        %v7233 = vmax.f32 %v6568, 0.0
        %v7234 = vmax.f32 %v4553, 0.0
        %v7235 = vmax.f32 %v4555, 0.0
        %v7236 = vmax.f32 %v5226, 0.0
        %v7237 = vmax.f32 %v5228, 0.0
        %v7238 = vmax.f32 %v5899, 0.0
        %v7239 = vmax.f32 %v5901, 0.0
        %v7240 = vmax.f32 %v6572, 0.0
        %v7241 = vmax.f32 %v6574, 0.0
        %v7242 = vmax.f32 %v4557, 0.0
        %v7243 = vmax.f32 %v4559, 0.0
        %v7244 = vmax.f32 %v5230, 0.0
        %v7245 = vmax.f32 %v5232, 0.0
        %v7246 = vmax.f32 %v5903, 0.0
        %v7247 = vmax.f32 %v5905, 0.0
        %v7248 = vmax.f32 %v6576, 0.0
        %v7249 = vmax.f32 %v6578, 0.0
        %v7250 = vmax.f32 %v4563, 0.0
        %v7251 = vmax.f32 %v4565, 0.0
        %v7252 = vmax.f32 %v5236, 0.0
        %v7253 = vmax.f32 %v5238, 0.0
        %v7254 = vmax.f32 %v5909, 0.0
        %v7255 = vmax.f32 %v5911, 0.0
        %v7256 = vmax.f32 %v6582, 0.0
        %v7257 = vmax.f32 %v6584, 0.0
        %v7258 = vmax.f32 %v4567, 0.0
        %v7259 = vmax.f32 %v4569, 0.0
        %v7260 = vmax.f32 %v5240, 0.0
        %v7261 = vmax.f32 %v5242, 0.0
        %v7262 = vmax.f32 %v5913, 0.0
        %v7263 = vmax.f32 %v5915, 0.0
        %v7264 = vmax.f32 %v6586, 0.0
        %v7265 = vmax.f32 %v6588, 0.0
        %v7266 = vmax.f32 %v4573, 0.0
        %v7267 = vmax.f32 %v4575, 0.0
        %v7268 = vmax.f32 %v5246, 0.0
        %v7269 = vmax.f32 %v5248, 0.0
        %v7270 = vmax.f32 %v5919, 0.0
        %v7271 = vmax.f32 %v5921, 0.0
        %v7272 = vmax.f32 %v6592, 0.0
        %v7273 = vmax.f32 %v6594, 0.0
        %v7274 = vmax.f32 %v4577, 0.0
        %v7275 = vmax.f32 %v4579, 0.0
        %v7276 = vmax.f32 %v5250, 0.0
        %v7277 = vmax.f32 %v5252, 0.0
        %v7278 = vmax.f32 %v5923, 0.0
        %v7279 = vmax.f32 %v5925, 0.0
        %v7280 = vmax.f32 %v6596, 0.0
        %v7281 = vmax.f32 %v6598, 0.0
        %v7282 = vmax.f32 %v4583, 0.0
        %v7283 = vmax.f32 %v4585, 0.0
        %v7284 = vmax.f32 %v5256, 0.0
        %v7285 = vmax.f32 %v5258, 0.0
        %v7286 = vmax.f32 %v5929, 0.0
        %v7287 = vmax.f32 %v5931, 0.0
        %v7288 = vmax.f32 %v6602, 0.0
        %v7289 = vmax.f32 %v6604, 0.0
        %v7290 = vmax.f32 %v4587, 0.0
        %v7291 = vmax.f32 %v4589, 0.0
        %v7292 = vmax.f32 %v5260, 0.0
        %v7293 = vmax.f32 %v5262, 0.0
        %v7294 = vmax.f32 %v5933, 0.0
        %v7295 = vmax.f32 %v5935, 0.0
        %v7296 = vmax.f32 %v6606, 0.0
        %v7297 = vmax.f32 %v6608, 0.0
        %v7298 = vmax.f32 %v4593, 0.0
        %v7299 = vmax.f32 %v4595, 0.0
        %v7300 = vmax.f32 %v5266, 0.0
        %v7301 = vmax.f32 %v5268, 0.0
        %v7302 = vmax.f32 %v5939, 0.0
        %v7303 = vmax.f32 %v5941, 0.0
        %v7304 = vmax.f32 %v6612, 0.0
        %v7305 = vmax.f32 %v6614, 0.0
        %v7306 = vmax.f32 %v4597, 0.0
        %v7307 = vmax.f32 %v4599, 0.0
        %v7308 = vmax.f32 %v5270, 0.0
        %v7309 = vmax.f32 %v5272, 0.0
        %v7310 = vmax.f32 %v5943, 0.0
        %v7311 = vmax.f32 %v5945, 0.0
        %v7312 = vmax.f32 %v6616, 0.0
        %v7313 = vmax.f32 %v6618, 0.0
        %v7314 = vmax.f32 %v4603, 0.0
        %v7315 = vmax.f32 %v4605, 0.0
        %v7316 = vmax.f32 %v5276, 0.0
        %v7317 = vmax.f32 %v5278, 0.0
        %v7318 = vmax.f32 %v5949, 0.0
        %v7319 = vmax.f32 %v5951, 0.0
        %v7320 = vmax.f32 %v6622, 0.0
        %v7321 = vmax.f32 %v6624, 0.0
        %v7322 = vmax.f32 %v4607, 0.0
        %v7323 = vmax.f32 %v4609, 0.0
        %v7324 = vmax.f32 %v5280, 0.0
        %v7325 = vmax.f32 %v5282, 0.0
        %v7326 = vmax.f32 %v5953, 0.0
        %v7327 = vmax.f32 %v5955, 0.0
        %v7328 = vmax.f32 %v6626, 0.0
        %v7329 = vmax.f32 %v6628, 0.0
        %v7330 = vmax.f32 %v4613, 0.0
        %v7331 = vmax.f32 %v4615, 0.0
        %v7332 = vmax.f32 %v5286, 0.0
        %v7333 = vmax.f32 %v5288, 0.0
        %v7334 = vmax.f32 %v5959, 0.0
        %v7335 = vmax.f32 %v5961, 0.0
        %v7336 = vmax.f32 %v6632, 0.0
        %v7337 = vmax.f32 %v6634, 0.0
        %v7338 = vmax.f32 %v4617, 0.0
        %v7339 = vmax.f32 %v4619, 0.0
        %v7340 = vmax.f32 %v5290, 0.0
        %v7341 = vmax.f32 %v5292, 0.0
        %v7342 = vmax.f32 %v5963, 0.0
        %v7343 = vmax.f32 %v5965, 0.0
        %v7344 = vmax.f32 %v6636, 0.0
        %v7345 = vmax.f32 %v6638, 0.0
        %v7346 = vmax.f32 %v4623, 0.0
        %v7347 = vmax.f32 %v4625, 0.0
        %v7348 = vmax.f32 %v5296, 0.0
        %v7349 = vmax.f32 %v5298, 0.0
        %v7350 = vmax.f32 %v5969, 0.0
        %v7351 = vmax.f32 %v5971, 0.0
        %v7352 = vmax.f32 %v6642, 0.0
        %v7353 = vmax.f32 %v6644, 0.0
        %v7354 = vmax.f32 %v4627, 0.0
        %v7355 = vmax.f32 %v4629, 0.0
        %v7356 = vmax.f32 %v5300, 0.0
        %v7357 = vmax.f32 %v5302, 0.0
        %v7358 = vmax.f32 %v5973, 0.0
        %v7359 = vmax.f32 %v5975, 0.0
        %v7360 = vmax.f32 %v6646, 0.0
        %v7361 = vmax.f32 %v6648, 0.0
        %v7362 = vmax.f32 %v4633, 0.0
        %v7363 = vmax.f32 %v4635, 0.0
        %v7364 = vmax.f32 %v5306, 0.0
        %v7365 = vmax.f32 %v5308, 0.0
        %v7366 = vmax.f32 %v5979, 0.0
        %v7367 = vmax.f32 %v5981, 0.0
        %v7368 = vmax.f32 %v6652, 0.0
        %v7369 = vmax.f32 %v6654, 0.0
        %v7370 = vmax.f32 %v4637, 0.0
        %v7371 = vmax.f32 %v4639, 0.0
        %v7372 = vmax.f32 %v5310, 0.0
        %v7373 = vmax.f32 %v5312, 0.0
        %v7374 = vmax.f32 %v5983, 0.0
        %v7375 = vmax.f32 %v5985, 0.0
        %v7376 = vmax.f32 %v6656, 0.0
        %v7377 = vmax.f32 %v6658, 0.0
        %v7378 = vmax.f32 %v4643, 0.0
        %v7379 = vmax.f32 %v4645, 0.0
        %v7380 = vmax.f32 %v5316, 0.0
        %v7381 = vmax.f32 %v5318, 0.0
        %v7382 = vmax.f32 %v5989, 0.0
        %v7383 = vmax.f32 %v5991, 0.0
        %v7384 = vmax.f32 %v6662, 0.0
        %v7385 = vmax.f32 %v6664, 0.0
        %v7386 = vmax.f32 %v4647, 0.0
        %v7387 = vmax.f32 %v4649, 0.0
        %v7388 = vmax.f32 %v5320, 0.0
        %v7389 = vmax.f32 %v5322, 0.0
        %v7390 = vmax.f32 %v5993, 0.0
        %v7391 = vmax.f32 %v5995, 0.0
        %v7392 = vmax.f32 %v6666, 0.0
        %v7393 = vmax.f32 %v6668, 0.0
        %v7394 = vmax.f32 %v4653, 0.0
        %v7395 = vmax.f32 %v4655, 0.0
        %v7396 = vmax.f32 %v5326, 0.0
        %v7397 = vmax.f32 %v5328, 0.0
        %v7398 = vmax.f32 %v5999, 0.0
        %v7399 = vmax.f32 %v6001, 0.0
        %v7400 = vmax.f32 %v6672, 0.0
        %v7401 = vmax.f32 %v6674, 0.0
        %v7402 = vmax.f32 %v4657, 0.0
        %v7403 = vmax.f32 %v4659, 0.0
        %v7404 = vmax.f32 %v5330, 0.0
        %v7405 = vmax.f32 %v5332, 0.0
        %v7406 = vmax.f32 %v6003, 0.0
        %v7407 = vmax.f32 %v6005, 0.0
        %v7408 = vmax.f32 %v6676, 0.0
        %v7409 = vmax.f32 %v6678, 0.0
        %v7410 = vmax.f32 %v4663, 0.0
        %v7411 = vmax.f32 %v4665, 0.0
        %v7412 = vmax.f32 %v5336, 0.0
        %v7413 = vmax.f32 %v5338, 0.0
        %v7414 = vmax.f32 %v6009, 0.0
        %v7415 = vmax.f32 %v6011, 0.0
        %v7416 = vmax.f32 %v6682, 0.0
        %v7417 = vmax.f32 %v6684, 0.0
        %v7418 = vmax.f32 %v4667, 0.0
        %v7419 = vmax.f32 %v4669, 0.0
        %v7420 = vmax.f32 %v5340, 0.0
        %v7421 = vmax.f32 %v5342, 0.0
        %v7422 = vmax.f32 %v6013, 0.0
        %v7423 = vmax.f32 %v6015, 0.0
        %v7424 = vmax.f32 %v6686, 0.0
        %v7425 = vmax.f32 %v6688, 0.0
        %v7426 = vmax.f32 %v4673, 0.0
        %v7427 = vmax.f32 %v4675, 0.0
        %v7428 = vmax.f32 %v5346, 0.0
        %v7429 = vmax.f32 %v5348, 0.0
        %v7430 = vmax.f32 %v6019, 0.0
        %v7431 = vmax.f32 %v6021, 0.0
        %v7432 = vmax.f32 %v6692, 0.0
        %v7433 = vmax.f32 %v6694, 0.0
        %v7434 = vmax.f32 %v4677, 0.0
        %v7435 = vmax.f32 %v4679, 0.0
        %v7436 = vmax.f32 %v5350, 0.0
        %v7437 = vmax.f32 %v5352, 0.0
        %v7438 = vmax.f32 %v6023, 0.0
        %v7439 = vmax.f32 %v6025, 0.0
        %v7440 = vmax.f32 %v6696, 0.0
        %v7441 = vmax.f32 %v6698, 0.0
        %v7442 = vmax.f32 %v4683, 0.0
        %v7443 = vmax.f32 %v4685, 0.0
        %v7444 = vmax.f32 %v5356, 0.0
        %v7445 = vmax.f32 %v5358, 0.0
        %v7446 = vmax.f32 %v6029, 0.0
        %v7447 = vmax.f32 %v6031, 0.0
        %v7448 = vmax.f32 %v6702, 0.0
        %v7449 = vmax.f32 %v6704, 0.0
        %v7450 = vmax.f32 %v4687, 0.0
        %v7451 = vmax.f32 %v4689, 0.0
        %v7452 = vmax.f32 %v5360, 0.0
        %v7453 = vmax.f32 %v5362, 0.0
        %v7454 = vmax.f32 %v6033, 0.0
        %v7455 = vmax.f32 %v6035, 0.0
        %v7456 = vmax.f32 %v6706, 0.0
        %v7457 = vmax.f32 %v6708, 0.0
        %v7458 = vmax.f32 %v4693, 0.0
        %v7459 = vmax.f32 %v4695, 0.0
        %v7460 = vmax.f32 %v5366, 0.0
        %v7461 = vmax.f32 %v5368, 0.0
        %v7462 = vmax.f32 %v6039, 0.0
        %v7463 = vmax.f32 %v6041, 0.0
        %v7464 = vmax.f32 %v6712, 0.0
        %v7465 = vmax.f32 %v6714, 0.0
        %v7466 = vmax.f32 %v4697, 0.0
        %v7467 = vmax.f32 %v4699, 0.0
        %v7468 = vmax.f32 %v5370, 0.0
        %v7469 = vmax.f32 %v5372, 0.0
        %v7470 = vmax.f32 %v6043, 0.0
        %v7471 = vmax.f32 %v6045, 0.0
        %v7472 = vmax.f32 %v6716, 0.0
        %v7473 = vmax.f32 %v6718, 0.0
        %v7474 = vmax.f32 %v4703, 0.0
        %v7475 = vmax.f32 %v4705, 0.0
        %v7476 = vmax.f32 %v5376, 0.0
        %v7477 = vmax.f32 %v5378, 0.0
        %v7478 = vmax.f32 %v6049, 0.0
        %v7479 = vmax.f32 %v6051, 0.0
        %v7480 = vmax.f32 %v6722, 0.0
        %v7481 = vmax.f32 %v6724, 0.0
        %v7482 = vmax.f32 %v4707, 0.0
        %v7483 = vmax.f32 %v4709, 0.0
        %v7484 = vmax.f32 %v5380, 0.0
        %v7485 = vmax.f32 %v5382, 0.0
        %v7486 = vmax.f32 %v6053, 0.0
        %v7487 = vmax.f32 %v6055, 0.0
        %v7488 = vmax.f32 %v6726, 0.0
        %v7489 = vmax.f32 %v6728, 0.0
        %v7490 = vmax.f32 %v4713, 0.0
        %v7491 = vmax.f32 %v4715, 0.0
        %v7492 = vmax.f32 %v5386, 0.0
        %v7493 = vmax.f32 %v5388, 0.0
        %v7494 = vmax.f32 %v6059, 0.0
        %v7495 = vmax.f32 %v6061, 0.0
        %v7496 = vmax.f32 %v6732, 0.0
        %v7497 = vmax.f32 %v6734, 0.0
        %v7498 = vmax.f32 %v4717, 0.0
        %v7499 = vmax.f32 %v4719, 0.0
        %v7500 = vmax.f32 %v5390, 0.0
        %v7501 = vmax.f32 %v5392, 0.0
        %v7502 = vmax.f32 %v6063, 0.0
        %v7503 = vmax.f32 %v6065, 0.0
        %v7504 = vmax.f32 %v6736, 0.0
        %v7505 = vmax.f32 %v6738, 0.0
        %v7506 = vmax.f32 %v4723, 0.0
        %v7507 = vmax.f32 %v4725, 0.0
        %v7508 = vmax.f32 %v5396, 0.0
        %v7509 = vmax.f32 %v5398, 0.0
        %v7510 = vmax.f32 %v6069, 0.0
        %v7511 = vmax.f32 %v6071, 0.0
        %v7512 = vmax.f32 %v6742, 0.0
        %v7513 = vmax.f32 %v6744, 0.0
        %v7514 = vmax.f32 %v4727, 0.0
        %v7515 = vmax.f32 %v4729, 0.0
        %v7516 = vmax.f32 %v5400, 0.0
        %v7517 = vmax.f32 %v5402, 0.0
        %v7518 = vmax.f32 %v6073, 0.0
        %v7519 = vmax.f32 %v6075, 0.0
        %v7520 = vmax.f32 %v6746, 0.0
        %v7521 = vmax.f32 %v6748, 0.0
        %v7522 = vmax.f32 %v4733, 0.0
        %v7523 = vmax.f32 %v4735, 0.0
        %v7524 = vmax.f32 %v5406, 0.0
        %v7525 = vmax.f32 %v5408, 0.0
        %v7526 = vmax.f32 %v6079, 0.0
        %v7527 = vmax.f32 %v6081, 0.0
        %v7528 = vmax.f32 %v6752, 0.0
        %v7529 = vmax.f32 %v6754, 0.0
        %v7530 = vmax.f32 %v4737, 0.0
        %v7531 = vmax.f32 %v4739, 0.0
        %v7532 = vmax.f32 %v5410, 0.0
        %v7533 = vmax.f32 %v5412, 0.0
        %v7534 = vmax.f32 %v6083, 0.0
        %v7535 = vmax.f32 %v6085, 0.0
        %v7536 = vmax.f32 %v6756, 0.0
        %v7537 = vmax.f32 %v6758, 0.0
        %v7538 = vmax.f32 %v4743, 0.0
        %v7539 = vmax.f32 %v4745, 0.0
        %v7540 = vmax.f32 %v5416, 0.0
        %v7541 = vmax.f32 %v5418, 0.0
        %v7542 = vmax.f32 %v6089, 0.0
        %v7543 = vmax.f32 %v6091, 0.0
        %v7544 = vmax.f32 %v6762, 0.0
        %v7545 = vmax.f32 %v6764, 0.0
        %v7546 = vmax.f32 %v4747, 0.0
        %v7547 = vmax.f32 %v4749, 0.0
        %v7548 = vmax.f32 %v5420, 0.0
        %v7549 = vmax.f32 %v5422, 0.0
        %v7550 = vmax.f32 %v6093, 0.0
        %v7551 = vmax.f32 %v6095, 0.0
        %v7552 = vmax.f32 %v6766, 0.0
        %v7553 = vmax.f32 %v6768, 0.0
        %v7554 = vmax.f32 %v4753, 0.0
        %v7555 = vmax.f32 %v4755, 0.0
        %v7556 = vmax.f32 %v5426, 0.0
        %v7557 = vmax.f32 %v5428, 0.0
        %v7558 = vmax.f32 %v6099, 0.0
        %v7559 = vmax.f32 %v6101, 0.0
        %v7560 = vmax.f32 %v6772, 0.0
        %v7561 = vmax.f32 %v6774, 0.0
        %v7562 = vmax.f32 %v4757, 0.0
        %v7563 = vmax.f32 %v4759, 0.0
        %v7564 = vmax.f32 %v5430, 0.0
        %v7565 = vmax.f32 %v5432, 0.0
        %v7566 = vmax.f32 %v6103, 0.0
        %v7567 = vmax.f32 %v6105, 0.0
        %v7568 = vmax.f32 %v6776, 0.0
        %v7569 = vmax.f32 %v6778, 0.0
        %v7570 = vmax.f32 %v4763, 0.0
        %v7571 = vmax.f32 %v4765, 0.0
        %v7572 = vmax.f32 %v5436, 0.0
        %v7573 = vmax.f32 %v5438, 0.0
        %v7574 = vmax.f32 %v6109, 0.0
        %v7575 = vmax.f32 %v6111, 0.0
        %v7576 = vmax.f32 %v6782, 0.0
        %v7577 = vmax.f32 %v6784, 0.0
        %v7578 = vmax.f32 %v4767, 0.0
        %v7579 = vmax.f32 %v4769, 0.0
        %v7580 = vmax.f32 %v5440, 0.0
        %v7581 = vmax.f32 %v5442, 0.0
        %v7582 = vmax.f32 %v6113, 0.0
        %v7583 = vmax.f32 %v6115, 0.0
        %v7584 = vmax.f32 %v6786, 0.0
        %v7585 = vmax.f32 %v6788, 0.0
        %v7586 = vmax.f32 %v4773, 0.0
        %v7587 = vmax.f32 %v4775, 0.0
        %v7588 = vmax.f32 %v5446, 0.0
        %v7589 = vmax.f32 %v5448, 0.0
        %v7590 = vmax.f32 %v6119, 0.0
        %v7591 = vmax.f32 %v6121, 0.0
        %v7592 = vmax.f32 %v6792, 0.0
        %v7593 = vmax.f32 %v6794, 0.0
        %v7594 = vmax.f32 %v4777, 0.0
        %v7595 = vmax.f32 %v4779, 0.0
        %v7596 = vmax.f32 %v5450, 0.0
        %v7597 = vmax.f32 %v5452, 0.0
        %v7598 = vmax.f32 %v6123, 0.0
        %v7599 = vmax.f32 %v6125, 0.0
        %v7600 = vmax.f32 %v6796, 0.0
        %v7601 = vmax.f32 %v6798, 0.0
        %v7602 = vmax.f32 %v4783, 0.0
        %v7603 = vmax.f32 %v4785, 0.0
        %v7604 = vmax.f32 %v5456, 0.0
        %v7605 = vmax.f32 %v5458, 0.0
        %v7606 = vmax.f32 %v6129, 0.0
        %v7607 = vmax.f32 %v6131, 0.0
        %v7608 = vmax.f32 %v6802, 0.0
        %v7609 = vmax.f32 %v6804, 0.0
        %v7610 = vmax.f32 %v4787, 0.0
        %v7611 = vmax.f32 %v4789, 0.0
        %v7612 = vmax.f32 %v5460, 0.0
        %v7613 = vmax.f32 %v5462, 0.0
        %v7614 = vmax.f32 %v6133, 0.0
        %v7615 = vmax.f32 %v6135, 0.0
        %v7616 = vmax.f32 %v6806, 0.0
        %v7617 = vmax.f32 %v6808, 0.0
        %v7618 = vmax.f32 %v4793, 0.0
        %v7619 = vmax.f32 %v4795, 0.0
        %v7620 = vmax.f32 %v5466, 0.0
        %v7621 = vmax.f32 %v5468, 0.0
        %v7622 = vmax.f32 %v6139, 0.0
        %v7623 = vmax.f32 %v6141, 0.0
        %v7624 = vmax.f32 %v6812, 0.0
        %v7625 = vmax.f32 %v6814, 0.0
        %v7626 = vmax.f32 %v4797, 0.0
        %v7627 = vmax.f32 %v4799, 0.0
        %v7628 = vmax.f32 %v5470, 0.0
        %v7629 = vmax.f32 %v5472, 0.0
        %v7630 = vmax.f32 %v6143, 0.0
        %v7631 = vmax.f32 %v6145, 0.0
        %v7632 = vmax.f32 %v6816, 0.0
        %v7633 = vmax.f32 %v6818, 0.0
        %v7634 = vmax.f32 %v4803, 0.0
        %v7635 = vmax.f32 %v4805, 0.0
        %v7636 = vmax.f32 %v5476, 0.0
        %v7637 = vmax.f32 %v5478, 0.0
        %v7638 = vmax.f32 %v6149, 0.0
        %v7639 = vmax.f32 %v6151, 0.0
        %v7640 = vmax.f32 %v6822, 0.0
        %v7641 = vmax.f32 %v6824, 0.0
        %v7642 = vmax.f32 %v4807, 0.0
        %v7643 = vmax.f32 %v4809, 0.0
        %v7644 = vmax.f32 %v5480, 0.0
        %v7645 = vmax.f32 %v5482, 0.0
        %v7646 = vmax.f32 %v6153, 0.0
        %v7647 = vmax.f32 %v6155, 0.0
        %v7648 = vmax.f32 %v6826, 0.0
        %v7649 = vmax.f32 %v6828, 0.0
        %v7650 = vmax.f32 %v4813, 0.0
        %v7651 = vmax.f32 %v4815, 0.0
        %v7652 = vmax.f32 %v5486, 0.0
        %v7653 = vmax.f32 %v5488, 0.0
        %v7654 = vmax.f32 %v6159, 0.0
        %v7655 = vmax.f32 %v6161, 0.0
        %v7656 = vmax.f32 %v6832, 0.0
        %v7657 = vmax.f32 %v6834, 0.0
        %v7658 = vmax.f32 %v4817, 0.0
        %v7659 = vmax.f32 %v4819, 0.0
        %v7660 = vmax.f32 %v5490, 0.0
        %v7661 = vmax.f32 %v5492, 0.0
        %v7662 = vmax.f32 %v6163, 0.0
        %v7663 = vmax.f32 %v6165, 0.0
        %v7664 = vmax.f32 %v6836, 0.0
        %v7665 = vmax.f32 %v6838, 0.0
        %v7666 = vmax.f32 %v4823, 0.0
        %v7667 = vmax.f32 %v4825, 0.0
        %v7668 = vmax.f32 %v5496, 0.0
        %v7669 = vmax.f32 %v5498, 0.0
        %v7670 = vmax.f32 %v6169, 0.0
        %v7671 = vmax.f32 %v6171, 0.0
        %v7672 = vmax.f32 %v6842, 0.0
        %v7673 = vmax.f32 %v6844, 0.0
        %v7674 = vmax.f32 %v4827, 0.0
        %v7675 = vmax.f32 %v4829, 0.0
        %v7676 = vmax.f32 %v5500, 0.0
        %v7677 = vmax.f32 %v5502, 0.0
        %v7678 = vmax.f32 %v6173, 0.0
        %v7679 = vmax.f32 %v6175, 0.0
        %v7680 = vmax.f32 %v6846, 0.0
        %v7681 = vmax.f32 %v6848, 0.0
        %v7682 = vmax.f32 %v4833, 0.0
        %v7683 = vmax.f32 %v4835, 0.0
        %v7684 = vmax.f32 %v5506, 0.0
        %v7685 = vmax.f32 %v5508, 0.0
        %v7686 = vmax.f32 %v6179, 0.0
        %v7687 = vmax.f32 %v6181, 0.0
        %v7688 = vmax.f32 %v6852, 0.0
        %v7689 = vmax.f32 %v6854, 0.0
        %v7690 = vmax.f32 %v4837, 0.0
        %v7691 = vmax.f32 %v4839, 0.0
        %v7692 = vmax.f32 %v5510, 0.0
        %v7693 = vmax.f32 %v5512, 0.0
        %v7694 = vmax.f32 %v6183, 0.0
        %v7695 = vmax.f32 %v6185, 0.0
        %v7696 = vmax.f32 %v6856, 0.0
        %v7697 = vmax.f32 %v6858, 0.0
        %v7698 = vmax.f32 %v4843, 0.0
        %v7699 = vmax.f32 %v4845, 0.0
        %v7700 = vmax.f32 %v5516, 0.0
        %v7701 = vmax.f32 %v5518, 0.0
        %v7702 = vmax.f32 %v6189, 0.0
        %v7703 = vmax.f32 %v6191, 0.0
        %v7704 = vmax.f32 %v6862, 0.0
        %v7705 = vmax.f32 %v6864, 0.0
        %v7706 = vmax.f32 %v4847, 0.0
        %v7707 = vmax.f32 %v4849, 0.0
        %v7708 = vmax.f32 %v5520, 0.0
        %v7709 = vmax.f32 %v5522, 0.0
        %v7710 = vmax.f32 %v6193, 0.0
        %v7711 = vmax.f32 %v6195, 0.0
        %v7712 = vmax.f32 %v6866, 0.0
        %v7713 = vmax.f32 %v6868, 0.0
        %v7714 = vmax.f32 %v4853, 0.0
        %v7715 = vmax.f32 %v4855, 0.0
        %v7716 = vmax.f32 %v5526, 0.0
        %v7717 = vmax.f32 %v5528, 0.0
        %v7718 = vmax.f32 %v6199, 0.0
        %v7719 = vmax.f32 %v6201, 0.0
        %v7720 = vmax.f32 %v6872, 0.0
        %v7721 = vmax.f32 %v6874, 0.0
        %v7722 = vmax.f32 %v4857, 0.0
        %v7723 = vmax.f32 %v4859, 0.0
        %v7724 = vmax.f32 %v5530, 0.0
        %v7725 = vmax.f32 %v5532, 0.0
        %v7726 = vmax.f32 %v6203, 0.0
        %v7727 = vmax.f32 %v6205, 0.0
        %v7728 = vmax.f32 %v6876, 0.0
        %v7729 = vmax.f32 %v6878, 0.0
        %v7730 = vmax.f32 %v4863, 0.0
        %v7731 = vmax.f32 %v4865, 0.0
        %v7732 = vmax.f32 %v5536, 0.0
        %v7733 = vmax.f32 %v5538, 0.0
        %v7734 = vmax.f32 %v6209, 0.0
        %v7735 = vmax.f32 %v6211, 0.0
        %v7736 = vmax.f32 %v6882, 0.0
        %v7737 = vmax.f32 %v6884, 0.0
        %v7738 = vmax.f32 %v4867, 0.0
        %v7739 = vmax.f32 %v4869, 0.0
        %v7740 = vmax.f32 %v5540, 0.0
        %v7741 = vmax.f32 %v5542, 0.0
        %v7742 = vmax.f32 %v6213, 0.0
        %v7743 = vmax.f32 %v6215, 0.0
        %v7744 = vmax.f32 %v6886, 0.0
        %v7745 = vmax.f32 %v6888, 0.0
        %v7746 = vmax.f32 %v4873, 0.0
        %v7747 = vmax.f32 %v4875, 0.0
        %v7748 = vmax.f32 %v5546, 0.0
        %v7749 = vmax.f32 %v5548, 0.0
        %v7750 = vmax.f32 %v6219, 0.0
        %v7751 = vmax.f32 %v6221, 0.0
        %v7752 = vmax.f32 %v6892, 0.0
        %v7753 = vmax.f32 %v6894, 0.0
        %v7754 = vmax.f32 %v4877, 0.0
        %v7755 = vmax.f32 %v4879, 0.0
        %v7756 = vmax.f32 %v5550, 0.0
        %v7757 = vmax.f32 %v5552, 0.0
        %v7758 = vmax.f32 %v6223, 0.0
        %v7759 = vmax.f32 %v6225, 0.0
        %v7760 = vmax.f32 %v6896, 0.0
        %v7761 = vmax.f32 %v6898, 0.0
        %v7762 = vmax.f32 %v4883, 0.0
        %v7763 = vmax.f32 %v4885, 0.0
        %v7764 = vmax.f32 %v5556, 0.0
        %v7765 = vmax.f32 %v5558, 0.0
        %v7766 = vmax.f32 %v6229, 0.0
        %v7767 = vmax.f32 %v6231, 0.0
        %v7768 = vmax.f32 %v6902, 0.0
        %v7769 = vmax.f32 %v6904, 0.0
        %v7770 = vmax.f32 %v4887, 0.0
        %v7771 = vmax.f32 %v4889, 0.0
        %v7772 = vmax.f32 %v5560, 0.0
        %v7773 = vmax.f32 %v5562, 0.0
        %v7774 = vmax.f32 %v6233, 0.0
        %v7775 = vmax.f32 %v6235, 0.0
        %v7776 = vmax.f32 %v6906, 0.0
        %v7777 = vmax.f32 %v6908, 0.0
        %v7778 = vmax.f32 %v4893, 0.0
        %v7779 = vmax.f32 %v4895, 0.0
        %v7780 = vmax.f32 %v5566, 0.0
        %v7781 = vmax.f32 %v5568, 0.0
        %v7782 = vmax.f32 %v6239, 0.0
        %v7783 = vmax.f32 %v6241, 0.0
        %v7784 = vmax.f32 %v6912, 0.0
        %v7785 = vmax.f32 %v6914, 0.0
        %v7786 = vmax.f32 %v4897, 0.0
        %v7787 = vmax.f32 %v4899, 0.0
        %v7788 = vmax.f32 %v5570, 0.0
        %v7789 = vmax.f32 %v5572, 0.0
        %v7790 = vmax.f32 %v6243, 0.0
        %v7791 = vmax.f32 %v6245, 0.0
        %v7792 = vmax.f32 %v6916, 0.0
        %v7793 = vmax.f32 %v6918, 0.0
        %v7794 = vmax.f32 %v4903, 0.0
        %v7795 = vmax.f32 %v4905, 0.0
        %v7796 = vmax.f32 %v5576, 0.0
        %v7797 = vmax.f32 %v5578, 0.0
        %v7798 = vmax.f32 %v6249, 0.0
        %v7799 = vmax.f32 %v6251, 0.0
        %v7800 = vmax.f32 %v6922, 0.0
        %v7801 = vmax.f32 %v6924, 0.0
        %v7802 = vmax.f32 %v4907, 0.0
        %v7803 = vmax.f32 %v4909, 0.0
        %v7804 = vmax.f32 %v5580, 0.0
        %v7805 = vmax.f32 %v5582, 0.0
        %v7806 = vmax.f32 %v6253, 0.0
        %v7807 = vmax.f32 %v6255, 0.0
        %v7808 = vmax.f32 %v6926, 0.0
        %v7809 = vmax.f32 %v6928, 0.0
        %v7810 = vmax.f32 %v4913, 0.0
        %v7811 = vmax.f32 %v4915, 0.0
        %v7812 = vmax.f32 %v5586, 0.0
        %v7813 = vmax.f32 %v5588, 0.0
        %v7814 = vmax.f32 %v6259, 0.0
        %v7815 = vmax.f32 %v6261, 0.0
        %v7816 = vmax.f32 %v6932, 0.0
        %v7817 = vmax.f32 %v6934, 0.0
        %v7818 = vmax.f32 %v4917, 0.0
        %v7819 = vmax.f32 %v4919, 0.0
        %v7820 = vmax.f32 %v5590, 0.0
        %v7821 = vmax.f32 %v5592, 0.0
        %v7822 = vmax.f32 %v6263, 0.0
        %v7823 = vmax.f32 %v6265, 0.0
        %v7824 = vmax.f32 %v6936, 0.0
        %v7825 = vmax.f32 %v6938, 0.0
        %v7826 = vmax.f32 %v4923, 0.0
        %v7827 = vmax.f32 %v4925, 0.0
        %v7828 = vmax.f32 %v5596, 0.0
        %v7829 = vmax.f32 %v5598, 0.0
        %v7830 = vmax.f32 %v6269, 0.0
        %v7831 = vmax.f32 %v6271, 0.0
        %v7832 = vmax.f32 %v6942, 0.0
        %v7833 = vmax.f32 %v6944, 0.0
        %v7834 = vmax.f32 %v4927, 0.0
        %v7835 = vmax.f32 %v4929, 0.0
        %v7836 = vmax.f32 %v5600, 0.0
        %v7837 = vmax.f32 %v5602, 0.0
        %v7838 = vmax.f32 %v6273, 0.0
        %v7839 = vmax.f32 %v6275, 0.0
        %v7840 = vmax.f32 %v6946, 0.0
        %v7841 = vmax.f32 %v6948, 0.0
        %v7842 = vmax.f32 %v4933, 0.0
        %v7843 = vmax.f32 %v4935, 0.0
        %v7844 = vmax.f32 %v5606, 0.0
        %v7845 = vmax.f32 %v5608, 0.0
        %v7846 = vmax.f32 %v6279, 0.0
        %v7847 = vmax.f32 %v6281, 0.0
        %v7848 = vmax.f32 %v6952, 0.0
        %v7849 = vmax.f32 %v6954, 0.0
        %v7850 = vmax.f32 %v4937, 0.0
        %v7851 = vmax.f32 %v4939, 0.0
        %v7852 = vmax.f32 %v5610, 0.0
        %v7853 = vmax.f32 %v5612, 0.0
        %v7854 = vmax.f32 %v6283, 0.0
        %v7855 = vmax.f32 %v6285, 0.0
        %v7856 = vmax.f32 %v6956, 0.0
        %v7857 = vmax.f32 %v6958, 0.0
        %v7858 = vmax.f32 %v4943, 0.0
        %v7859 = vmax.f32 %v4945, 0.0
        %v7860 = vmax.f32 %v5616, 0.0
        %v7861 = vmax.f32 %v5618, 0.0
        %v7862 = vmax.f32 %v6289, 0.0
        %v7863 = vmax.f32 %v6291, 0.0
        %v7864 = vmax.f32 %v6962, 0.0
        %v7865 = vmax.f32 %v6964, 0.0
        %v7866 = vmax.f32 %v4947, 0.0
        %v7867 = vmax.f32 %v4949, 0.0
        %v7868 = vmax.f32 %v5620, 0.0
        %v7869 = vmax.f32 %v5622, 0.0
        %v7870 = vmax.f32 %v6293, 0.0
        %v7871 = vmax.f32 %v6295, 0.0
        %v7872 = vmax.f32 %v6966, 0.0
        %v7873 = vmax.f32 %v6968, 0.0
        %v7874 = vmax.f32 %v4953, 0.0
        %v7875 = vmax.f32 %v4955, 0.0
        %v7876 = vmax.f32 %v5626, 0.0
        %v7877 = vmax.f32 %v5628, 0.0
        %v7878 = vmax.f32 %v6299, 0.0
        %v7879 = vmax.f32 %v6301, 0.0
        %v7880 = vmax.f32 %v6972, 0.0
        %v7881 = vmax.f32 %v6974, 0.0
        %v7882 = vmax.f32 %v4957, 0.0
        %v7883 = vmax.f32 %v4959, 0.0
        %v7884 = vmax.f32 %v5630, 0.0
        %v7885 = vmax.f32 %v5632, 0.0
        %v7886 = vmax.f32 %v6303, 0.0
        %v7887 = vmax.f32 %v6305, 0.0
        %v7888 = vmax.f32 %v6976, 0.0
        %v7889 = vmax.f32 %v6978, 0.0
        %v7890 = vmax.f32 %v4963, 0.0
        %v7891 = vmax.f32 %v4965, 0.0
        %v7892 = vmax.f32 %v5636, 0.0
        %v7893 = vmax.f32 %v5638, 0.0
        %v7894 = vmax.f32 %v6309, 0.0
        %v7895 = vmax.f32 %v6311, 0.0
        %v7896 = vmax.f32 %v6982, 0.0
        %v7897 = vmax.f32 %v6984, 0.0
        %v7898 = vmax.f32 %v4967, 0.0
        %v7899 = vmax.f32 %v4969, 0.0
        %v7900 = vmax.f32 %v5640, 0.0
        %v7901 = vmax.f32 %v5642, 0.0
        %v7902 = vmax.f32 %v6313, 0.0
        %v7903 = vmax.f32 %v6315, 0.0
        %v7904 = vmax.f32 %v6986, 0.0
        %v7905 = vmax.f32 %v6988, 0.0
        %v7906 = vmax.f32 %v4973, 0.0
        %v7907 = vmax.f32 %v4975, 0.0
        %v7908 = vmax.f32 %v5646, 0.0
        %v7909 = vmax.f32 %v5648, 0.0
        %v7910 = vmax.f32 %v6319, 0.0
        %v7911 = vmax.f32 %v6321, 0.0
        %v7912 = vmax.f32 %v6992, 0.0
        %v7913 = vmax.f32 %v6994, 0.0
        %v7914 = vmax.f32 %v4977, 0.0
        %v7915 = vmax.f32 %v4979, 0.0
        %v7916 = vmax.f32 %v5650, 0.0
        %v7917 = vmax.f32 %v5652, 0.0
        %v7918 = vmax.f32 %v6323, 0.0
        %v7919 = vmax.f32 %v6325, 0.0
        %v7920 = vmax.f32 %v6996, 0.0
        %v7921 = vmax.f32 %v6998, 0.0
        %v7922 = vmax.f32 %v4983, 0.0
        %v7923 = vmax.f32 %v4985, 0.0
        %v7924 = vmax.f32 %v5656, 0.0
        %v7925 = vmax.f32 %v5658, 0.0
        %v7926 = vmax.f32 %v6329, 0.0
        %v7927 = vmax.f32 %v6331, 0.0
        %v7928 = vmax.f32 %v7002, 0.0
        %v7929 = vmax.f32 %v7004, 0.0
        %v7930 = vmax.f32 %v4987, 0.0
        %v7931 = vmax.f32 %v4989, 0.0
        %v7932 = vmax.f32 %v5660, 0.0
        %v7933 = vmax.f32 %v5662, 0.0
        %v7934 = vmax.f32 %v6333, 0.0
        %v7935 = vmax.f32 %v6335, 0.0
        %v7936 = vmax.f32 %v7006, 0.0
        %v7937 = vmax.f32 %v7008, 0.0
        %v7938 = vmax.f32 %v4993, 0.0
        %v7939 = vmax.f32 %v4995, 0.0
        %v7940 = vmax.f32 %v5666, 0.0
        %v7941 = vmax.f32 %v5668, 0.0
        %v7942 = vmax.f32 %v6339, 0.0
        %v7943 = vmax.f32 %v6341, 0.0
        %v7944 = vmax.f32 %v7012, 0.0
        %v7945 = vmax.f32 %v7014, 0.0
        %v7946 = vmax.f32 %v4997, 0.0
        %v7947 = vmax.f32 %v4999, 0.0
        %v7948 = vmax.f32 %v5670, 0.0
        %v7949 = vmax.f32 %v5672, 0.0
        %v7950 = vmax.f32 %v6343, 0.0
        %v7951 = vmax.f32 %v6345, 0.0
        %v7952 = vmax.f32 %v7016, 0.0
        %v7953 = vmax.f32 %v7018, 0.0
        %v7954 = vmax.f32 %v5003, 0.0
        %v7955 = vmax.f32 %v5005, 0.0
        %v7956 = vmax.f32 %v5676, 0.0
        %v7957 = vmax.f32 %v5678, 0.0
        %v7958 = vmax.f32 %v6349, 0.0
        %v7959 = vmax.f32 %v6351, 0.0
        %v7960 = vmax.f32 %v7022, 0.0
        %v7961 = vmax.f32 %v7024, 0.0
        %v7962 = vmax.f32 %v5007, 0.0
        %v7963 = vmax.f32 %v5009, 0.0
        %v7964 = vmax.f32 %v5680, 0.0
        %v7965 = vmax.f32 %v5682, 0.0
        %v7966 = vmax.f32 %v6353, 0.0
        %v7967 = vmax.f32 %v6355, 0.0
        %v7968 = vmax.f32 %v7026, 0.0
        %v7969 = vmax.f32 %v7028, 0.0
        %v7970 = vmax.f32 %v5013, 0.0
        %v7971 = vmax.f32 %v5015, 0.0
        %v7972 = vmax.f32 %v5686, 0.0
        %v7973 = vmax.f32 %v5688, 0.0
        %v7974 = vmax.f32 %v6359, 0.0
        %v7975 = vmax.f32 %v6361, 0.0
        %v7976 = vmax.f32 %v7032, 0.0
        %v7977 = vmax.f32 %v7034, 0.0
        %v7978 = vmax.f32 %v5017, 0.0
        %v7979 = vmax.f32 %v5019, 0.0
        %v7980 = vmax.f32 %v5690, 0.0
        %v7981 = vmax.f32 %v5692, 0.0
        %v7982 = vmax.f32 %v6363, 0.0
        %v7983 = vmax.f32 %v6365, 0.0
        %v7984 = vmax.f32 %v7036, 0.0
        %v7985 = vmax.f32 %v7038, 0.0
        %v7986 = vmax.f32 %v5023, 0.0
        %v7987 = vmax.f32 %v5025, 0.0
        %v7988 = vmax.f32 %v5696, 0.0
        %v7989 = vmax.f32 %v5698, 0.0
        %v7990 = vmax.f32 %v6369, 0.0
        %v7991 = vmax.f32 %v6371, 0.0
        %v7992 = vmax.f32 %v7042, 0.0
        %v7993 = vmax.f32 %v7044, 0.0
        %v7994 = vmax.f32 %v5027, 0.0
        %v7995 = vmax.f32 %v5029, 0.0
        %v7996 = vmax.f32 %v5700, 0.0
        %v7997 = vmax.f32 %v5702, 0.0
        %v7998 = vmax.f32 %v6373, 0.0
        %v7999 = vmax.f32 %v6375, 0.0
        %v8000 = vmax.f32 %v7046, 0.0
        %v8001 = vmax.f32 %v7048, 0.0
        %v8002 = vmax.f32 %v5033, 0.0
        %v8003 = vmax.f32 %v5035, 0.0
        %v8004 = vmax.f32 %v5706, 0.0
        %v8005 = vmax.f32 %v5708, 0.0
        %v8006 = vmax.f32 %v6379, 0.0
        %v8007 = vmax.f32 %v6381, 0.0
        %v8008 = vmax.f32 %v7052, 0.0
        %v8009 = vmax.f32 %v7054, 0.0
        %v8010 = vmax.f32 %v5037, 0.0
        %v8011 = vmax.f32 %v5039, 0.0
        %v8012 = vmax.f32 %v5710, 0.0
        %v8013 = vmax.f32 %v5712, 0.0
        %v8014 = vmax.f32 %v6383, 0.0
        %v8015 = vmax.f32 %v6385, 0.0
        %v8016 = vmax.f32 %v7056, 0.0
        %v8017 = vmax.f32 %v7058, 0.0
        %v8018 = vmax.f32 %v5043, 0.0
        %v8019 = vmax.f32 %v5045, 0.0
        %v8020 = vmax.f32 %v5716, 0.0
        %v8021 = vmax.f32 %v5718, 0.0
        %v8022 = vmax.f32 %v6389, 0.0
        %v8023 = vmax.f32 %v6391, 0.0
        %v8024 = vmax.f32 %v7062, 0.0
        %v8025 = vmax.f32 %v7064, 0.0
        %v8026 = vmax.f32 %v5047, 0.0
        %v8027 = vmax.f32 %v5049, 0.0
        %v8028 = vmax.f32 %v5720, 0.0
        %v8029 = vmax.f32 %v5722, 0.0
        %v8030 = vmax.f32 %v6393, 0.0
        %v8031 = vmax.f32 %v6395, 0.0
        %v8032 = vmax.f32 %v7066, 0.0
        %v8033 = vmax.f32 %v7068, 0.0
        %v8034 = vmax.f32 %v5053, 0.0
        %v8035 = vmax.f32 %v5055, 0.0
        %v8036 = vmax.f32 %v5726, 0.0
        %v8037 = vmax.f32 %v5728, 0.0
        %v8038 = vmax.f32 %v6399, 0.0
        %v8039 = vmax.f32 %v6401, 0.0
        %v8040 = vmax.f32 %v7072, 0.0
        %v8041 = vmax.f32 %v7074, 0.0
        %v8042 = vmax.f32 %v5057, 0.0
        %v8043 = vmax.f32 %v5059, 0.0
        %v8044 = vmax.f32 %v5730, 0.0
        %v8045 = vmax.f32 %v5732, 0.0
        %v8046 = vmax.f32 %v6403, 0.0
        %v8047 = vmax.f32 %v6405, 0.0
        %v8048 = vmax.f32 %v7076, 0.0
        %v8049 = vmax.f32 %v7078, 0.0
        %v8050 = vmax.f32 %v5063, 0.0
        %v8051 = vmax.f32 %v5065, 0.0
        %v8052 = vmax.f32 %v5736, 0.0
        %v8053 = vmax.f32 %v5738, 0.0
        %v8054 = vmax.f32 %v6409, 0.0
        %v8055 = vmax.f32 %v6411, 0.0
        %v8056 = vmax.f32 %v7082, 0.0
        %v8057 = vmax.f32 %v7084, 0.0
        %v8058 = vmax.f32 %v5067, 0.0
        %v8059 = vmax.f32 %v5069, 0.0
        %v8060 = vmax.f32 %v5740, 0.0
        %v8061 = vmax.f32 %v5742, 0.0
        %v8062 = vmax.f32 %v6413, 0.0
        %v8063 = vmax.f32 %v6415, 0.0
        %v8064 = vmax.f32 %v7086, 0.0
        %v8065 = vmax.f32 %v7088, 0.0
        %v8066 = vmax.f32 %v5073, 0.0
        %v8067 = vmax.f32 %v5075, 0.0
        %v8068 = vmax.f32 %v5746, 0.0
        %v8069 = vmax.f32 %v5748, 0.0
        %v8070 = vmax.f32 %v6419, 0.0
        %v8071 = vmax.f32 %v6421, 0.0
        %v8072 = vmax.f32 %v7092, 0.0
        %v8073 = vmax.f32 %v7094, 0.0
        %v8074 = vmax.f32 %v5077, 0.0
        %v8075 = vmax.f32 %v5079, 0.0
        %v8076 = vmax.f32 %v5750, 0.0
        %v8077 = vmax.f32 %v5752, 0.0
        %v8078 = vmax.f32 %v6423, 0.0
        %v8079 = vmax.f32 %v6425, 0.0
        %v8080 = vmax.f32 %v7096, 0.0
        %v8081 = vmax.f32 %v7098, 0.0
        %v8082 = vmax.f32 %v5083, 0.0
        %v8083 = vmax.f32 %v5085, 0.0
        %v8084 = vmax.f32 %v5756, 0.0
        %v8085 = vmax.f32 %v5758, 0.0
        %v8086 = vmax.f32 %v6429, 0.0
        %v8087 = vmax.f32 %v6431, 0.0
        %v8088 = vmax.f32 %v7102, 0.0
        %v8089 = vmax.f32 %v7104, 0.0
        %v8090 = vmax.f32 %v5087, 0.0
        %v8091 = vmax.f32 %v5089, 0.0
        %v8092 = vmax.f32 %v5760, 0.0
        %v8093 = vmax.f32 %v5762, 0.0
        %v8094 = vmax.f32 %v6433, 0.0
        %v8095 = vmax.f32 %v6435, 0.0
        %v8096 = vmax.f32 %v7106, 0.0
        %v8097 = vmax.f32 %v7108, 0.0
        %v8098 = vmax.f32 %v5093, 0.0
        %v8099 = vmax.f32 %v5095, 0.0
        %v8100 = vmax.f32 %v5766, 0.0
        %v8101 = vmax.f32 %v5768, 0.0
        %v8102 = vmax.f32 %v6439, 0.0
        %v8103 = vmax.f32 %v6441, 0.0
        %v8104 = vmax.f32 %v7112, 0.0
        %v8105 = vmax.f32 %v7114, 0.0
        %v8106 = vmax.f32 %v5097, 0.0
        %v8107 = vmax.f32 %v5099, 0.0
        %v8108 = vmax.f32 %v5770, 0.0
        %v8109 = vmax.f32 %v5772, 0.0
        %v8110 = vmax.f32 %v6443, 0.0
        %v8111 = vmax.f32 %v6445, 0.0
        %v8112 = vmax.f32 %v7116, 0.0
        %v8113 = vmax.f32 %v7118, 0.0
        %v8114 = vmax.f32 %v5103, 0.0
        %v8115 = vmax.f32 %v5105, 0.0
        %v8116 = vmax.f32 %v5776, 0.0
        %v8117 = vmax.f32 %v5778, 0.0
        %v8118 = vmax.f32 %v6449, 0.0
        %v8119 = vmax.f32 %v6451, 0.0
        %v8120 = vmax.f32 %v7122, 0.0
        %v8121 = vmax.f32 %v7124, 0.0
        %v8122 = vmax.f32 %v5107, 0.0
        %v8123 = vmax.f32 %v5109, 0.0
        %v8124 = vmax.f32 %v5780, 0.0
        %v8125 = vmax.f32 %v5782, 0.0
        %v8126 = vmax.f32 %v6453, 0.0
        %v8127 = vmax.f32 %v6455, 0.0
        %v8128 = vmax.f32 %v7126, 0.0
        %v8129 = vmax.f32 %v7128, 0.0
        %v8130 = vmax.f32 %v5113, 0.0
        %v8131 = vmax.f32 %v5115, 0.0
        %v8132 = vmax.f32 %v5786, 0.0
        %v8133 = vmax.f32 %v5788, 0.0
        %v8134 = vmax.f32 %v6459, 0.0
        %v8135 = vmax.f32 %v6461, 0.0
        %v8136 = vmax.f32 %v7132, 0.0
        %v8137 = vmax.f32 %v7134, 0.0
        %v8138 = vmax.f32 %v5117, 0.0
        %v8139 = vmax.f32 %v5119, 0.0
        %v8140 = vmax.f32 %v5790, 0.0
        %v8141 = vmax.f32 %v5792, 0.0
        %v8142 = vmax.f32 %v6463, 0.0
        %v8143 = vmax.f32 %v6465, 0.0
        %v8144 = vmax.f32 %v7136, 0.0
        %v8145 = vmax.f32 %v7138, 0.0
        %v8146 = vmax.f32 %v5123, 0.0
        %v8147 = vmax.f32 %v5125, 0.0
        %v8148 = vmax.f32 %v5796, 0.0
        %v8149 = vmax.f32 %v5798, 0.0
        %v8150 = vmax.f32 %v6469, 0.0
        %v8151 = vmax.f32 %v6471, 0.0
        %v8152 = vmax.f32 %v7142, 0.0
        %v8153 = vmax.f32 %v7144, 0.0
        %v8154 = vmax.f32 %v5127, 0.0
        %v8155 = vmax.f32 %v5129, 0.0
        %v8156 = vmax.f32 %v5800, 0.0
        %v8157 = vmax.f32 %v5802, 0.0
        %v8158 = vmax.f32 %v6473, 0.0
        %v8159 = vmax.f32 %v6475, 0.0
        %v8160 = vmax.f32 %v7146, 0.0
        %v8161 = vmax.f32 %v7148, 0.0
        %v8162 = vmax.f32 %v5133, 0.0
        %v8163 = vmax.f32 %v5135, 0.0
        %v8164 = vmax.f32 %v5806, 0.0
        %v8165 = vmax.f32 %v5808, 0.0
        %v8166 = vmax.f32 %v6479, 0.0
        %v8167 = vmax.f32 %v6481, 0.0
        %v8168 = vmax.f32 %v7152, 0.0
        %v8169 = vmax.f32 %v7154, 0.0
        %v8170 = vmax.f32 %v5137, 0.0
        %v8171 = vmax.f32 %v5139, 0.0
        %v8172 = vmax.f32 %v5810, 0.0
        %v8173 = vmax.f32 %v5812, 0.0
        %v8174 = vmax.f32 %v6483, 0.0
        %v8175 = vmax.f32 %v6485, 0.0
        %v8176 = vmax.f32 %v7156, 0.0
        %v8177 = vmax.f32 %v7158, 0.0
        %v8178 = vmax.f32 %v5143, 0.0
        %v8179 = vmax.f32 %v5145, 0.0
        %v8180 = vmax.f32 %v5816, 0.0
        %v8181 = vmax.f32 %v5818, 0.0
        %v8182 = vmax.f32 %v6489, 0.0
        %v8183 = vmax.f32 %v6491, 0.0
        %v8184 = vmax.f32 %v7162, 0.0
        %v8185 = vmax.f32 %v7164, 0.0
        %v8186 = vmax.f32 %v5147, 0.0
        %v8187 = vmax.f32 %v5149, 0.0
        %v8188 = vmax.f32 %v5820, 0.0
        %v8189 = vmax.f32 %v5822, 0.0
        %v8190 = vmax.f32 %v6493, 0.0
        %v8191 = vmax.f32 %v6495, 0.0
        %v8192 = vmax.f32 %v7166, 0.0
        %v8193 = vmax.f32 %v7168, 0.0
        %v8194 = vlaneseq
        %v8195 = vshrl.u32 %v8194, 7
        %v8196 = vadd.s32 %v8195, 8
        %v8197 = vadd.s32 %v8195, 16
        %v8198 = vadd.s32 %v8195, 24
        %v8199 = vadd.s32 %v8195, 32
        %v8200 = vadd.s32 %v8195, 40
        %v8201 = vadd.s32 %v8195, 48
        %v8202 = vadd.s32 %v8195, 56
        %v8203 = vadd.s32 %v8195, 64
        %v8204 = vadd.s32 %v8195, 72
        %v8205 = vadd.s32 %v8195, 80
        %v8206 = vadd.s32 %v8195, 88
        %v8207 = vadd.s32 %v8195, 96
        %v8208 = vadd.s32 %v8195, 104
        %v8209 = vadd.s32 %v8195, 112
        %v8210 = vadd.s32 %v8195, 120
        %v8211 = vadd.s32 %v8195, 128
        %v8212 = vadd.s32 %v8195, 136
        %v8213 = vadd.s32 %v8195, 144
        %v8214 = vadd.s32 %v8195, 152
        %v8215 = vadd.s32 %v8195, 160
        %v8216 = vadd.s32 %v8195, 168
        %v8217 = vadd.s32 %v8195, 176
        %v8218 = vadd.s32 %v8195, 184
        %v8219 = vadd.s32 %v8195, 192
        %v8220 = vadd.s32 %v8195, 200
        %v8221 = vadd.s32 %v8195, 208
        %v8222 = vadd.s32 %v8195, 216
        %v8223 = vadd.s32 %v8195, 224
        %v8224 = vadd.s32 %v8195, 232
        %v8225 = vadd.s32 %v8195, 240
        %v8226 = vadd.s32 %v8195, 248
        %v8227 = vadd.s32 %v8195, 256
        %v8228 = vadd.s32 %v8195, 264
        %v8229 = vadd.s32 %v8195, 272
        %v8230 = vadd.s32 %v8195, 280
        %v8231 = vadd.s32 %v8195, 288
        %v8232 = vadd.s32 %v8195, 296
        %v8233 = vadd.s32 %v8195, 304
        %v8234 = vadd.s32 %v8195, 312
        %v8235 = vadd.s32 %v8195, 320
        %v8236 = vadd.s32 %v8195, 328
        %v8237 = vadd.s32 %v8195, 336
        %v8238 = vadd.s32 %v8195, 344
        %v8239 = vadd.s32 %v8195, 352
        %v8240 = vadd.s32 %v8195, 360
        %v8241 = vadd.s32 %v8195, 368
        %v8242 = vadd.s32 %v8195, 376
        %v8243 = vadd.s32 %v8195, 384
        %v8244 = vadd.s32 %v8195, 392
        %v8245 = vadd.s32 %v8195, 400
        %v8246 = vadd.s32 %v8195, 408
        %v8247 = vadd.s32 %v8195, 416
        %v8248 = vadd.s32 %v8195, 424
        %v8249 = vadd.s32 %v8195, 432
        %v8250 = vadd.s32 %v8195, 440
        %v8251 = vadd.s32 %v8195, 448
        %v8252 = vadd.s32 %v8195, 456
        %v8253 = vadd.s32 %v8195, 464
        %v8254 = vadd.s32 %v8195, 472
        %v8255 = vadd.s32 %v8195, 480
        %v8256 = vadd.s32 %v8195, 488
        %v8257 = vadd.s32 %v8195, 496
        %v8258 = vadd.s32 %v8195, 504
        %v8259 = vadd.s32 %v8195, 512
        %v8260 = vadd.s32 %v8195, 520
        %v8261 = vadd.s32 %v8195, 528
        %v8262 = vadd.s32 %v8195, 536
        %v8263 = vadd.s32 %v8195, 544
        %v8264 = vadd.s32 %v8195, 552
        %v8265 = vadd.s32 %v8195, 560
        %v8266 = vadd.s32 %v8195, 568
        %v8267 = vadd.s32 %v8195, 576
        %v8268 = vadd.s32 %v8195, 584
        %v8269 = vadd.s32 %v8195, 592
        %v8270 = vadd.s32 %v8195, 600
        %v8271 = vadd.s32 %v8195, 608
        %v8272 = vadd.s32 %v8195, 616
        %v8273 = vadd.s32 %v8195, 624
        %v8274 = vadd.s32 %v8195, 632
        %v8275 = vadd.s32 %v8195, 640
        %v8276 = vadd.s32 %v8195, 648
        %v8277 = vadd.s32 %v8195, 656
        %v8278 = vadd.s32 %v8195, 664
        %v8279 = vadd.s32 %v8195, 672
        %v8280 = vadd.s32 %v8195, 680
        %v8281 = vadd.s32 %v8195, 688
        %v8282 = vadd.s32 %v8195, 696
        %v8283 = vadd.s32 %v8195, 704
        %v8284 = vadd.s32 %v8195, 712
        %v8285 = vadd.s32 %v8195, 720
        %v8286 = vadd.s32 %v8195, 728
        %v8287 = vadd.s32 %v8195, 736
        %v8288 = vadd.s32 %v8195, 744
        %v8289 = vadd.s32 %v8195, 752
        %v8290 = vadd.s32 %v8195, 760
        %v8291 = vadd.s32 %v8195, 768
        %v8292 = vadd.s32 %v8195, 776
        %v8293 = vadd.s32 %v8195, 784
        %v8294 = vadd.s32 %v8195, 792
        %v8295 = vadd.s32 %v8195, 800
        %v8296 = vadd.s32 %v8195, 808
        %v8297 = vadd.s32 %v8195, 816
        %v8298 = vadd.s32 %v8195, 824
        %v8299 = vadd.s32 %v8195, 832
        %v8300 = vadd.s32 %v8195, 840
        %v8301 = vadd.s32 %v8195, 848
        %v8302 = vadd.s32 %v8195, 856
        %v8303 = vadd.s32 %v8195, 864
        %v8304 = vadd.s32 %v8195, 872
        %v8305 = vadd.s32 %v8195, 880
        %v8306 = vadd.s32 %v8195, 888
        %v8307 = vadd.s32 %v8195, 896
        %v8308 = vadd.s32 %v8195, 904
        %v8309 = vadd.s32 %v8195, 912
        %v8310 = vadd.s32 %v8195, 920
        %v8311 = vadd.s32 %v8195, 928
        %v8312 = vadd.s32 %v8195, 936
        %v8313 = vadd.s32 %v8195, 944
        %v8314 = vadd.s32 %v8195, 952
        %v8315 = vadd.s32 %v8195, 960
        %v8316 = vadd.s32 %v8195, 968
        %v8317 = vadd.s32 %v8195, 976
        %v8318 = vadd.s32 %v8195, 984
        %v8319 = vadd.s32 %v8195, 992
        %v8320 = vadd.s32 %v8195, 1000
        %v8321 = vadd.s32 %v8195, 1008
        %v8322 = vadd.s32 %v8195, 1016
        %s8323 = smul.u32 %s26, 1024
        %v8324 = vstv %s8323
        %v8325 = vadd.s32 %v8195, %v8324
        %v8326 = vadd.s32 %v8196, %v8324
        %v8327 = vadd.s32 %v8197, %v8324
        %v8328 = vadd.s32 %v8198, %v8324
        %v8329 = vadd.s32 %v8199, %v8324
        %v8330 = vadd.s32 %v8200, %v8324
        %v8331 = vadd.s32 %v8201, %v8324
        %v8332 = vadd.s32 %v8202, %v8324
        %v8333 = vadd.s32 %v8203, %v8324
        %v8334 = vadd.s32 %v8204, %v8324
        %v8335 = vadd.s32 %v8205, %v8324
        %v8336 = vadd.s32 %v8206, %v8324
        %v8337 = vadd.s32 %v8207, %v8324
        %v8338 = vadd.s32 %v8208, %v8324
        %v8339 = vadd.s32 %v8209, %v8324
        %v8340 = vadd.s32 %v8210, %v8324
        %v8341 = vadd.s32 %v8211, %v8324
        %v8342 = vadd.s32 %v8212, %v8324
        %v8343 = vadd.s32 %v8213, %v8324
        %v8344 = vadd.s32 %v8214, %v8324
        %v8345 = vadd.s32 %v8215, %v8324
        %v8346 = vadd.s32 %v8216, %v8324
        %v8347 = vadd.s32 %v8217, %v8324
        %v8348 = vadd.s32 %v8218, %v8324
        %v8349 = vadd.s32 %v8219, %v8324
        %v8350 = vadd.s32 %v8220, %v8324
        %v8351 = vadd.s32 %v8221, %v8324
        %v8352 = vadd.s32 %v8222, %v8324
        %v8353 = vadd.s32 %v8223, %v8324
        %v8354 = vadd.s32 %v8224, %v8324
        %v8355 = vadd.s32 %v8225, %v8324
        %v8356 = vadd.s32 %v8226, %v8324
        %v8357 = vadd.s32 %v8227, %v8324
        %v8358 = vadd.s32 %v8228, %v8324
        %v8359 = vadd.s32 %v8229, %v8324
        %v8360 = vadd.s32 %v8230, %v8324
        %v8361 = vadd.s32 %v8231, %v8324
        %v8362 = vadd.s32 %v8232, %v8324
        %v8363 = vadd.s32 %v8233, %v8324
        %v8364 = vadd.s32 %v8234, %v8324
        %v8365 = vadd.s32 %v8235, %v8324
        %v8366 = vadd.s32 %v8236, %v8324
        %v8367 = vadd.s32 %v8237, %v8324
        %v8368 = vadd.s32 %v8238, %v8324
        %v8369 = vadd.s32 %v8239, %v8324
        %v8370 = vadd.s32 %v8240, %v8324
        %v8371 = vadd.s32 %v8241, %v8324
        %v8372 = vadd.s32 %v8242, %v8324
        %v8373 = vadd.s32 %v8243, %v8324
        %v8374 = vadd.s32 %v8244, %v8324
        %v8375 = vadd.s32 %v8245, %v8324
        %v8376 = vadd.s32 %v8246, %v8324
        %v8377 = vadd.s32 %v8247, %v8324
        %v8378 = vadd.s32 %v8248, %v8324
        %v8379 = vadd.s32 %v8249, %v8324
        %v8380 = vadd.s32 %v8250, %v8324
        %v8381 = vadd.s32 %v8251, %v8324
        %v8382 = vadd.s32 %v8252, %v8324
        %v8383 = vadd.s32 %v8253, %v8324
        %v8384 = vadd.s32 %v8254, %v8324
        %v8385 = vadd.s32 %v8255, %v8324
        %v8386 = vadd.s32 %v8256, %v8324
        %v8387 = vadd.s32 %v8257, %v8324
        %v8388 = vadd.s32 %v8258, %v8324
        %v8389 = vadd.s32 %v8259, %v8324
        %v8390 = vadd.s32 %v8260, %v8324
        %v8391 = vadd.s32 %v8261, %v8324
        %v8392 = vadd.s32 %v8262, %v8324
        %v8393 = vadd.s32 %v8263, %v8324
        %v8394 = vadd.s32 %v8264, %v8324
        %v8395 = vadd.s32 %v8265, %v8324
        %v8396 = vadd.s32 %v8266, %v8324
        %v8397 = vadd.s32 %v8267, %v8324
        %v8398 = vadd.s32 %v8268, %v8324
        %v8399 = vadd.s32 %v8269, %v8324
        %v8400 = vadd.s32 %v8270, %v8324
        %v8401 = vadd.s32 %v8271, %v8324
        %v8402 = vadd.s32 %v8272, %v8324
        %v8403 = vadd.s32 %v8273, %v8324
        %v8404 = vadd.s32 %v8274, %v8324
        %v8405 = vadd.s32 %v8275, %v8324
        %v8406 = vadd.s32 %v8276, %v8324
        %v8407 = vadd.s32 %v8277, %v8324
        %v8408 = vadd.s32 %v8278, %v8324
        %v8409 = vadd.s32 %v8279, %v8324
        %v8410 = vadd.s32 %v8280, %v8324
        %v8411 = vadd.s32 %v8281, %v8324
        %v8412 = vadd.s32 %v8282, %v8324
        %v8413 = vadd.s32 %v8283, %v8324
        %v8414 = vadd.s32 %v8284, %v8324
        %v8415 = vadd.s32 %v8285, %v8324
        %v8416 = vadd.s32 %v8286, %v8324
        %v8417 = vadd.s32 %v8287, %v8324
        %v8418 = vadd.s32 %v8288, %v8324
        %v8419 = vadd.s32 %v8289, %v8324
        %v8420 = vadd.s32 %v8290, %v8324
        %v8421 = vadd.s32 %v8291, %v8324
        %v8422 = vadd.s32 %v8292, %v8324
        %v8423 = vadd.s32 %v8293, %v8324
        %v8424 = vadd.s32 %v8294, %v8324
        %v8425 = vadd.s32 %v8295, %v8324
        %v8426 = vadd.s32 %v8296, %v8324
        %v8427 = vadd.s32 %v8297, %v8324
        %v8428 = vadd.s32 %v8298, %v8324
        %v8429 = vadd.s32 %v8299, %v8324
        %v8430 = vadd.s32 %v8300, %v8324
        %v8431 = vadd.s32 %v8301, %v8324
        %v8432 = vadd.s32 %v8302, %v8324
        %v8433 = vadd.s32 %v8303, %v8324
        %v8434 = vadd.s32 %v8304, %v8324
        %v8435 = vadd.s32 %v8305, %v8324
        %v8436 = vadd.s32 %v8306, %v8324
        %v8437 = vadd.s32 %v8307, %v8324
        %v8438 = vadd.s32 %v8308, %v8324
        %v8439 = vadd.s32 %v8309, %v8324
        %v8440 = vadd.s32 %v8310, %v8324
        %v8441 = vadd.s32 %v8311, %v8324
        %v8442 = vadd.s32 %v8312, %v8324
        %v8443 = vadd.s32 %v8313, %v8324
        %v8444 = vadd.s32 %v8314, %v8324
        %v8445 = vadd.s32 %v8315, %v8324
        %v8446 = vadd.s32 %v8316, %v8324
        %v8447 = vadd.s32 %v8317, %v8324
        %v8448 = vadd.s32 %v8318, %v8324
        %v8449 = vadd.s32 %v8319, %v8324
        %v8450 = vadd.s32 %v8320, %v8324
        %v8451 = vadd.s32 %v8321, %v8324
        %v8452 = vadd.s32 %v8322, %v8324
        %vm8453 = vcmp.lt.s32.totalorder %v8325, 2500
        %vm8454 = vcmp.lt.s32.totalorder %v8326, 2500
        %vm8455 = vcmp.lt.s32.totalorder %v8327, 2500
        %vm8456 = vcmp.lt.s32.totalorder %v8328, 2500
        %vm8457 = vcmp.lt.s32.totalorder %v8329, 2500
        %vm8458 = vcmp.lt.s32.totalorder %v8330, 2500
        %vm8459 = vcmp.lt.s32.totalorder %v8331, 2500
        %vm8460 = vcmp.lt.s32.totalorder %v8332, 2500
        %vm8461 = vcmp.lt.s32.totalorder %v8333, 2500
        %vm8462 = vcmp.lt.s32.totalorder %v8334, 2500
        %vm8463 = vcmp.lt.s32.totalorder %v8335, 2500
        %vm8464 = vcmp.lt.s32.totalorder %v8336, 2500
        %vm8465 = vcmp.lt.s32.totalorder %v8337, 2500
        %vm8466 = vcmp.lt.s32.totalorder %v8338, 2500
        %vm8467 = vcmp.lt.s32.totalorder %v8339, 2500
        %vm8468 = vcmp.lt.s32.totalorder %v8340, 2500
        %vm8469 = vcmp.lt.s32.totalorder %v8341, 2500
        %vm8470 = vcmp.lt.s32.totalorder %v8342, 2500
        %vm8471 = vcmp.lt.s32.totalorder %v8343, 2500
        %vm8472 = vcmp.lt.s32.totalorder %v8344, 2500
        %vm8473 = vcmp.lt.s32.totalorder %v8345, 2500
        %vm8474 = vcmp.lt.s32.totalorder %v8346, 2500
        %vm8475 = vcmp.lt.s32.totalorder %v8347, 2500
        %vm8476 = vcmp.lt.s32.totalorder %v8348, 2500
        %vm8477 = vcmp.lt.s32.totalorder %v8349, 2500
        %vm8478 = vcmp.lt.s32.totalorder %v8350, 2500
        %vm8479 = vcmp.lt.s32.totalorder %v8351, 2500
        %vm8480 = vcmp.lt.s32.totalorder %v8352, 2500
        %vm8481 = vcmp.lt.s32.totalorder %v8353, 2500
        %vm8482 = vcmp.lt.s32.totalorder %v8354, 2500
        %vm8483 = vcmp.lt.s32.totalorder %v8355, 2500
        %vm8484 = vcmp.lt.s32.totalorder %v8356, 2500
        %vm8485 = vcmp.lt.s32.totalorder %v8357, 2500
        %vm8486 = vcmp.lt.s32.totalorder %v8358, 2500
        %vm8487 = vcmp.lt.s32.totalorder %v8359, 2500
        %vm8488 = vcmp.lt.s32.totalorder %v8360, 2500
        %vm8489 = vcmp.lt.s32.totalorder %v8361, 2500
        %vm8490 = vcmp.lt.s32.totalorder %v8362, 2500
        %vm8491 = vcmp.lt.s32.totalorder %v8363, 2500
        %vm8492 = vcmp.lt.s32.totalorder %v8364, 2500
        %vm8493 = vcmp.lt.s32.totalorder %v8365, 2500
        %vm8494 = vcmp.lt.s32.totalorder %v8366, 2500
        %vm8495 = vcmp.lt.s32.totalorder %v8367, 2500
        %vm8496 = vcmp.lt.s32.totalorder %v8368, 2500
        %vm8497 = vcmp.lt.s32.totalorder %v8369, 2500
        %vm8498 = vcmp.lt.s32.totalorder %v8370, 2500
        %vm8499 = vcmp.lt.s32.totalorder %v8371, 2500
        %vm8500 = vcmp.lt.s32.totalorder %v8372, 2500
        %vm8501 = vcmp.lt.s32.totalorder %v8373, 2500
        %vm8502 = vcmp.lt.s32.totalorder %v8374, 2500
        %vm8503 = vcmp.lt.s32.totalorder %v8375, 2500
        %vm8504 = vcmp.lt.s32.totalorder %v8376, 2500
        %vm8505 = vcmp.lt.s32.totalorder %v8377, 2500
        %vm8506 = vcmp.lt.s32.totalorder %v8378, 2500
        %vm8507 = vcmp.lt.s32.totalorder %v8379, 2500
        %vm8508 = vcmp.lt.s32.totalorder %v8380, 2500
        %vm8509 = vcmp.lt.s32.totalorder %v8381, 2500
        %vm8510 = vcmp.lt.s32.totalorder %v8382, 2500
        %vm8511 = vcmp.lt.s32.totalorder %v8383, 2500
        %vm8512 = vcmp.lt.s32.totalorder %v8384, 2500
        %vm8513 = vcmp.lt.s32.totalorder %v8385, 2500
        %vm8514 = vcmp.lt.s32.totalorder %v8386, 2500
        %vm8515 = vcmp.lt.s32.totalorder %v8387, 2500
        %vm8516 = vcmp.lt.s32.totalorder %v8388, 2500
        %vm8517 = vcmp.lt.s32.totalorder %v8389, 2500
        %vm8518 = vcmp.lt.s32.totalorder %v8390, 2500
        %vm8519 = vcmp.lt.s32.totalorder %v8391, 2500
        %vm8520 = vcmp.lt.s32.totalorder %v8392, 2500
        %vm8521 = vcmp.lt.s32.totalorder %v8393, 2500
        %vm8522 = vcmp.lt.s32.totalorder %v8394, 2500
        %vm8523 = vcmp.lt.s32.totalorder %v8395, 2500
        %vm8524 = vcmp.lt.s32.totalorder %v8396, 2500
        %vm8525 = vcmp.lt.s32.totalorder %v8397, 2500
        %vm8526 = vcmp.lt.s32.totalorder %v8398, 2500
        %vm8527 = vcmp.lt.s32.totalorder %v8399, 2500
        %vm8528 = vcmp.lt.s32.totalorder %v8400, 2500
        %vm8529 = vcmp.lt.s32.totalorder %v8401, 2500
        %vm8530 = vcmp.lt.s32.totalorder %v8402, 2500
        %vm8531 = vcmp.lt.s32.totalorder %v8403, 2500
        %vm8532 = vcmp.lt.s32.totalorder %v8404, 2500
        %vm8533 = vcmp.lt.s32.totalorder %v8405, 2500
        %vm8534 = vcmp.lt.s32.totalorder %v8406, 2500
        %vm8535 = vcmp.lt.s32.totalorder %v8407, 2500
        %vm8536 = vcmp.lt.s32.totalorder %v8408, 2500
        %vm8537 = vcmp.lt.s32.totalorder %v8409, 2500
        %vm8538 = vcmp.lt.s32.totalorder %v8410, 2500
        %vm8539 = vcmp.lt.s32.totalorder %v8411, 2500
        %vm8540 = vcmp.lt.s32.totalorder %v8412, 2500
        %vm8541 = vcmp.lt.s32.totalorder %v8413, 2500
        %vm8542 = vcmp.lt.s32.totalorder %v8414, 2500
        %vm8543 = vcmp.lt.s32.totalorder %v8415, 2500
        %vm8544 = vcmp.lt.s32.totalorder %v8416, 2500
        %vm8545 = vcmp.lt.s32.totalorder %v8417, 2500
        %vm8546 = vcmp.lt.s32.totalorder %v8418, 2500
        %vm8547 = vcmp.lt.s32.totalorder %v8419, 2500
        %vm8548 = vcmp.lt.s32.totalorder %v8420, 2500
        %vm8549 = vcmp.lt.s32.totalorder %v8421, 2500
        %vm8550 = vcmp.lt.s32.totalorder %v8422, 2500
        %vm8551 = vcmp.lt.s32.totalorder %v8423, 2500
        %vm8552 = vcmp.lt.s32.totalorder %v8424, 2500
        %vm8553 = vcmp.lt.s32.totalorder %v8425, 2500
        %vm8554 = vcmp.lt.s32.totalorder %v8426, 2500
        %vm8555 = vcmp.lt.s32.totalorder %v8427, 2500
        %vm8556 = vcmp.lt.s32.totalorder %v8428, 2500
        %vm8557 = vcmp.lt.s32.totalorder %v8429, 2500
        %vm8558 = vcmp.lt.s32.totalorder %v8430, 2500
        %vm8559 = vcmp.lt.s32.totalorder %v8431, 2500
        %vm8560 = vcmp.lt.s32.totalorder %v8432, 2500
        %vm8561 = vcmp.lt.s32.totalorder %v8433, 2500
        %vm8562 = vcmp.lt.s32.totalorder %v8434, 2500
        %vm8563 = vcmp.lt.s32.totalorder %v8435, 2500
        %vm8564 = vcmp.lt.s32.totalorder %v8436, 2500
        %vm8565 = vcmp.lt.s32.totalorder %v8437, 2500
        %vm8566 = vcmp.lt.s32.totalorder %v8438, 2500
        %vm8567 = vcmp.lt.s32.totalorder %v8439, 2500
        %vm8568 = vcmp.lt.s32.totalorder %v8440, 2500
        %vm8569 = vcmp.lt.s32.totalorder %v8441, 2500
        %vm8570 = vcmp.lt.s32.totalorder %v8442, 2500
        %vm8571 = vcmp.lt.s32.totalorder %v8443, 2500
        %vm8572 = vcmp.lt.s32.totalorder %v8444, 2500
        %vm8573 = vcmp.lt.s32.totalorder %v8445, 2500
        %vm8574 = vcmp.lt.s32.totalorder %v8446, 2500
        %vm8575 = vcmp.lt.s32.totalorder %v8447, 2500
        %vm8576 = vcmp.lt.s32.totalorder %v8448, 2500
        %vm8577 = vcmp.lt.s32.totalorder %v8449, 2500
        %vm8578 = vcmp.lt.s32.totalorder %v8450, 2500
        %vm8579 = vcmp.lt.s32.totalorder %v8451, 2500
        %vm8580 = vcmp.lt.s32.totalorder %v8452, 2500
        %v8581 = vsel %vm8453, 1, 0
        %v8582 = vsel %vm8454, 1, 0
        %v8583 = vsel %vm8455, 1, 0
        %v8584 = vsel %vm8456, 1, 0
        %v8585 = vsel %vm8457, 1, 0
        %v8586 = vsel %vm8458, 1, 0
        %v8587 = vsel %vm8459, 1, 0
        %v8588 = vsel %vm8460, 1, 0
        %v8589 = vsel %vm8461, 1, 0
        %v8590 = vsel %vm8462, 1, 0
        %v8591 = vsel %vm8463, 1, 0
        %v8592 = vsel %vm8464, 1, 0
        %v8593 = vsel %vm8465, 1, 0
        %v8594 = vsel %vm8466, 1, 0
        %v8595 = vsel %vm8467, 1, 0
        %v8596 = vsel %vm8468, 1, 0
        %v8597 = vsel %vm8469, 1, 0
        %v8598 = vsel %vm8470, 1, 0
        %v8599 = vsel %vm8471, 1, 0
        %v8600 = vsel %vm8472, 1, 0
        %v8601 = vsel %vm8473, 1, 0
        %v8602 = vsel %vm8474, 1, 0
        %v8603 = vsel %vm8475, 1, 0
        %v8604 = vsel %vm8476, 1, 0
        %v8605 = vsel %vm8477, 1, 0
        %v8606 = vsel %vm8478, 1, 0
        %v8607 = vsel %vm8479, 1, 0
        %v8608 = vsel %vm8480, 1, 0
        %v8609 = vsel %vm8481, 1, 0
        %v8610 = vsel %vm8482, 1, 0
        %v8611 = vsel %vm8483, 1, 0
        %v8612 = vsel %vm8484, 1, 0
        %v8613 = vsel %vm8485, 1, 0
        %v8614 = vsel %vm8486, 1, 0
        %v8615 = vsel %vm8487, 1, 0
        %v8616 = vsel %vm8488, 1, 0
        %v8617 = vsel %vm8489, 1, 0
        %v8618 = vsel %vm8490, 1, 0
        %v8619 = vsel %vm8491, 1, 0
        %v8620 = vsel %vm8492, 1, 0
        %v8621 = vsel %vm8493, 1, 0
        %v8622 = vsel %vm8494, 1, 0
        %v8623 = vsel %vm8495, 1, 0
        %v8624 = vsel %vm8496, 1, 0
        %v8625 = vsel %vm8497, 1, 0
        %v8626 = vsel %vm8498, 1, 0
        %v8627 = vsel %vm8499, 1, 0
        %v8628 = vsel %vm8500, 1, 0
        %v8629 = vsel %vm8501, 1, 0
        %v8630 = vsel %vm8502, 1, 0
        %v8631 = vsel %vm8503, 1, 0
        %v8632 = vsel %vm8504, 1, 0
        %v8633 = vsel %vm8505, 1, 0
        %v8634 = vsel %vm8506, 1, 0
        %v8635 = vsel %vm8507, 1, 0
        %v8636 = vsel %vm8508, 1, 0
        %v8637 = vsel %vm8509, 1, 0
        %v8638 = vsel %vm8510, 1, 0
        %v8639 = vsel %vm8511, 1, 0
        %v8640 = vsel %vm8512, 1, 0
        %v8641 = vsel %vm8513, 1, 0
        %v8642 = vsel %vm8514, 1, 0
        %v8643 = vsel %vm8515, 1, 0
        %v8644 = vsel %vm8516, 1, 0
        %v8645 = vsel %vm8517, 1, 0
        %v8646 = vsel %vm8518, 1, 0
        %v8647 = vsel %vm8519, 1, 0
        %v8648 = vsel %vm8520, 1, 0
        %v8649 = vsel %vm8521, 1, 0
        %v8650 = vsel %vm8522, 1, 0
        %v8651 = vsel %vm8523, 1, 0
        %v8652 = vsel %vm8524, 1, 0
        %v8653 = vsel %vm8525, 1, 0
        %v8654 = vsel %vm8526, 1, 0
        %v8655 = vsel %vm8527, 1, 0
        %v8656 = vsel %vm8528, 1, 0
        %v8657 = vsel %vm8529, 1, 0
        %v8658 = vsel %vm8530, 1, 0
        %v8659 = vsel %vm8531, 1, 0
        %v8660 = vsel %vm8532, 1, 0
        %v8661 = vsel %vm8533, 1, 0
        %v8662 = vsel %vm8534, 1, 0
        %v8663 = vsel %vm8535, 1, 0
        %v8664 = vsel %vm8536, 1, 0
        %v8665 = vsel %vm8537, 1, 0
        %v8666 = vsel %vm8538, 1, 0
        %v8667 = vsel %vm8539, 1, 0
        %v8668 = vsel %vm8540, 1, 0
        %v8669 = vsel %vm8541, 1, 0
        %v8670 = vsel %vm8542, 1, 0
        %v8671 = vsel %vm8543, 1, 0
        %v8672 = vsel %vm8544, 1, 0
        %v8673 = vsel %vm8545, 1, 0
        %v8674 = vsel %vm8546, 1, 0
        %v8675 = vsel %vm8547, 1, 0
        %v8676 = vsel %vm8548, 1, 0
        %v8677 = vsel %vm8549, 1, 0
        %v8678 = vsel %vm8550, 1, 0
        %v8679 = vsel %vm8551, 1, 0
        %v8680 = vsel %vm8552, 1, 0
        %v8681 = vsel %vm8553, 1, 0
        %v8682 = vsel %vm8554, 1, 0
        %v8683 = vsel %vm8555, 1, 0
        %v8684 = vsel %vm8556, 1, 0
        %v8685 = vsel %vm8557, 1, 0
        %v8686 = vsel %vm8558, 1, 0
        %v8687 = vsel %vm8559, 1, 0
        %v8688 = vsel %vm8560, 1, 0
        %v8689 = vsel %vm8561, 1, 0
        %v8690 = vsel %vm8562, 1, 0
        %v8691 = vsel %vm8563, 1, 0
        %v8692 = vsel %vm8564, 1, 0
        %v8693 = vsel %vm8565, 1, 0
        %v8694 = vsel %vm8566, 1, 0
        %v8695 = vsel %vm8567, 1, 0
        %v8696 = vsel %vm8568, 1, 0
        %v8697 = vsel %vm8569, 1, 0
        %v8698 = vsel %vm8570, 1, 0
        %v8699 = vsel %vm8571, 1, 0
        %v8700 = vsel %vm8572, 1, 0
        %v8701 = vsel %vm8573, 1, 0
        %v8702 = vsel %vm8574, 1, 0
        %v8703 = vsel %vm8575, 1, 0
        %v8704 = vsel %vm8576, 1, 0
        %v8705 = vsel %vm8577, 1, 0
        %v8706 = vsel %vm8578, 1, 0
        %v8707 = vsel %vm8579, 1, 0
        %v8708 = vsel %vm8580, 1, 0
        %vm8709 = vcmp.eq.s32.totalorder %v8581, 1
        %vm8710 = vcmp.eq.s32.totalorder %v8582, 1
        %vm8711 = vcmp.eq.s32.totalorder %v8583, 1
        %vm8712 = vcmp.eq.s32.totalorder %v8584, 1
        %vm8713 = vcmp.eq.s32.totalorder %v8585, 1
        %vm8714 = vcmp.eq.s32.totalorder %v8586, 1
        %vm8715 = vcmp.eq.s32.totalorder %v8587, 1
        %vm8716 = vcmp.eq.s32.totalorder %v8588, 1
        %vm8717 = vcmp.eq.s32.totalorder %v8589, 1
        %vm8718 = vcmp.eq.s32.totalorder %v8590, 1
        %vm8719 = vcmp.eq.s32.totalorder %v8591, 1
        %vm8720 = vcmp.eq.s32.totalorder %v8592, 1
        %vm8721 = vcmp.eq.s32.totalorder %v8593, 1
        %vm8722 = vcmp.eq.s32.totalorder %v8594, 1
        %vm8723 = vcmp.eq.s32.totalorder %v8595, 1
        %vm8724 = vcmp.eq.s32.totalorder %v8596, 1
        %vm8725 = vcmp.eq.s32.totalorder %v8597, 1
        %vm8726 = vcmp.eq.s32.totalorder %v8598, 1
        %vm8727 = vcmp.eq.s32.totalorder %v8599, 1
        %vm8728 = vcmp.eq.s32.totalorder %v8600, 1
        %vm8729 = vcmp.eq.s32.totalorder %v8601, 1
        %vm8730 = vcmp.eq.s32.totalorder %v8602, 1
        %vm8731 = vcmp.eq.s32.totalorder %v8603, 1
        %vm8732 = vcmp.eq.s32.totalorder %v8604, 1
        %vm8733 = vcmp.eq.s32.totalorder %v8605, 1
        %vm8734 = vcmp.eq.s32.totalorder %v8606, 1
        %vm8735 = vcmp.eq.s32.totalorder %v8607, 1
        %vm8736 = vcmp.eq.s32.totalorder %v8608, 1
        %vm8737 = vcmp.eq.s32.totalorder %v8609, 1
        %vm8738 = vcmp.eq.s32.totalorder %v8610, 1
        %vm8739 = vcmp.eq.s32.totalorder %v8611, 1
        %vm8740 = vcmp.eq.s32.totalorder %v8612, 1
        %vm8741 = vcmp.eq.s32.totalorder %v8613, 1
        %vm8742 = vcmp.eq.s32.totalorder %v8614, 1
        %vm8743 = vcmp.eq.s32.totalorder %v8615, 1
        %vm8744 = vcmp.eq.s32.totalorder %v8616, 1
        %vm8745 = vcmp.eq.s32.totalorder %v8617, 1
        %vm8746 = vcmp.eq.s32.totalorder %v8618, 1
        %vm8747 = vcmp.eq.s32.totalorder %v8619, 1
        %vm8748 = vcmp.eq.s32.totalorder %v8620, 1
        %vm8749 = vcmp.eq.s32.totalorder %v8621, 1
        %vm8750 = vcmp.eq.s32.totalorder %v8622, 1
        %vm8751 = vcmp.eq.s32.totalorder %v8623, 1
        %vm8752 = vcmp.eq.s32.totalorder %v8624, 1
        %vm8753 = vcmp.eq.s32.totalorder %v8625, 1
        %vm8754 = vcmp.eq.s32.totalorder %v8626, 1
        %vm8755 = vcmp.eq.s32.totalorder %v8627, 1
        %vm8756 = vcmp.eq.s32.totalorder %v8628, 1
        %vm8757 = vcmp.eq.s32.totalorder %v8629, 1
        %vm8758 = vcmp.eq.s32.totalorder %v8630, 1
        %vm8759 = vcmp.eq.s32.totalorder %v8631, 1
        %vm8760 = vcmp.eq.s32.totalorder %v8632, 1
        %vm8761 = vcmp.eq.s32.totalorder %v8633, 1
        %vm8762 = vcmp.eq.s32.totalorder %v8634, 1
        %vm8763 = vcmp.eq.s32.totalorder %v8635, 1
        %vm8764 = vcmp.eq.s32.totalorder %v8636, 1
        %vm8765 = vcmp.eq.s32.totalorder %v8637, 1
        %vm8766 = vcmp.eq.s32.totalorder %v8638, 1
        %vm8767 = vcmp.eq.s32.totalorder %v8639, 1
        %vm8768 = vcmp.eq.s32.totalorder %v8640, 1
        %vm8769 = vcmp.eq.s32.totalorder %v8641, 1
        %vm8770 = vcmp.eq.s32.totalorder %v8642, 1
        %vm8771 = vcmp.eq.s32.totalorder %v8643, 1
        %vm8772 = vcmp.eq.s32.totalorder %v8644, 1
        %vm8773 = vcmp.eq.s32.totalorder %v8645, 1
        %vm8774 = vcmp.eq.s32.totalorder %v8646, 1
        %vm8775 = vcmp.eq.s32.totalorder %v8647, 1
        %vm8776 = vcmp.eq.s32.totalorder %v8648, 1
        %vm8777 = vcmp.eq.s32.totalorder %v8649, 1
        %vm8778 = vcmp.eq.s32.totalorder %v8650, 1
        %vm8779 = vcmp.eq.s32.totalorder %v8651, 1
        %vm8780 = vcmp.eq.s32.totalorder %v8652, 1
        %vm8781 = vcmp.eq.s32.totalorder %v8653, 1
        %vm8782 = vcmp.eq.s32.totalorder %v8654, 1
        %vm8783 = vcmp.eq.s32.totalorder %v8655, 1
        %vm8784 = vcmp.eq.s32.totalorder %v8656, 1
        %vm8785 = vcmp.eq.s32.totalorder %v8657, 1
        %vm8786 = vcmp.eq.s32.totalorder %v8658, 1
        %vm8787 = vcmp.eq.s32.totalorder %v8659, 1
        %vm8788 = vcmp.eq.s32.totalorder %v8660, 1
        %vm8789 = vcmp.eq.s32.totalorder %v8661, 1
        %vm8790 = vcmp.eq.s32.totalorder %v8662, 1
        %vm8791 = vcmp.eq.s32.totalorder %v8663, 1
        %vm8792 = vcmp.eq.s32.totalorder %v8664, 1
        %vm8793 = vcmp.eq.s32.totalorder %v8665, 1
        %vm8794 = vcmp.eq.s32.totalorder %v8666, 1
        %vm8795 = vcmp.eq.s32.totalorder %v8667, 1
        %vm8796 = vcmp.eq.s32.totalorder %v8668, 1
        %vm8797 = vcmp.eq.s32.totalorder %v8669, 1
        %vm8798 = vcmp.eq.s32.totalorder %v8670, 1
        %vm8799 = vcmp.eq.s32.totalorder %v8671, 1
        %vm8800 = vcmp.eq.s32.totalorder %v8672, 1
        %vm8801 = vcmp.eq.s32.totalorder %v8673, 1
        %vm8802 = vcmp.eq.s32.totalorder %v8674, 1
        %vm8803 = vcmp.eq.s32.totalorder %v8675, 1
        %vm8804 = vcmp.eq.s32.totalorder %v8676, 1
        %vm8805 = vcmp.eq.s32.totalorder %v8677, 1
        %vm8806 = vcmp.eq.s32.totalorder %v8678, 1
        %vm8807 = vcmp.eq.s32.totalorder %v8679, 1
        %vm8808 = vcmp.eq.s32.totalorder %v8680, 1
        %vm8809 = vcmp.eq.s32.totalorder %v8681, 1
        %vm8810 = vcmp.eq.s32.totalorder %v8682, 1
        %vm8811 = vcmp.eq.s32.totalorder %v8683, 1
        %vm8812 = vcmp.eq.s32.totalorder %v8684, 1
        %vm8813 = vcmp.eq.s32.totalorder %v8685, 1
        %vm8814 = vcmp.eq.s32.totalorder %v8686, 1
        %vm8815 = vcmp.eq.s32.totalorder %v8687, 1
        %vm8816 = vcmp.eq.s32.totalorder %v8688, 1
        %vm8817 = vcmp.eq.s32.totalorder %v8689, 1
        %vm8818 = vcmp.eq.s32.totalorder %v8690, 1
        %vm8819 = vcmp.eq.s32.totalorder %v8691, 1
        %vm8820 = vcmp.eq.s32.totalorder %v8692, 1
        %vm8821 = vcmp.eq.s32.totalorder %v8693, 1
        %vm8822 = vcmp.eq.s32.totalorder %v8694, 1
        %vm8823 = vcmp.eq.s32.totalorder %v8695, 1
        %vm8824 = vcmp.eq.s32.totalorder %v8696, 1
        %vm8825 = vcmp.eq.s32.totalorder %v8697, 1
        %vm8826 = vcmp.eq.s32.totalorder %v8698, 1
        %vm8827 = vcmp.eq.s32.totalorder %v8699, 1
        %vm8828 = vcmp.eq.s32.totalorder %v8700, 1
        %vm8829 = vcmp.eq.s32.totalorder %v8701, 1
        %vm8830 = vcmp.eq.s32.totalorder %v8702, 1
        %vm8831 = vcmp.eq.s32.totalorder %v8703, 1
        %vm8832 = vcmp.eq.s32.totalorder %v8704, 1
        %vm8833 = vcmp.eq.s32.totalorder %v8705, 1
        %vm8834 = vcmp.eq.s32.totalorder %v8706, 1
        %vm8835 = vcmp.eq.s32.totalorder %v8707, 1
        %vm8836 = vcmp.eq.s32.totalorder %v8708, 1
        %v8837 = vsel %vm8709, %v7170, -inf
        %v8838 = vsel %vm8709, %v7171, -inf
        %v8839 = vsel %vm8709, %v7172, -inf
        %v8840 = vsel %vm8709, %v7173, -inf
        %v8841 = vsel %vm8709, %v7174, -inf
        %v8842 = vsel %vm8709, %v7175, -inf
        %v8843 = vsel %vm8709, %v7176, -inf
        %v8844 = vsel %vm8709, %v7177, -inf
        %v8845 = vsel %vm8710, %v7178, -inf
        %v8846 = vsel %vm8710, %v7179, -inf
        %v8847 = vsel %vm8710, %v7180, -inf
        %v8848 = vsel %vm8710, %v7181, -inf
        %v8849 = vsel %vm8710, %v7182, -inf
        %v8850 = vsel %vm8710, %v7183, -inf
        %v8851 = vsel %vm8710, %v7184, -inf
        %v8852 = vsel %vm8710, %v7185, -inf
        %v8853 = vsel %vm8711, %v7186, -inf
        %v8854 = vsel %vm8711, %v7187, -inf
        %v8855 = vsel %vm8711, %v7188, -inf
        %v8856 = vsel %vm8711, %v7189, -inf
        %v8857 = vsel %vm8711, %v7190, -inf
        %v8858 = vsel %vm8711, %v7191, -inf
        %v8859 = vsel %vm8711, %v7192, -inf
        %v8860 = vsel %vm8711, %v7193, -inf
        %v8861 = vsel %vm8712, %v7194, -inf
        %v8862 = vsel %vm8712, %v7195, -inf
        %v8863 = vsel %vm8712, %v7196, -inf
        %v8864 = vsel %vm8712, %v7197, -inf
        %v8865 = vsel %vm8712, %v7198, -inf
        %v8866 = vsel %vm8712, %v7199, -inf
        %v8867 = vsel %vm8712, %v7200, -inf
        %v8868 = vsel %vm8712, %v7201, -inf
        %v8869 = vsel %vm8713, %v7202, -inf
        %v8870 = vsel %vm8713, %v7203, -inf
        %v8871 = vsel %vm8713, %v7204, -inf
        %v8872 = vsel %vm8713, %v7205, -inf
        %v8873 = vsel %vm8713, %v7206, -inf
        %v8874 = vsel %vm8713, %v7207, -inf
        %v8875 = vsel %vm8713, %v7208, -inf
        %v8876 = vsel %vm8713, %v7209, -inf
        %v8877 = vsel %vm8714, %v7210, -inf
        %v8878 = vsel %vm8714, %v7211, -inf
        %v8879 = vsel %vm8714, %v7212, -inf
        %v8880 = vsel %vm8714, %v7213, -inf
        %v8881 = vsel %vm8714, %v7214, -inf
        %v8882 = vsel %vm8714, %v7215, -inf
        %v8883 = vsel %vm8714, %v7216, -inf
        %v8884 = vsel %vm8714, %v7217, -inf
        %v8885 = vsel %vm8715, %v7218, -inf
        %v8886 = vsel %vm8715, %v7219, -inf
        %v8887 = vsel %vm8715, %v7220, -inf
        %v8888 = vsel %vm8715, %v7221, -inf
        %v8889 = vsel %vm8715, %v7222, -inf
        %v8890 = vsel %vm8715, %v7223, -inf
        %v8891 = vsel %vm8715, %v7224, -inf
        %v8892 = vsel %vm8715, %v7225, -inf
        %v8893 = vsel %vm8716, %v7226, -inf
        %v8894 = vsel %vm8716, %v7227, -inf
        %v8895 = vsel %vm8716, %v7228, -inf
        %v8896 = vsel %vm8716, %v7229, -inf
        %v8897 = vsel %vm8716, %v7230, -inf
        %v8898 = vsel %vm8716, %v7231, -inf
        %v8899 = vsel %vm8716, %v7232, -inf
        %v8900 = vsel %vm8716, %v7233, -inf
        %v8901 = vsel %vm8717, %v7234, -inf
        %v8902 = vsel %vm8717, %v7235, -inf
        %v8903 = vsel %vm8717, %v7236, -inf
        %v8904 = vsel %vm8717, %v7237, -inf
        %v8905 = vsel %vm8717, %v7238, -inf
        %v8906 = vsel %vm8717, %v7239, -inf
        %v8907 = vsel %vm8717, %v7240, -inf
        %v8908 = vsel %vm8717, %v7241, -inf
        %v8909 = vsel %vm8718, %v7242, -inf
        %v8910 = vsel %vm8718, %v7243, -inf
        %v8911 = vsel %vm8718, %v7244, -inf
        %v8912 = vsel %vm8718, %v7245, -inf
        %v8913 = vsel %vm8718, %v7246, -inf
        %v8914 = vsel %vm8718, %v7247, -inf
        %v8915 = vsel %vm8718, %v7248, -inf
        %v8916 = vsel %vm8718, %v7249, -inf
        %v8917 = vsel %vm8719, %v7250, -inf
        %v8918 = vsel %vm8719, %v7251, -inf
        %v8919 = vsel %vm8719, %v7252, -inf
        %v8920 = vsel %vm8719, %v7253, -inf
        %v8921 = vsel %vm8719, %v7254, -inf
        %v8922 = vsel %vm8719, %v7255, -inf
        %v8923 = vsel %vm8719, %v7256, -inf
        %v8924 = vsel %vm8719, %v7257, -inf
        %v8925 = vsel %vm8720, %v7258, -inf
        %v8926 = vsel %vm8720, %v7259, -inf
        %v8927 = vsel %vm8720, %v7260, -inf
        %v8928 = vsel %vm8720, %v7261, -inf
        %v8929 = vsel %vm8720, %v7262, -inf
        %v8930 = vsel %vm8720, %v7263, -inf
        %v8931 = vsel %vm8720, %v7264, -inf
        %v8932 = vsel %vm8720, %v7265, -inf
        %v8933 = vsel %vm8721, %v7266, -inf
        %v8934 = vsel %vm8721, %v7267, -inf
        %v8935 = vsel %vm8721, %v7268, -inf
        %v8936 = vsel %vm8721, %v7269, -inf
        %v8937 = vsel %vm8721, %v7270, -inf
        %v8938 = vsel %vm8721, %v7271, -inf
        %v8939 = vsel %vm8721, %v7272, -inf
        %v8940 = vsel %vm8721, %v7273, -inf
        %v8941 = vsel %vm8722, %v7274, -inf
        %v8942 = vsel %vm8722, %v7275, -inf
        %v8943 = vsel %vm8722, %v7276, -inf
        %v8944 = vsel %vm8722, %v7277, -inf
        %v8945 = vsel %vm8722, %v7278, -inf
        %v8946 = vsel %vm8722, %v7279, -inf
        %v8947 = vsel %vm8722, %v7280, -inf
        %v8948 = vsel %vm8722, %v7281, -inf
        %v8949 = vsel %vm8723, %v7282, -inf
        %v8950 = vsel %vm8723, %v7283, -inf
        %v8951 = vsel %vm8723, %v7284, -inf
        %v8952 = vsel %vm8723, %v7285, -inf
        %v8953 = vsel %vm8723, %v7286, -inf
        %v8954 = vsel %vm8723, %v7287, -inf
        %v8955 = vsel %vm8723, %v7288, -inf
        %v8956 = vsel %vm8723, %v7289, -inf
        %v8957 = vsel %vm8724, %v7290, -inf
        %v8958 = vsel %vm8724, %v7291, -inf
        %v8959 = vsel %vm8724, %v7292, -inf
        %v8960 = vsel %vm8724, %v7293, -inf
        %v8961 = vsel %vm8724, %v7294, -inf
        %v8962 = vsel %vm8724, %v7295, -inf
        %v8963 = vsel %vm8724, %v7296, -inf
        %v8964 = vsel %vm8724, %v7297, -inf
        %v8965 = vsel %vm8725, %v7298, -inf
        %v8966 = vsel %vm8725, %v7299, -inf
        %v8967 = vsel %vm8725, %v7300, -inf
        %v8968 = vsel %vm8725, %v7301, -inf
        %v8969 = vsel %vm8725, %v7302, -inf
        %v8970 = vsel %vm8725, %v7303, -inf
        %v8971 = vsel %vm8725, %v7304, -inf
        %v8972 = vsel %vm8725, %v7305, -inf
        %v8973 = vsel %vm8726, %v7306, -inf
        %v8974 = vsel %vm8726, %v7307, -inf
        %v8975 = vsel %vm8726, %v7308, -inf
        %v8976 = vsel %vm8726, %v7309, -inf
        %v8977 = vsel %vm8726, %v7310, -inf
        %v8978 = vsel %vm8726, %v7311, -inf
        %v8979 = vsel %vm8726, %v7312, -inf
        %v8980 = vsel %vm8726, %v7313, -inf
        %v8981 = vsel %vm8727, %v7314, -inf
        %v8982 = vsel %vm8727, %v7315, -inf
        %v8983 = vsel %vm8727, %v7316, -inf
        %v8984 = vsel %vm8727, %v7317, -inf
        %v8985 = vsel %vm8727, %v7318, -inf
        %v8986 = vsel %vm8727, %v7319, -inf
        %v8987 = vsel %vm8727, %v7320, -inf
        %v8988 = vsel %vm8727, %v7321, -inf
        %v8989 = vsel %vm8728, %v7322, -inf
        %v8990 = vsel %vm8728, %v7323, -inf
        %v8991 = vsel %vm8728, %v7324, -inf
        %v8992 = vsel %vm8728, %v7325, -inf
        %v8993 = vsel %vm8728, %v7326, -inf
        %v8994 = vsel %vm8728, %v7327, -inf
        %v8995 = vsel %vm8728, %v7328, -inf
        %v8996 = vsel %vm8728, %v7329, -inf
        %v8997 = vsel %vm8729, %v7330, -inf
        %v8998 = vsel %vm8729, %v7331, -inf
        %v8999 = vsel %vm8729, %v7332, -inf
        %v9000 = vsel %vm8729, %v7333, -inf
        %v9001 = vsel %vm8729, %v7334, -inf
        %v9002 = vsel %vm8729, %v7335, -inf
        %v9003 = vsel %vm8729, %v7336, -inf
        %v9004 = vsel %vm8729, %v7337, -inf
        %v9005 = vsel %vm8730, %v7338, -inf
        %v9006 = vsel %vm8730, %v7339, -inf
        %v9007 = vsel %vm8730, %v7340, -inf
        %v9008 = vsel %vm8730, %v7341, -inf
        %v9009 = vsel %vm8730, %v7342, -inf
        %v9010 = vsel %vm8730, %v7343, -inf
        %v9011 = vsel %vm8730, %v7344, -inf
        %v9012 = vsel %vm8730, %v7345, -inf
        %v9013 = vsel %vm8731, %v7346, -inf
        %v9014 = vsel %vm8731, %v7347, -inf
        %v9015 = vsel %vm8731, %v7348, -inf
        %v9016 = vsel %vm8731, %v7349, -inf
        %v9017 = vsel %vm8731, %v7350, -inf
        %v9018 = vsel %vm8731, %v7351, -inf
        %v9019 = vsel %vm8731, %v7352, -inf
        %v9020 = vsel %vm8731, %v7353, -inf
        %v9021 = vsel %vm8732, %v7354, -inf
        %v9022 = vsel %vm8732, %v7355, -inf
        %v9023 = vsel %vm8732, %v7356, -inf
        %v9024 = vsel %vm8732, %v7357, -inf
        %v9025 = vsel %vm8732, %v7358, -inf
        %v9026 = vsel %vm8732, %v7359, -inf
        %v9027 = vsel %vm8732, %v7360, -inf
        %v9028 = vsel %vm8732, %v7361, -inf
        %v9029 = vsel %vm8733, %v7362, -inf
        %v9030 = vsel %vm8733, %v7363, -inf
        %v9031 = vsel %vm8733, %v7364, -inf
        %v9032 = vsel %vm8733, %v7365, -inf
        %v9033 = vsel %vm8733, %v7366, -inf
        %v9034 = vsel %vm8733, %v7367, -inf
        %v9035 = vsel %vm8733, %v7368, -inf
        %v9036 = vsel %vm8733, %v7369, -inf
        %v9037 = vsel %vm8734, %v7370, -inf
        %v9038 = vsel %vm8734, %v7371, -inf
        %v9039 = vsel %vm8734, %v7372, -inf
        %v9040 = vsel %vm8734, %v7373, -inf
        %v9041 = vsel %vm8734, %v7374, -inf
        %v9042 = vsel %vm8734, %v7375, -inf
        %v9043 = vsel %vm8734, %v7376, -inf
        %v9044 = vsel %vm8734, %v7377, -inf
        %v9045 = vsel %vm8735, %v7378, -inf
        %v9046 = vsel %vm8735, %v7379, -inf
        %v9047 = vsel %vm8735, %v7380, -inf
        %v9048 = vsel %vm8735, %v7381, -inf
        %v9049 = vsel %vm8735, %v7382, -inf
        %v9050 = vsel %vm8735, %v7383, -inf
        %v9051 = vsel %vm8735, %v7384, -inf
        %v9052 = vsel %vm8735, %v7385, -inf
        %v9053 = vsel %vm8736, %v7386, -inf
        %v9054 = vsel %vm8736, %v7387, -inf
        %v9055 = vsel %vm8736, %v7388, -inf
        %v9056 = vsel %vm8736, %v7389, -inf
        %v9057 = vsel %vm8736, %v7390, -inf
        %v9058 = vsel %vm8736, %v7391, -inf
        %v9059 = vsel %vm8736, %v7392, -inf
        %v9060 = vsel %vm8736, %v7393, -inf
        %v9061 = vsel %vm8737, %v7394, -inf
        %v9062 = vsel %vm8737, %v7395, -inf
        %v9063 = vsel %vm8737, %v7396, -inf
        %v9064 = vsel %vm8737, %v7397, -inf
        %v9065 = vsel %vm8737, %v7398, -inf
        %v9066 = vsel %vm8737, %v7399, -inf
        %v9067 = vsel %vm8737, %v7400, -inf
        %v9068 = vsel %vm8737, %v7401, -inf
        %v9069 = vsel %vm8738, %v7402, -inf
        %v9070 = vsel %vm8738, %v7403, -inf
        %v9071 = vsel %vm8738, %v7404, -inf
        %v9072 = vsel %vm8738, %v7405, -inf
        %v9073 = vsel %vm8738, %v7406, -inf
        %v9074 = vsel %vm8738, %v7407, -inf
        %v9075 = vsel %vm8738, %v7408, -inf
        %v9076 = vsel %vm8738, %v7409, -inf
        %v9077 = vsel %vm8739, %v7410, -inf
        %v9078 = vsel %vm8739, %v7411, -inf
        %v9079 = vsel %vm8739, %v7412, -inf
        %v9080 = vsel %vm8739, %v7413, -inf
        %v9081 = vsel %vm8739, %v7414, -inf
        %v9082 = vsel %vm8739, %v7415, -inf
        %v9083 = vsel %vm8739, %v7416, -inf
        %v9084 = vsel %vm8739, %v7417, -inf
        %v9085 = vsel %vm8740, %v7418, -inf
        %v9086 = vsel %vm8740, %v7419, -inf
        %v9087 = vsel %vm8740, %v7420, -inf
        %v9088 = vsel %vm8740, %v7421, -inf
        %v9089 = vsel %vm8740, %v7422, -inf
        %v9090 = vsel %vm8740, %v7423, -inf
        %v9091 = vsel %vm8740, %v7424, -inf
        %v9092 = vsel %vm8740, %v7425, -inf
        %v9093 = vsel %vm8741, %v7426, -inf
        %v9094 = vsel %vm8741, %v7427, -inf
        %v9095 = vsel %vm8741, %v7428, -inf
        %v9096 = vsel %vm8741, %v7429, -inf
        %v9097 = vsel %vm8741, %v7430, -inf
        %v9098 = vsel %vm8741, %v7431, -inf
        %v9099 = vsel %vm8741, %v7432, -inf
        %v9100 = vsel %vm8741, %v7433, -inf
        %v9101 = vsel %vm8742, %v7434, -inf
        %v9102 = vsel %vm8742, %v7435, -inf
        %v9103 = vsel %vm8742, %v7436, -inf
        %v9104 = vsel %vm8742, %v7437, -inf
        %v9105 = vsel %vm8742, %v7438, -inf
        %v9106 = vsel %vm8742, %v7439, -inf
        %v9107 = vsel %vm8742, %v7440, -inf
        %v9108 = vsel %vm8742, %v7441, -inf
        %v9109 = vsel %vm8743, %v7442, -inf
        %v9110 = vsel %vm8743, %v7443, -inf
        %v9111 = vsel %vm8743, %v7444, -inf
        %v9112 = vsel %vm8743, %v7445, -inf
        %v9113 = vsel %vm8743, %v7446, -inf
        %v9114 = vsel %vm8743, %v7447, -inf
        %v9115 = vsel %vm8743, %v7448, -inf
        %v9116 = vsel %vm8743, %v7449, -inf
        %v9117 = vsel %vm8744, %v7450, -inf
        %v9118 = vsel %vm8744, %v7451, -inf
        %v9119 = vsel %vm8744, %v7452, -inf
        %v9120 = vsel %vm8744, %v7453, -inf
        %v9121 = vsel %vm8744, %v7454, -inf
        %v9122 = vsel %vm8744, %v7455, -inf
        %v9123 = vsel %vm8744, %v7456, -inf
        %v9124 = vsel %vm8744, %v7457, -inf
        %v9125 = vsel %vm8745, %v7458, -inf
        %v9126 = vsel %vm8745, %v7459, -inf
        %v9127 = vsel %vm8745, %v7460, -inf
        %v9128 = vsel %vm8745, %v7461, -inf
        %v9129 = vsel %vm8745, %v7462, -inf
        %v9130 = vsel %vm8745, %v7463, -inf
        %v9131 = vsel %vm8745, %v7464, -inf
        %v9132 = vsel %vm8745, %v7465, -inf
        %v9133 = vsel %vm8746, %v7466, -inf
        %v9134 = vsel %vm8746, %v7467, -inf
        %v9135 = vsel %vm8746, %v7468, -inf
        %v9136 = vsel %vm8746, %v7469, -inf
        %v9137 = vsel %vm8746, %v7470, -inf
        %v9138 = vsel %vm8746, %v7471, -inf
        %v9139 = vsel %vm8746, %v7472, -inf
        %v9140 = vsel %vm8746, %v7473, -inf
        %v9141 = vsel %vm8747, %v7474, -inf
        %v9142 = vsel %vm8747, %v7475, -inf
        %v9143 = vsel %vm8747, %v7476, -inf
        %v9144 = vsel %vm8747, %v7477, -inf
        %v9145 = vsel %vm8747, %v7478, -inf
        %v9146 = vsel %vm8747, %v7479, -inf
        %v9147 = vsel %vm8747, %v7480, -inf
        %v9148 = vsel %vm8747, %v7481, -inf
        %v9149 = vsel %vm8748, %v7482, -inf
        %v9150 = vsel %vm8748, %v7483, -inf
        %v9151 = vsel %vm8748, %v7484, -inf
        %v9152 = vsel %vm8748, %v7485, -inf
        %v9153 = vsel %vm8748, %v7486, -inf
        %v9154 = vsel %vm8748, %v7487, -inf
        %v9155 = vsel %vm8748, %v7488, -inf
        %v9156 = vsel %vm8748, %v7489, -inf
        %v9157 = vsel %vm8749, %v7490, -inf
        %v9158 = vsel %vm8749, %v7491, -inf
        %v9159 = vsel %vm8749, %v7492, -inf
        %v9160 = vsel %vm8749, %v7493, -inf
        %v9161 = vsel %vm8749, %v7494, -inf
        %v9162 = vsel %vm8749, %v7495, -inf
        %v9163 = vsel %vm8749, %v7496, -inf
        %v9164 = vsel %vm8749, %v7497, -inf
        %v9165 = vsel %vm8750, %v7498, -inf
        %v9166 = vsel %vm8750, %v7499, -inf
        %v9167 = vsel %vm8750, %v7500, -inf
        %v9168 = vsel %vm8750, %v7501, -inf
        %v9169 = vsel %vm8750, %v7502, -inf
        %v9170 = vsel %vm8750, %v7503, -inf
        %v9171 = vsel %vm8750, %v7504, -inf
        %v9172 = vsel %vm8750, %v7505, -inf
        %v9173 = vsel %vm8751, %v7506, -inf
        %v9174 = vsel %vm8751, %v7507, -inf
        %v9175 = vsel %vm8751, %v7508, -inf
        %v9176 = vsel %vm8751, %v7509, -inf
        %v9177 = vsel %vm8751, %v7510, -inf
        %v9178 = vsel %vm8751, %v7511, -inf
        %v9179 = vsel %vm8751, %v7512, -inf
        %v9180 = vsel %vm8751, %v7513, -inf
        %v9181 = vsel %vm8752, %v7514, -inf
        %v9182 = vsel %vm8752, %v7515, -inf
        %v9183 = vsel %vm8752, %v7516, -inf
        %v9184 = vsel %vm8752, %v7517, -inf
        %v9185 = vsel %vm8752, %v7518, -inf
        %v9186 = vsel %vm8752, %v7519, -inf
        %v9187 = vsel %vm8752, %v7520, -inf
        %v9188 = vsel %vm8752, %v7521, -inf
        %v9189 = vsel %vm8753, %v7522, -inf
        %v9190 = vsel %vm8753, %v7523, -inf
        %v9191 = vsel %vm8753, %v7524, -inf
        %v9192 = vsel %vm8753, %v7525, -inf
        %v9193 = vsel %vm8753, %v7526, -inf
        %v9194 = vsel %vm8753, %v7527, -inf
        %v9195 = vsel %vm8753, %v7528, -inf
        %v9196 = vsel %vm8753, %v7529, -inf
        %v9197 = vsel %vm8754, %v7530, -inf
        %v9198 = vsel %vm8754, %v7531, -inf
        %v9199 = vsel %vm8754, %v7532, -inf
        %v9200 = vsel %vm8754, %v7533, -inf
        %v9201 = vsel %vm8754, %v7534, -inf
        %v9202 = vsel %vm8754, %v7535, -inf
        %v9203 = vsel %vm8754, %v7536, -inf
        %v9204 = vsel %vm8754, %v7537, -inf
        %v9205 = vsel %vm8755, %v7538, -inf
        %v9206 = vsel %vm8755, %v7539, -inf
        %v9207 = vsel %vm8755, %v7540, -inf
        %v9208 = vsel %vm8755, %v7541, -inf
        %v9209 = vsel %vm8755, %v7542, -inf
        %v9210 = vsel %vm8755, %v7543, -inf
        %v9211 = vsel %vm8755, %v7544, -inf
        %v9212 = vsel %vm8755, %v7545, -inf
        %v9213 = vsel %vm8756, %v7546, -inf
        %v9214 = vsel %vm8756, %v7547, -inf
        %v9215 = vsel %vm8756, %v7548, -inf
        %v9216 = vsel %vm8756, %v7549, -inf
        %v9217 = vsel %vm8756, %v7550, -inf
        %v9218 = vsel %vm8756, %v7551, -inf
        %v9219 = vsel %vm8756, %v7552, -inf
        %v9220 = vsel %vm8756, %v7553, -inf
        %v9221 = vsel %vm8757, %v7554, -inf
        %v9222 = vsel %vm8757, %v7555, -inf
        %v9223 = vsel %vm8757, %v7556, -inf
        %v9224 = vsel %vm8757, %v7557, -inf
        %v9225 = vsel %vm8757, %v7558, -inf
        %v9226 = vsel %vm8757, %v7559, -inf
        %v9227 = vsel %vm8757, %v7560, -inf
        %v9228 = vsel %vm8757, %v7561, -inf
        %v9229 = vsel %vm8758, %v7562, -inf
        %v9230 = vsel %vm8758, %v7563, -inf
        %v9231 = vsel %vm8758, %v7564, -inf
        %v9232 = vsel %vm8758, %v7565, -inf
        %v9233 = vsel %vm8758, %v7566, -inf
        %v9234 = vsel %vm8758, %v7567, -inf
        %v9235 = vsel %vm8758, %v7568, -inf
        %v9236 = vsel %vm8758, %v7569, -inf
        %v9237 = vsel %vm8759, %v7570, -inf
        %v9238 = vsel %vm8759, %v7571, -inf
        %v9239 = vsel %vm8759, %v7572, -inf
        %v9240 = vsel %vm8759, %v7573, -inf
        %v9241 = vsel %vm8759, %v7574, -inf
        %v9242 = vsel %vm8759, %v7575, -inf
        %v9243 = vsel %vm8759, %v7576, -inf
        %v9244 = vsel %vm8759, %v7577, -inf
        %v9245 = vsel %vm8760, %v7578, -inf
        %v9246 = vsel %vm8760, %v7579, -inf
        %v9247 = vsel %vm8760, %v7580, -inf
        %v9248 = vsel %vm8760, %v7581, -inf
        %v9249 = vsel %vm8760, %v7582, -inf
        %v9250 = vsel %vm8760, %v7583, -inf
        %v9251 = vsel %vm8760, %v7584, -inf
        %v9252 = vsel %vm8760, %v7585, -inf
        %v9253 = vsel %vm8761, %v7586, -inf
        %v9254 = vsel %vm8761, %v7587, -inf
        %v9255 = vsel %vm8761, %v7588, -inf
        %v9256 = vsel %vm8761, %v7589, -inf
        %v9257 = vsel %vm8761, %v7590, -inf
        %v9258 = vsel %vm8761, %v7591, -inf
        %v9259 = vsel %vm8761, %v7592, -inf
        %v9260 = vsel %vm8761, %v7593, -inf
        %v9261 = vsel %vm8762, %v7594, -inf
        %v9262 = vsel %vm8762, %v7595, -inf
        %v9263 = vsel %vm8762, %v7596, -inf
        %v9264 = vsel %vm8762, %v7597, -inf
        %v9265 = vsel %vm8762, %v7598, -inf
        %v9266 = vsel %vm8762, %v7599, -inf
        %v9267 = vsel %vm8762, %v7600, -inf
        %v9268 = vsel %vm8762, %v7601, -inf
        %v9269 = vsel %vm8763, %v7602, -inf
        %v9270 = vsel %vm8763, %v7603, -inf
        %v9271 = vsel %vm8763, %v7604, -inf
        %v9272 = vsel %vm8763, %v7605, -inf
        %v9273 = vsel %vm8763, %v7606, -inf
        %v9274 = vsel %vm8763, %v7607, -inf
        %v9275 = vsel %vm8763, %v7608, -inf
        %v9276 = vsel %vm8763, %v7609, -inf
        %v9277 = vsel %vm8764, %v7610, -inf
        %v9278 = vsel %vm8764, %v7611, -inf
        %v9279 = vsel %vm8764, %v7612, -inf
        %v9280 = vsel %vm8764, %v7613, -inf
        %v9281 = vsel %vm8764, %v7614, -inf
        %v9282 = vsel %vm8764, %v7615, -inf
        %v9283 = vsel %vm8764, %v7616, -inf
        %v9284 = vsel %vm8764, %v7617, -inf
        %v9285 = vsel %vm8765, %v7618, -inf
        %v9286 = vsel %vm8765, %v7619, -inf
        %v9287 = vsel %vm8765, %v7620, -inf
        %v9288 = vsel %vm8765, %v7621, -inf
        %v9289 = vsel %vm8765, %v7622, -inf
        %v9290 = vsel %vm8765, %v7623, -inf
        %v9291 = vsel %vm8765, %v7624, -inf
        %v9292 = vsel %vm8765, %v7625, -inf
        %v9293 = vsel %vm8766, %v7626, -inf
        %v9294 = vsel %vm8766, %v7627, -inf
        %v9295 = vsel %vm8766, %v7628, -inf
        %v9296 = vsel %vm8766, %v7629, -inf
        %v9297 = vsel %vm8766, %v7630, -inf
        %v9298 = vsel %vm8766, %v7631, -inf
        %v9299 = vsel %vm8766, %v7632, -inf
        %v9300 = vsel %vm8766, %v7633, -inf
        %v9301 = vsel %vm8767, %v7634, -inf
        %v9302 = vsel %vm8767, %v7635, -inf
        %v9303 = vsel %vm8767, %v7636, -inf
        %v9304 = vsel %vm8767, %v7637, -inf
        %v9305 = vsel %vm8767, %v7638, -inf
        %v9306 = vsel %vm8767, %v7639, -inf
        %v9307 = vsel %vm8767, %v7640, -inf
        %v9308 = vsel %vm8767, %v7641, -inf
        %v9309 = vsel %vm8768, %v7642, -inf
        %v9310 = vsel %vm8768, %v7643, -inf
        %v9311 = vsel %vm8768, %v7644, -inf
        %v9312 = vsel %vm8768, %v7645, -inf
        %v9313 = vsel %vm8768, %v7646, -inf
        %v9314 = vsel %vm8768, %v7647, -inf
        %v9315 = vsel %vm8768, %v7648, -inf
        %v9316 = vsel %vm8768, %v7649, -inf
        %v9317 = vsel %vm8769, %v7650, -inf
        %v9318 = vsel %vm8769, %v7651, -inf
        %v9319 = vsel %vm8769, %v7652, -inf
        %v9320 = vsel %vm8769, %v7653, -inf
        %v9321 = vsel %vm8769, %v7654, -inf
        %v9322 = vsel %vm8769, %v7655, -inf
        %v9323 = vsel %vm8769, %v7656, -inf
        %v9324 = vsel %vm8769, %v7657, -inf
        %v9325 = vsel %vm8770, %v7658, -inf
        %v9326 = vsel %vm8770, %v7659, -inf
        %v9327 = vsel %vm8770, %v7660, -inf
        %v9328 = vsel %vm8770, %v7661, -inf
        %v9329 = vsel %vm8770, %v7662, -inf
        %v9330 = vsel %vm8770, %v7663, -inf
        %v9331 = vsel %vm8770, %v7664, -inf
        %v9332 = vsel %vm8770, %v7665, -inf
        %v9333 = vsel %vm8771, %v7666, -inf
        %v9334 = vsel %vm8771, %v7667, -inf
        %v9335 = vsel %vm8771, %v7668, -inf
        %v9336 = vsel %vm8771, %v7669, -inf
        %v9337 = vsel %vm8771, %v7670, -inf
        %v9338 = vsel %vm8771, %v7671, -inf
        %v9339 = vsel %vm8771, %v7672, -inf
        %v9340 = vsel %vm8771, %v7673, -inf
        %v9341 = vsel %vm8772, %v7674, -inf
        %v9342 = vsel %vm8772, %v7675, -inf
        %v9343 = vsel %vm8772, %v7676, -inf
        %v9344 = vsel %vm8772, %v7677, -inf
        %v9345 = vsel %vm8772, %v7678, -inf
        %v9346 = vsel %vm8772, %v7679, -inf
        %v9347 = vsel %vm8772, %v7680, -inf
        %v9348 = vsel %vm8772, %v7681, -inf
        %v9349 = vsel %vm8773, %v7682, -inf
        %v9350 = vsel %vm8773, %v7683, -inf
        %v9351 = vsel %vm8773, %v7684, -inf
        %v9352 = vsel %vm8773, %v7685, -inf
        %v9353 = vsel %vm8773, %v7686, -inf
        %v9354 = vsel %vm8773, %v7687, -inf
        %v9355 = vsel %vm8773, %v7688, -inf
        %v9356 = vsel %vm8773, %v7689, -inf
        %v9357 = vsel %vm8774, %v7690, -inf
        %v9358 = vsel %vm8774, %v7691, -inf
        %v9359 = vsel %vm8774, %v7692, -inf
        %v9360 = vsel %vm8774, %v7693, -inf
        %v9361 = vsel %vm8774, %v7694, -inf
        %v9362 = vsel %vm8774, %v7695, -inf
        %v9363 = vsel %vm8774, %v7696, -inf
        %v9364 = vsel %vm8774, %v7697, -inf
        %v9365 = vsel %vm8775, %v7698, -inf
        %v9366 = vsel %vm8775, %v7699, -inf
        %v9367 = vsel %vm8775, %v7700, -inf
        %v9368 = vsel %vm8775, %v7701, -inf
        %v9369 = vsel %vm8775, %v7702, -inf
        %v9370 = vsel %vm8775, %v7703, -inf
        %v9371 = vsel %vm8775, %v7704, -inf
        %v9372 = vsel %vm8775, %v7705, -inf
        %v9373 = vsel %vm8776, %v7706, -inf
        %v9374 = vsel %vm8776, %v7707, -inf
        %v9375 = vsel %vm8776, %v7708, -inf
        %v9376 = vsel %vm8776, %v7709, -inf
        %v9377 = vsel %vm8776, %v7710, -inf
        %v9378 = vsel %vm8776, %v7711, -inf
        %v9379 = vsel %vm8776, %v7712, -inf
        %v9380 = vsel %vm8776, %v7713, -inf
        %v9381 = vsel %vm8777, %v7714, -inf
        %v9382 = vsel %vm8777, %v7715, -inf
        %v9383 = vsel %vm8777, %v7716, -inf
        %v9384 = vsel %vm8777, %v7717, -inf
        %v9385 = vsel %vm8777, %v7718, -inf
        %v9386 = vsel %vm8777, %v7719, -inf
        %v9387 = vsel %vm8777, %v7720, -inf
        %v9388 = vsel %vm8777, %v7721, -inf
        %v9389 = vsel %vm8778, %v7722, -inf
        %v9390 = vsel %vm8778, %v7723, -inf
        %v9391 = vsel %vm8778, %v7724, -inf
        %v9392 = vsel %vm8778, %v7725, -inf
        %v9393 = vsel %vm8778, %v7726, -inf
        %v9394 = vsel %vm8778, %v7727, -inf
        %v9395 = vsel %vm8778, %v7728, -inf
        %v9396 = vsel %vm8778, %v7729, -inf
        %v9397 = vsel %vm8779, %v7730, -inf
        %v9398 = vsel %vm8779, %v7731, -inf
        %v9399 = vsel %vm8779, %v7732, -inf
        %v9400 = vsel %vm8779, %v7733, -inf
        %v9401 = vsel %vm8779, %v7734, -inf
        %v9402 = vsel %vm8779, %v7735, -inf
        %v9403 = vsel %vm8779, %v7736, -inf
        %v9404 = vsel %vm8779, %v7737, -inf
        %v9405 = vsel %vm8780, %v7738, -inf
        %v9406 = vsel %vm8780, %v7739, -inf
        %v9407 = vsel %vm8780, %v7740, -inf
        %v9408 = vsel %vm8780, %v7741, -inf
        %v9409 = vsel %vm8780, %v7742, -inf
        %v9410 = vsel %vm8780, %v7743, -inf
        %v9411 = vsel %vm8780, %v7744, -inf
        %v9412 = vsel %vm8780, %v7745, -inf
        %v9413 = vsel %vm8781, %v7746, -inf
        %v9414 = vsel %vm8781, %v7747, -inf
        %v9415 = vsel %vm8781, %v7748, -inf
        %v9416 = vsel %vm8781, %v7749, -inf
        %v9417 = vsel %vm8781, %v7750, -inf
        %v9418 = vsel %vm8781, %v7751, -inf
        %v9419 = vsel %vm8781, %v7752, -inf
        %v9420 = vsel %vm8781, %v7753, -inf
        %v9421 = vsel %vm8782, %v7754, -inf
        %v9422 = vsel %vm8782, %v7755, -inf
        %v9423 = vsel %vm8782, %v7756, -inf
        %v9424 = vsel %vm8782, %v7757, -inf
        %v9425 = vsel %vm8782, %v7758, -inf
        %v9426 = vsel %vm8782, %v7759, -inf
        %v9427 = vsel %vm8782, %v7760, -inf
        %v9428 = vsel %vm8782, %v7761, -inf
        %v9429 = vsel %vm8783, %v7762, -inf
        %v9430 = vsel %vm8783, %v7763, -inf
        %v9431 = vsel %vm8783, %v7764, -inf
        %v9432 = vsel %vm8783, %v7765, -inf
        %v9433 = vsel %vm8783, %v7766, -inf
        %v9434 = vsel %vm8783, %v7767, -inf
        %v9435 = vsel %vm8783, %v7768, -inf
        %v9436 = vsel %vm8783, %v7769, -inf
        %v9437 = vsel %vm8784, %v7770, -inf
        %v9438 = vsel %vm8784, %v7771, -inf
        %v9439 = vsel %vm8784, %v7772, -inf
        %v9440 = vsel %vm8784, %v7773, -inf
        %v9441 = vsel %vm8784, %v7774, -inf
        %v9442 = vsel %vm8784, %v7775, -inf
        %v9443 = vsel %vm8784, %v7776, -inf
        %v9444 = vsel %vm8784, %v7777, -inf
        %v9445 = vsel %vm8785, %v7778, -inf
        %v9446 = vsel %vm8785, %v7779, -inf
        %v9447 = vsel %vm8785, %v7780, -inf
        %v9448 = vsel %vm8785, %v7781, -inf
        %v9449 = vsel %vm8785, %v7782, -inf
        %v9450 = vsel %vm8785, %v7783, -inf
        %v9451 = vsel %vm8785, %v7784, -inf
        %v9452 = vsel %vm8785, %v7785, -inf
        %v9453 = vsel %vm8786, %v7786, -inf
        %v9454 = vsel %vm8786, %v7787, -inf
        %v9455 = vsel %vm8786, %v7788, -inf
        %v9456 = vsel %vm8786, %v7789, -inf
        %v9457 = vsel %vm8786, %v7790, -inf
        %v9458 = vsel %vm8786, %v7791, -inf
        %v9459 = vsel %vm8786, %v7792, -inf
        %v9460 = vsel %vm8786, %v7793, -inf
        %v9461 = vsel %vm8787, %v7794, -inf
        %v9462 = vsel %vm8787, %v7795, -inf
        %v9463 = vsel %vm8787, %v7796, -inf
        %v9464 = vsel %vm8787, %v7797, -inf
        %v9465 = vsel %vm8787, %v7798, -inf
        %v9466 = vsel %vm8787, %v7799, -inf
        %v9467 = vsel %vm8787, %v7800, -inf
        %v9468 = vsel %vm8787, %v7801, -inf
        %v9469 = vsel %vm8788, %v7802, -inf
        %v9470 = vsel %vm8788, %v7803, -inf
        %v9471 = vsel %vm8788, %v7804, -inf
        %v9472 = vsel %vm8788, %v7805, -inf
        %v9473 = vsel %vm8788, %v7806, -inf
        %v9474 = vsel %vm8788, %v7807, -inf
        %v9475 = vsel %vm8788, %v7808, -inf
        %v9476 = vsel %vm8788, %v7809, -inf
        %v9477 = vsel %vm8789, %v7810, -inf
        %v9478 = vsel %vm8789, %v7811, -inf
        %v9479 = vsel %vm8789, %v7812, -inf
        %v9480 = vsel %vm8789, %v7813, -inf
        %v9481 = vsel %vm8789, %v7814, -inf
        %v9482 = vsel %vm8789, %v7815, -inf
        %v9483 = vsel %vm8789, %v7816, -inf
        %v9484 = vsel %vm8789, %v7817, -inf
        %v9485 = vsel %vm8790, %v7818, -inf
        %v9486 = vsel %vm8790, %v7819, -inf
        %v9487 = vsel %vm8790, %v7820, -inf
        %v9488 = vsel %vm8790, %v7821, -inf
        %v9489 = vsel %vm8790, %v7822, -inf
        %v9490 = vsel %vm8790, %v7823, -inf
        %v9491 = vsel %vm8790, %v7824, -inf
        %v9492 = vsel %vm8790, %v7825, -inf
        %v9493 = vsel %vm8791, %v7826, -inf
        %v9494 = vsel %vm8791, %v7827, -inf
        %v9495 = vsel %vm8791, %v7828, -inf
        %v9496 = vsel %vm8791, %v7829, -inf
        %v9497 = vsel %vm8791, %v7830, -inf
        %v9498 = vsel %vm8791, %v7831, -inf
        %v9499 = vsel %vm8791, %v7832, -inf
        %v9500 = vsel %vm8791, %v7833, -inf
        %v9501 = vsel %vm8792, %v7834, -inf
        %v9502 = vsel %vm8792, %v7835, -inf
        %v9503 = vsel %vm8792, %v7836, -inf
        %v9504 = vsel %vm8792, %v7837, -inf
        %v9505 = vsel %vm8792, %v7838, -inf
        %v9506 = vsel %vm8792, %v7839, -inf
        %v9507 = vsel %vm8792, %v7840, -inf
        %v9508 = vsel %vm8792, %v7841, -inf
        %v9509 = vsel %vm8793, %v7842, -inf
        %v9510 = vsel %vm8793, %v7843, -inf
        %v9511 = vsel %vm8793, %v7844, -inf
        %v9512 = vsel %vm8793, %v7845, -inf
        %v9513 = vsel %vm8793, %v7846, -inf
        %v9514 = vsel %vm8793, %v7847, -inf
        %v9515 = vsel %vm8793, %v7848, -inf
        %v9516 = vsel %vm8793, %v7849, -inf
        %v9517 = vsel %vm8794, %v7850, -inf
        %v9518 = vsel %vm8794, %v7851, -inf
        %v9519 = vsel %vm8794, %v7852, -inf
        %v9520 = vsel %vm8794, %v7853, -inf
        %v9521 = vsel %vm8794, %v7854, -inf
        %v9522 = vsel %vm8794, %v7855, -inf
        %v9523 = vsel %vm8794, %v7856, -inf
        %v9524 = vsel %vm8794, %v7857, -inf
        %v9525 = vsel %vm8795, %v7858, -inf
        %v9526 = vsel %vm8795, %v7859, -inf
        %v9527 = vsel %vm8795, %v7860, -inf
        %v9528 = vsel %vm8795, %v7861, -inf
        %v9529 = vsel %vm8795, %v7862, -inf
        %v9530 = vsel %vm8795, %v7863, -inf
        %v9531 = vsel %vm8795, %v7864, -inf
        %v9532 = vsel %vm8795, %v7865, -inf
        %v9533 = vsel %vm8796, %v7866, -inf
        %v9534 = vsel %vm8796, %v7867, -inf
        %v9535 = vsel %vm8796, %v7868, -inf
        %v9536 = vsel %vm8796, %v7869, -inf
        %v9537 = vsel %vm8796, %v7870, -inf
        %v9538 = vsel %vm8796, %v7871, -inf
        %v9539 = vsel %vm8796, %v7872, -inf
        %v9540 = vsel %vm8796, %v7873, -inf
        %v9541 = vsel %vm8797, %v7874, -inf
        %v9542 = vsel %vm8797, %v7875, -inf
        %v9543 = vsel %vm8797, %v7876, -inf
        %v9544 = vsel %vm8797, %v7877, -inf
        %v9545 = vsel %vm8797, %v7878, -inf
        %v9546 = vsel %vm8797, %v7879, -inf
        %v9547 = vsel %vm8797, %v7880, -inf
        %v9548 = vsel %vm8797, %v7881, -inf
        %v9549 = vsel %vm8798, %v7882, -inf
        %v9550 = vsel %vm8798, %v7883, -inf
        %v9551 = vsel %vm8798, %v7884, -inf
        %v9552 = vsel %vm8798, %v7885, -inf
        %v9553 = vsel %vm8798, %v7886, -inf
        %v9554 = vsel %vm8798, %v7887, -inf
        %v9555 = vsel %vm8798, %v7888, -inf
        %v9556 = vsel %vm8798, %v7889, -inf
        %v9557 = vsel %vm8799, %v7890, -inf
        %v9558 = vsel %vm8799, %v7891, -inf
        %v9559 = vsel %vm8799, %v7892, -inf
        %v9560 = vsel %vm8799, %v7893, -inf
        %v9561 = vsel %vm8799, %v7894, -inf
        %v9562 = vsel %vm8799, %v7895, -inf
        %v9563 = vsel %vm8799, %v7896, -inf
        %v9564 = vsel %vm8799, %v7897, -inf
        %v9565 = vsel %vm8800, %v7898, -inf
        %v9566 = vsel %vm8800, %v7899, -inf
        %v9567 = vsel %vm8800, %v7900, -inf
        %v9568 = vsel %vm8800, %v7901, -inf
        %v9569 = vsel %vm8800, %v7902, -inf
        %v9570 = vsel %vm8800, %v7903, -inf
        %v9571 = vsel %vm8800, %v7904, -inf
        %v9572 = vsel %vm8800, %v7905, -inf
        %v9573 = vsel %vm8801, %v7906, -inf
        %v9574 = vsel %vm8801, %v7907, -inf
        %v9575 = vsel %vm8801, %v7908, -inf
        %v9576 = vsel %vm8801, %v7909, -inf
        %v9577 = vsel %vm8801, %v7910, -inf
        %v9578 = vsel %vm8801, %v7911, -inf
        %v9579 = vsel %vm8801, %v7912, -inf
        %v9580 = vsel %vm8801, %v7913, -inf
        %v9581 = vsel %vm8802, %v7914, -inf
        %v9582 = vsel %vm8802, %v7915, -inf
        %v9583 = vsel %vm8802, %v7916, -inf
        %v9584 = vsel %vm8802, %v7917, -inf
        %v9585 = vsel %vm8802, %v7918, -inf
        %v9586 = vsel %vm8802, %v7919, -inf
        %v9587 = vsel %vm8802, %v7920, -inf
        %v9588 = vsel %vm8802, %v7921, -inf
        %v9589 = vsel %vm8803, %v7922, -inf
        %v9590 = vsel %vm8803, %v7923, -inf
        %v9591 = vsel %vm8803, %v7924, -inf
        %v9592 = vsel %vm8803, %v7925, -inf
        %v9593 = vsel %vm8803, %v7926, -inf
        %v9594 = vsel %vm8803, %v7927, -inf
        %v9595 = vsel %vm8803, %v7928, -inf
        %v9596 = vsel %vm8803, %v7929, -inf
        %v9597 = vsel %vm8804, %v7930, -inf
        %v9598 = vsel %vm8804, %v7931, -inf
        %v9599 = vsel %vm8804, %v7932, -inf
        %v9600 = vsel %vm8804, %v7933, -inf
        %v9601 = vsel %vm8804, %v7934, -inf
        %v9602 = vsel %vm8804, %v7935, -inf
        %v9603 = vsel %vm8804, %v7936, -inf
        %v9604 = vsel %vm8804, %v7937, -inf
        %v9605 = vsel %vm8805, %v7938, -inf
        %v9606 = vsel %vm8805, %v7939, -inf
        %v9607 = vsel %vm8805, %v7940, -inf
        %v9608 = vsel %vm8805, %v7941, -inf
        %v9609 = vsel %vm8805, %v7942, -inf
        %v9610 = vsel %vm8805, %v7943, -inf
        %v9611 = vsel %vm8805, %v7944, -inf
        %v9612 = vsel %vm8805, %v7945, -inf
        %v9613 = vsel %vm8806, %v7946, -inf
        %v9614 = vsel %vm8806, %v7947, -inf
        %v9615 = vsel %vm8806, %v7948, -inf
        %v9616 = vsel %vm8806, %v7949, -inf
        %v9617 = vsel %vm8806, %v7950, -inf
        %v9618 = vsel %vm8806, %v7951, -inf
        %v9619 = vsel %vm8806, %v7952, -inf
        %v9620 = vsel %vm8806, %v7953, -inf
        %v9621 = vsel %vm8807, %v7954, -inf
        %v9622 = vsel %vm8807, %v7955, -inf
        %v9623 = vsel %vm8807, %v7956, -inf
        %v9624 = vsel %vm8807, %v7957, -inf
        %v9625 = vsel %vm8807, %v7958, -inf
        %v9626 = vsel %vm8807, %v7959, -inf
        %v9627 = vsel %vm8807, %v7960, -inf
        %v9628 = vsel %vm8807, %v7961, -inf
        %v9629 = vsel %vm8808, %v7962, -inf
        %v9630 = vsel %vm8808, %v7963, -inf
        %v9631 = vsel %vm8808, %v7964, -inf
        %v9632 = vsel %vm8808, %v7965, -inf
        %v9633 = vsel %vm8808, %v7966, -inf
        %v9634 = vsel %vm8808, %v7967, -inf
        %v9635 = vsel %vm8808, %v7968, -inf
        %v9636 = vsel %vm8808, %v7969, -inf
        %v9637 = vsel %vm8809, %v7970, -inf
        %v9638 = vsel %vm8809, %v7971, -inf
        %v9639 = vsel %vm8809, %v7972, -inf
        %v9640 = vsel %vm8809, %v7973, -inf
        %v9641 = vsel %vm8809, %v7974, -inf
        %v9642 = vsel %vm8809, %v7975, -inf
        %v9643 = vsel %vm8809, %v7976, -inf
        %v9644 = vsel %vm8809, %v7977, -inf
        %v9645 = vsel %vm8810, %v7978, -inf
        %v9646 = vsel %vm8810, %v7979, -inf
        %v9647 = vsel %vm8810, %v7980, -inf
        %v9648 = vsel %vm8810, %v7981, -inf
        %v9649 = vsel %vm8810, %v7982, -inf
        %v9650 = vsel %vm8810, %v7983, -inf
        %v9651 = vsel %vm8810, %v7984, -inf
        %v9652 = vsel %vm8810, %v7985, -inf
        %v9653 = vsel %vm8811, %v7986, -inf
        %v9654 = vsel %vm8811, %v7987, -inf
        %v9655 = vsel %vm8811, %v7988, -inf
        %v9656 = vsel %vm8811, %v7989, -inf
        %v9657 = vsel %vm8811, %v7990, -inf
        %v9658 = vsel %vm8811, %v7991, -inf
        %v9659 = vsel %vm8811, %v7992, -inf
        %v9660 = vsel %vm8811, %v7993, -inf
        %v9661 = vsel %vm8812, %v7994, -inf
        %v9662 = vsel %vm8812, %v7995, -inf
        %v9663 = vsel %vm8812, %v7996, -inf
        %v9664 = vsel %vm8812, %v7997, -inf
        %v9665 = vsel %vm8812, %v7998, -inf
        %v9666 = vsel %vm8812, %v7999, -inf
        %v9667 = vsel %vm8812, %v8000, -inf
        %v9668 = vsel %vm8812, %v8001, -inf
        %v9669 = vsel %vm8813, %v8002, -inf
        %v9670 = vsel %vm8813, %v8003, -inf
        %v9671 = vsel %vm8813, %v8004, -inf
        %v9672 = vsel %vm8813, %v8005, -inf
        %v9673 = vsel %vm8813, %v8006, -inf
        %v9674 = vsel %vm8813, %v8007, -inf
        %v9675 = vsel %vm8813, %v8008, -inf
        %v9676 = vsel %vm8813, %v8009, -inf
        %v9677 = vsel %vm8814, %v8010, -inf
        %v9678 = vsel %vm8814, %v8011, -inf
        %v9679 = vsel %vm8814, %v8012, -inf
        %v9680 = vsel %vm8814, %v8013, -inf
        %v9681 = vsel %vm8814, %v8014, -inf
        %v9682 = vsel %vm8814, %v8015, -inf
        %v9683 = vsel %vm8814, %v8016, -inf
        %v9684 = vsel %vm8814, %v8017, -inf
        %v9685 = vsel %vm8815, %v8018, -inf
        %v9686 = vsel %vm8815, %v8019, -inf
        %v9687 = vsel %vm8815, %v8020, -inf
        %v9688 = vsel %vm8815, %v8021, -inf
        %v9689 = vsel %vm8815, %v8022, -inf
        %v9690 = vsel %vm8815, %v8023, -inf
        %v9691 = vsel %vm8815, %v8024, -inf
        %v9692 = vsel %vm8815, %v8025, -inf
        %v9693 = vsel %vm8816, %v8026, -inf
        %v9694 = vsel %vm8816, %v8027, -inf
        %v9695 = vsel %vm8816, %v8028, -inf
        %v9696 = vsel %vm8816, %v8029, -inf
        %v9697 = vsel %vm8816, %v8030, -inf
        %v9698 = vsel %vm8816, %v8031, -inf
        %v9699 = vsel %vm8816, %v8032, -inf
        %v9700 = vsel %vm8816, %v8033, -inf
        %v9701 = vsel %vm8817, %v8034, -inf
        %v9702 = vsel %vm8817, %v8035, -inf
        %v9703 = vsel %vm8817, %v8036, -inf
        %v9704 = vsel %vm8817, %v8037, -inf
        %v9705 = vsel %vm8817, %v8038, -inf
        %v9706 = vsel %vm8817, %v8039, -inf
        %v9707 = vsel %vm8817, %v8040, -inf
        %v9708 = vsel %vm8817, %v8041, -inf
        %v9709 = vsel %vm8818, %v8042, -inf
        %v9710 = vsel %vm8818, %v8043, -inf
        %v9711 = vsel %vm8818, %v8044, -inf
        %v9712 = vsel %vm8818, %v8045, -inf
        %v9713 = vsel %vm8818, %v8046, -inf
        %v9714 = vsel %vm8818, %v8047, -inf
        %v9715 = vsel %vm8818, %v8048, -inf
        %v9716 = vsel %vm8818, %v8049, -inf
        %v9717 = vsel %vm8819, %v8050, -inf
        %v9718 = vsel %vm8819, %v8051, -inf
        %v9719 = vsel %vm8819, %v8052, -inf
        %v9720 = vsel %vm8819, %v8053, -inf
        %v9721 = vsel %vm8819, %v8054, -inf
        %v9722 = vsel %vm8819, %v8055, -inf
        %v9723 = vsel %vm8819, %v8056, -inf
        %v9724 = vsel %vm8819, %v8057, -inf
        %v9725 = vsel %vm8820, %v8058, -inf
        %v9726 = vsel %vm8820, %v8059, -inf
        %v9727 = vsel %vm8820, %v8060, -inf
        %v9728 = vsel %vm8820, %v8061, -inf
        %v9729 = vsel %vm8820, %v8062, -inf
        %v9730 = vsel %vm8820, %v8063, -inf
        %v9731 = vsel %vm8820, %v8064, -inf
        %v9732 = vsel %vm8820, %v8065, -inf
        %v9733 = vsel %vm8821, %v8066, -inf
        %v9734 = vsel %vm8821, %v8067, -inf
        %v9735 = vsel %vm8821, %v8068, -inf
        %v9736 = vsel %vm8821, %v8069, -inf
        %v9737 = vsel %vm8821, %v8070, -inf
        %v9738 = vsel %vm8821, %v8071, -inf
        %v9739 = vsel %vm8821, %v8072, -inf
        %v9740 = vsel %vm8821, %v8073, -inf
        %v9741 = vsel %vm8822, %v8074, -inf
        %v9742 = vsel %vm8822, %v8075, -inf
        %v9743 = vsel %vm8822, %v8076, -inf
        %v9744 = vsel %vm8822, %v8077, -inf
        %v9745 = vsel %vm8822, %v8078, -inf
        %v9746 = vsel %vm8822, %v8079, -inf
        %v9747 = vsel %vm8822, %v8080, -inf
        %v9748 = vsel %vm8822, %v8081, -inf
        %v9749 = vsel %vm8823, %v8082, -inf
        %v9750 = vsel %vm8823, %v8083, -inf
        %v9751 = vsel %vm8823, %v8084, -inf
        %v9752 = vsel %vm8823, %v8085, -inf
        %v9753 = vsel %vm8823, %v8086, -inf
        %v9754 = vsel %vm8823, %v8087, -inf
        %v9755 = vsel %vm8823, %v8088, -inf
        %v9756 = vsel %vm8823, %v8089, -inf
        %v9757 = vsel %vm8824, %v8090, -inf
        %v9758 = vsel %vm8824, %v8091, -inf
        %v9759 = vsel %vm8824, %v8092, -inf
        %v9760 = vsel %vm8824, %v8093, -inf
        %v9761 = vsel %vm8824, %v8094, -inf
        %v9762 = vsel %vm8824, %v8095, -inf
        %v9763 = vsel %vm8824, %v8096, -inf
        %v9764 = vsel %vm8824, %v8097, -inf
        %v9765 = vsel %vm8825, %v8098, -inf
        %v9766 = vsel %vm8825, %v8099, -inf
        %v9767 = vsel %vm8825, %v8100, -inf
        %v9768 = vsel %vm8825, %v8101, -inf
        %v9769 = vsel %vm8825, %v8102, -inf
        %v9770 = vsel %vm8825, %v8103, -inf
        %v9771 = vsel %vm8825, %v8104, -inf
        %v9772 = vsel %vm8825, %v8105, -inf
        %v9773 = vsel %vm8826, %v8106, -inf
        %v9774 = vsel %vm8826, %v8107, -inf
        %v9775 = vsel %vm8826, %v8108, -inf
        %v9776 = vsel %vm8826, %v8109, -inf
        %v9777 = vsel %vm8826, %v8110, -inf
        %v9778 = vsel %vm8826, %v8111, -inf
        %v9779 = vsel %vm8826, %v8112, -inf
        %v9780 = vsel %vm8826, %v8113, -inf
        %v9781 = vsel %vm8827, %v8114, -inf
        %v9782 = vsel %vm8827, %v8115, -inf
        %v9783 = vsel %vm8827, %v8116, -inf
        %v9784 = vsel %vm8827, %v8117, -inf
        %v9785 = vsel %vm8827, %v8118, -inf
        %v9786 = vsel %vm8827, %v8119, -inf
        %v9787 = vsel %vm8827, %v8120, -inf
        %v9788 = vsel %vm8827, %v8121, -inf
        %v9789 = vsel %vm8828, %v8122, -inf
        %v9790 = vsel %vm8828, %v8123, -inf
        %v9791 = vsel %vm8828, %v8124, -inf
        %v9792 = vsel %vm8828, %v8125, -inf
        %v9793 = vsel %vm8828, %v8126, -inf
        %v9794 = vsel %vm8828, %v8127, -inf
        %v9795 = vsel %vm8828, %v8128, -inf
        %v9796 = vsel %vm8828, %v8129, -inf
        %v9797 = vsel %vm8829, %v8130, -inf
        %v9798 = vsel %vm8829, %v8131, -inf
        %v9799 = vsel %vm8829, %v8132, -inf
        %v9800 = vsel %vm8829, %v8133, -inf
        %v9801 = vsel %vm8829, %v8134, -inf
        %v9802 = vsel %vm8829, %v8135, -inf
        %v9803 = vsel %vm8829, %v8136, -inf
        %v9804 = vsel %vm8829, %v8137, -inf
        %v9805 = vsel %vm8830, %v8138, -inf
        %v9806 = vsel %vm8830, %v8139, -inf
        %v9807 = vsel %vm8830, %v8140, -inf
        %v9808 = vsel %vm8830, %v8141, -inf
        %v9809 = vsel %vm8830, %v8142, -inf
        %v9810 = vsel %vm8830, %v8143, -inf
        %v9811 = vsel %vm8830, %v8144, -inf
        %v9812 = vsel %vm8830, %v8145, -inf
        %v9813 = vsel %vm8831, %v8146, -inf
        %v9814 = vsel %vm8831, %v8147, -inf
        %v9815 = vsel %vm8831, %v8148, -inf
        %v9816 = vsel %vm8831, %v8149, -inf
        %v9817 = vsel %vm8831, %v8150, -inf
        %v9818 = vsel %vm8831, %v8151, -inf
        %v9819 = vsel %vm8831, %v8152, -inf
        %v9820 = vsel %vm8831, %v8153, -inf
        %v9821 = vsel %vm8832, %v8154, -inf
        %v9822 = vsel %vm8832, %v8155, -inf
        %v9823 = vsel %vm8832, %v8156, -inf
        %v9824 = vsel %vm8832, %v8157, -inf
        %v9825 = vsel %vm8832, %v8158, -inf
        %v9826 = vsel %vm8832, %v8159, -inf
        %v9827 = vsel %vm8832, %v8160, -inf
        %v9828 = vsel %vm8832, %v8161, -inf
        %v9829 = vsel %vm8833, %v8162, -inf
        %v9830 = vsel %vm8833, %v8163, -inf
        %v9831 = vsel %vm8833, %v8164, -inf
        %v9832 = vsel %vm8833, %v8165, -inf
        %v9833 = vsel %vm8833, %v8166, -inf
        %v9834 = vsel %vm8833, %v8167, -inf
        %v9835 = vsel %vm8833, %v8168, -inf
        %v9836 = vsel %vm8833, %v8169, -inf
        %v9837 = vsel %vm8834, %v8170, -inf
        %v9838 = vsel %vm8834, %v8171, -inf
        %v9839 = vsel %vm8834, %v8172, -inf
        %v9840 = vsel %vm8834, %v8173, -inf
        %v9841 = vsel %vm8834, %v8174, -inf
        %v9842 = vsel %vm8834, %v8175, -inf
        %v9843 = vsel %vm8834, %v8176, -inf
        %v9844 = vsel %vm8834, %v8177, -inf
        %v9845 = vsel %vm8835, %v8178, -inf
        %v9846 = vsel %vm8835, %v8179, -inf
        %v9847 = vsel %vm8835, %v8180, -inf
        %v9848 = vsel %vm8835, %v8181, -inf
        %v9849 = vsel %vm8835, %v8182, -inf
        %v9850 = vsel %vm8835, %v8183, -inf
        %v9851 = vsel %vm8835, %v8184, -inf
        %v9852 = vsel %vm8835, %v8185, -inf
        %v9853 = vsel %vm8836, %v8186, -inf
        %v9854 = vsel %vm8836, %v8187, -inf
        %v9855 = vsel %vm8836, %v8188, -inf
        %v9856 = vsel %vm8836, %v8189, -inf
        %v9857 = vsel %vm8836, %v8190, -inf
        %v9858 = vsel %vm8836, %v8191, -inf
        %v9859 = vsel %vm8836, %v8192, -inf
        %v9860 = vsel %vm8836, %v8193, -inf
        %v9861 = vmax.f32 %v8837, %v8845
        %v9862 = vmax.f32 %v9861, %v8853
        %v9863 = vmax.f32 %v9862, %v8861
        %v9864 = vmax.f32 %v9863, %v8869
        %v9865 = vmax.f32 %v9864, %v8877
        %v9866 = vmax.f32 %v9865, %v8885
        %v9867 = vmax.f32 %v9866, %v8893
        %v9868 = vmax.f32 %v9867, %v8901
        %v9869 = vmax.f32 %v9868, %v8909
        %v9870 = vmax.f32 %v9869, %v8917
        %v9871 = vmax.f32 %v9870, %v8925
        %v9872 = vmax.f32 %v9871, %v8933
        %v9873 = vmax.f32 %v9872, %v8941
        %v9874 = vmax.f32 %v9873, %v8949
        %v9875 = vmax.f32 %v9874, %v8957
        %v9876 = vmax.f32 %v9875, %v8965
        %v9877 = vmax.f32 %v9876, %v8973
        %v9878 = vmax.f32 %v9877, %v8981
        %v9879 = vmax.f32 %v9878, %v8989
        %v9880 = vmax.f32 %v9879, %v8997
        %v9881 = vmax.f32 %v9880, %v9005
        %v9882 = vmax.f32 %v9881, %v9013
        %v9883 = vmax.f32 %v9882, %v9021
        %v9884 = vmax.f32 %v9883, %v9029
        %v9885 = vmax.f32 %v9884, %v9037
        %v9886 = vmax.f32 %v9885, %v9045
        %v9887 = vmax.f32 %v9886, %v9053
        %v9888 = vmax.f32 %v9887, %v9061
        %v9889 = vmax.f32 %v9888, %v9069
        %v9890 = vmax.f32 %v9889, %v9077
        %v9891 = vmax.f32 %v9890, %v9085
        %v9892 = vmax.f32 %v9891, %v9093
        %v9893 = vmax.f32 %v9892, %v9101
        %v9894 = vmax.f32 %v9893, %v9109
        %v9895 = vmax.f32 %v9894, %v9117
        %v9896 = vmax.f32 %v9895, %v9125
        %v9897 = vmax.f32 %v9896, %v9133
        %v9898 = vmax.f32 %v9897, %v9141
        %v9899 = vmax.f32 %v9898, %v9149
        %v9900 = vmax.f32 %v9899, %v9157
        %v9901 = vmax.f32 %v9900, %v9165
        %v9902 = vmax.f32 %v9901, %v9173
        %v9903 = vmax.f32 %v9902, %v9181
        %v9904 = vmax.f32 %v9903, %v9189
        %v9905 = vmax.f32 %v9904, %v9197
        %v9906 = vmax.f32 %v9905, %v9205
        %v9907 = vmax.f32 %v9906, %v9213
        %v9908 = vmax.f32 %v9907, %v9221
        %v9909 = vmax.f32 %v9908, %v9229
        %v9910 = vmax.f32 %v9909, %v9237
        %v9911 = vmax.f32 %v9910, %v9245
        %v9912 = vmax.f32 %v9911, %v9253
        %v9913 = vmax.f32 %v9912, %v9261
        %v9914 = vmax.f32 %v9913, %v9269
        %v9915 = vmax.f32 %v9914, %v9277
        %v9916 = vmax.f32 %v9915, %v9285
        %v9917 = vmax.f32 %v9916, %v9293
        %v9918 = vmax.f32 %v9917, %v9301
        %v9919 = vmax.f32 %v9918, %v9309
        %v9920 = vmax.f32 %v9919, %v9317
        %v9921 = vmax.f32 %v9920, %v9325
        %v9922 = vmax.f32 %v9921, %v9333
        %v9923 = vmax.f32 %v9922, %v9341
        %v9924 = vmax.f32 %v9923, %v9349
        %v9925 = vmax.f32 %v9924, %v9357
        %v9926 = vmax.f32 %v9925, %v9365
        %v9927 = vmax.f32 %v9926, %v9373
        %v9928 = vmax.f32 %v9927, %v9381
        %v9929 = vmax.f32 %v9928, %v9389
        %v9930 = vmax.f32 %v9929, %v9397
        %v9931 = vmax.f32 %v9930, %v9405
        %v9932 = vmax.f32 %v9931, %v9413
        %v9933 = vmax.f32 %v9932, %v9421
        %v9934 = vmax.f32 %v9933, %v9429
        %v9935 = vmax.f32 %v9934, %v9437
        %v9936 = vmax.f32 %v9935, %v9445
        %v9937 = vmax.f32 %v9936, %v9453
        %v9938 = vmax.f32 %v9937, %v9461
        %v9939 = vmax.f32 %v9938, %v9469
        %v9940 = vmax.f32 %v9939, %v9477
        %v9941 = vmax.f32 %v9940, %v9485
        %v9942 = vmax.f32 %v9941, %v9493
        %v9943 = vmax.f32 %v9942, %v9501
        %v9944 = vmax.f32 %v9943, %v9509
        %v9945 = vmax.f32 %v9944, %v9517
        %v9946 = vmax.f32 %v9945, %v9525
        %v9947 = vmax.f32 %v9946, %v9533
        %v9948 = vmax.f32 %v9947, %v9541
        %v9949 = vmax.f32 %v9948, %v9549
        %v9950 = vmax.f32 %v9949, %v9557
        %v9951 = vmax.f32 %v9950, %v9565
        %v9952 = vmax.f32 %v9951, %v9573
        %v9953 = vmax.f32 %v9952, %v9581
        %v9954 = vmax.f32 %v9953, %v9589
        %v9955 = vmax.f32 %v9954, %v9597
        %v9956 = vmax.f32 %v9955, %v9605
        %v9957 = vmax.f32 %v9956, %v9613
        %v9958 = vmax.f32 %v9957, %v9621
        %v9959 = vmax.f32 %v9958, %v9629
        %v9960 = vmax.f32 %v9959, %v9637
        %v9961 = vmax.f32 %v9960, %v9645
        %v9962 = vmax.f32 %v9961, %v9653
        %v9963 = vmax.f32 %v9962, %v9661
        %v9964 = vmax.f32 %v9963, %v9669
        %v9965 = vmax.f32 %v9964, %v9677
        %v9966 = vmax.f32 %v9965, %v9685
        %v9967 = vmax.f32 %v9966, %v9693
        %v9968 = vmax.f32 %v9967, %v9701
        %v9969 = vmax.f32 %v9968, %v9709
        %v9970 = vmax.f32 %v9969, %v9717
        %v9971 = vmax.f32 %v9970, %v9725
        %v9972 = vmax.f32 %v9971, %v9733
        %v9973 = vmax.f32 %v9972, %v9741
        %v9974 = vmax.f32 %v9973, %v9749
        %v9975 = vmax.f32 %v9974, %v9757
        %v9976 = vmax.f32 %v9975, %v9765
        %v9977 = vmax.f32 %v9976, %v9773
        %v9978 = vmax.f32 %v9977, %v9781
        %v9979 = vmax.f32 %v9978, %v9789
        %v9980 = vmax.f32 %v9979, %v9797
        %v9981 = vmax.f32 %v9980, %v9805
        %v9982 = vmax.f32 %v9981, %v9813
        %v9983 = vmax.f32 %v9982, %v9821
        %v9984 = vmax.f32 %v9983, %v9829
        %v9985 = vmax.f32 %v9984, %v9837
        %v9986 = vmax.f32 %v9985, %v9845
        %v9987 = vmax.f32 %v9986, %v9853
        %v9988 = vrot.slane %v9987, 4
        %v9989 = vmax.f32 %v9987, %v9988
        %v9990 = vrot.slane %v9989, 2
        %v9991 = vmax.f32 %v9989, %v9990
        %v9992 = vrot.slane %v9991, 1
        %v9993 = vmax.f32 %v9991, %v9992
        %v9994 = vmax.f32 %v8838, %v8846
        %v9995 = vmax.f32 %v9994, %v8854
        %v9996 = vmax.f32 %v9995, %v8862
        %v9997 = vmax.f32 %v9996, %v8870
        %v9998 = vmax.f32 %v9997, %v8878
        %v9999 = vmax.f32 %v9998, %v8886
        %v10000 = vmax.f32 %v9999, %v8894
        %v10001 = vmax.f32 %v10000, %v8902
        %v10002 = vmax.f32 %v10001, %v8910
        %v10003 = vmax.f32 %v10002, %v8918
        %v10004 = vmax.f32 %v10003, %v8926
        %v10005 = vmax.f32 %v10004, %v8934
        %v10006 = vmax.f32 %v10005, %v8942
        %v10007 = vmax.f32 %v10006, %v8950
        %v10008 = vmax.f32 %v10007, %v8958
        %v10009 = vmax.f32 %v10008, %v8966
        %v10010 = vmax.f32 %v10009, %v8974
        %v10011 = vmax.f32 %v10010, %v8982
        %v10012 = vmax.f32 %v10011, %v8990
        %v10013 = vmax.f32 %v10012, %v8998
        %v10014 = vmax.f32 %v10013, %v9006
        %v10015 = vmax.f32 %v10014, %v9014
        %v10016 = vmax.f32 %v10015, %v9022
        %v10017 = vmax.f32 %v10016, %v9030
        %v10018 = vmax.f32 %v10017, %v9038
        %v10019 = vmax.f32 %v10018, %v9046
        %v10020 = vmax.f32 %v10019, %v9054
        %v10021 = vmax.f32 %v10020, %v9062
        %v10022 = vmax.f32 %v10021, %v9070
        %v10023 = vmax.f32 %v10022, %v9078
        %v10024 = vmax.f32 %v10023, %v9086
        %v10025 = vmax.f32 %v10024, %v9094
        %v10026 = vmax.f32 %v10025, %v9102
        %v10027 = vmax.f32 %v10026, %v9110
        %v10028 = vmax.f32 %v10027, %v9118
        %v10029 = vmax.f32 %v10028, %v9126
        %v10030 = vmax.f32 %v10029, %v9134
        %v10031 = vmax.f32 %v10030, %v9142
        %v10032 = vmax.f32 %v10031, %v9150
        %v10033 = vmax.f32 %v10032, %v9158
        %v10034 = vmax.f32 %v10033, %v9166
        %v10035 = vmax.f32 %v10034, %v9174
        %v10036 = vmax.f32 %v10035, %v9182
        %v10037 = vmax.f32 %v10036, %v9190
        %v10038 = vmax.f32 %v10037, %v9198
        %v10039 = vmax.f32 %v10038, %v9206
        %v10040 = vmax.f32 %v10039, %v9214
        %v10041 = vmax.f32 %v10040, %v9222
        %v10042 = vmax.f32 %v10041, %v9230
        %v10043 = vmax.f32 %v10042, %v9238
        %v10044 = vmax.f32 %v10043, %v9246
        %v10045 = vmax.f32 %v10044, %v9254
        %v10046 = vmax.f32 %v10045, %v9262
        %v10047 = vmax.f32 %v10046, %v9270
        %v10048 = vmax.f32 %v10047, %v9278
        %v10049 = vmax.f32 %v10048, %v9286
        %v10050 = vmax.f32 %v10049, %v9294
        %v10051 = vmax.f32 %v10050, %v9302
        %v10052 = vmax.f32 %v10051, %v9310
        %v10053 = vmax.f32 %v10052, %v9318
        %v10054 = vmax.f32 %v10053, %v9326
        %v10055 = vmax.f32 %v10054, %v9334
        %v10056 = vmax.f32 %v10055, %v9342
        %v10057 = vmax.f32 %v10056, %v9350
        %v10058 = vmax.f32 %v10057, %v9358
        %v10059 = vmax.f32 %v10058, %v9366
        %v10060 = vmax.f32 %v10059, %v9374
        %v10061 = vmax.f32 %v10060, %v9382
        %v10062 = vmax.f32 %v10061, %v9390
        %v10063 = vmax.f32 %v10062, %v9398
        %v10064 = vmax.f32 %v10063, %v9406
        %v10065 = vmax.f32 %v10064, %v9414
        %v10066 = vmax.f32 %v10065, %v9422
        %v10067 = vmax.f32 %v10066, %v9430
        %v10068 = vmax.f32 %v10067, %v9438
        %v10069 = vmax.f32 %v10068, %v9446
        %v10070 = vmax.f32 %v10069, %v9454
        %v10071 = vmax.f32 %v10070, %v9462
        %v10072 = vmax.f32 %v10071, %v9470
        %v10073 = vmax.f32 %v10072, %v9478
        %v10074 = vmax.f32 %v10073, %v9486
        %v10075 = vmax.f32 %v10074, %v9494
        %v10076 = vmax.f32 %v10075, %v9502
        %v10077 = vmax.f32 %v10076, %v9510
        %v10078 = vmax.f32 %v10077, %v9518
        %v10079 = vmax.f32 %v10078, %v9526
        %v10080 = vmax.f32 %v10079, %v9534
        %v10081 = vmax.f32 %v10080, %v9542
        %v10082 = vmax.f32 %v10081, %v9550
        %v10083 = vmax.f32 %v10082, %v9558
        %v10084 = vmax.f32 %v10083, %v9566
        %v10085 = vmax.f32 %v10084, %v9574
        %v10086 = vmax.f32 %v10085, %v9582
        %v10087 = vmax.f32 %v10086, %v9590
        %v10088 = vmax.f32 %v10087, %v9598
        %v10089 = vmax.f32 %v10088, %v9606
        %v10090 = vmax.f32 %v10089, %v9614
        %v10091 = vmax.f32 %v10090, %v9622
        %v10092 = vmax.f32 %v10091, %v9630
        %v10093 = vmax.f32 %v10092, %v9638
        %v10094 = vmax.f32 %v10093, %v9646
        %v10095 = vmax.f32 %v10094, %v9654
        %v10096 = vmax.f32 %v10095, %v9662
        %v10097 = vmax.f32 %v10096, %v9670
        %v10098 = vmax.f32 %v10097, %v9678
        %v10099 = vmax.f32 %v10098, %v9686
        %v10100 = vmax.f32 %v10099, %v9694
        %v10101 = vmax.f32 %v10100, %v9702
        %v10102 = vmax.f32 %v10101, %v9710
        %v10103 = vmax.f32 %v10102, %v9718
        %v10104 = vmax.f32 %v10103, %v9726
        %v10105 = vmax.f32 %v10104, %v9734
        %v10106 = vmax.f32 %v10105, %v9742
        %v10107 = vmax.f32 %v10106, %v9750
        %v10108 = vmax.f32 %v10107, %v9758
        %v10109 = vmax.f32 %v10108, %v9766
        %v10110 = vmax.f32 %v10109, %v9774
        %v10111 = vmax.f32 %v10110, %v9782
        %v10112 = vmax.f32 %v10111, %v9790
        %v10113 = vmax.f32 %v10112, %v9798
        %v10114 = vmax.f32 %v10113, %v9806
        %v10115 = vmax.f32 %v10114, %v9814
        %v10116 = vmax.f32 %v10115, %v9822
        %v10117 = vmax.f32 %v10116, %v9830
        %v10118 = vmax.f32 %v10117, %v9838
        %v10119 = vmax.f32 %v10118, %v9846
        %v10120 = vmax.f32 %v10119, %v9854
        %v10121 = vrot.slane %v10120, 4
        %v10122 = vmax.f32 %v10120, %v10121
        %v10123 = vrot.slane %v10122, 2
        %v10124 = vmax.f32 %v10122, %v10123
        %v10125 = vrot.slane %v10124, 1
        %v10126 = vmax.f32 %v10124, %v10125
        %v10127 = vmax.f32 %v8839, %v8847
        %v10128 = vmax.f32 %v10127, %v8855
        %v10129 = vmax.f32 %v10128, %v8863
        %v10130 = vmax.f32 %v10129, %v8871
        %v10131 = vmax.f32 %v10130, %v8879
        %v10132 = vmax.f32 %v10131, %v8887
        %v10133 = vmax.f32 %v10132, %v8895
        %v10134 = vmax.f32 %v10133, %v8903
        %v10135 = vmax.f32 %v10134, %v8911
        %v10136 = vmax.f32 %v10135, %v8919
        %v10137 = vmax.f32 %v10136, %v8927
        %v10138 = vmax.f32 %v10137, %v8935
        %v10139 = vmax.f32 %v10138, %v8943
        %v10140 = vmax.f32 %v10139, %v8951
        %v10141 = vmax.f32 %v10140, %v8959
        %v10142 = vmax.f32 %v10141, %v8967
        %v10143 = vmax.f32 %v10142, %v8975
        %v10144 = vmax.f32 %v10143, %v8983
        %v10145 = vmax.f32 %v10144, %v8991
        %v10146 = vmax.f32 %v10145, %v8999
        %v10147 = vmax.f32 %v10146, %v9007
        %v10148 = vmax.f32 %v10147, %v9015
        %v10149 = vmax.f32 %v10148, %v9023
        %v10150 = vmax.f32 %v10149, %v9031
        %v10151 = vmax.f32 %v10150, %v9039
        %v10152 = vmax.f32 %v10151, %v9047
        %v10153 = vmax.f32 %v10152, %v9055
        %v10154 = vmax.f32 %v10153, %v9063
        %v10155 = vmax.f32 %v10154, %v9071
        %v10156 = vmax.f32 %v10155, %v9079
        %v10157 = vmax.f32 %v10156, %v9087
        %v10158 = vmax.f32 %v10157, %v9095
        %v10159 = vmax.f32 %v10158, %v9103
        %v10160 = vmax.f32 %v10159, %v9111
        %v10161 = vmax.f32 %v10160, %v9119
        %v10162 = vmax.f32 %v10161, %v9127
        %v10163 = vmax.f32 %v10162, %v9135
        %v10164 = vmax.f32 %v10163, %v9143
        %v10165 = vmax.f32 %v10164, %v9151
        %v10166 = vmax.f32 %v10165, %v9159
        %v10167 = vmax.f32 %v10166, %v9167
        %v10168 = vmax.f32 %v10167, %v9175
        %v10169 = vmax.f32 %v10168, %v9183
        %v10170 = vmax.f32 %v10169, %v9191
        %v10171 = vmax.f32 %v10170, %v9199
        %v10172 = vmax.f32 %v10171, %v9207
        %v10173 = vmax.f32 %v10172, %v9215
        %v10174 = vmax.f32 %v10173, %v9223
        %v10175 = vmax.f32 %v10174, %v9231
        %v10176 = vmax.f32 %v10175, %v9239
        %v10177 = vmax.f32 %v10176, %v9247
        %v10178 = vmax.f32 %v10177, %v9255
        %v10179 = vmax.f32 %v10178, %v9263
        %v10180 = vmax.f32 %v10179, %v9271
        %v10181 = vmax.f32 %v10180, %v9279
        %v10182 = vmax.f32 %v10181, %v9287
        %v10183 = vmax.f32 %v10182, %v9295
        %v10184 = vmax.f32 %v10183, %v9303
        %v10185 = vmax.f32 %v10184, %v9311
        %v10186 = vmax.f32 %v10185, %v9319
        %v10187 = vmax.f32 %v10186, %v9327
        %v10188 = vmax.f32 %v10187, %v9335
        %v10189 = vmax.f32 %v10188, %v9343
        %v10190 = vmax.f32 %v10189, %v9351
        %v10191 = vmax.f32 %v10190, %v9359
        %v10192 = vmax.f32 %v10191, %v9367
        %v10193 = vmax.f32 %v10192, %v9375
        %v10194 = vmax.f32 %v10193, %v9383
        %v10195 = vmax.f32 %v10194, %v9391
        %v10196 = vmax.f32 %v10195, %v9399
        %v10197 = vmax.f32 %v10196, %v9407
        %v10198 = vmax.f32 %v10197, %v9415
        %v10199 = vmax.f32 %v10198, %v9423
        %v10200 = vmax.f32 %v10199, %v9431
        %v10201 = vmax.f32 %v10200, %v9439
        %v10202 = vmax.f32 %v10201, %v9447
        %v10203 = vmax.f32 %v10202, %v9455
        %v10204 = vmax.f32 %v10203, %v9463
        %v10205 = vmax.f32 %v10204, %v9471
        %v10206 = vmax.f32 %v10205, %v9479
        %v10207 = vmax.f32 %v10206, %v9487
        %v10208 = vmax.f32 %v10207, %v9495
        %v10209 = vmax.f32 %v10208, %v9503
        %v10210 = vmax.f32 %v10209, %v9511
        %v10211 = vmax.f32 %v10210, %v9519
        %v10212 = vmax.f32 %v10211, %v9527
        %v10213 = vmax.f32 %v10212, %v9535
        %v10214 = vmax.f32 %v10213, %v9543
        %v10215 = vmax.f32 %v10214, %v9551
        %v10216 = vmax.f32 %v10215, %v9559
        %v10217 = vmax.f32 %v10216, %v9567
        %v10218 = vmax.f32 %v10217, %v9575
        %v10219 = vmax.f32 %v10218, %v9583
        %v10220 = vmax.f32 %v10219, %v9591
        %v10221 = vmax.f32 %v10220, %v9599
        %v10222 = vmax.f32 %v10221, %v9607
        %v10223 = vmax.f32 %v10222, %v9615
        %v10224 = vmax.f32 %v10223, %v9623
        %v10225 = vmax.f32 %v10224, %v9631
        %v10226 = vmax.f32 %v10225, %v9639
        %v10227 = vmax.f32 %v10226, %v9647
        %v10228 = vmax.f32 %v10227, %v9655
        %v10229 = vmax.f32 %v10228, %v9663
        %v10230 = vmax.f32 %v10229, %v9671
        %v10231 = vmax.f32 %v10230, %v9679
        %v10232 = vmax.f32 %v10231, %v9687
        %v10233 = vmax.f32 %v10232, %v9695
        %v10234 = vmax.f32 %v10233, %v9703
        %v10235 = vmax.f32 %v10234, %v9711
        %v10236 = vmax.f32 %v10235, %v9719
        %v10237 = vmax.f32 %v10236, %v9727
        %v10238 = vmax.f32 %v10237, %v9735
        %v10239 = vmax.f32 %v10238, %v9743
        %v10240 = vmax.f32 %v10239, %v9751
        %v10241 = vmax.f32 %v10240, %v9759
        %v10242 = vmax.f32 %v10241, %v9767
        %v10243 = vmax.f32 %v10242, %v9775
        %v10244 = vmax.f32 %v10243, %v9783
        %v10245 = vmax.f32 %v10244, %v9791
        %v10246 = vmax.f32 %v10245, %v9799
        %v10247 = vmax.f32 %v10246, %v9807
        %v10248 = vmax.f32 %v10247, %v9815
        %v10249 = vmax.f32 %v10248, %v9823
        %v10250 = vmax.f32 %v10249, %v9831
        %v10251 = vmax.f32 %v10250, %v9839
        %v10252 = vmax.f32 %v10251, %v9847
        %v10253 = vmax.f32 %v10252, %v9855
        %v10254 = vrot.slane %v10253, 4
        %v10255 = vmax.f32 %v10253, %v10254
        %v10256 = vrot.slane %v10255, 2
        %v10257 = vmax.f32 %v10255, %v10256
        %v10258 = vrot.slane %v10257, 1
        %v10259 = vmax.f32 %v10257, %v10258
        %v10260 = vmax.f32 %v8840, %v8848
        %v10261 = vmax.f32 %v10260, %v8856
        %v10262 = vmax.f32 %v10261, %v8864
        %v10263 = vmax.f32 %v10262, %v8872
        %v10264 = vmax.f32 %v10263, %v8880
        %v10265 = vmax.f32 %v10264, %v8888
        %v10266 = vmax.f32 %v10265, %v8896
        %v10267 = vmax.f32 %v10266, %v8904
        %v10268 = vmax.f32 %v10267, %v8912
        %v10269 = vmax.f32 %v10268, %v8920
        %v10270 = vmax.f32 %v10269, %v8928
        %v10271 = vmax.f32 %v10270, %v8936
        %v10272 = vmax.f32 %v10271, %v8944
        %v10273 = vmax.f32 %v10272, %v8952
        %v10274 = vmax.f32 %v10273, %v8960
        %v10275 = vmax.f32 %v10274, %v8968
        %v10276 = vmax.f32 %v10275, %v8976
        %v10277 = vmax.f32 %v10276, %v8984
        %v10278 = vmax.f32 %v10277, %v8992
        %v10279 = vmax.f32 %v10278, %v9000
        %v10280 = vmax.f32 %v10279, %v9008
        %v10281 = vmax.f32 %v10280, %v9016
        %v10282 = vmax.f32 %v10281, %v9024
        %v10283 = vmax.f32 %v10282, %v9032
        %v10284 = vmax.f32 %v10283, %v9040
        %v10285 = vmax.f32 %v10284, %v9048
        %v10286 = vmax.f32 %v10285, %v9056
        %v10287 = vmax.f32 %v10286, %v9064
        %v10288 = vmax.f32 %v10287, %v9072
        %v10289 = vmax.f32 %v10288, %v9080
        %v10290 = vmax.f32 %v10289, %v9088
        %v10291 = vmax.f32 %v10290, %v9096
        %v10292 = vmax.f32 %v10291, %v9104
        %v10293 = vmax.f32 %v10292, %v9112
        %v10294 = vmax.f32 %v10293, %v9120
        %v10295 = vmax.f32 %v10294, %v9128
        %v10296 = vmax.f32 %v10295, %v9136
        %v10297 = vmax.f32 %v10296, %v9144
        %v10298 = vmax.f32 %v10297, %v9152
        %v10299 = vmax.f32 %v10298, %v9160
        %v10300 = vmax.f32 %v10299, %v9168
        %v10301 = vmax.f32 %v10300, %v9176
        %v10302 = vmax.f32 %v10301, %v9184
        %v10303 = vmax.f32 %v10302, %v9192
        %v10304 = vmax.f32 %v10303, %v9200
        %v10305 = vmax.f32 %v10304, %v9208
        %v10306 = vmax.f32 %v10305, %v9216
        %v10307 = vmax.f32 %v10306, %v9224
        %v10308 = vmax.f32 %v10307, %v9232
        %v10309 = vmax.f32 %v10308, %v9240
        %v10310 = vmax.f32 %v10309, %v9248
        %v10311 = vmax.f32 %v10310, %v9256
        %v10312 = vmax.f32 %v10311, %v9264
        %v10313 = vmax.f32 %v10312, %v9272
        %v10314 = vmax.f32 %v10313, %v9280
        %v10315 = vmax.f32 %v10314, %v9288
        %v10316 = vmax.f32 %v10315, %v9296
        %v10317 = vmax.f32 %v10316, %v9304
        %v10318 = vmax.f32 %v10317, %v9312
        %v10319 = vmax.f32 %v10318, %v9320
        %v10320 = vmax.f32 %v10319, %v9328
        %v10321 = vmax.f32 %v10320, %v9336
        %v10322 = vmax.f32 %v10321, %v9344
        %v10323 = vmax.f32 %v10322, %v9352
        %v10324 = vmax.f32 %v10323, %v9360
        %v10325 = vmax.f32 %v10324, %v9368
        %v10326 = vmax.f32 %v10325, %v9376
        %v10327 = vmax.f32 %v10326, %v9384
        %v10328 = vmax.f32 %v10327, %v9392
        %v10329 = vmax.f32 %v10328, %v9400
        %v10330 = vmax.f32 %v10329, %v9408
        %v10331 = vmax.f32 %v10330, %v9416
        %v10332 = vmax.f32 %v10331, %v9424
        %v10333 = vmax.f32 %v10332, %v9432
        %v10334 = vmax.f32 %v10333, %v9440
        %v10335 = vmax.f32 %v10334, %v9448
        %v10336 = vmax.f32 %v10335, %v9456
        %v10337 = vmax.f32 %v10336, %v9464
        %v10338 = vmax.f32 %v10337, %v9472
        %v10339 = vmax.f32 %v10338, %v9480
        %v10340 = vmax.f32 %v10339, %v9488
        %v10341 = vmax.f32 %v10340, %v9496
        %v10342 = vmax.f32 %v10341, %v9504
        %v10343 = vmax.f32 %v10342, %v9512
        %v10344 = vmax.f32 %v10343, %v9520
        %v10345 = vmax.f32 %v10344, %v9528
        %v10346 = vmax.f32 %v10345, %v9536
        %v10347 = vmax.f32 %v10346, %v9544
        %v10348 = vmax.f32 %v10347, %v9552
        %v10349 = vmax.f32 %v10348, %v9560
        %v10350 = vmax.f32 %v10349, %v9568
        %v10351 = vmax.f32 %v10350, %v9576
        %v10352 = vmax.f32 %v10351, %v9584
        %v10353 = vmax.f32 %v10352, %v9592
        %v10354 = vmax.f32 %v10353, %v9600
        %v10355 = vmax.f32 %v10354, %v9608
        %v10356 = vmax.f32 %v10355, %v9616
        %v10357 = vmax.f32 %v10356, %v9624
        %v10358 = vmax.f32 %v10357, %v9632
        %v10359 = vmax.f32 %v10358, %v9640
        %v10360 = vmax.f32 %v10359, %v9648
        %v10361 = vmax.f32 %v10360, %v9656
        %v10362 = vmax.f32 %v10361, %v9664
        %v10363 = vmax.f32 %v10362, %v9672
        %v10364 = vmax.f32 %v10363, %v9680
        %v10365 = vmax.f32 %v10364, %v9688
        %v10366 = vmax.f32 %v10365, %v9696
        %v10367 = vmax.f32 %v10366, %v9704
        %v10368 = vmax.f32 %v10367, %v9712
        %v10369 = vmax.f32 %v10368, %v9720
        %v10370 = vmax.f32 %v10369, %v9728
        %v10371 = vmax.f32 %v10370, %v9736
        %v10372 = vmax.f32 %v10371, %v9744
        %v10373 = vmax.f32 %v10372, %v9752
        %v10374 = vmax.f32 %v10373, %v9760
        %v10375 = vmax.f32 %v10374, %v9768
        %v10376 = vmax.f32 %v10375, %v9776
        %v10377 = vmax.f32 %v10376, %v9784
        %v10378 = vmax.f32 %v10377, %v9792
        %v10379 = vmax.f32 %v10378, %v9800
        %v10380 = vmax.f32 %v10379, %v9808
        %v10381 = vmax.f32 %v10380, %v9816
        %v10382 = vmax.f32 %v10381, %v9824
        %v10383 = vmax.f32 %v10382, %v9832
        %v10384 = vmax.f32 %v10383, %v9840
        %v10385 = vmax.f32 %v10384, %v9848
        %v10386 = vmax.f32 %v10385, %v9856
        %v10387 = vrot.slane %v10386, 4
        %v10388 = vmax.f32 %v10386, %v10387
        %v10389 = vrot.slane %v10388, 2
        %v10390 = vmax.f32 %v10388, %v10389
        %v10391 = vrot.slane %v10390, 1
        %v10392 = vmax.f32 %v10390, %v10391
        %v10393 = vmax.f32 %v8841, %v8849
        %v10394 = vmax.f32 %v10393, %v8857
        %v10395 = vmax.f32 %v10394, %v8865
        %v10396 = vmax.f32 %v10395, %v8873
        %v10397 = vmax.f32 %v10396, %v8881
        %v10398 = vmax.f32 %v10397, %v8889
        %v10399 = vmax.f32 %v10398, %v8897
        %v10400 = vmax.f32 %v10399, %v8905
        %v10401 = vmax.f32 %v10400, %v8913
        %v10402 = vmax.f32 %v10401, %v8921
        %v10403 = vmax.f32 %v10402, %v8929
        %v10404 = vmax.f32 %v10403, %v8937
        %v10405 = vmax.f32 %v10404, %v8945
        %v10406 = vmax.f32 %v10405, %v8953
        %v10407 = vmax.f32 %v10406, %v8961
        %v10408 = vmax.f32 %v10407, %v8969
        %v10409 = vmax.f32 %v10408, %v8977
        %v10410 = vmax.f32 %v10409, %v8985
        %v10411 = vmax.f32 %v10410, %v8993
        %v10412 = vmax.f32 %v10411, %v9001
        %v10413 = vmax.f32 %v10412, %v9009
        %v10414 = vmax.f32 %v10413, %v9017
        %v10415 = vmax.f32 %v10414, %v9025
        %v10416 = vmax.f32 %v10415, %v9033
        %v10417 = vmax.f32 %v10416, %v9041
        %v10418 = vmax.f32 %v10417, %v9049
        %v10419 = vmax.f32 %v10418, %v9057
        %v10420 = vmax.f32 %v10419, %v9065
        %v10421 = vmax.f32 %v10420, %v9073
        %v10422 = vmax.f32 %v10421, %v9081
        %v10423 = vmax.f32 %v10422, %v9089
        %v10424 = vmax.f32 %v10423, %v9097
        %v10425 = vmax.f32 %v10424, %v9105
        %v10426 = vmax.f32 %v10425, %v9113
        %v10427 = vmax.f32 %v10426, %v9121
        %v10428 = vmax.f32 %v10427, %v9129
        %v10429 = vmax.f32 %v10428, %v9137
        %v10430 = vmax.f32 %v10429, %v9145
        %v10431 = vmax.f32 %v10430, %v9153
        %v10432 = vmax.f32 %v10431, %v9161
        %v10433 = vmax.f32 %v10432, %v9169
        %v10434 = vmax.f32 %v10433, %v9177
        %v10435 = vmax.f32 %v10434, %v9185
        %v10436 = vmax.f32 %v10435, %v9193
        %v10437 = vmax.f32 %v10436, %v9201
        %v10438 = vmax.f32 %v10437, %v9209
        %v10439 = vmax.f32 %v10438, %v9217
        %v10440 = vmax.f32 %v10439, %v9225
        %v10441 = vmax.f32 %v10440, %v9233
        %v10442 = vmax.f32 %v10441, %v9241
        %v10443 = vmax.f32 %v10442, %v9249
        %v10444 = vmax.f32 %v10443, %v9257
        %v10445 = vmax.f32 %v10444, %v9265
        %v10446 = vmax.f32 %v10445, %v9273
        %v10447 = vmax.f32 %v10446, %v9281
        %v10448 = vmax.f32 %v10447, %v9289
        %v10449 = vmax.f32 %v10448, %v9297
        %v10450 = vmax.f32 %v10449, %v9305
        %v10451 = vmax.f32 %v10450, %v9313
        %v10452 = vmax.f32 %v10451, %v9321
        %v10453 = vmax.f32 %v10452, %v9329
        %v10454 = vmax.f32 %v10453, %v9337
        %v10455 = vmax.f32 %v10454, %v9345
        %v10456 = vmax.f32 %v10455, %v9353
        %v10457 = vmax.f32 %v10456, %v9361
        %v10458 = vmax.f32 %v10457, %v9369
        %v10459 = vmax.f32 %v10458, %v9377
        %v10460 = vmax.f32 %v10459, %v9385
        %v10461 = vmax.f32 %v10460, %v9393
        %v10462 = vmax.f32 %v10461, %v9401
        %v10463 = vmax.f32 %v10462, %v9409
        %v10464 = vmax.f32 %v10463, %v9417
        %v10465 = vmax.f32 %v10464, %v9425
        %v10466 = vmax.f32 %v10465, %v9433
        %v10467 = vmax.f32 %v10466, %v9441
        %v10468 = vmax.f32 %v10467, %v9449
        %v10469 = vmax.f32 %v10468, %v9457
        %v10470 = vmax.f32 %v10469, %v9465
        %v10471 = vmax.f32 %v10470, %v9473
        %v10472 = vmax.f32 %v10471, %v9481
        %v10473 = vmax.f32 %v10472, %v9489
        %v10474 = vmax.f32 %v10473, %v9497
        %v10475 = vmax.f32 %v10474, %v9505
        %v10476 = vmax.f32 %v10475, %v9513
        %v10477 = vmax.f32 %v10476, %v9521
        %v10478 = vmax.f32 %v10477, %v9529
        %v10479 = vmax.f32 %v10478, %v9537
        %v10480 = vmax.f32 %v10479, %v9545
        %v10481 = vmax.f32 %v10480, %v9553
        %v10482 = vmax.f32 %v10481, %v9561
        %v10483 = vmax.f32 %v10482, %v9569
        %v10484 = vmax.f32 %v10483, %v9577
        %v10485 = vmax.f32 %v10484, %v9585
        %v10486 = vmax.f32 %v10485, %v9593
        %v10487 = vmax.f32 %v10486, %v9601
        %v10488 = vmax.f32 %v10487, %v9609
        %v10489 = vmax.f32 %v10488, %v9617
        %v10490 = vmax.f32 %v10489, %v9625
        %v10491 = vmax.f32 %v10490, %v9633
        %v10492 = vmax.f32 %v10491, %v9641
        %v10493 = vmax.f32 %v10492, %v9649
        %v10494 = vmax.f32 %v10493, %v9657
        %v10495 = vmax.f32 %v10494, %v9665
        %v10496 = vmax.f32 %v10495, %v9673
        %v10497 = vmax.f32 %v10496, %v9681
        %v10498 = vmax.f32 %v10497, %v9689
        %v10499 = vmax.f32 %v10498, %v9697
        %v10500 = vmax.f32 %v10499, %v9705
        %v10501 = vmax.f32 %v10500, %v9713
        %v10502 = vmax.f32 %v10501, %v9721
        %v10503 = vmax.f32 %v10502, %v9729
        %v10504 = vmax.f32 %v10503, %v9737
        %v10505 = vmax.f32 %v10504, %v9745
        %v10506 = vmax.f32 %v10505, %v9753
        %v10507 = vmax.f32 %v10506, %v9761
        %v10508 = vmax.f32 %v10507, %v9769
        %v10509 = vmax.f32 %v10508, %v9777
        %v10510 = vmax.f32 %v10509, %v9785
        %v10511 = vmax.f32 %v10510, %v9793
        %v10512 = vmax.f32 %v10511, %v9801
        %v10513 = vmax.f32 %v10512, %v9809
        %v10514 = vmax.f32 %v10513, %v9817
        %v10515 = vmax.f32 %v10514, %v9825
        %v10516 = vmax.f32 %v10515, %v9833
        %v10517 = vmax.f32 %v10516, %v9841
        %v10518 = vmax.f32 %v10517, %v9849
        %v10519 = vmax.f32 %v10518, %v9857
        %v10520 = vrot.slane %v10519, 4
        %v10521 = vmax.f32 %v10519, %v10520
        %v10522 = vrot.slane %v10521, 2
        %v10523 = vmax.f32 %v10521, %v10522
        %v10524 = vrot.slane %v10523, 1
        %v10525 = vmax.f32 %v10523, %v10524
        %v10526 = vmax.f32 %v8842, %v8850
        %v10527 = vmax.f32 %v10526, %v8858
        %v10528 = vmax.f32 %v10527, %v8866
        %v10529 = vmax.f32 %v10528, %v8874
        %v10530 = vmax.f32 %v10529, %v8882
        %v10531 = vmax.f32 %v10530, %v8890
        %v10532 = vmax.f32 %v10531, %v8898
        %v10533 = vmax.f32 %v10532, %v8906
        %v10534 = vmax.f32 %v10533, %v8914
        %v10535 = vmax.f32 %v10534, %v8922
        %v10536 = vmax.f32 %v10535, %v8930
        %v10537 = vmax.f32 %v10536, %v8938
        %v10538 = vmax.f32 %v10537, %v8946
        %v10539 = vmax.f32 %v10538, %v8954
        %v10540 = vmax.f32 %v10539, %v8962
        %v10541 = vmax.f32 %v10540, %v8970
        %v10542 = vmax.f32 %v10541, %v8978
        %v10543 = vmax.f32 %v10542, %v8986
        %v10544 = vmax.f32 %v10543, %v8994
        %v10545 = vmax.f32 %v10544, %v9002
        %v10546 = vmax.f32 %v10545, %v9010
        %v10547 = vmax.f32 %v10546, %v9018
        %v10548 = vmax.f32 %v10547, %v9026
        %v10549 = vmax.f32 %v10548, %v9034
        %v10550 = vmax.f32 %v10549, %v9042
        %v10551 = vmax.f32 %v10550, %v9050
        %v10552 = vmax.f32 %v10551, %v9058
        %v10553 = vmax.f32 %v10552, %v9066
        %v10554 = vmax.f32 %v10553, %v9074
        %v10555 = vmax.f32 %v10554, %v9082
        %v10556 = vmax.f32 %v10555, %v9090
        %v10557 = vmax.f32 %v10556, %v9098
        %v10558 = vmax.f32 %v10557, %v9106
        %v10559 = vmax.f32 %v10558, %v9114
        %v10560 = vmax.f32 %v10559, %v9122
        %v10561 = vmax.f32 %v10560, %v9130
        %v10562 = vmax.f32 %v10561, %v9138
        %v10563 = vmax.f32 %v10562, %v9146
        %v10564 = vmax.f32 %v10563, %v9154
        %v10565 = vmax.f32 %v10564, %v9162
        %v10566 = vmax.f32 %v10565, %v9170
        %v10567 = vmax.f32 %v10566, %v9178
        %v10568 = vmax.f32 %v10567, %v9186
        %v10569 = vmax.f32 %v10568, %v9194
        %v10570 = vmax.f32 %v10569, %v9202
        %v10571 = vmax.f32 %v10570, %v9210
        %v10572 = vmax.f32 %v10571, %v9218
        %v10573 = vmax.f32 %v10572, %v9226
        %v10574 = vmax.f32 %v10573, %v9234
        %v10575 = vmax.f32 %v10574, %v9242
        %v10576 = vmax.f32 %v10575, %v9250
        %v10577 = vmax.f32 %v10576, %v9258
        %v10578 = vmax.f32 %v10577, %v9266
        %v10579 = vmax.f32 %v10578, %v9274
        %v10580 = vmax.f32 %v10579, %v9282
        %v10581 = vmax.f32 %v10580, %v9290
        %v10582 = vmax.f32 %v10581, %v9298
        %v10583 = vmax.f32 %v10582, %v9306
        %v10584 = vmax.f32 %v10583, %v9314
        %v10585 = vmax.f32 %v10584, %v9322
        %v10586 = vmax.f32 %v10585, %v9330
        %v10587 = vmax.f32 %v10586, %v9338
        %v10588 = vmax.f32 %v10587, %v9346
        %v10589 = vmax.f32 %v10588, %v9354
        %v10590 = vmax.f32 %v10589, %v9362
        %v10591 = vmax.f32 %v10590, %v9370
        %v10592 = vmax.f32 %v10591, %v9378
        %v10593 = vmax.f32 %v10592, %v9386
        %v10594 = vmax.f32 %v10593, %v9394
        %v10595 = vmax.f32 %v10594, %v9402
        %v10596 = vmax.f32 %v10595, %v9410
        %v10597 = vmax.f32 %v10596, %v9418
        %v10598 = vmax.f32 %v10597, %v9426
        %v10599 = vmax.f32 %v10598, %v9434
        %v10600 = vmax.f32 %v10599, %v9442
        %v10601 = vmax.f32 %v10600, %v9450
        %v10602 = vmax.f32 %v10601, %v9458
        %v10603 = vmax.f32 %v10602, %v9466
        %v10604 = vmax.f32 %v10603, %v9474
        %v10605 = vmax.f32 %v10604, %v9482
        %v10606 = vmax.f32 %v10605, %v9490
        %v10607 = vmax.f32 %v10606, %v9498
        %v10608 = vmax.f32 %v10607, %v9506
        %v10609 = vmax.f32 %v10608, %v9514
        %v10610 = vmax.f32 %v10609, %v9522
        %v10611 = vmax.f32 %v10610, %v9530
        %v10612 = vmax.f32 %v10611, %v9538
        %v10613 = vmax.f32 %v10612, %v9546
        %v10614 = vmax.f32 %v10613, %v9554
        %v10615 = vmax.f32 %v10614, %v9562
        %v10616 = vmax.f32 %v10615, %v9570
        %v10617 = vmax.f32 %v10616, %v9578
        %v10618 = vmax.f32 %v10617, %v9586
        %v10619 = vmax.f32 %v10618, %v9594
        %v10620 = vmax.f32 %v10619, %v9602
        %v10621 = vmax.f32 %v10620, %v9610
        %v10622 = vmax.f32 %v10621, %v9618
        %v10623 = vmax.f32 %v10622, %v9626
        %v10624 = vmax.f32 %v10623, %v9634
        %v10625 = vmax.f32 %v10624, %v9642
        %v10626 = vmax.f32 %v10625, %v9650
        %v10627 = vmax.f32 %v10626, %v9658
        %v10628 = vmax.f32 %v10627, %v9666
        %v10629 = vmax.f32 %v10628, %v9674
        %v10630 = vmax.f32 %v10629, %v9682
        %v10631 = vmax.f32 %v10630, %v9690
        %v10632 = vmax.f32 %v10631, %v9698
        %v10633 = vmax.f32 %v10632, %v9706
        %v10634 = vmax.f32 %v10633, %v9714
        %v10635 = vmax.f32 %v10634, %v9722
        %v10636 = vmax.f32 %v10635, %v9730
        %v10637 = vmax.f32 %v10636, %v9738
        %v10638 = vmax.f32 %v10637, %v9746
        %v10639 = vmax.f32 %v10638, %v9754
        %v10640 = vmax.f32 %v10639, %v9762
        %v10641 = vmax.f32 %v10640, %v9770
        %v10642 = vmax.f32 %v10641, %v9778
        %v10643 = vmax.f32 %v10642, %v9786
        %v10644 = vmax.f32 %v10643, %v9794
        %v10645 = vmax.f32 %v10644, %v9802
        %v10646 = vmax.f32 %v10645, %v9810
        %v10647 = vmax.f32 %v10646, %v9818
        %v10648 = vmax.f32 %v10647, %v9826
        %v10649 = vmax.f32 %v10648, %v9834
        %v10650 = vmax.f32 %v10649, %v9842
        %v10651 = vmax.f32 %v10650, %v9850
        %v10652 = vmax.f32 %v10651, %v9858
        %v10653 = vrot.slane %v10652, 4
        %v10654 = vmax.f32 %v10652, %v10653
        %v10655 = vrot.slane %v10654, 2
        %v10656 = vmax.f32 %v10654, %v10655
        %v10657 = vrot.slane %v10656, 1
        %v10658 = vmax.f32 %v10656, %v10657
        %v10659 = vmax.f32 %v8843, %v8851
        %v10660 = vmax.f32 %v10659, %v8859
        %v10661 = vmax.f32 %v10660, %v8867
        %v10662 = vmax.f32 %v10661, %v8875
        %v10663 = vmax.f32 %v10662, %v8883
        %v10664 = vmax.f32 %v10663, %v8891
        %v10665 = vmax.f32 %v10664, %v8899
        %v10666 = vmax.f32 %v10665, %v8907
        %v10667 = vmax.f32 %v10666, %v8915
        %v10668 = vmax.f32 %v10667, %v8923
        %v10669 = vmax.f32 %v10668, %v8931
        %v10670 = vmax.f32 %v10669, %v8939
        %v10671 = vmax.f32 %v10670, %v8947
        %v10672 = vmax.f32 %v10671, %v8955
        %v10673 = vmax.f32 %v10672, %v8963
        %v10674 = vmax.f32 %v10673, %v8971
        %v10675 = vmax.f32 %v10674, %v8979
        %v10676 = vmax.f32 %v10675, %v8987
        %v10677 = vmax.f32 %v10676, %v8995
        %v10678 = vmax.f32 %v10677, %v9003
        %v10679 = vmax.f32 %v10678, %v9011
        %v10680 = vmax.f32 %v10679, %v9019
        %v10681 = vmax.f32 %v10680, %v9027
        %v10682 = vmax.f32 %v10681, %v9035
        %v10683 = vmax.f32 %v10682, %v9043
        %v10684 = vmax.f32 %v10683, %v9051
        %v10685 = vmax.f32 %v10684, %v9059
        %v10686 = vmax.f32 %v10685, %v9067
        %v10687 = vmax.f32 %v10686, %v9075
        %v10688 = vmax.f32 %v10687, %v9083
        %v10689 = vmax.f32 %v10688, %v9091
        %v10690 = vmax.f32 %v10689, %v9099
        %v10691 = vmax.f32 %v10690, %v9107
        %v10692 = vmax.f32 %v10691, %v9115
        %v10693 = vmax.f32 %v10692, %v9123
        %v10694 = vmax.f32 %v10693, %v9131
        %v10695 = vmax.f32 %v10694, %v9139
        %v10696 = vmax.f32 %v10695, %v9147
        %v10697 = vmax.f32 %v10696, %v9155
        %v10698 = vmax.f32 %v10697, %v9163
        %v10699 = vmax.f32 %v10698, %v9171
        %v10700 = vmax.f32 %v10699, %v9179
        %v10701 = vmax.f32 %v10700, %v9187
        %v10702 = vmax.f32 %v10701, %v9195
        %v10703 = vmax.f32 %v10702, %v9203
        %v10704 = vmax.f32 %v10703, %v9211
        %v10705 = vmax.f32 %v10704, %v9219
        %v10706 = vmax.f32 %v10705, %v9227
        %v10707 = vmax.f32 %v10706, %v9235
        %v10708 = vmax.f32 %v10707, %v9243
        %v10709 = vmax.f32 %v10708, %v9251
        %v10710 = vmax.f32 %v10709, %v9259
        %v10711 = vmax.f32 %v10710, %v9267
        %v10712 = vmax.f32 %v10711, %v9275
        %v10713 = vmax.f32 %v10712, %v9283
        %v10714 = vmax.f32 %v10713, %v9291
        %v10715 = vmax.f32 %v10714, %v9299
        %v10716 = vmax.f32 %v10715, %v9307
        %v10717 = vmax.f32 %v10716, %v9315
        %v10718 = vmax.f32 %v10717, %v9323
        %v10719 = vmax.f32 %v10718, %v9331
        %v10720 = vmax.f32 %v10719, %v9339
        %v10721 = vmax.f32 %v10720, %v9347
        %v10722 = vmax.f32 %v10721, %v9355
        %v10723 = vmax.f32 %v10722, %v9363
        %v10724 = vmax.f32 %v10723, %v9371
        %v10725 = vmax.f32 %v10724, %v9379
        %v10726 = vmax.f32 %v10725, %v9387
        %v10727 = vmax.f32 %v10726, %v9395
        %v10728 = vmax.f32 %v10727, %v9403
        %v10729 = vmax.f32 %v10728, %v9411
        %v10730 = vmax.f32 %v10729, %v9419
        %v10731 = vmax.f32 %v10730, %v9427
        %v10732 = vmax.f32 %v10731, %v9435
        %v10733 = vmax.f32 %v10732, %v9443
        %v10734 = vmax.f32 %v10733, %v9451
        %v10735 = vmax.f32 %v10734, %v9459
        %v10736 = vmax.f32 %v10735, %v9467
        %v10737 = vmax.f32 %v10736, %v9475
        %v10738 = vmax.f32 %v10737, %v9483
        %v10739 = vmax.f32 %v10738, %v9491
        %v10740 = vmax.f32 %v10739, %v9499
        %v10741 = vmax.f32 %v10740, %v9507
        %v10742 = vmax.f32 %v10741, %v9515
        %v10743 = vmax.f32 %v10742, %v9523
        %v10744 = vmax.f32 %v10743, %v9531
        %v10745 = vmax.f32 %v10744, %v9539
        %v10746 = vmax.f32 %v10745, %v9547
        %v10747 = vmax.f32 %v10746, %v9555
        %v10748 = vmax.f32 %v10747, %v9563
        %v10749 = vmax.f32 %v10748, %v9571
        %v10750 = vmax.f32 %v10749, %v9579
        %v10751 = vmax.f32 %v10750, %v9587
        %v10752 = vmax.f32 %v10751, %v9595
        %v10753 = vmax.f32 %v10752, %v9603
        %v10754 = vmax.f32 %v10753, %v9611
        %v10755 = vmax.f32 %v10754, %v9619
        %v10756 = vmax.f32 %v10755, %v9627
        %v10757 = vmax.f32 %v10756, %v9635
        %v10758 = vmax.f32 %v10757, %v9643
        %v10759 = vmax.f32 %v10758, %v9651
        %v10760 = vmax.f32 %v10759, %v9659
        %v10761 = vmax.f32 %v10760, %v9667
        %v10762 = vmax.f32 %v10761, %v9675
        %v10763 = vmax.f32 %v10762, %v9683
        %v10764 = vmax.f32 %v10763, %v9691
        %v10765 = vmax.f32 %v10764, %v9699
        %v10766 = vmax.f32 %v10765, %v9707
        %v10767 = vmax.f32 %v10766, %v9715
        %v10768 = vmax.f32 %v10767, %v9723
        %v10769 = vmax.f32 %v10768, %v9731
        %v10770 = vmax.f32 %v10769, %v9739
        %v10771 = vmax.f32 %v10770, %v9747
        %v10772 = vmax.f32 %v10771, %v9755
        %v10773 = vmax.f32 %v10772, %v9763
        %v10774 = vmax.f32 %v10773, %v9771
        %v10775 = vmax.f32 %v10774, %v9779
        %v10776 = vmax.f32 %v10775, %v9787
        %v10777 = vmax.f32 %v10776, %v9795
        %v10778 = vmax.f32 %v10777, %v9803
        %v10779 = vmax.f32 %v10778, %v9811
        %v10780 = vmax.f32 %v10779, %v9819
        %v10781 = vmax.f32 %v10780, %v9827
        %v10782 = vmax.f32 %v10781, %v9835
        %v10783 = vmax.f32 %v10782, %v9843
        %v10784 = vmax.f32 %v10783, %v9851
        %v10785 = vmax.f32 %v10784, %v9859
        %v10786 = vrot.slane %v10785, 4
        %v10787 = vmax.f32 %v10785, %v10786
        %v10788 = vrot.slane %v10787, 2
        %v10789 = vmax.f32 %v10787, %v10788
        %v10790 = vrot.slane %v10789, 1
        %v10791 = vmax.f32 %v10789, %v10790
        %v10792 = vmax.f32 %v8844, %v8852
        %v10793 = vmax.f32 %v10792, %v8860
        %v10794 = vmax.f32 %v10793, %v8868
        %v10795 = vmax.f32 %v10794, %v8876
        %v10796 = vmax.f32 %v10795, %v8884
        %v10797 = vmax.f32 %v10796, %v8892
        %v10798 = vmax.f32 %v10797, %v8900
        %v10799 = vmax.f32 %v10798, %v8908
        %v10800 = vmax.f32 %v10799, %v8916
        %v10801 = vmax.f32 %v10800, %v8924
        %v10802 = vmax.f32 %v10801, %v8932
        %v10803 = vmax.f32 %v10802, %v8940
        %v10804 = vmax.f32 %v10803, %v8948
        %v10805 = vmax.f32 %v10804, %v8956
        %v10806 = vmax.f32 %v10805, %v8964
        %v10807 = vmax.f32 %v10806, %v8972
        %v10808 = vmax.f32 %v10807, %v8980
        %v10809 = vmax.f32 %v10808, %v8988
        %v10810 = vmax.f32 %v10809, %v8996
        %v10811 = vmax.f32 %v10810, %v9004
        %v10812 = vmax.f32 %v10811, %v9012
        %v10813 = vmax.f32 %v10812, %v9020
        %v10814 = vmax.f32 %v10813, %v9028
        %v10815 = vmax.f32 %v10814, %v9036
        %v10816 = vmax.f32 %v10815, %v9044
        %v10817 = vmax.f32 %v10816, %v9052
        %v10818 = vmax.f32 %v10817, %v9060
        %v10819 = vmax.f32 %v10818, %v9068
        %v10820 = vmax.f32 %v10819, %v9076
        %v10821 = vmax.f32 %v10820, %v9084
        %v10822 = vmax.f32 %v10821, %v9092
        %v10823 = vmax.f32 %v10822, %v9100
        %v10824 = vmax.f32 %v10823, %v9108
        %v10825 = vmax.f32 %v10824, %v9116
        %v10826 = vmax.f32 %v10825, %v9124
        %v10827 = vmax.f32 %v10826, %v9132
        %v10828 = vmax.f32 %v10827, %v9140
        %v10829 = vmax.f32 %v10828, %v9148
        %v10830 = vmax.f32 %v10829, %v9156
        %v10831 = vmax.f32 %v10830, %v9164
        %v10832 = vmax.f32 %v10831, %v9172
        %v10833 = vmax.f32 %v10832, %v9180
        %v10834 = vmax.f32 %v10833, %v9188
        %v10835 = vmax.f32 %v10834, %v9196
        %v10836 = vmax.f32 %v10835, %v9204
        %v10837 = vmax.f32 %v10836, %v9212
        %v10838 = vmax.f32 %v10837, %v9220
        %v10839 = vmax.f32 %v10838, %v9228
        %v10840 = vmax.f32 %v10839, %v9236
        %v10841 = vmax.f32 %v10840, %v9244
        %v10842 = vmax.f32 %v10841, %v9252
        %v10843 = vmax.f32 %v10842, %v9260
        %v10844 = vmax.f32 %v10843, %v9268
        %v10845 = vmax.f32 %v10844, %v9276
        %v10846 = vmax.f32 %v10845, %v9284
        %v10847 = vmax.f32 %v10846, %v9292
        %v10848 = vmax.f32 %v10847, %v9300
        %v10849 = vmax.f32 %v10848, %v9308
        %v10850 = vmax.f32 %v10849, %v9316
        %v10851 = vmax.f32 %v10850, %v9324
        %v10852 = vmax.f32 %v10851, %v9332
        %v10853 = vmax.f32 %v10852, %v9340
        %v10854 = vmax.f32 %v10853, %v9348
        %v10855 = vmax.f32 %v10854, %v9356
        %v10856 = vmax.f32 %v10855, %v9364
        %v10857 = vmax.f32 %v10856, %v9372
        %v10858 = vmax.f32 %v10857, %v9380
        %v10859 = vmax.f32 %v10858, %v9388
        %v10860 = vmax.f32 %v10859, %v9396
        %v10861 = vmax.f32 %v10860, %v9404
        %v10862 = vmax.f32 %v10861, %v9412
        %v10863 = vmax.f32 %v10862, %v9420
        %v10864 = vmax.f32 %v10863, %v9428
        %v10865 = vmax.f32 %v10864, %v9436
        %v10866 = vmax.f32 %v10865, %v9444
        %v10867 = vmax.f32 %v10866, %v9452
        %v10868 = vmax.f32 %v10867, %v9460
        %v10869 = vmax.f32 %v10868, %v9468
        %v10870 = vmax.f32 %v10869, %v9476
        %v10871 = vmax.f32 %v10870, %v9484
        %v10872 = vmax.f32 %v10871, %v9492
        %v10873 = vmax.f32 %v10872, %v9500
        %v10874 = vmax.f32 %v10873, %v9508
        %v10875 = vmax.f32 %v10874, %v9516
        %v10876 = vmax.f32 %v10875, %v9524
        %v10877 = vmax.f32 %v10876, %v9532
        %v10878 = vmax.f32 %v10877, %v9540
        %v10879 = vmax.f32 %v10878, %v9548
        %v10880 = vmax.f32 %v10879, %v9556
        %v10881 = vmax.f32 %v10880, %v9564
        %v10882 = vmax.f32 %v10881, %v9572
        %v10883 = vmax.f32 %v10882, %v9580
        %v10884 = vmax.f32 %v10883, %v9588
        %v10885 = vmax.f32 %v10884, %v9596
        %v10886 = vmax.f32 %v10885, %v9604
        %v10887 = vmax.f32 %v10886, %v9612
        %v10888 = vmax.f32 %v10887, %v9620
        %v10889 = vmax.f32 %v10888, %v9628
        %v10890 = vmax.f32 %v10889, %v9636
        %v10891 = vmax.f32 %v10890, %v9644
        %v10892 = vmax.f32 %v10891, %v9652
        %v10893 = vmax.f32 %v10892, %v9660
        %v10894 = vmax.f32 %v10893, %v9668
        %v10895 = vmax.f32 %v10894, %v9676
        %v10896 = vmax.f32 %v10895, %v9684
        %v10897 = vmax.f32 %v10896, %v9692
        %v10898 = vmax.f32 %v10897, %v9700
        %v10899 = vmax.f32 %v10898, %v9708
        %v10900 = vmax.f32 %v10899, %v9716
        %v10901 = vmax.f32 %v10900, %v9724
        %v10902 = vmax.f32 %v10901, %v9732
        %v10903 = vmax.f32 %v10902, %v9740
        %v10904 = vmax.f32 %v10903, %v9748
        %v10905 = vmax.f32 %v10904, %v9756
        %v10906 = vmax.f32 %v10905, %v9764
        %v10907 = vmax.f32 %v10906, %v9772
        %v10908 = vmax.f32 %v10907, %v9780
        %v10909 = vmax.f32 %v10908, %v9788
        %v10910 = vmax.f32 %v10909, %v9796
        %v10911 = vmax.f32 %v10910, %v9804
        %v10912 = vmax.f32 %v10911, %v9812
        %v10913 = vmax.f32 %v10912, %v9820
        %v10914 = vmax.f32 %v10913, %v9828
        %v10915 = vmax.f32 %v10914, %v9836
        %v10916 = vmax.f32 %v10915, %v9844
        %v10917 = vmax.f32 %v10916, %v9852
        %v10918 = vmax.f32 %v10917, %v9860
        %v10919 = vrot.slane %v10918, 4
        %v10920 = vmax.f32 %v10918, %v10919
        %v10921 = vrot.slane %v10920, 2
        %v10922 = vmax.f32 %v10920, %v10921
        %v10923 = vrot.slane %v10922, 1
        %v10924 = vmax.f32 %v10922, %v10923
        %v10925 = vld [vmem:[%s294] sm:$0xff]
        %v10934 = vcombine.low %v9993, %v10126
        %v10935 = vcombine.low %v10259, %v10392
        %v10936 = vcombine.low %v10525, %v10658
        %v10937 = vcombine.low %v10791, %v10924
        %v10939 = vunpack.c.l.s4 1966171168
        %v10940 = vunpack.c.0.s8 %v10939
        %v10941 = vlaneseq
        %v10942 = vshrl.u32 %v10941, 7
        %v10943 = vsub.s32 %v10940, %v10942
        %v10944 = vrot.slane %v10934, %v10943
        %v10946 = vunpack.c.l.s4 1966171168
        %v10947 = vunpack.c.0.s8 %v10946
        %v10948 = vlaneseq
        %v10949 = vshrl.u32 %v10948, 7
        %v10950 = vsub.s32 %v10947, %v10949
        %v10951 = vrot.slane %v10935, %v10950
        %v10953 = vunpack.c.l.s4 1966171168
        %v10954 = vunpack.c.0.s8 %v10953
        %v10955 = vlaneseq
        %v10956 = vshrl.u32 %v10955, 7
        %v10957 = vsub.s32 %v10954, %v10956
        %v10958 = vrot.slane %v10936, %v10957
        %v10960 = vunpack.c.l.s4 1966171168
        %v10961 = vunpack.c.0.s8 %v10960
        %v10962 = vlaneseq
        %v10963 = vshrl.u32 %v10962, 7
        %v10964 = vsub.s32 %v10961, %v10963
        %v10965 = vrot.slane %v10937, %v10964
        %v10966 = vcombine.low %v10944, %v10951
        %v10967 = vcombine.low %v10958, %v10965
        %v10969 = vunpack.c.l.s4 1966171168
        %v10970 = vunpack.c.0.s8 %v10969
        %v10971 = vlaneseq
        %v10972 = vshrl.u32 %v10971, 7
        %v10973 = vsub.s32 %v10970, %v10972
        %v10974 = vrot.slane %v10966, %v10973
        %v10976 = vunpack.c.l.s4 1966171168
        %v10977 = vunpack.c.0.s8 %v10976
        %v10978 = vlaneseq
        %v10979 = vshrl.u32 %v10978, 7
        %v10980 = vsub.s32 %v10977, %v10979
        %v10981 = vrot.slane %v10967, %v10980
        %v10982 = vcombine.low %v10974, %v10981
        %v10984 = vmax.f32 %v10925, %v10982
        %10985 = vst [vmem:[%s294] sm:$0xff] %v10984
        %s10986 = sand.u32 %s195, 1
        %s10987 = scalar_lea.sflag [#allocation3], %s10986
        %s10988 = sand.u32 %s195, 1
        %s10989 = smul.addr %s10988, 8
        %s10990 = scalar_lea.vmem [#allocation2], %s10989
        // Predicated region
        $region53: #{tpu_custom_call.1} parent=47 // pred_check
          %p10991 = pneg %p205
        $region54: #{tpu_custom_call.1} parent=47 // pred_check_branch
          %10993 = sbr.rel (%p10991) target = $region56
        $region55: #{tpu_custom_call.1} parent=47 // pred_region
          %s10995 = ssub.s32 128, 128
          %10996 = vsyncadd %s10987, %s10995
          %s10997 = smul.addr %s25, 8
          %s10998 = smul.addr %s10997, 16
          %s10999 = scalar_lea.hbm %s7, %s10998
          %s11001 = sshll.u32 %s10990, 4
          %s11002 = int_to_ptr.vmem [resolvable:$true] %s11001
          %11004 = dma.vmem_to_hbm [thread:$0]  %s11002, 128, %s10999, %s10987
        $region56: #{tpu_custom_call.1} parent=47 // pred_fallthru
          _
      $region48: #{tpu_custom_call.1} parent=5 // pred_fallthru
        _
      %p11005 = scmp.le.s32.totalorder 2, %s16
      // Predicated region
      $region57: #{tpu_custom_call.1} parent=5 // pred_check
        %p11006 = pneg %p11005
      $region58: #{tpu_custom_call.1} parent=5 // pred_check_branch
        %11008 = sbr.rel (%p11006) target = $region60
      $region59: #{tpu_custom_call.1} parent=5 // pred_region
        %s11009 = ssub.s32 %s16, 2
        // Predicated region
        $region61: #{tpu_custom_call.1} parent=59 // pred_check
          %p11010 = pneg %p211
        $region62: #{tpu_custom_call.1} parent=59 // pred_check_branch
          %11012 = sbr.rel (%p11010) target = $region64
        $region63: #{tpu_custom_call.1} parent=59 // pred_region
          %s11013 = sand.u32 %s196, 1
          %s11014 = scalar_lea.sflag [#allocation3], %s11013
          %s11015 = sand.u32 %s196, 1
          %s11016 = smul.addr %s11015, 8
          %s11017 = scalar_lea.vmem [#allocation2], %s11016
          %11018 = dma.done %s11014, 128
        $region64: #{tpu_custom_call.1} parent=59 // pred_fallthru
          _
      $region60: #{tpu_custom_call.1} parent=5 // pred_fallthru
        _
    $region6: #{tpu_custom_call.1} parent=1 // loop_footer
      %s20 = sadd.s32 1, %s16
    $region7: #{tpu_custom_call.1} parent=1 // loop_footer_branch
      %15 = sbr.rel target = $region3
    $region8: #{tpu_custom_call.1} parent=1 // loop_exit
      _
    %11019 = vsyncpa [#allocation3], 1
    %s11020 = scalar_lea.sflag [#allocation3], 1
    %11021 = vsyncpa %s11020, 1

</llo_original>
